<compile_context>
chip_gen: v7x
topology: tpu7x:2x2x1
jax: 0.10.0
libtpu: 0.0.40
codegen_flags: <defaults>
</compile_context>

<pallas_src>
import functools
import math

import jax
import jax.numpy as jnp
from jax.experimental import pallas as pl
from jax.experimental.pallas import tpu as pltpu

EPS = 1e-5


# --------------------------------------------------------------------------
# Pallas kernels
# --------------------------------------------------------------------------
def _residual(a_ref, h_ref, w1_ref, t1_ref, w2_ref, t2_ref, Ho):
    """ImpalaResidual: relu -> conv1 -> BN1 -> relu -> conv2 -> BN2 -> (+x).

    a_ref: (Ho+2, WoC) VMEM scratch holding the row-padded input activation.
    h_ref: (Ho+2, WoC) VMEM scratch for the intra-block intermediate.
    w*_ref: (3, WoC, WoC) banded conv weights (BN scale folded), bf16.
    t*_ref: (1, WoC) folded BN shift, f32.
    """
    woc = a_ref.shape[-1]
    zrow = jnp.zeros((1, woc), jnp.float32)

    y1 = None
    for dy in range(3):
        xs = jnp.maximum(a_ref[dy:dy + Ho, :], 0.0).astype(jnp.bfloat16)
        part = jnp.dot(xs, w1_ref[dy], preferred_element_type=jnp.float32)
        y1 = part if y1 is None else y1 + part
    y1 = y1 + t1_ref[...]

    h_ref[0:1, :] = zrow
    h_ref[Ho + 1:Ho + 2, :] = zrow
    h_ref[1:Ho + 1, :] = jnp.maximum(y1, 0.0)

    y2 = None
    for dy in range(3):
        hs = h_ref[dy:dy + Ho, :].astype(jnp.bfloat16)
        part = jnp.dot(hs, w2_ref[dy], preferred_element_type=jnp.float32)
        y2 = part if y2 is None else y2 + part
    return y2 + t2_ref[...] + a_ref[1:Ho + 1, :]


def _block_kernel(x_ref, wp_ref, tp_ref, sr_ref,
                  w1a_ref, t1a_ref, w2a_ref, t2a_ref,
                  w1b_ref, t1b_ref, w2b_ref, t2b_ref,
                  o_ref, acc_a, acc_b, *, H, bt):
    """One IMPALA block: Conv+BN+MaxPool fused with two residual blocks."""
    Ho = H // 2
    woc = o_ref.shape[-1]
    zrow = jnp.zeros((1, woc), jnp.float32)

    for b in range(bt):
        # ---- Conv3x3(pad=1) + BN(scale folded) fused with MaxPool(3, s2, p1).
        # Column pooling is folded into 3 column-phase band matrices; row
        # pooling is 3 tiny 0/1 selection matmuls.  Max is taken before adding
        # the per-channel shift (valid: shift is constant over the window and
        # the folded BN scale is positive).
        col_taps = []
        for m in range(3):
            acc = None
            for dy in range(3):
                xs = x_ref[b, dy:dy + H, :].astype(jnp.bfloat16)
                part = jnp.dot(xs, wp_ref[m, dy],
                               preferred_element_type=jnp.float32)
                acc = part if acc is None else acc + part
            col_taps.append(acc)                                  # (H, Wo*Cout)
        col_max = jnp.maximum(jnp.maximum(col_taps[0], col_taps[1]), col_taps[2])
        row_taps = [jnp.dot(sr_ref[k], col_max, preferred_element_type=jnp.float32)
                    for k in range(3)]                            # (Ho, Wo*Cout)
        a0 = (jnp.maximum(jnp.maximum(row_taps[0], row_taps[1]), row_taps[2])
              + tp_ref[...])

        # ---- two ImpalaResidual blocks, intermediates resident in VMEM.
        acc_a[0:1, :] = zrow
        acc_a[Ho + 1:Ho + 2, :] = zrow
        acc_a[1:Ho + 1, :] = a0
        a1 = _residual(acc_a, acc_b, w1a_ref, t1a_ref, w2a_ref, t2a_ref, Ho)
        acc_a[1:Ho + 1, :] = a1
        a2 = _residual(acc_a, acc_b, w1b_ref, t1b_ref, w2b_ref, t2b_ref, Ho)

        # ---- row-padded output (rows 0 / Ho+1 are the next conv's zero pad).
        o_ref[b, 0:1, :] = zrow
        o_ref[b, Ho + 1:Ho + 2, :] = zrow
        o_ref[b, 1:Ho + 1, :] = a2


def _linear_relu_kernel(x_ref, w_ref, b_ref, o_ref):
    """relu(relu(x) @ W + b)  (input ReLU fused before the matmul)."""
    x = jnp.maximum(x_ref[...], 0.0).astype(jnp.bfloat16)
    y = jnp.dot(x, w_ref[...], preferred_element_type=jnp.float32) + b_ref[...]
    o_ref[...] = jnp.maximum(y, 0.0)


# --------------------------------------------------------------------------
# pallas_call wrappers
# --------------------------------------------------------------------------
def impala_block(x_pad, blk):
    """x_pad: (N, H+2, W*Cin) row-padded activation -> (N, Ho+2, Wo*Cout)."""
    N, Hp, WCin = x_pad.shape
    H = Hp - 2
    Ho = H // 2
    WoC = blk["wp"].shape[-1]
    bt = 1  # images per grid step (batch tile); keep 1 so v7x's 2 TCs split N.

    kernel = functools.partial(_block_kernel, H=H, bt=bt)

    def bcast(shape):
        nd = len(shape)
        return pl.BlockSpec(shape, lambda n: (0,) * nd)

    return pl.pallas_call(
        kernel,
        out_shape=jax.ShapeDtypeStruct((N, Ho + 2, WoC), jnp.float32),
        grid=(N // bt,),
        in_specs=[
            pl.BlockSpec((bt, Hp, WCin), lambda n: (n, 0, 0)),
            bcast(blk["wp"].shape),
            bcast(blk["tp"].shape),
            bcast(blk["sr"].shape),
            bcast(blk["r1w1"].shape), bcast(blk["r1t1"].shape),
            bcast(blk["r1w2"].shape), bcast(blk["r1t2"].shape),
            bcast(blk["r2w1"].shape), bcast(blk["r2t1"].shape),
            bcast(blk["r2w2"].shape), bcast(blk["r2t2"].shape),
        ],
        out_specs=pl.BlockSpec((bt, Ho + 2, WoC), lambda n: (n, 0, 0)),
        scratch_shapes=[pltpu.VMEM((Ho + 2, WoC), jnp.float32),
                        pltpu.VMEM((Ho + 2, WoC), jnp.float32)],
        compiler_params=pltpu.CompilerParams(dimension_semantics=("parallel",)),
    )(x_pad, blk["wp"], blk["tp"], blk["sr"],
      blk["r1w1"], blk["r1t1"], blk["r1w2"], blk["r1t2"],
      blk["r2w1"], blk["r2t1"], blk["r2w2"], blk["r2t2"])


def linear_relu(x_flat, w_mat, bias):
    N, F = x_flat.shape
    Hd = w_mat.shape[1]
    return pl.pallas_call(
        _linear_relu_kernel,
        out_shape=jax.ShapeDtypeStruct((N, Hd), jnp.float32),
        grid=(1,),
        in_specs=[pl.BlockSpec((N, F), lambda i: (0, 0)),
                  pl.BlockSpec((F, Hd), lambda i: (0, 0)),
                  pl.BlockSpec((1, Hd), lambda i: (0, 0))],
        out_specs=pl.BlockSpec((N, Hd), lambda i: (0, 0)),
    )(x_flat, w_mat, bias)


# --------------------------------------------------------------------------
# Parameter construction (PyTorch-equivalent init) + inference-time folding
# --------------------------------------------------------------------------
def _orthogonal(key, rows, cols, gain=1.0):
    n = max(rows, cols)
    a = jax.random.normal(key, (n, n), dtype=jnp.float32)
    q, r = jnp.linalg.qr(a)
    q = q * jnp.sign(jnp.diagonal(r))
    return gain * q[:rows, :cols]


def _bn_fold(bias, cout):
    """Eval-mode BatchNorm (identity running stats) folded to scale/shift."""
    gamma = jnp.ones((cout,), jnp.float32)
    beta = jnp.zeros((cout,), jnp.float32)
    mean = jnp.zeros((cout,), jnp.float32)
    var = jnp.ones((cout,), jnp.float32)
    s = gamma / jnp.sqrt(var + EPS)
    t = (bias - mean) * s + beta
    return s, t


def _banded(w_oihw, scale, w_in, out_cols):
    """Build the 3 (per-dy) banded matmul matrices for a 3x3 pad=1 conv.

    Entry [dy][wi*Cin+ci, j*Cout+co] = scale[co] * w[co, ci, dy, wi - c_j + 1]
    (zero outside the band), where c_j = out_cols[j] is the conv output column
    produced at output block j.  Returns (3, w_in*Cin, n_out*Cout) float32.
    """
    cout, cin = int(w_oihw.shape[0]), int(w_oihw.shape[1])
    n_out = int(out_cols.shape[0])
    ws = w_oihw.astype(jnp.float32) * scale[:, None, None, None]
    wi = jnp.arange(w_in)[:, None]                       # (w_in, 1)
    wo = out_cols[None, :]                               # (1, n_out)
    bands = []
    for dy in range(3):
        acc = jnp.zeros((w_in, cin, n_out, cout), jnp.float32)
        for dx in range(3):
            mask = (wi == wo + dx - 1).astype(jnp.float32)          # (w_in, n_out)
            wt = jnp.transpose(ws[:, :, dy, dx])                    # (cin, cout)
            acc = acc + mask[:, None, :, None] * wt[None, :, None, :]
        bands.append(acc.reshape(w_in * cin, n_out * cout))
    return jnp.stack(bands, axis=0)


def make_params(key, image_size, depth_in, hidden_size):
    # TODO(synk): only image sizes divisible by 8 are supported (even spatial
    #             size at every pooling stage); image_size=16 satisfies this.
    assert image_size % 8 == 0, "image_size must be a multiple of 8"
    keys = iter(jax.random.split(key, 64))
    relu_gain = math.sqrt(2.0)
    params = {"blocks": []}
    d_in = depth_in
    sp = image_size

    def conv_default(cin, cout):           # PyTorch default Conv2d init
        fan_in = cin * 9
        bound = 1.0 / math.sqrt(fan_in)
        w = jax.random.uniform(next(keys), (cout, cin, 3, 3), jnp.float32, -bound, bound)
        b = jax.random.uniform(next(keys), (cout,), jnp.float32, -bound, bound)
        return w, b

    def conv_orth(cin, cout, gain):        # orthogonal_ + zero bias
        w = _orthogonal(next(keys), cout, cin * 9, gain).reshape(cout, cin, 3, 3)
        b = jnp.zeros((cout,), jnp.float32)
        return w, b

    for depth_out in [16, 32, 32]:
        H = sp
        Ho = H // 2
        blk = {}

        # stem conv + BN + pool (column-pool phases folded into the bands,
        # boundary windows handled by index clamping -- duplicates are
        # harmless under max).
        w, b = conv_default(d_in, depth_out)
        sc, t = _bn_fold(b, depth_out)
        pool_cols = [jnp.clip(2 * jnp.arange(Ho) + m - 1, 0, H - 1) for m in range(3)]
        blk["wp"] = jnp.stack([_banded(w, sc, H, c) for c in pool_cols],
                              axis=0).astype(jnp.bfloat16)         # (3,3,W*Cin,Wo*Cout)
        blk["tp"] = jnp.tile(t, Ho).reshape(1, Ho * depth_out)
        rows = jnp.clip(2 * jnp.arange(Ho)[:, None] + jnp.arange(3)[None, :] - 1,
                        0, H - 1)                                   # (Ho, 3)
        blk["sr"] = (jnp.arange(H)[None, None, :]
                     == rows.T[:, :, None]).astype(jnp.float32)     # (3, Ho, H)

        # two residual blocks (run at the pooled resolution Ho x Ho)
        ident_cols = jnp.arange(Ho)
        for r in (1, 2):
            w1, b1 = conv_orth(depth_out, depth_out, relu_gain)
            sc1, t1 = _bn_fold(b1, depth_out)
            w2, b2 = conv_orth(depth_out, depth_out, relu_gain)
            sc2, t2 = _bn_fold(b2, depth_out)
            blk[f"r{r}w1"] = _banded(w1, sc1, Ho, ident_cols).astype(jnp.bfloat16)
            blk[f"r{r}t1"] = jnp.tile(t1, Ho).reshape(1, Ho * depth_out)
            blk[f"r{r}w2"] = _banded(w2, sc2, Ho, ident_cols).astype(jnp.bfloat16)
            blk[f"r{r}t2"] = jnp.tile(t2, Ho).reshape(1, Ho * depth_out)

        params["blocks"].append(blk)
        d_in = depth_out
        sp = Ho

    # final linear: permute the weight once to the kernel's (h, w, c) flatten
    # order instead of transposing the activation every forward pass.
    feat = math.ceil(image_size / 8) ** 2 * d_in
    lin_w = _orthogonal(next(keys), hidden_size, feat, 1.0)   # (hidden, feat=(c,h,w))
    Hf = Wf = sp
    w_mat = lin_w.reshape(hidden_size, d_in, Hf, Wf)
    w_mat = jnp.transpose(w_mat, (2, 3, 1, 0)).reshape(Hf * Wf * d_in, hidden_size)
    params["lin_w"] = w_mat.astype(jnp.bfloat16)
    params["lin_b"] = jnp.zeros((1, hidden_size), jnp.float32)
    return params


# --------------------------------------------------------------------------
# Forward pass (matches ImpalaCNN.forward semantics)
# --------------------------------------------------------------------------
def impala_cnn_forward(x, params):
    in_shape = x.shape
    if len(in_shape) == 5:
        B, S = in_shape[0], in_shape[1]
        x = x.reshape(B * S, *in_shape[2:])
    N, C, H, W = x.shape

    # NCHW -> row-padded (N, H+2, W*C): channels map to TPU lanes.
    x = jnp.transpose(x, (0, 2, 3, 1)).astype(jnp.float32).reshape(N, H, W * C)
    x = jnp.pad(x, ((0, 0), (1, 1), (0, 0)))

    for blk in params["blocks"]:
        x = impala_block(x, blk)

    # F.relu -> flatten -> Linear -> F.relu (relu fused into the linear kernel;
    # flatten order matched by the pre-permuted linear weight).
    Np, Hp, WC = x.shape
    x_flat = x[:, 1:Hp - 1, :].reshape(Np, (Hp - 2) * WC)
    out = linear_relu(x_flat, params["lin_w"], params["lin_b"])

    if len(in_shape) == 5:
        out = out.reshape(B, S, -1)
    return out


# --------------------------------------------------------------------------
if __name__ == "__main__":
    image_size, depth_in, hidden_size = 16, 4, 32
    key = jax.random.PRNGKey(0)
    k_params, k_x = jax.random.split(key)

    params = make_params(k_params, image_size, depth_in, hidden_size)
    x = jax.random.normal(k_x, (2, depth_in, image_size, image_size), jnp.float32)

    fwd = jax.jit(impala_cnn_forward)
    out = jax.block_until_ready(fwd(x, params))

    assert out.shape == (2, hidden_size), out.shape
    assert bool(jnp.all(jnp.isfinite(out))) and bool(jnp.all(out >= 0.0))
    print("KERNEL_OK")
</pallas_src>

<mosaic_0001>
module attributes {stable_mosaic.version = 11 : i64} {
  func.func @_block_kernel(%arg0: i32, %arg1: memref<1x18x64xf32, #tpu.memory_space<vmem>>, %arg2: memref<3x3x64x128xbf16, #tpu.memory_space<vmem>>, %arg3: memref<1x128xf32, #tpu.memory_space<vmem>>, %arg4: memref<3x8x16xf32, #tpu.memory_space<vmem>>, %arg5: memref<3x128x128xbf16, #tpu.memory_space<vmem>>, %arg6: memref<1x128xf32, #tpu.memory_space<vmem>>, %arg7: memref<3x128x128xbf16, #tpu.memory_space<vmem>>, %arg8: memref<1x128xf32, #tpu.memory_space<vmem>>, %arg9: memref<3x128x128xbf16, #tpu.memory_space<vmem>>, %arg10: memref<1x128xf32, #tpu.memory_space<vmem>>, %arg11: memref<3x128x128xbf16, #tpu.memory_space<vmem>>, %arg12: memref<1x128xf32, #tpu.memory_space<vmem>>, %arg13: memref<1x10x128xf32, #tpu.memory_space<vmem>>, %arg14: memref<10x128xf32, #tpu.memory_space<vmem>>, %arg15: memref<10x128xf32, #tpu.memory_space<vmem>>) attributes {dimension_semantics = [#tpu.dimension_semantics<parallel>], iteration_bounds = array<i64: 2>, scalar_prefetch = 0 : i64, scratch_operands = 2 : i64, tpu.core_type = #tpu.core_type<tc>, window_params = [{transform_indices = @transform_0, window_bounds = array<i64: 1, 18, 64>}, {pipeline_mode = #tpu.pipeline_mode<synchronous>, transform_indices = @transform_1, window_bounds = array<i64: 3, 3, 64, 128>}, {pipeline_mode = #tpu.pipeline_mode<synchronous>, transform_indices = @transform_2, window_bounds = array<i64: 1, 128>}, {pipeline_mode = #tpu.pipeline_mode<synchronous>, transform_indices = @transform_3, window_bounds = array<i64: 3, 8, 16>}, {pipeline_mode = #tpu.pipeline_mode<synchronous>, transform_indices = @transform_4, window_bounds = array<i64: 3, 128, 128>}, {pipeline_mode = #tpu.pipeline_mode<synchronous>, transform_indices = @transform_5, window_bounds = array<i64: 1, 128>}, {pipeline_mode = #tpu.pipeline_mode<synchronous>, transform_indices = @transform_6, window_bounds = array<i64: 3, 128, 128>}, {pipeline_mode = #tpu.pipeline_mode<synchronous>, transform_indices = @transform_7, window_bounds = array<i64: 1, 128>}, {pipeline_mode = #tpu.pipeline_mode<synchronous>, transform_indices = @transform_8, window_bounds = array<i64: 3, 128, 128>}, {pipeline_mode = #tpu.pipeline_mode<synchronous>, transform_indices = @transform_9, window_bounds = array<i64: 1, 128>}, {pipeline_mode = #tpu.pipeline_mode<synchronous>, transform_indices = @transform_10, window_bounds = array<i64: 3, 128, 128>}, {pipeline_mode = #tpu.pipeline_mode<synchronous>, transform_indices = @transform_11, window_bounds = array<i64: 1, 128>}, {transform_indices = @transform_12, window_bounds = array<i64: 1, 10, 128>}]} {
    %cst = arith.constant 0.000000e+00 : f32
    %0 = vector.broadcast %cst : f32 to vector<1x128xf32>
    %c0 = arith.constant 0 : index
    %c0_0 = arith.constant 0 : index
    %c0_1 = arith.constant 0 : index
    %1 = vector.load %arg1[%c0, %c0_0, %c0_1] : memref<1x18x64xf32, #tpu.memory_space<vmem>>, vector<1x16x64xf32>
    %2 = vector.shape_cast %1 : vector<1x16x64xf32> to vector<16x64xf32>
    %3 = arith.truncf %2 : vector<16x64xf32> to vector<16x64xbf16>
    %c0_2 = arith.constant 0 : index
    %c0_3 = arith.constant 0 : index
    %c0_4 = arith.constant 0 : index
    %c0_5 = arith.constant 0 : index
    %4 = vector.load %arg2[%c0_2, %c0_3, %c0_4, %c0_5] : memref<3x3x64x128xbf16, #tpu.memory_space<vmem>>, vector<1x1x64x128xbf16>
    %5 = vector.shape_cast %4 : vector<1x1x64x128xbf16> to vector<64x128xbf16>
    %cst_6 = arith.constant dense<0.000000e+00> : vector<16x128xf32>
    %6 = tpu.matmul %3, %5, %cst_6 {dimension_numbers = #tpu.dot_dimension_numbers<[1], [0], [0], [1], [0, 0, 1, 1], [], []>} : vector<16x64xbf16>, vector<64x128xbf16>, vector<16x128xf32> -> vector<16x128xf32>
    %c0_7 = arith.constant 0 : index
    %c1 = arith.constant 1 : index
    %c0_8 = arith.constant 0 : index
    %7 = vector.load %arg1[%c0_7, %c1, %c0_8] : memref<1x18x64xf32, #tpu.memory_space<vmem>>, vector<1x16x64xf32>
    %8 = vector.shape_cast %7 : vector<1x16x64xf32> to vector<16x64xf32>
    %9 = arith.truncf %8 : vector<16x64xf32> to vector<16x64xbf16>
    %c0_9 = arith.constant 0 : index
    %c1_10 = arith.constant 1 : index
    %c0_11 = arith.constant 0 : index
    %c0_12 = arith.constant 0 : index
    %10 = vector.load %arg2[%c0_9, %c1_10, %c0_11, %c0_12] : memref<3x3x64x128xbf16, #tpu.memory_space<vmem>>, vector<1x1x64x128xbf16>
    %11 = vector.shape_cast %10 : vector<1x1x64x128xbf16> to vector<64x128xbf16>
    %cst_13 = arith.constant dense<0.000000e+00> : vector<16x128xf32>
    %12 = tpu.matmul %9, %11, %cst_13 {dimension_numbers = #tpu.dot_dimension_numbers<[1], [0], [0], [1], [0, 0, 1, 1], [], []>} : vector<16x64xbf16>, vector<64x128xbf16>, vector<16x128xf32> -> vector<16x128xf32>
    %13 = arith.addf %6, %12 : vector<16x128xf32>
    %c0_14 = arith.constant 0 : index
    %c2 = arith.constant 2 : index
    %c0_15 = arith.constant 0 : index
    %14 = vector.load %arg1[%c0_14, %c2, %c0_15] : memref<1x18x64xf32, #tpu.memory_space<vmem>>, vector<1x16x64xf32>
    %15 = vector.shape_cast %14 : vector<1x16x64xf32> to vector<16x64xf32>
    %16 = arith.truncf %15 : vector<16x64xf32> to vector<16x64xbf16>
    %c0_16 = arith.constant 0 : index
    %c2_17 = arith.constant 2 : index
    %c0_18 = arith.constant 0 : index
    %c0_19 = arith.constant 0 : index
    %17 = vector.load %arg2[%c0_16, %c2_17, %c0_18, %c0_19] : memref<3x3x64x128xbf16, #tpu.memory_space<vmem>>, vector<1x1x64x128xbf16>
    %18 = vector.shape_cast %17 : vector<1x1x64x128xbf16> to vector<64x128xbf16>
    %cst_20 = arith.constant dense<0.000000e+00> : vector<16x128xf32>
    %19 = tpu.matmul %16, %18, %cst_20 {dimension_numbers = #tpu.dot_dimension_numbers<[1], [0], [0], [1], [0, 0, 1, 1], [], []>} : vector<16x64xbf16>, vector<64x128xbf16>, vector<16x128xf32> -> vector<16x128xf32>
    %20 = arith.addf %13, %19 : vector<16x128xf32>
    %c0_21 = arith.constant 0 : index
    %c0_22 = arith.constant 0 : index
    %c0_23 = arith.constant 0 : index
    %21 = vector.load %arg1[%c0_21, %c0_22, %c0_23] : memref<1x18x64xf32, #tpu.memory_space<vmem>>, vector<1x16x64xf32>
    %22 = vector.shape_cast %21 : vector<1x16x64xf32> to vector<16x64xf32>
    %23 = arith.truncf %22 : vector<16x64xf32> to vector<16x64xbf16>
    %c1_24 = arith.constant 1 : index
    %c0_25 = arith.constant 0 : index
    %c0_26 = arith.constant 0 : index
    %c0_27 = arith.constant 0 : index
    %24 = vector.load %arg2[%c1_24, %c0_25, %c0_26, %c0_27] : memref<3x3x64x128xbf16, #tpu.memory_space<vmem>>, vector<1x1x64x128xbf16>
    %25 = vector.shape_cast %24 : vector<1x1x64x128xbf16> to vector<64x128xbf16>
    %cst_28 = arith.constant dense<0.000000e+00> : vector<16x128xf32>
    %26 = tpu.matmul %23, %25, %cst_28 {dimension_numbers = #tpu.dot_dimension_numbers<[1], [0], [0], [1], [0, 0, 1, 1], [], []>} : vector<16x64xbf16>, vector<64x128xbf16>, vector<16x128xf32> -> vector<16x128xf32>
    %c0_29 = arith.constant 0 : index
    %c1_30 = arith.constant 1 : index
    %c0_31 = arith.constant 0 : index
    %27 = vector.load %arg1[%c0_29, %c1_30, %c0_31] : memref<1x18x64xf32, #tpu.memory_space<vmem>>, vector<1x16x64xf32>
    %28 = vector.shape_cast %27 : vector<1x16x64xf32> to vector<16x64xf32>
    %29 = arith.truncf %28 : vector<16x64xf32> to vector<16x64xbf16>
    %c1_32 = arith.constant 1 : index
    %c1_33 = arith.constant 1 : index
    %c0_34 = arith.constant 0 : index
    %c0_35 = arith.constant 0 : index
    %30 = vector.load %arg2[%c1_32, %c1_33, %c0_34, %c0_35] : memref<3x3x64x128xbf16, #tpu.memory_space<vmem>>, vector<1x1x64x128xbf16>
    %31 = vector.shape_cast %30 : vector<1x1x64x128xbf16> to vector<64x128xbf16>
    %cst_36 = arith.constant dense<0.000000e+00> : vector<16x128xf32>
    %32 = tpu.matmul %29, %31, %cst_36 {dimension_numbers = #tpu.dot_dimension_numbers<[1], [0], [0], [1], [0, 0, 1, 1], [], []>} : vector<16x64xbf16>, vector<64x128xbf16>, vector<16x128xf32> -> vector<16x128xf32>
    %33 = arith.addf %26, %32 : vector<16x128xf32>
    %c0_37 = arith.constant 0 : index
    %c2_38 = arith.constant 2 : index
    %c0_39 = arith.constant 0 : index
    %34 = vector.load %arg1[%c0_37, %c2_38, %c0_39] : memref<1x18x64xf32, #tpu.memory_space<vmem>>, vector<1x16x64xf32>
    %35 = vector.shape_cast %34 : vector<1x16x64xf32> to vector<16x64xf32>
    %36 = arith.truncf %35 : vector<16x64xf32> to vector<16x64xbf16>
    %c1_40 = arith.constant 1 : index
    %c2_41 = arith.constant 2 : index
    %c0_42 = arith.constant 0 : index
    %c0_43 = arith.constant 0 : index
    %37 = vector.load %arg2[%c1_40, %c2_41, %c0_42, %c0_43] : memref<3x3x64x128xbf16, #tpu.memory_space<vmem>>, vector<1x1x64x128xbf16>
    %38 = vector.shape_cast %37 : vector<1x1x64x128xbf16> to vector<64x128xbf16>
    %cst_44 = arith.constant dense<0.000000e+00> : vector<16x128xf32>
    %39 = tpu.matmul %36, %38, %cst_44 {dimension_numbers = #tpu.dot_dimension_numbers<[1], [0], [0], [1], [0, 0, 1, 1], [], []>} : vector<16x64xbf16>, vector<64x128xbf16>, vector<16x128xf32> -> vector<16x128xf32>
    %40 = arith.addf %33, %39 : vector<16x128xf32>
    %c0_45 = arith.constant 0 : index
    %c0_46 = arith.constant 0 : index
    %c0_47 = arith.constant 0 : index
    %41 = vector.load %arg1[%c0_45, %c0_46, %c0_47] : memref<1x18x64xf32, #tpu.memory_space<vmem>>, vector<1x16x64xf32>
    %42 = vector.shape_cast %41 : vector<1x16x64xf32> to vector<16x64xf32>
    %43 = arith.truncf %42 : vector<16x64xf32> to vector<16x64xbf16>
    %c2_48 = arith.constant 2 : index
    %c0_49 = arith.constant 0 : index
    %c0_50 = arith.constant 0 : index
    %c0_51 = arith.constant 0 : index
    %44 = vector.load %arg2[%c2_48, %c0_49, %c0_50, %c0_51] : memref<3x3x64x128xbf16, #tpu.memory_space<vmem>>, vector<1x1x64x128xbf16>
    %45 = vector.shape_cast %44 : vector<1x1x64x128xbf16> to vector<64x128xbf16>
    %cst_52 = arith.constant dense<0.000000e+00> : vector<16x128xf32>
    %46 = tpu.matmul %43, %45, %cst_52 {dimension_numbers = #tpu.dot_dimension_numbers<[1], [0], [0], [1], [0, 0, 1, 1], [], []>} : vector<16x64xbf16>, vector<64x128xbf16>, vector<16x128xf32> -> vector<16x128xf32>
    %c0_53 = arith.constant 0 : index
    %c1_54 = arith.constant 1 : index
    %c0_55 = arith.constant 0 : index
    %47 = vector.load %arg1[%c0_53, %c1_54, %c0_55] : memref<1x18x64xf32, #tpu.memory_space<vmem>>, vector<1x16x64xf32>
    %48 = vector.shape_cast %47 : vector<1x16x64xf32> to vector<16x64xf32>
    %49 = arith.truncf %48 : vector<16x64xf32> to vector<16x64xbf16>
    %c2_56 = arith.constant 2 : index
    %c1_57 = arith.constant 1 : index
    %c0_58 = arith.constant 0 : index
    %c0_59 = arith.constant 0 : index
    %50 = vector.load %arg2[%c2_56, %c1_57, %c0_58, %c0_59] : memref<3x3x64x128xbf16, #tpu.memory_space<vmem>>, vector<1x1x64x128xbf16>
    %51 = vector.shape_cast %50 : vector<1x1x64x128xbf16> to vector<64x128xbf16>
    %cst_60 = arith.constant dense<0.000000e+00> : vector<16x128xf32>
    %52 = tpu.matmul %49, %51, %cst_60 {dimension_numbers = #tpu.dot_dimension_numbers<[1], [0], [0], [1], [0, 0, 1, 1], [], []>} : vector<16x64xbf16>, vector<64x128xbf16>, vector<16x128xf32> -> vector<16x128xf32>
    %53 = arith.addf %46, %52 : vector<16x128xf32>
    %c0_61 = arith.constant 0 : index
    %c2_62 = arith.constant 2 : index
    %c0_63 = arith.constant 0 : index
    %54 = vector.load %arg1[%c0_61, %c2_62, %c0_63] : memref<1x18x64xf32, #tpu.memory_space<vmem>>, vector<1x16x64xf32>
    %55 = vector.shape_cast %54 : vector<1x16x64xf32> to vector<16x64xf32>
    %56 = arith.truncf %55 : vector<16x64xf32> to vector<16x64xbf16>
    %c2_64 = arith.constant 2 : index
    %c2_65 = arith.constant 2 : index
    %c0_66 = arith.constant 0 : index
    %c0_67 = arith.constant 0 : index
    %57 = vector.load %arg2[%c2_64, %c2_65, %c0_66, %c0_67] : memref<3x3x64x128xbf16, #tpu.memory_space<vmem>>, vector<1x1x64x128xbf16>
    %58 = vector.shape_cast %57 : vector<1x1x64x128xbf16> to vector<64x128xbf16>
    %cst_68 = arith.constant dense<0.000000e+00> : vector<16x128xf32>
    %59 = tpu.matmul %56, %58, %cst_68 {dimension_numbers = #tpu.dot_dimension_numbers<[1], [0], [0], [1], [0, 0, 1, 1], [], []>} : vector<16x64xbf16>, vector<64x128xbf16>, vector<16x128xf32> -> vector<16x128xf32>
    %60 = arith.addf %53, %59 : vector<16x128xf32>
    %61 = arith.maximumf %20, %40 : vector<16x128xf32>
    %62 = arith.maximumf %61, %60 : vector<16x128xf32>
    %c0_69 = arith.constant 0 : index
    %c0_70 = arith.constant 0 : index
    %c0_71 = arith.constant 0 : index
    %63 = vector.load %arg4[%c0_69, %c0_70, %c0_71] : memref<3x8x16xf32, #tpu.memory_space<vmem>>, vector<1x8x16xf32>
    %64 = vector.shape_cast %63 : vector<1x8x16xf32> to vector<8x16xf32>
    %cst_72 = arith.constant dense<0.000000e+00> : vector<8x128xf32>
    %65 = tpu.matmul %64, %62, %cst_72 {dimension_numbers = #tpu.dot_dimension_numbers<[1], [0], [0], [1], [0, 0, 1, 1], [], []>} : vector<8x16xf32>, vector<16x128xf32>, vector<8x128xf32> -> vector<8x128xf32>
    %c1_73 = arith.constant 1 : index
    %c0_74 = arith.constant 0 : index
    %c0_75 = arith.constant 0 : index
    %66 = vector.load %arg4[%c1_73, %c0_74, %c0_75] : memref<3x8x16xf32, #tpu.memory_space<vmem>>, vector<1x8x16xf32>
    %67 = vector.shape_cast %66 : vector<1x8x16xf32> to vector<8x16xf32>
    %cst_76 = arith.constant dense<0.000000e+00> : vector<8x128xf32>
    %68 = tpu.matmul %67, %62, %cst_76 {dimension_numbers = #tpu.dot_dimension_numbers<[1], [0], [0], [1], [0, 0, 1, 1], [], []>} : vector<8x16xf32>, vector<16x128xf32>, vector<8x128xf32> -> vector<8x128xf32>
    %c2_77 = arith.constant 2 : index
    %c0_78 = arith.constant 0 : index
    %c0_79 = arith.constant 0 : index
    %69 = vector.load %arg4[%c2_77, %c0_78, %c0_79] : memref<3x8x16xf32, #tpu.memory_space<vmem>>, vector<1x8x16xf32>
    %70 = vector.shape_cast %69 : vector<1x8x16xf32> to vector<8x16xf32>
    %cst_80 = arith.constant dense<0.000000e+00> : vector<8x128xf32>
    %71 = tpu.matmul %70, %62, %cst_80 {dimension_numbers = #tpu.dot_dimension_numbers<[1], [0], [0], [1], [0, 0, 1, 1], [], []>} : vector<8x16xf32>, vector<16x128xf32>, vector<8x128xf32> -> vector<8x128xf32>
    %72 = arith.maximumf %65, %68 : vector<8x128xf32>
    %73 = arith.maximumf %72, %71 : vector<8x128xf32>
    %c0_81 = arith.constant 0 : index
    %c0_82 = arith.constant 0 : index
    %74 = vector.load %arg3[%c0_81, %c0_82] : memref<1x128xf32, #tpu.memory_space<vmem>>, vector<1x128xf32>
    %75 = vector.broadcast %74 : vector<1x128xf32> to vector<8x128xf32>
    %76 = arith.addf %73, %75 : vector<8x128xf32>
    %c0_83 = arith.constant 0 : index
    %c0_84 = arith.constant 0 : index
    %77 = vector.load %arg14[%c0_83, %c0_84] : memref<10x128xf32, #tpu.memory_space<vmem>>, vector<1x128xf32>
    tpu.vector_store %arg14[%c0_83, %c0_84], %0 {strides = array<i32>} : memref<10x128xf32, #tpu.memory_space<vmem>>, vector<1x128xf32>,
    %c9 = arith.constant 9 : index
    %c0_85 = arith.constant 0 : index
    %78 = vector.load %arg14[%c9, %c0_85] : memref<10x128xf32, #tpu.memory_space<vmem>>, vector<1x128xf32>
    tpu.vector_store %arg14[%c9, %c0_85], %0 {strides = array<i32>} : memref<10x128xf32, #tpu.memory_space<vmem>>, vector<1x128xf32>,
    %c1_86 = arith.constant 1 : index
    %c0_87 = arith.constant 0 : index
    %79 = vector.load %arg14[%c1_86, %c0_87] : memref<10x128xf32, #tpu.memory_space<vmem>>, vector<8x128xf32>
    tpu.vector_store %arg14[%c1_86, %c0_87], %76 {strides = array<i32>} : memref<10x128xf32, #tpu.memory_space<vmem>>, vector<8x128xf32>,
    %cst_88 = arith.constant 0.000000e+00 : f32
    %80 = vector.broadcast %cst_88 : f32 to vector<1x128xf32>
    %c0_89 = arith.constant 0 : index
    %c0_90 = arith.constant 0 : index
    %81 = vector.load %arg14[%c0_89, %c0_90] : memref<10x128xf32, #tpu.memory_space<vmem>>, vector<8x128xf32>
    %cst_91 = arith.constant 0.000000e+00 : f32
    %82 = vector.broadcast %cst_91 : f32 to vector<8x128xf32>
    %83 = arith.maximumf %81, %82 : vector<8x128xf32>
    %84 = arith.truncf %83 : vector<8x128xf32> to vector<8x128xbf16>
    %c0_92 = arith.constant 0 : index
    %c0_93 = arith.constant 0 : index
    %c0_94 = arith.constant 0 : index
    %85 = vector.load %arg5[%c0_92, %c0_93, %c0_94] : memref<3x128x128xbf16, #tpu.memory_space<vmem>>, vector<1x128x128xbf16>
    %86 = vector.shape_cast %85 : vector<1x128x128xbf16> to vector<128x128xbf16>
    %cst_95 = arith.constant dense<0.000000e+00> : vector<8x128xf32>
    %87 = tpu.matmul %84, %86, %cst_95 {dimension_numbers = #tpu.dot_dimension_numbers<[1], [0], [0], [1], [0, 0, 1, 1], [], []>} : vector<8x128xbf16>, vector<128x128xbf16>, vector<8x128xf32> -> vector<8x128xf32>
    %c1_96 = arith.constant 1 : index
    %c0_97 = arith.constant 0 : index
    %88 = vector.load %arg14[%c1_96, %c0_97] : memref<10x128xf32, #tpu.memory_space<vmem>>, vector<8x128xf32>
    %cst_98 = arith.constant 0.000000e+00 : f32
    %89 = vector.broadcast %cst_98 : f32 to vector<8x128xf32>
    %90 = arith.maximumf %88, %89 : vector<8x128xf32>
    %91 = arith.truncf %90 : vector<8x128xf32> to vector<8x128xbf16>
    %c1_99 = arith.constant 1 : index
    %c0_100 = arith.constant 0 : index
    %c0_101 = arith.constant 0 : index
    %92 = vector.load %arg5[%c1_99, %c0_100, %c0_101] : memref<3x128x128xbf16, #tpu.memory_space<vmem>>, vector<1x128x128xbf16>
    %93 = vector.shape_cast %92 : vector<1x128x128xbf16> to vector<128x128xbf16>
    %cst_102 = arith.constant dense<0.000000e+00> : vector<8x128xf32>
    %94 = tpu.matmul %91, %93, %cst_102 {dimension_numbers = #tpu.dot_dimension_numbers<[1], [0], [0], [1], [0, 0, 1, 1], [], []>} : vector<8x128xbf16>, vector<128x128xbf16>, vector<8x128xf32> -> vector<8x128xf32>
    %95 = arith.addf %87, %94 : vector<8x128xf32>
    %c2_103 = arith.constant 2 : index
    %c0_104 = arith.constant 0 : index
    %96 = vector.load %arg14[%c2_103, %c0_104] : memref<10x128xf32, #tpu.memory_space<vmem>>, vector<8x128xf32>
    %cst_105 = arith.constant 0.000000e+00 : f32
    %97 = vector.broadcast %cst_105 : f32 to vector<8x128xf32>
    %98 = arith.maximumf %96, %97 : vector<8x128xf32>
    %99 = arith.truncf %98 : vector<8x128xf32> to vector<8x128xbf16>
    %c2_106 = arith.constant 2 : index
    %c0_107 = arith.constant 0 : index
    %c0_108 = arith.constant 0 : index
    %100 = vector.load %arg5[%c2_106, %c0_107, %c0_108] : memref<3x128x128xbf16, #tpu.memory_space<vmem>>, vector<1x128x128xbf16>
    %101 = vector.shape_cast %100 : vector<1x128x128xbf16> to vector<128x128xbf16>
    %cst_109 = arith.constant dense<0.000000e+00> : vector<8x128xf32>
    %102 = tpu.matmul %99, %101, %cst_109 {dimension_numbers = #tpu.dot_dimension_numbers<[1], [0], [0], [1], [0, 0, 1, 1], [], []>} : vector<8x128xbf16>, vector<128x128xbf16>, vector<8x128xf32> -> vector<8x128xf32>
    %103 = arith.addf %95, %102 : vector<8x128xf32>
    %c0_110 = arith.constant 0 : index
    %c0_111 = arith.constant 0 : index
    %104 = vector.load %arg6[%c0_110, %c0_111] : memref<1x128xf32, #tpu.memory_space<vmem>>, vector<1x128xf32>
    %105 = vector.broadcast %104 : vector<1x128xf32> to vector<8x128xf32>
    %106 = arith.addf %103, %105 : vector<8x128xf32>
    %c0_112 = arith.constant 0 : index
    %c0_113 = arith.constant 0 : index
    %107 = vector.load %arg15[%c0_112, %c0_113] : memref<10x128xf32, #tpu.memory_space<vmem>>, vector<1x128xf32>
    tpu.vector_store %arg15[%c0_112, %c0_113], %80 {strides = array<i32>} : memref<10x128xf32, #tpu.memory_space<vmem>>, vector<1x128xf32>,
    %c9_114 = arith.constant 9 : index
    %c0_115 = arith.constant 0 : index
    %108 = vector.load %arg15[%c9_114, %c0_115] : memref<10x128xf32, #tpu.memory_space<vmem>>, vector<1x128xf32>
    tpu.vector_store %arg15[%c9_114, %c0_115], %80 {strides = array<i32>} : memref<10x128xf32, #tpu.memory_space<vmem>>, vector<1x128xf32>,
    %cst_116 = arith.constant 0.000000e+00 : f32
    %109 = vector.broadcast %cst_116 : f32 to vector<8x128xf32>
    %110 = arith.maximumf %106, %109 : vector<8x128xf32>
    %c1_117 = arith.constant 1 : index
    %c0_118 = arith.constant 0 : index
    %111 = vector.load %arg15[%c1_117, %c0_118] : memref<10x128xf32, #tpu.memory_space<vmem>>, vector<8x128xf32>
    tpu.vector_store %arg15[%c1_117, %c0_118], %110 {strides = array<i32>} : memref<10x128xf32, #tpu.memory_space<vmem>>, vector<8x128xf32>,
    %c0_119 = arith.constant 0 : index
    %c0_120 = arith.constant 0 : index
    %112 = vector.load %arg15[%c0_119, %c0_120] : memref<10x128xf32, #tpu.memory_space<vmem>>, vector<8x128xf32>
    %113 = arith.truncf %112 : vector<8x128xf32> to vector<8x128xbf16>
    %c0_121 = arith.constant 0 : index
    %c0_122 = arith.constant 0 : index
    %c0_123 = arith.constant 0 : index
    %114 = vector.load %arg7[%c0_121, %c0_122, %c0_123] : memref<3x128x128xbf16, #tpu.memory_space<vmem>>, vector<1x128x128xbf16>
    %115 = vector.shape_cast %114 : vector<1x128x128xbf16> to vector<128x128xbf16>
    %cst_124 = arith.constant dense<0.000000e+00> : vector<8x128xf32>
    %116 = tpu.matmul %113, %115, %cst_124 {dimension_numbers = #tpu.dot_dimension_numbers<[1], [0], [0], [1], [0, 0, 1, 1], [], []>} : vector<8x128xbf16>, vector<128x128xbf16>, vector<8x128xf32> -> vector<8x128xf32>
    %c1_125 = arith.constant 1 : index
    %c0_126 = arith.constant 0 : index
    %117 = vector.load %arg15[%c1_125, %c0_126] : memref<10x128xf32, #tpu.memory_space<vmem>>, vector<8x128xf32>
    %118 = arith.truncf %117 : vector<8x128xf32> to vector<8x128xbf16>
    %c1_127 = arith.constant 1 : index
    %c0_128 = arith.constant 0 : index
    %c0_129 = arith.constant 0 : index
    %119 = vector.load %arg7[%c1_127, %c0_128, %c0_129] : memref<3x128x128xbf16, #tpu.memory_space<vmem>>, vector<1x128x128xbf16>
    %120 = vector.shape_cast %119 : vector<1x128x128xbf16> to vector<128x128xbf16>
    %cst_130 = arith.constant dense<0.000000e+00> : vector<8x128xf32>
    %121 = tpu.matmul %118, %120, %cst_130 {dimension_numbers = #tpu.dot_dimension_numbers<[1], [0], [0], [1], [0, 0, 1, 1], [], []>} : vector<8x128xbf16>, vector<128x128xbf16>, vector<8x128xf32> -> vector<8x128xf32>
    %122 = arith.addf %116, %121 : vector<8x128xf32>
    %c2_131 = arith.constant 2 : index
    %c0_132 = arith.constant 0 : index
    %123 = vector.load %arg15[%c2_131, %c0_132] : memref<10x128xf32, #tpu.memory_space<vmem>>, vector<8x128xf32>
    %124 = arith.truncf %123 : vector<8x128xf32> to vector<8x128xbf16>
    %c2_133 = arith.constant 2 : index
    %c0_134 = arith.constant 0 : index
    %c0_135 = arith.constant 0 : index
    %125 = vector.load %arg7[%c2_133, %c0_134, %c0_135] : memref<3x128x128xbf16, #tpu.memory_space<vmem>>, vector<1x128x128xbf16>
    %126 = vector.shape_cast %125 : vector<1x128x128xbf16> to vector<128x128xbf16>
    %cst_136 = arith.constant dense<0.000000e+00> : vector<8x128xf32>
    %127 = tpu.matmul %124, %126, %cst_136 {dimension_numbers = #tpu.dot_dimension_numbers<[1], [0], [0], [1], [0, 0, 1, 1], [], []>} : vector<8x128xbf16>, vector<128x128xbf16>, vector<8x128xf32> -> vector<8x128xf32>
    %128 = arith.addf %122, %127 : vector<8x128xf32>
    %c0_137 = arith.constant 0 : index
    %c0_138 = arith.constant 0 : index
    %129 = vector.load %arg8[%c0_137, %c0_138] : memref<1x128xf32, #tpu.memory_space<vmem>>, vector<1x128xf32>
    %130 = vector.broadcast %129 : vector<1x128xf32> to vector<8x128xf32>
    %131 = arith.addf %128, %130 : vector<8x128xf32>
    %c1_139 = arith.constant 1 : index
    %c0_140 = arith.constant 0 : index
    %132 = vector.load %arg14[%c1_139, %c0_140] : memref<10x128xf32, #tpu.memory_space<vmem>>, vector<8x128xf32>
    %133 = arith.addf %131, %132 : vector<8x128xf32>
    %c1_141 = arith.constant 1 : index
    %c0_142 = arith.constant 0 : index
    %134 = vector.load %arg14[%c1_141, %c0_142] : memref<10x128xf32, #tpu.memory_space<vmem>>, vector<8x128xf32>
    tpu.vector_store %arg14[%c1_141, %c0_142], %133 {strides = array<i32>} : memref<10x128xf32, #tpu.memory_space<vmem>>, vector<8x128xf32>,
    %cst_143 = arith.constant 0.000000e+00 : f32
    %135 = vector.broadcast %cst_143 : f32 to vector<1x128xf32>
    %c0_144 = arith.constant 0 : index
    %c0_145 = arith.constant 0 : index
    %136 = vector.load %arg14[%c0_144, %c0_145] : memref<10x128xf32, #tpu.memory_space<vmem>>, vector<8x128xf32>
    %cst_146 = arith.constant 0.000000e+00 : f32
    %137 = vector.broadcast %cst_146 : f32 to vector<8x128xf32>
    %138 = arith.maximumf %136, %137 : vector<8x128xf32>
    %139 = arith.truncf %138 : vector<8x128xf32> to vector<8x128xbf16>
    %c0_147 = arith.constant 0 : index
    %c0_148 = arith.constant 0 : index
    %c0_149 = arith.constant 0 : index
    %140 = vector.load %arg9[%c0_147, %c0_148, %c0_149] : memref<3x128x128xbf16, #tpu.memory_space<vmem>>, vector<1x128x128xbf16>
    %141 = vector.shape_cast %140 : vector<1x128x128xbf16> to vector<128x128xbf16>
    %cst_150 = arith.constant dense<0.000000e+00> : vector<8x128xf32>
    %142 = tpu.matmul %139, %141, %cst_150 {dimension_numbers = #tpu.dot_dimension_numbers<[1], [0], [0], [1], [0, 0, 1, 1], [], []>} : vector<8x128xbf16>, vector<128x128xbf16>, vector<8x128xf32> -> vector<8x128xf32>
    %c1_151 = arith.constant 1 : index
    %c0_152 = arith.constant 0 : index
    %143 = vector.load %arg14[%c1_151, %c0_152] : memref<10x128xf32, #tpu.memory_space<vmem>>, vector<8x128xf32>
    %cst_153 = arith.constant 0.000000e+00 : f32
    %144 = vector.broadcast %cst_153 : f32 to vector<8x128xf32>
    %145 = arith.maximumf %143, %144 : vector<8x128xf32>
    %146 = arith.truncf %145 : vector<8x128xf32> to vector<8x128xbf16>
    %c1_154 = arith.constant 1 : index
    %c0_155 = arith.constant 0 : index
    %c0_156 = arith.constant 0 : index
    %147 = vector.load %arg9[%c1_154, %c0_155, %c0_156] : memref<3x128x128xbf16, #tpu.memory_space<vmem>>, vector<1x128x128xbf16>
    %148 = vector.shape_cast %147 : vector<1x128x128xbf16> to vector<128x128xbf16>
    %cst_157 = arith.constant dense<0.000000e+00> : vector<8x128xf32>
    %149 = tpu.matmul %146, %148, %cst_157 {dimension_numbers = #tpu.dot_dimension_numbers<[1], [0], [0], [1], [0, 0, 1, 1], [], []>} : vector<8x128xbf16>, vector<128x128xbf16>, vector<8x128xf32> -> vector<8x128xf32>
    %150 = arith.addf %142, %149 : vector<8x128xf32>
    %c2_158 = arith.constant 2 : index
    %c0_159 = arith.constant 0 : index
    %151 = vector.load %arg14[%c2_158, %c0_159] : memref<10x128xf32, #tpu.memory_space<vmem>>, vector<8x128xf32>
    %cst_160 = arith.constant 0.000000e+00 : f32
    %152 = vector.broadcast %cst_160 : f32 to vector<8x128xf32>
    %153 = arith.maximumf %151, %152 : vector<8x128xf32>
    %154 = arith.truncf %153 : vector<8x128xf32> to vector<8x128xbf16>
    %c2_161 = arith.constant 2 : index
    %c0_162 = arith.constant 0 : index
    %c0_163 = arith.constant 0 : index
    %155 = vector.load %arg9[%c2_161, %c0_162, %c0_163] : memref<3x128x128xbf16, #tpu.memory_space<vmem>>, vector<1x128x128xbf16>
    %156 = vector.shape_cast %155 : vector<1x128x128xbf16> to vector<128x128xbf16>
    %cst_164 = arith.constant dense<0.000000e+00> : vector<8x128xf32>
    %157 = tpu.matmul %154, %156, %cst_164 {dimension_numbers = #tpu.dot_dimension_numbers<[1], [0], [0], [1], [0, 0, 1, 1], [], []>} : vector<8x128xbf16>, vector<128x128xbf16>, vector<8x128xf32> -> vector<8x128xf32>
    %158 = arith.addf %150, %157 : vector<8x128xf32>
    %c0_165 = arith.constant 0 : index
    %c0_166 = arith.constant 0 : index
    %159 = vector.load %arg10[%c0_165, %c0_166] : memref<1x128xf32, #tpu.memory_space<vmem>>, vector<1x128xf32>
    %160 = vector.broadcast %159 : vector<1x128xf32> to vector<8x128xf32>
    %161 = arith.addf %158, %160 : vector<8x128xf32>
    %c0_167 = arith.constant 0 : index
    %c0_168 = arith.constant 0 : index
    %162 = vector.load %arg15[%c0_167, %c0_168] : memref<10x128xf32, #tpu.memory_space<vmem>>, vector<1x128xf32>
    tpu.vector_store %arg15[%c0_167, %c0_168], %135 {strides = array<i32>} : memref<10x128xf32, #tpu.memory_space<vmem>>, vector<1x128xf32>,
    %c9_169 = arith.constant 9 : index
    %c0_170 = arith.constant 0 : index
    %163 = vector.load %arg15[%c9_169, %c0_170] : memref<10x128xf32, #tpu.memory_space<vmem>>, vector<1x128xf32>
    tpu.vector_store %arg15[%c9_169, %c0_170], %135 {strides = array<i32>} : memref<10x128xf32, #tpu.memory_space<vmem>>, vector<1x128xf32>,
    %cst_171 = arith.constant 0.000000e+00 : f32
    %164 = vector.broadcast %cst_171 : f32 to vector<8x128xf32>
    %165 = arith.maximumf %161, %164 : vector<8x128xf32>
    %c1_172 = arith.constant 1 : index
    %c0_173 = arith.constant 0 : index
    %166 = vector.load %arg15[%c1_172, %c0_173] : memref<10x128xf32, #tpu.memory_space<vmem>>, vector<8x128xf32>
    tpu.vector_store %arg15[%c1_172, %c0_173], %165 {strides = array<i32>} : memref<10x128xf32, #tpu.memory_space<vmem>>, vector<8x128xf32>,
    %c0_174 = arith.constant 0 : index
    %c0_175 = arith.constant 0 : index
    %167 = vector.load %arg15[%c0_174, %c0_175] : memref<10x128xf32, #tpu.memory_space<vmem>>, vector<8x128xf32>
    %168 = arith.truncf %167 : vector<8x128xf32> to vector<8x128xbf16>
    %c0_176 = arith.constant 0 : index
    %c0_177 = arith.constant 0 : index
    %c0_178 = arith.constant 0 : index
    %169 = vector.load %arg11[%c0_176, %c0_177, %c0_178] : memref<3x128x128xbf16, #tpu.memory_space<vmem>>, vector<1x128x128xbf16>
    %170 = vector.shape_cast %169 : vector<1x128x128xbf16> to vector<128x128xbf16>
    %cst_179 = arith.constant dense<0.000000e+00> : vector<8x128xf32>
    %171 = tpu.matmul %168, %170, %cst_179 {dimension_numbers = #tpu.dot_dimension_numbers<[1], [0], [0], [1], [0, 0, 1, 1], [], []>} : vector<8x128xbf16>, vector<128x128xbf16>, vector<8x128xf32> -> vector<8x128xf32>
    %c1_180 = arith.constant 1 : index
    %c0_181 = arith.constant 0 : index
    %172 = vector.load %arg15[%c1_180, %c0_181] : memref<10x128xf32, #tpu.memory_space<vmem>>, vector<8x128xf32>
    %173 = arith.truncf %172 : vector<8x128xf32> to vector<8x128xbf16>
    %c1_182 = arith.constant 1 : index
    %c0_183 = arith.constant 0 : index
    %c0_184 = arith.constant 0 : index
    %174 = vector.load %arg11[%c1_182, %c0_183, %c0_184] : memref<3x128x128xbf16, #tpu.memory_space<vmem>>, vector<1x128x128xbf16>
    %175 = vector.shape_cast %174 : vector<1x128x128xbf16> to vector<128x128xbf16>
    %cst_185 = arith.constant dense<0.000000e+00> : vector<8x128xf32>
    %176 = tpu.matmul %173, %175, %cst_185 {dimension_numbers = #tpu.dot_dimension_numbers<[1], [0], [0], [1], [0, 0, 1, 1], [], []>} : vector<8x128xbf16>, vector<128x128xbf16>, vector<8x128xf32> -> vector<8x128xf32>
    %177 = arith.addf %171, %176 : vector<8x128xf32>
    %c2_186 = arith.constant 2 : index
    %c0_187 = arith.constant 0 : index
    %178 = vector.load %arg15[%c2_186, %c0_187] : memref<10x128xf32, #tpu.memory_space<vmem>>, vector<8x128xf32>
    %179 = arith.truncf %178 : vector<8x128xf32> to vector<8x128xbf16>
    %c2_188 = arith.constant 2 : index
    %c0_189 = arith.constant 0 : index
    %c0_190 = arith.constant 0 : index
    %180 = vector.load %arg11[%c2_188, %c0_189, %c0_190] : memref<3x128x128xbf16, #tpu.memory_space<vmem>>, vector<1x128x128xbf16>
    %181 = vector.shape_cast %180 : vector<1x128x128xbf16> to vector<128x128xbf16>
    %cst_191 = arith.constant dense<0.000000e+00> : vector<8x128xf32>
    %182 = tpu.matmul %179, %181, %cst_191 {dimension_numbers = #tpu.dot_dimension_numbers<[1], [0], [0], [1], [0, 0, 1, 1], [], []>} : vector<8x128xbf16>, vector<128x128xbf16>, vector<8x128xf32> -> vector<8x128xf32>
    %183 = arith.addf %177, %182 : vector<8x128xf32>
    %c0_192 = arith.constant 0 : index
    %c0_193 = arith.constant 0 : index
    %184 = vector.load %arg12[%c0_192, %c0_193] : memref<1x128xf32, #tpu.memory_space<vmem>>, vector<1x128xf32>
    %185 = vector.broadcast %184 : vector<1x128xf32> to vector<8x128xf32>
    %186 = arith.addf %183, %185 : vector<8x128xf32>
    %c1_194 = arith.constant 1 : index
    %c0_195 = arith.constant 0 : index
    %187 = vector.load %arg14[%c1_194, %c0_195] : memref<10x128xf32, #tpu.memory_space<vmem>>, vector<8x128xf32>
    %188 = arith.addf %186, %187 : vector<8x128xf32>
    %c0_196 = arith.constant 0 : index
    %c0_197 = arith.constant 0 : index
    %c0_198 = arith.constant 0 : index
    %189 = vector.load %arg13[%c0_196, %c0_197, %c0_198] : memref<1x10x128xf32, #tpu.memory_space<vmem>>, vector<1x1x128xf32>
    %190 = vector.shape_cast %189 : vector<1x1x128xf32> to vector<1x128xf32>
    %191 = vector.shape_cast %0 : vector<1x128xf32> to vector<1x1x128xf32>
    tpu.vector_store %arg13[%c0_196, %c0_197, %c0_198], %191 {strides = array<i32>} : memref<1x10x128xf32, #tpu.memory_space<vmem>>, vector<1x1x128xf32>,
    %c0_199 = arith.constant 0 : index
    %c9_200 = arith.constant 9 : index
    %c0_201 = arith.constant 0 : index
    %192 = vector.load %arg13[%c0_199, %c9_200, %c0_201] : memref<1x10x128xf32, #tpu.memory_space<vmem>>, vector<1x1x128xf32>
    %193 = vector.shape_cast %192 : vector<1x1x128xf32> to vector<1x128xf32>
    %194 = vector.shape_cast %0 : vector<1x128xf32> to vector<1x1x128xf32>
    tpu.vector_store %arg13[%c0_199, %c9_200, %c0_201], %194 {strides = array<i32>} : memref<1x10x128xf32, #tpu.memory_space<vmem>>, vector<1x1x128xf32>,
    %c0_202 = arith.constant 0 : index
    %c1_203 = arith.constant 1 : index
    %c0_204 = arith.constant 0 : index
    %195 = vector.load %arg13[%c0_202, %c1_203, %c0_204] : memref<1x10x128xf32, #tpu.memory_space<vmem>>, vector<1x8x128xf32>
    %196 = vector.shape_cast %195 : vector<1x8x128xf32> to vector<8x128xf32>
    %197 = vector.shape_cast %188 : vector<8x128xf32> to vector<1x8x128xf32>
    tpu.vector_store %arg13[%c0_202, %c1_203, %c0_204], %197 {strides = array<i32>} : memref<1x10x128xf32, #tpu.memory_space<vmem>>, vector<1x8x128xf32>,
    return
  }
  func.func @transform_0(%arg0: i32) -> (i32, i32, i32) {
    %c0_i32 = arith.constant 0 : i32
    %c0_i32_0 = arith.constant 0 : i32
    %c0_i32_1 = arith.constant 0 : i32
    return %arg0, %c0_i32, %c0_i32_0 : i32, i32, i32
  }
  func.func @transform_1(%arg0: i32) -> (i32, i32, i32, i32) {
    %c0_i32 = arith.constant 0 : i32
    %c0_i32_0 = arith.constant 0 : i32
    %c0_i32_1 = arith.constant 0 : i32
    %c0_i32_2 = arith.constant 0 : i32
    %c0_i32_3 = arith.constant 0 : i32
    return %c0_i32, %c0_i32_0, %c0_i32_1, %c0_i32_2 : i32, i32, i32, i32
  }
  func.func @transform_2(%arg0: i32) -> (i32, i32) {
    %c0_i32 = arith.constant 0 : i32
    %c0_i32_0 = arith.constant 0 : i32
    %c0_i32_1 = arith.constant 0 : i32
    return %c0_i32, %c0_i32_0 : i32, i32
  }
  func.func @transform_3(%arg0: i32) -> (i32, i32, i32) {
    %c0_i32 = arith.constant 0 : i32
    %c0_i32_0 = arith.constant 0 : i32
    %c0_i32_1 = arith.constant 0 : i32
    %c0_i32_2 = arith.constant 0 : i32
    return %c0_i32, %c0_i32_0, %c0_i32_1 : i32, i32, i32
  }
  func.func @transform_4(%arg0: i32) -> (i32, i32, i32) {
    %c0_i32 = arith.constant 0 : i32
    %c0_i32_0 = arith.constant 0 : i32
    %c0_i32_1 = arith.constant 0 : i32
    %c0_i32_2 = arith.constant 0 : i32
    return %c0_i32, %c0_i32_0, %c0_i32_1 : i32, i32, i32
  }
  func.func @transform_5(%arg0: i32) -> (i32, i32) {
    %c0_i32 = arith.constant 0 : i32
    %c0_i32_0 = arith.constant 0 : i32
    %c0_i32_1 = arith.constant 0 : i32
    return %c0_i32, %c0_i32_0 : i32, i32
  }
  func.func @transform_6(%arg0: i32) -> (i32, i32, i32) {
    %c0_i32 = arith.constant 0 : i32
    %c0_i32_0 = arith.constant 0 : i32
    %c0_i32_1 = arith.constant 0 : i32
    %c0_i32_2 = arith.constant 0 : i32
    return %c0_i32, %c0_i32_0, %c0_i32_1 : i32, i32, i32
  }
  func.func @transform_7(%arg0: i32) -> (i32, i32) {
    %c0_i32 = arith.constant 0 : i32
    %c0_i32_0 = arith.constant 0 : i32
    %c0_i32_1 = arith.constant 0 : i32
    return %c0_i32, %c0_i32_0 : i32, i32
  }
  func.func @transform_8(%arg0: i32) -> (i32, i32, i32) {
    %c0_i32 = arith.constant 0 : i32
    %c0_i32_0 = arith.constant 0 : i32
    %c0_i32_1 = arith.constant 0 : i32
    %c0_i32_2 = arith.constant 0 : i32
    return %c0_i32, %c0_i32_0, %c0_i32_1 : i32, i32, i32
  }
  func.func @transform_9(%arg0: i32) -> (i32, i32) {
    %c0_i32 = arith.constant 0 : i32
    %c0_i32_0 = arith.constant 0 : i32
    %c0_i32_1 = arith.constant 0 : i32
    return %c0_i32, %c0_i32_0 : i32, i32
  }
  func.func @transform_10(%arg0: i32) -> (i32, i32, i32) {
    %c0_i32 = arith.constant 0 : i32
    %c0_i32_0 = arith.constant 0 : i32
    %c0_i32_1 = arith.constant 0 : i32
    %c0_i32_2 = arith.constant 0 : i32
    return %c0_i32, %c0_i32_0, %c0_i32_1 : i32, i32, i32
  }
  func.func @transform_11(%arg0: i32) -> (i32, i32) {
    %c0_i32 = arith.constant 0 : i32
    %c0_i32_0 = arith.constant 0 : i32
    %c0_i32_1 = arith.constant 0 : i32
    return %c0_i32, %c0_i32_0 : i32, i32
  }
  func.func @transform_12(%arg0: i32) -> (i32, i32, i32) {
    %c0_i32 = arith.constant 0 : i32
    %c0_i32_0 = arith.constant 0 : i32
    %c0_i32_1 = arith.constant 0 : i32
    return %arg0, %c0_i32, %c0_i32_0 : i32, i32, i32
  }
}

module attributes {stable_mosaic.version = 11 : i64} {
  func.func @_block_kernel(%arg0: i32, %arg1: memref<1x10x128xf32, #tpu.memory_space<vmem>>, %arg2: memref<3x3x128x128xbf16, #tpu.memory_space<vmem>>, %arg3: memref<1x128xf32, #tpu.memory_space<vmem>>, %arg4: memref<3x4x8xf32, #tpu.memory_space<vmem>>, %arg5: memref<3x128x128xbf16, #tpu.memory_space<vmem>>, %arg6: memref<1x128xf32, #tpu.memory_space<vmem>>, %arg7: memref<3x128x128xbf16, #tpu.memory_space<vmem>>, %arg8: memref<1x128xf32, #tpu.memory_space<vmem>>, %arg9: memref<3x128x128xbf16, #tpu.memory_space<vmem>>, %arg10: memref<1x128xf32, #tpu.memory_space<vmem>>, %arg11: memref<3x128x128xbf16, #tpu.memory_space<vmem>>, %arg12: memref<1x128xf32, #tpu.memory_space<vmem>>, %arg13: memref<1x6x128xf32, #tpu.memory_space<vmem>>, %arg14: memref<6x128xf32, #tpu.memory_space<vmem>>, %arg15: memref<6x128xf32, #tpu.memory_space<vmem>>) attributes {dimension_semantics = [#tpu.dimension_semantics<parallel>], iteration_bounds = array<i64: 2>, scalar_prefetch = 0 : i64, scratch_operands = 2 : i64, tpu.core_type = #tpu.core_type<tc>, window_params = [{transform_indices = @transform_0, window_bounds = array<i64: 1, 10, 128>}, {pipeline_mode = #tpu.pipeline_mode<synchronous>, transform_indices = @transform_1, window_bounds = array<i64: 3, 3, 128, 128>}, {pipeline_mode = #tpu.pipeline_mode<synchronous>, transform_indices = @transform_2, window_bounds = array<i64: 1, 128>}, {pipeline_mode = #tpu.pipeline_mode<synchronous>, transform_indices = @transform_3, window_bounds = array<i64: 3, 4, 8>}, {pipeline_mode = #tpu.pipeline_mode<synchronous>, transform_indices = @transform_4, window_bounds = array<i64: 3, 128, 128>}, {pipeline_mode = #tpu.pipeline_mode<synchronous>, transform_indices = @transform_5, window_bounds = array<i64: 1, 128>}, {pipeline_mode = #tpu.pipeline_mode<synchronous>, transform_indices = @transform_6, window_bounds = array<i64: 3, 128, 128>}, {pipeline_mode = #tpu.pipeline_mode<synchronous>, transform_indices = @transform_7, window_bounds = array<i64: 1, 128>}, {pipeline_mode = #tpu.pipeline_mode<synchronous>, transform_indices = @transform_8, window_bounds = array<i64: 3, 128, 128>}, {pipeline_mode = #tpu.pipeline_mode<synchronous>, transform_indices = @transform_9, window_bounds = array<i64: 1, 128>}, {pipeline_mode = #tpu.pipeline_mode<synchronous>, transform_indices = @transform_10, window_bounds = array<i64: 3, 128, 128>}, {pipeline_mode = #tpu.pipeline_mode<synchronous>, transform_indices = @transform_11, window_bounds = array<i64: 1, 128>}, {transform_indices = @transform_12, window_bounds = array<i64: 1, 6, 128>}]} {
    %cst = arith.constant 0.000000e+00 : f32
    %0 = vector.broadcast %cst : f32 to vector<1x128xf32>
    %c0 = arith.constant 0 : index
    %c0_0 = arith.constant 0 : index
    %c0_1 = arith.constant 0 : index
    %1 = vector.load %arg1[%c0, %c0_0, %c0_1] : memref<1x10x128xf32, #tpu.memory_space<vmem>>, vector<1x8x128xf32>
    %2 = vector.shape_cast %1 : vector<1x8x128xf32> to vector<8x128xf32>
    %3 = arith.truncf %2 : vector<8x128xf32> to vector<8x128xbf16>
    %c0_2 = arith.constant 0 : index
    %c0_3 = arith.constant 0 : index
    %c0_4 = arith.constant 0 : index
    %c0_5 = arith.constant 0 : index
    %4 = vector.load %arg2[%c0_2, %c0_3, %c0_4, %c0_5] : memref<3x3x128x128xbf16, #tpu.memory_space<vmem>>, vector<1x1x128x128xbf16>
    %5 = vector.shape_cast %4 : vector<1x1x128x128xbf16> to vector<128x128xbf16>
    %cst_6 = arith.constant dense<0.000000e+00> : vector<8x128xf32>
    %6 = tpu.matmul %3, %5, %cst_6 {dimension_numbers = #tpu.dot_dimension_numbers<[1], [0], [0], [1], [0, 0, 1, 1], [], []>} : vector<8x128xbf16>, vector<128x128xbf16>, vector<8x128xf32> -> vector<8x128xf32>
    %c0_7 = arith.constant 0 : index
    %c1 = arith.constant 1 : index
    %c0_8 = arith.constant 0 : index
    %7 = vector.load %arg1[%c0_7, %c1, %c0_8] : memref<1x10x128xf32, #tpu.memory_space<vmem>>, vector<1x8x128xf32>
    %8 = vector.shape_cast %7 : vector<1x8x128xf32> to vector<8x128xf32>
    %9 = arith.truncf %8 : vector<8x128xf32> to vector<8x128xbf16>
    %c0_9 = arith.constant 0 : index
    %c1_10 = arith.constant 1 : index
    %c0_11 = arith.constant 0 : index
    %c0_12 = arith.constant 0 : index
    %10 = vector.load %arg2[%c0_9, %c1_10, %c0_11, %c0_12] : memref<3x3x128x128xbf16, #tpu.memory_space<vmem>>, vector<1x1x128x128xbf16>
    %11 = vector.shape_cast %10 : vector<1x1x128x128xbf16> to vector<128x128xbf16>
    %cst_13 = arith.constant dense<0.000000e+00> : vector<8x128xf32>
    %12 = tpu.matmul %9, %11, %cst_13 {dimension_numbers = #tpu.dot_dimension_numbers<[1], [0], [0], [1], [0, 0, 1, 1], [], []>} : vector<8x128xbf16>, vector<128x128xbf16>, vector<8x128xf32> -> vector<8x128xf32>
    %13 = arith.addf %6, %12 : vector<8x128xf32>
    %c0_14 = arith.constant 0 : index
    %c2 = arith.constant 2 : index
    %c0_15 = arith.constant 0 : index
    %14 = vector.load %arg1[%c0_14, %c2, %c0_15] : memref<1x10x128xf32, #tpu.memory_space<vmem>>, vector<1x8x128xf32>
    %15 = vector.shape_cast %14 : vector<1x8x128xf32> to vector<8x128xf32>
    %16 = arith.truncf %15 : vector<8x128xf32> to vector<8x128xbf16>
    %c0_16 = arith.constant 0 : index
    %c2_17 = arith.constant 2 : index
    %c0_18 = arith.constant 0 : index
    %c0_19 = arith.constant 0 : index
    %17 = vector.load %arg2[%c0_16, %c2_17, %c0_18, %c0_19] : memref<3x3x128x128xbf16, #tpu.memory_space<vmem>>, vector<1x1x128x128xbf16>
    %18 = vector.shape_cast %17 : vector<1x1x128x128xbf16> to vector<128x128xbf16>
    %cst_20 = arith.constant dense<0.000000e+00> : vector<8x128xf32>
    %19 = tpu.matmul %16, %18, %cst_20 {dimension_numbers = #tpu.dot_dimension_numbers<[1], [0], [0], [1], [0, 0, 1, 1], [], []>} : vector<8x128xbf16>, vector<128x128xbf16>, vector<8x128xf32> -> vector<8x128xf32>
    %20 = arith.addf %13, %19 : vector<8x128xf32>
    %c0_21 = arith.constant 0 : index
    %c0_22 = arith.constant 0 : index
    %c0_23 = arith.constant 0 : index
    %21 = vector.load %arg1[%c0_21, %c0_22, %c0_23] : memref<1x10x128xf32, #tpu.memory_space<vmem>>, vector<1x8x128xf32>
    %22 = vector.shape_cast %21 : vector<1x8x128xf32> to vector<8x128xf32>
    %23 = arith.truncf %22 : vector<8x128xf32> to vector<8x128xbf16>
    %c1_24 = arith.constant 1 : index
    %c0_25 = arith.constant 0 : index
    %c0_26 = arith.constant 0 : index
    %c0_27 = arith.constant 0 : index
    %24 = vector.load %arg2[%c1_24, %c0_25, %c0_26, %c0_27] : memref<3x3x128x128xbf16, #tpu.memory_space<vmem>>, vector<1x1x128x128xbf16>
    %25 = vector.shape_cast %24 : vector<1x1x128x128xbf16> to vector<128x128xbf16>
    %cst_28 = arith.constant dense<0.000000e+00> : vector<8x128xf32>
    %26 = tpu.matmul %23, %25, %cst_28 {dimension_numbers = #tpu.dot_dimension_numbers<[1], [0], [0], [1], [0, 0, 1, 1], [], []>} : vector<8x128xbf16>, vector<128x128xbf16>, vector<8x128xf32> -> vector<8x128xf32>
    %c0_29 = arith.constant 0 : index
    %c1_30 = arith.constant 1 : index
    %c0_31 = arith.constant 0 : index
    %27 = vector.load %arg1[%c0_29, %c1_30, %c0_31] : memref<1x10x128xf32, #tpu.memory_space<vmem>>, vector<1x8x128xf32>
    %28 = vector.shape_cast %27 : vector<1x8x128xf32> to vector<8x128xf32>
    %29 = arith.truncf %28 : vector<8x128xf32> to vector<8x128xbf16>
    %c1_32 = arith.constant 1 : index
    %c1_33 = arith.constant 1 : index
    %c0_34 = arith.constant 0 : index
    %c0_35 = arith.constant 0 : index
    %30 = vector.load %arg2[%c1_32, %c1_33, %c0_34, %c0_35] : memref<3x3x128x128xbf16, #tpu.memory_space<vmem>>, vector<1x1x128x128xbf16>
    %31 = vector.shape_cast %30 : vector<1x1x128x128xbf16> to vector<128x128xbf16>
    %cst_36 = arith.constant dense<0.000000e+00> : vector<8x128xf32>
    %32 = tpu.matmul %29, %31, %cst_36 {dimension_numbers = #tpu.dot_dimension_numbers<[1], [0], [0], [1], [0, 0, 1, 1], [], []>} : vector<8x128xbf16>, vector<128x128xbf16>, vector<8x128xf32> -> vector<8x128xf32>
    %33 = arith.addf %26, %32 : vector<8x128xf32>
    %c0_37 = arith.constant 0 : index
    %c2_38 = arith.constant 2 : index
    %c0_39 = arith.constant 0 : index
    %34 = vector.load %arg1[%c0_37, %c2_38, %c0_39] : memref<1x10x128xf32, #tpu.memory_space<vmem>>, vector<1x8x128xf32>
    %35 = vector.shape_cast %34 : vector<1x8x128xf32> to vector<8x128xf32>
    %36 = arith.truncf %35 : vector<8x128xf32> to vector<8x128xbf16>
    %c1_40 = arith.constant 1 : index
    %c2_41 = arith.constant 2 : index
    %c0_42 = arith.constant 0 : index
    %c0_43 = arith.constant 0 : index
    %37 = vector.load %arg2[%c1_40, %c2_41, %c0_42, %c0_43] : memref<3x3x128x128xbf16, #tpu.memory_space<vmem>>, vector<1x1x128x128xbf16>
    %38 = vector.shape_cast %37 : vector<1x1x128x128xbf16> to vector<128x128xbf16>
    %cst_44 = arith.constant dense<0.000000e+00> : vector<8x128xf32>
    %39 = tpu.matmul %36, %38, %cst_44 {dimension_numbers = #tpu.dot_dimension_numbers<[1], [0], [0], [1], [0, 0, 1, 1], [], []>} : vector<8x128xbf16>, vector<128x128xbf16>, vector<8x128xf32> -> vector<8x128xf32>
    %40 = arith.addf %33, %39 : vector<8x128xf32>
    %c0_45 = arith.constant 0 : index
    %c0_46 = arith.constant 0 : index
    %c0_47 = arith.constant 0 : index
    %41 = vector.load %arg1[%c0_45, %c0_46, %c0_47] : memref<1x10x128xf32, #tpu.memory_space<vmem>>, vector<1x8x128xf32>
    %42 = vector.shape_cast %41 : vector<1x8x128xf32> to vector<8x128xf32>
    %43 = arith.truncf %42 : vector<8x128xf32> to vector<8x128xbf16>
    %c2_48 = arith.constant 2 : index
    %c0_49 = arith.constant 0 : index
    %c0_50 = arith.constant 0 : index
    %c0_51 = arith.constant 0 : index
    %44 = vector.load %arg2[%c2_48, %c0_49, %c0_50, %c0_51] : memref<3x3x128x128xbf16, #tpu.memory_space<vmem>>, vector<1x1x128x128xbf16>
    %45 = vector.shape_cast %44 : vector<1x1x128x128xbf16> to vector<128x128xbf16>
    %cst_52 = arith.constant dense<0.000000e+00> : vector<8x128xf32>
    %46 = tpu.matmul %43, %45, %cst_52 {dimension_numbers = #tpu.dot_dimension_numbers<[1], [0], [0], [1], [0, 0, 1, 1], [], []>} : vector<8x128xbf16>, vector<128x128xbf16>, vector<8x128xf32> -> vector<8x128xf32>
    %c0_53 = arith.constant 0 : index
    %c1_54 = arith.constant 1 : index
    %c0_55 = arith.constant 0 : index
    %47 = vector.load %arg1[%c0_53, %c1_54, %c0_55] : memref<1x10x128xf32, #tpu.memory_space<vmem>>, vector<1x8x128xf32>
    %48 = vector.shape_cast %47 : vector<1x8x128xf32> to vector<8x128xf32>
    %49 = arith.truncf %48 : vector<8x128xf32> to vector<8x128xbf16>
    %c2_56 = arith.constant 2 : index
    %c1_57 = arith.constant 1 : index
    %c0_58 = arith.constant 0 : index
    %c0_59 = arith.constant 0 : index
    %50 = vector.load %arg2[%c2_56, %c1_57, %c0_58, %c0_59] : memref<3x3x128x128xbf16, #tpu.memory_space<vmem>>, vector<1x1x128x128xbf16>
    %51 = vector.shape_cast %50 : vector<1x1x128x128xbf16> to vector<128x128xbf16>
    %cst_60 = arith.constant dense<0.000000e+00> : vector<8x128xf32>
    %52 = tpu.matmul %49, %51, %cst_60 {dimension_numbers = #tpu.dot_dimension_numbers<[1], [0], [0], [1], [0, 0, 1, 1], [], []>} : vector<8x128xbf16>, vector<128x128xbf16>, vector<8x128xf32> -> vector<8x128xf32>
    %53 = arith.addf %46, %52 : vector<8x128xf32>
    %c0_61 = arith.constant 0 : index
    %c2_62 = arith.constant 2 : index
    %c0_63 = arith.constant 0 : index
    %54 = vector.load %arg1[%c0_61, %c2_62, %c0_63] : memref<1x10x128xf32, #tpu.memory_space<vmem>>, vector<1x8x128xf32>
    %55 = vector.shape_cast %54 : vector<1x8x128xf32> to vector<8x128xf32>
    %56 = arith.truncf %55 : vector<8x128xf32> to vector<8x128xbf16>
    %c2_64 = arith.constant 2 : index
    %c2_65 = arith.constant 2 : index
    %c0_66 = arith.constant 0 : index
    %c0_67 = arith.constant 0 : index
    %57 = vector.load %arg2[%c2_64, %c2_65, %c0_66, %c0_67] : memref<3x3x128x128xbf16, #tpu.memory_space<vmem>>, vector<1x1x128x128xbf16>
    %58 = vector.shape_cast %57 : vector<1x1x128x128xbf16> to vector<128x128xbf16>
    %cst_68 = arith.constant dense<0.000000e+00> : vector<8x128xf32>
    %59 = tpu.matmul %56, %58, %cst_68 {dimension_numbers = #tpu.dot_dimension_numbers<[1], [0], [0], [1], [0, 0, 1, 1], [], []>} : vector<8x128xbf16>, vector<128x128xbf16>, vector<8x128xf32> -> vector<8x128xf32>
    %60 = arith.addf %53, %59 : vector<8x128xf32>
    %61 = arith.maximumf %20, %40 : vector<8x128xf32>
    %62 = arith.maximumf %61, %60 : vector<8x128xf32>
    %c0_69 = arith.constant 0 : index
    %c0_70 = arith.constant 0 : index
    %c0_71 = arith.constant 0 : index
    %63 = vector.load %arg4[%c0_69, %c0_70, %c0_71] : memref<3x4x8xf32, #tpu.memory_space<vmem>>, vector<1x4x8xf32>
    %64 = vector.shape_cast %63 : vector<1x4x8xf32> to vector<4x8xf32>
    %cst_72 = arith.constant dense<0.000000e+00> : vector<4x128xf32>
    %65 = tpu.matmul %64, %62, %cst_72 {dimension_numbers = #tpu.dot_dimension_numbers<[1], [0], [0], [1], [0, 0, 1, 1], [], []>} : vector<4x8xf32>, vector<8x128xf32>, vector<4x128xf32> -> vector<4x128xf32>
    %c1_73 = arith.constant 1 : index
    %c0_74 = arith.constant 0 : index
    %c0_75 = arith.constant 0 : index
    %66 = vector.load %arg4[%c1_73, %c0_74, %c0_75] : memref<3x4x8xf32, #tpu.memory_space<vmem>>, vector<1x4x8xf32>
    %67 = vector.shape_cast %66 : vector<1x4x8xf32> to vector<4x8xf32>
    %cst_76 = arith.constant dense<0.000000e+00> : vector<4x128xf32>
    %68 = tpu.matmul %67, %62, %cst_76 {dimension_numbers = #tpu.dot_dimension_numbers<[1], [0], [0], [1], [0, 0, 1, 1], [], []>} : vector<4x8xf32>, vector<8x128xf32>, vector<4x128xf32> -> vector<4x128xf32>
    %c2_77 = arith.constant 2 : index
    %c0_78 = arith.constant 0 : index
    %c0_79 = arith.constant 0 : index
    %69 = vector.load %arg4[%c2_77, %c0_78, %c0_79] : memref<3x4x8xf32, #tpu.memory_space<vmem>>, vector<1x4x8xf32>
    %70 = vector.shape_cast %69 : vector<1x4x8xf32> to vector<4x8xf32>
    %cst_80 = arith.constant dense<0.000000e+00> : vector<4x128xf32>
    %71 = tpu.matmul %70, %62, %cst_80 {dimension_numbers = #tpu.dot_dimension_numbers<[1], [0], [0], [1], [0, 0, 1, 1], [], []>} : vector<4x8xf32>, vector<8x128xf32>, vector<4x128xf32> -> vector<4x128xf32>
    %72 = arith.maximumf %65, %68 : vector<4x128xf32>
    %73 = arith.maximumf %72, %71 : vector<4x128xf32>
    %c0_81 = arith.constant 0 : index
    %c0_82 = arith.constant 0 : index
    %74 = vector.load %arg3[%c0_81, %c0_82] : memref<1x128xf32, #tpu.memory_space<vmem>>, vector<1x128xf32>
    %75 = vector.broadcast %74 : vector<1x128xf32> to vector<4x128xf32>
    %76 = arith.addf %73, %75 : vector<4x128xf32>
    %c0_83 = arith.constant 0 : index
    %c0_84 = arith.constant 0 : index
    %77 = vector.load %arg14[%c0_83, %c0_84] : memref<6x128xf32, #tpu.memory_space<vmem>>, vector<1x128xf32>
    tpu.vector_store %arg14[%c0_83, %c0_84], %0 {strides = array<i32>} : memref<6x128xf32, #tpu.memory_space<vmem>>, vector<1x128xf32>,
    %c5 = arith.constant 5 : index
    %c0_85 = arith.constant 0 : index
    %78 = vector.load %arg14[%c5, %c0_85] : memref<6x128xf32, #tpu.memory_space<vmem>>, vector<1x128xf32>
    tpu.vector_store %arg14[%c5, %c0_85], %0 {strides = array<i32>} : memref<6x128xf32, #tpu.memory_space<vmem>>, vector<1x128xf32>,
    %c1_86 = arith.constant 1 : index
    %c0_87 = arith.constant 0 : index
    %79 = vector.load %arg14[%c1_86, %c0_87] : memref<6x128xf32, #tpu.memory_space<vmem>>, vector<4x128xf32>
    tpu.vector_store %arg14[%c1_86, %c0_87], %76 {strides = array<i32>} : memref<6x128xf32, #tpu.memory_space<vmem>>, vector<4x128xf32>,
    %cst_88 = arith.constant 0.000000e+00 : f32
    %80 = vector.broadcast %cst_88 : f32 to vector<1x128xf32>
    %c0_89 = arith.constant 0 : index
    %c0_90 = arith.constant 0 : index
    %81 = vector.load %arg14[%c0_89, %c0_90] : memref<6x128xf32, #tpu.memory_space<vmem>>, vector<4x128xf32>
    %cst_91 = arith.constant 0.000000e+00 : f32
    %82 = vector.broadcast %cst_91 : f32 to vector<4x128xf32>
    %83 = arith.maximumf %81, %82 : vector<4x128xf32>
    %84 = arith.truncf %83 : vector<4x128xf32> to vector<4x128xbf16>
    %c0_92 = arith.constant 0 : index
    %c0_93 = arith.constant 0 : index
    %c0_94 = arith.constant 0 : index
    %85 = vector.load %arg5[%c0_92, %c0_93, %c0_94] : memref<3x128x128xbf16, #tpu.memory_space<vmem>>, vector<1x128x128xbf16>
    %86 = vector.shape_cast %85 : vector<1x128x128xbf16> to vector<128x128xbf16>
    %cst_95 = arith.constant dense<0.000000e+00> : vector<4x128xf32>
    %87 = tpu.matmul %84, %86, %cst_95 {dimension_numbers = #tpu.dot_dimension_numbers<[1], [0], [0], [1], [0, 0, 1, 1], [], []>} : vector<4x128xbf16>, vector<128x128xbf16>, vector<4x128xf32> -> vector<4x128xf32>
    %c1_96 = arith.constant 1 : index
    %c0_97 = arith.constant 0 : index
    %88 = vector.load %arg14[%c1_96, %c0_97] : memref<6x128xf32, #tpu.memory_space<vmem>>, vector<4x128xf32>
    %cst_98 = arith.constant 0.000000e+00 : f32
    %89 = vector.broadcast %cst_98 : f32 to vector<4x128xf32>
    %90 = arith.maximumf %88, %89 : vector<4x128xf32>
    %91 = arith.truncf %90 : vector<4x128xf32> to vector<4x128xbf16>
    %c1_99 = arith.constant 1 : index
    %c0_100 = arith.constant 0 : index
    %c0_101 = arith.constant 0 : index
    %92 = vector.load %arg5[%c1_99, %c0_100, %c0_101] : memref<3x128x128xbf16, #tpu.memory_space<vmem>>, vector<1x128x128xbf16>
    %93 = vector.shape_cast %92 : vector<1x128x128xbf16> to vector<128x128xbf16>
    %cst_102 = arith.constant dense<0.000000e+00> : vector<4x128xf32>
    %94 = tpu.matmul %91, %93, %cst_102 {dimension_numbers = #tpu.dot_dimension_numbers<[1], [0], [0], [1], [0, 0, 1, 1], [], []>} : vector<4x128xbf16>, vector<128x128xbf16>, vector<4x128xf32> -> vector<4x128xf32>
    %95 = arith.addf %87, %94 : vector<4x128xf32>
    %c2_103 = arith.constant 2 : index
    %c0_104 = arith.constant 0 : index
    %96 = vector.load %arg14[%c2_103, %c0_104] : memref<6x128xf32, #tpu.memory_space<vmem>>, vector<4x128xf32>
    %cst_105 = arith.constant 0.000000e+00 : f32
    %97 = vector.broadcast %cst_105 : f32 to vector<4x128xf32>
    %98 = arith.maximumf %96, %97 : vector<4x128xf32>
    %99 = arith.truncf %98 : vector<4x128xf32> to vector<4x128xbf16>
    %c2_106 = arith.constant 2 : index
    %c0_107 = arith.constant 0 : index
    %c0_108 = arith.constant 0 : index
    %100 = vector.load %arg5[%c2_106, %c0_107, %c0_108] : memref<3x128x128xbf16, #tpu.memory_space<vmem>>, vector<1x128x128xbf16>
    %101 = vector.shape_cast %100 : vector<1x128x128xbf16> to vector<128x128xbf16>
    %cst_109 = arith.constant dense<0.000000e+00> : vector<4x128xf32>
    %102 = tpu.matmul %99, %101, %cst_109 {dimension_numbers = #tpu.dot_dimension_numbers<[1], [0], [0], [1], [0, 0, 1, 1], [], []>} : vector<4x128xbf16>, vector<128x128xbf16>, vector<4x128xf32> -> vector<4x128xf32>
    %103 = arith.addf %95, %102 : vector<4x128xf32>
    %c0_110 = arith.constant 0 : index
    %c0_111 = arith.constant 0 : index
    %104 = vector.load %arg6[%c0_110, %c0_111] : memref<1x128xf32, #tpu.memory_space<vmem>>, vector<1x128xf32>
    %105 = vector.broadcast %104 : vector<1x128xf32> to vector<4x128xf32>
    %106 = arith.addf %103, %105 : vector<4x128xf32>
    %c0_112 = arith.constant 0 : index
    %c0_113 = arith.constant 0 : index
    %107 = vector.load %arg15[%c0_112, %c0_113] : memref<6x128xf32, #tpu.memory_space<vmem>>, vector<1x128xf32>
    tpu.vector_store %arg15[%c0_112, %c0_113], %80 {strides = array<i32>} : memref<6x128xf32, #tpu.memory_space<vmem>>, vector<1x128xf32>,
    %c5_114 = arith.constant 5 : index
    %c0_115 = arith.constant 0 : index
    %108 = vector.load %arg15[%c5_114, %c0_115] : memref<6x128xf32, #tpu.memory_space<vmem>>, vector<1x128xf32>
    tpu.vector_store %arg15[%c5_114, %c0_115], %80 {strides = array<i32>} : memref<6x128xf32, #tpu.memory_space<vmem>>, vector<1x128xf32>,
    %cst_116 = arith.constant 0.000000e+00 : f32
    %109 = vector.broadcast %cst_116 : f32 to vector<4x128xf32>
    %110 = arith.maximumf %106, %109 : vector<4x128xf32>
    %c1_117 = arith.constant 1 : index
    %c0_118 = arith.constant 0 : index
    %111 = vector.load %arg15[%c1_117, %c0_118] : memref<6x128xf32, #tpu.memory_space<vmem>>, vector<4x128xf32>
    tpu.vector_store %arg15[%c1_117, %c0_118], %110 {strides = array<i32>} : memref<6x128xf32, #tpu.memory_space<vmem>>, vector<4x128xf32>,
    %c0_119 = arith.constant 0 : index
    %c0_120 = arith.constant 0 : index
    %112 = vector.load %arg15[%c0_119, %c0_120] : memref<6x128xf32, #tpu.memory_space<vmem>>, vector<4x128xf32>
    %113 = arith.truncf %112 : vector<4x128xf32> to vector<4x128xbf16>
    %c0_121 = arith.constant 0 : index
    %c0_122 = arith.constant 0 : index
    %c0_123 = arith.constant 0 : index
    %114 = vector.load %arg7[%c0_121, %c0_122, %c0_123] : memref<3x128x128xbf16, #tpu.memory_space<vmem>>, vector<1x128x128xbf16>
    %115 = vector.shape_cast %114 : vector<1x128x128xbf16> to vector<128x128xbf16>
    %cst_124 = arith.constant dense<0.000000e+00> : vector<4x128xf32>
    %116 = tpu.matmul %113, %115, %cst_124 {dimension_numbers = #tpu.dot_dimension_numbers<[1], [0], [0], [1], [0, 0, 1, 1], [], []>} : vector<4x128xbf16>, vector<128x128xbf16>, vector<4x128xf32> -> vector<4x128xf32>
    %c1_125 = arith.constant 1 : index
    %c0_126 = arith.constant 0 : index
    %117 = vector.load %arg15[%c1_125, %c0_126] : memref<6x128xf32, #tpu.memory_space<vmem>>, vector<4x128xf32>
    %118 = arith.truncf %117 : vector<4x128xf32> to vector<4x128xbf16>
    %c1_127 = arith.constant 1 : index
    %c0_128 = arith.constant 0 : index
    %c0_129 = arith.constant 0 : index
    %119 = vector.load %arg7[%c1_127, %c0_128, %c0_129] : memref<3x128x128xbf16, #tpu.memory_space<vmem>>, vector<1x128x128xbf16>
    %120 = vector.shape_cast %119 : vector<1x128x128xbf16> to vector<128x128xbf16>
    %cst_130 = arith.constant dense<0.000000e+00> : vector<4x128xf32>
    %121 = tpu.matmul %118, %120, %cst_130 {dimension_numbers = #tpu.dot_dimension_numbers<[1], [0], [0], [1], [0, 0, 1, 1], [], []>} : vector<4x128xbf16>, vector<128x128xbf16>, vector<4x128xf32> -> vector<4x128xf32>
    %122 = arith.addf %116, %121 : vector<4x128xf32>
    %c2_131 = arith.constant 2 : index
    %c0_132 = arith.constant 0 : index
    %123 = vector.load %arg15[%c2_131, %c0_132] : memref<6x128xf32, #tpu.memory_space<vmem>>, vector<4x128xf32>
    %124 = arith.truncf %123 : vector<4x128xf32> to vector<4x128xbf16>
    %c2_133 = arith.constant 2 : index
    %c0_134 = arith.constant 0 : index
    %c0_135 = arith.constant 0 : index
    %125 = vector.load %arg7[%c2_133, %c0_134, %c0_135] : memref<3x128x128xbf16, #tpu.memory_space<vmem>>, vector<1x128x128xbf16>
    %126 = vector.shape_cast %125 : vector<1x128x128xbf16> to vector<128x128xbf16>
    %cst_136 = arith.constant dense<0.000000e+00> : vector<4x128xf32>
    %127 = tpu.matmul %124, %126, %cst_136 {dimension_numbers = #tpu.dot_dimension_numbers<[1], [0], [0], [1], [0, 0, 1, 1], [], []>} : vector<4x128xbf16>, vector<128x128xbf16>, vector<4x128xf32> -> vector<4x128xf32>
    %128 = arith.addf %122, %127 : vector<4x128xf32>
    %c0_137 = arith.constant 0 : index
    %c0_138 = arith.constant 0 : index
    %129 = vector.load %arg8[%c0_137, %c0_138] : memref<1x128xf32, #tpu.memory_space<vmem>>, vector<1x128xf32>
    %130 = vector.broadcast %129 : vector<1x128xf32> to vector<4x128xf32>
    %131 = arith.addf %128, %130 : vector<4x128xf32>
    %c1_139 = arith.constant 1 : index
    %c0_140 = arith.constant 0 : index
    %132 = vector.load %arg14[%c1_139, %c0_140] : memref<6x128xf32, #tpu.memory_space<vmem>>, vector<4x128xf32>
    %133 = arith.addf %131, %132 : vector<4x128xf32>
    %c1_141 = arith.constant 1 : index
    %c0_142 = arith.constant 0 : index
    %134 = vector.load %arg14[%c1_141, %c0_142] : memref<6x128xf32, #tpu.memory_space<vmem>>, vector<4x128xf32>
    tpu.vector_store %arg14[%c1_141, %c0_142], %133 {strides = array<i32>} : memref<6x128xf32, #tpu.memory_space<vmem>>, vector<4x128xf32>,
    %cst_143 = arith.constant 0.000000e+00 : f32
    %135 = vector.broadcast %cst_143 : f32 to vector<1x128xf32>
    %c0_144 = arith.constant 0 : index
    %c0_145 = arith.constant 0 : index
    %136 = vector.load %arg14[%c0_144, %c0_145] : memref<6x128xf32, #tpu.memory_space<vmem>>, vector<4x128xf32>
    %cst_146 = arith.constant 0.000000e+00 : f32
    %137 = vector.broadcast %cst_146 : f32 to vector<4x128xf32>
    %138 = arith.maximumf %136, %137 : vector<4x128xf32>
    %139 = arith.truncf %138 : vector<4x128xf32> to vector<4x128xbf16>
    %c0_147 = arith.constant 0 : index
    %c0_148 = arith.constant 0 : index
    %c0_149 = arith.constant 0 : index
    %140 = vector.load %arg9[%c0_147, %c0_148, %c0_149] : memref<3x128x128xbf16, #tpu.memory_space<vmem>>, vector<1x128x128xbf16>
    %141 = vector.shape_cast %140 : vector<1x128x128xbf16> to vector<128x128xbf16>
    %cst_150 = arith.constant dense<0.000000e+00> : vector<4x128xf32>
    %142 = tpu.matmul %139, %141, %cst_150 {dimension_numbers = #tpu.dot_dimension_numbers<[1], [0], [0], [1], [0, 0, 1, 1], [], []>} : vector<4x128xbf16>, vector<128x128xbf16>, vector<4x128xf32> -> vector<4x128xf32>
    %c1_151 = arith.constant 1 : index
    %c0_152 = arith.constant 0 : index
    %143 = vector.load %arg14[%c1_151, %c0_152] : memref<6x128xf32, #tpu.memory_space<vmem>>, vector<4x128xf32>
    %cst_153 = arith.constant 0.000000e+00 : f32
    %144 = vector.broadcast %cst_153 : f32 to vector<4x128xf32>
    %145 = arith.maximumf %143, %144 : vector<4x128xf32>
    %146 = arith.truncf %145 : vector<4x128xf32> to vector<4x128xbf16>
    %c1_154 = arith.constant 1 : index
    %c0_155 = arith.constant 0 : index
    %c0_156 = arith.constant 0 : index
    %147 = vector.load %arg9[%c1_154, %c0_155, %c0_156] : memref<3x128x128xbf16, #tpu.memory_space<vmem>>, vector<1x128x128xbf16>
    %148 = vector.shape_cast %147 : vector<1x128x128xbf16> to vector<128x128xbf16>
    %cst_157 = arith.constant dense<0.000000e+00> : vector<4x128xf32>
    %149 = tpu.matmul %146, %148, %cst_157 {dimension_numbers = #tpu.dot_dimension_numbers<[1], [0], [0], [1], [0, 0, 1, 1], [], []>} : vector<4x128xbf16>, vector<128x128xbf16>, vector<4x128xf32> -> vector<4x128xf32>
    %150 = arith.addf %142, %149 : vector<4x128xf32>
    %c2_158 = arith.constant 2 : index
    %c0_159 = arith.constant 0 : index
    %151 = vector.load %arg14[%c2_158, %c0_159] : memref<6x128xf32, #tpu.memory_space<vmem>>, vector<4x128xf32>
    %cst_160 = arith.constant 0.000000e+00 : f32
    %152 = vector.broadcast %cst_160 : f32 to vector<4x128xf32>
    %153 = arith.maximumf %151, %152 : vector<4x128xf32>
    %154 = arith.truncf %153 : vector<4x128xf32> to vector<4x128xbf16>
    %c2_161 = arith.constant 2 : index
    %c0_162 = arith.constant 0 : index
    %c0_163 = arith.constant 0 : index
    %155 = vector.load %arg9[%c2_161, %c0_162, %c0_163] : memref<3x128x128xbf16, #tpu.memory_space<vmem>>, vector<1x128x128xbf16>
    %156 = vector.shape_cast %155 : vector<1x128x128xbf16> to vector<128x128xbf16>
    %cst_164 = arith.constant dense<0.000000e+00> : vector<4x128xf32>
    %157 = tpu.matmul %154, %156, %cst_164 {dimension_numbers = #tpu.dot_dimension_numbers<[1], [0], [0], [1], [0, 0, 1, 1], [], []>} : vector<4x128xbf16>, vector<128x128xbf16>, vector<4x128xf32> -> vector<4x128xf32>
    %158 = arith.addf %150, %157 : vector<4x128xf32>
    %c0_165 = arith.constant 0 : index
    %c0_166 = arith.constant 0 : index
    %159 = vector.load %arg10[%c0_165, %c0_166] : memref<1x128xf32, #tpu.memory_space<vmem>>, vector<1x128xf32>
    %160 = vector.broadcast %159 : vector<1x128xf32> to vector<4x128xf32>
    %161 = arith.addf %158, %160 : vector<4x128xf32>
    %c0_167 = arith.constant 0 : index
    %c0_168 = arith.constant 0 : index
    %162 = vector.load %arg15[%c0_167, %c0_168] : memref<6x128xf32, #tpu.memory_space<vmem>>, vector<1x128xf32>
    tpu.vector_store %arg15[%c0_167, %c0_168], %135 {strides = array<i32>} : memref<6x128xf32, #tpu.memory_space<vmem>>, vector<1x128xf32>,
    %c5_169 = arith.constant 5 : index
    %c0_170 = arith.constant 0 : index
    %163 = vector.load %arg15[%c5_169, %c0_170] : memref<6x128xf32, #tpu.memory_space<vmem>>, vector<1x128xf32>
    tpu.vector_store %arg15[%c5_169, %c0_170], %135 {strides = array<i32>} : memref<6x128xf32, #tpu.memory_space<vmem>>, vector<1x128xf32>,
    %cst_171 = arith.constant 0.000000e+00 : f32
    %164 = vector.broadcast %cst_171 : f32 to vector<4x128xf32>
    %165 = arith.maximumf %161, %164 : vector<4x128xf32>
    %c1_172 = arith.constant 1 : index
    %c0_173 = arith.constant 0 : index
    %166 = vector.load %arg15[%c1_172, %c0_173] : memref<6x128xf32, #tpu.memory_space<vmem>>, vector<4x128xf32>
    tpu.vector_store %arg15[%c1_172, %c0_173], %165 {strides = array<i32>} : memref<6x128xf32, #tpu.memory_space<vmem>>, vector<4x128xf32>,
    %c0_174 = arith.constant 0 : index
    %c0_175 = arith.constant 0 : index
    %167 = vector.load %arg15[%c0_174, %c0_175] : memref<6x128xf32, #tpu.memory_space<vmem>>, vector<4x128xf32>
    %168 = arith.truncf %167 : vector<4x128xf32> to vector<4x128xbf16>
    %c0_176 = arith.constant 0 : index
    %c0_177 = arith.constant 0 : index
    %c0_178 = arith.constant 0 : index
    %169 = vector.load %arg11[%c0_176, %c0_177, %c0_178] : memref<3x128x128xbf16, #tpu.memory_space<vmem>>, vector<1x128x128xbf16>
    %170 = vector.shape_cast %169 : vector<1x128x128xbf16> to vector<128x128xbf16>
    %cst_179 = arith.constant dense<0.000000e+00> : vector<4x128xf32>
    %171 = tpu.matmul %168, %170, %cst_179 {dimension_numbers = #tpu.dot_dimension_numbers<[1], [0], [0], [1], [0, 0, 1, 1], [], []>} : vector<4x128xbf16>, vector<128x128xbf16>, vector<4x128xf32> -> vector<4x128xf32>
    %c1_180 = arith.constant 1 : index
    %c0_181 = arith.constant 0 : index
    %172 = vector.load %arg15[%c1_180, %c0_181] : memref<6x128xf32, #tpu.memory_space<vmem>>, vector<4x128xf32>
    %173 = arith.truncf %172 : vector<4x128xf32> to vector<4x128xbf16>
    %c1_182 = arith.constant 1 : index
    %c0_183 = arith.constant 0 : index
    %c0_184 = arith.constant 0 : index
    %174 = vector.load %arg11[%c1_182, %c0_183, %c0_184] : memref<3x128x128xbf16, #tpu.memory_space<vmem>>, vector<1x128x128xbf16>
    %175 = vector.shape_cast %174 : vector<1x128x128xbf16> to vector<128x128xbf16>
    %cst_185 = arith.constant dense<0.000000e+00> : vector<4x128xf32>
    %176 = tpu.matmul %173, %175, %cst_185 {dimension_numbers = #tpu.dot_dimension_numbers<[1], [0], [0], [1], [0, 0, 1, 1], [], []>} : vector<4x128xbf16>, vector<128x128xbf16>, vector<4x128xf32> -> vector<4x128xf32>
    %177 = arith.addf %171, %176 : vector<4x128xf32>
    %c2_186 = arith.constant 2 : index
    %c0_187 = arith.constant 0 : index
    %178 = vector.load %arg15[%c2_186, %c0_187] : memref<6x128xf32, #tpu.memory_space<vmem>>, vector<4x128xf32>
    %179 = arith.truncf %178 : vector<4x128xf32> to vector<4x128xbf16>
    %c2_188 = arith.constant 2 : index
    %c0_189 = arith.constant 0 : index
    %c0_190 = arith.constant 0 : index
    %180 = vector.load %arg11[%c2_188, %c0_189, %c0_190] : memref<3x128x128xbf16, #tpu.memory_space<vmem>>, vector<1x128x128xbf16>
    %181 = vector.shape_cast %180 : vector<1x128x128xbf16> to vector<128x128xbf16>
    %cst_191 = arith.constant dense<0.000000e+00> : vector<4x128xf32>
    %182 = tpu.matmul %179, %181, %cst_191 {dimension_numbers = #tpu.dot_dimension_numbers<[1], [0], [0], [1], [0, 0, 1, 1], [], []>} : vector<4x128xbf16>, vector<128x128xbf16>, vector<4x128xf32> -> vector<4x128xf32>
    %183 = arith.addf %177, %182 : vector<4x128xf32>
    %c0_192 = arith.constant 0 : index
    %c0_193 = arith.constant 0 : index
    %184 = vector.load %arg12[%c0_192, %c0_193] : memref<1x128xf32, #tpu.memory_space<vmem>>, vector<1x128xf32>
    %185 = vector.broadcast %184 : vector<1x128xf32> to vector<4x128xf32>
    %186 = arith.addf %183, %185 : vector<4x128xf32>
    %c1_194 = arith.constant 1 : index
    %c0_195 = arith.constant 0 : index
    %187 = vector.load %arg14[%c1_194, %c0_195] : memref<6x128xf32, #tpu.memory_space<vmem>>, vector<4x128xf32>
    %188 = arith.addf %186, %187 : vector<4x128xf32>
    %c0_196 = arith.constant 0 : index
    %c0_197 = arith.constant 0 : index
    %c0_198 = arith.constant 0 : index
    %189 = vector.load %arg13[%c0_196, %c0_197, %c0_198] : memref<1x6x128xf32, #tpu.memory_space<vmem>>, vector<1x1x128xf32>
    %190 = vector.shape_cast %189 : vector<1x1x128xf32> to vector<1x128xf32>
    %191 = vector.shape_cast %0 : vector<1x128xf32> to vector<1x1x128xf32>
    tpu.vector_store %arg13[%c0_196, %c0_197, %c0_198], %191 {strides = array<i32>} : memref<1x6x128xf32, #tpu.memory_space<vmem>>, vector<1x1x128xf32>,
    %c0_199 = arith.constant 0 : index
    %c5_200 = arith.constant 5 : index
    %c0_201 = arith.constant 0 : index
    %192 = vector.load %arg13[%c0_199, %c5_200, %c0_201] : memref<1x6x128xf32, #tpu.memory_space<vmem>>, vector<1x1x128xf32>
    %193 = vector.shape_cast %192 : vector<1x1x128xf32> to vector<1x128xf32>
    %194 = vector.shape_cast %0 : vector<1x128xf32> to vector<1x1x128xf32>
    tpu.vector_store %arg13[%c0_199, %c5_200, %c0_201], %194 {strides = array<i32>} : memref<1x6x128xf32, #tpu.memory_space<vmem>>, vector<1x1x128xf32>,
    %c0_202 = arith.constant 0 : index
    %c1_203 = arith.constant 1 : index
    %c0_204 = arith.constant 0 : index
    %195 = vector.load %arg13[%c0_202, %c1_203, %c0_204] : memref<1x6x128xf32, #tpu.memory_space<vmem>>, vector<1x4x128xf32>
    %196 = vector.shape_cast %195 : vector<1x4x128xf32> to vector<4x128xf32>
    %197 = vector.shape_cast %188 : vector<4x128xf32> to vector<1x4x128xf32>
    tpu.vector_store %arg13[%c0_202, %c1_203, %c0_204], %197 {strides = array<i32>} : memref<1x6x128xf32, #tpu.memory_space<vmem>>, vector<1x4x128xf32>,
    return
  }
  func.func @transform_0(%arg0: i32) -> (i32, i32, i32) {
    %c0_i32 = arith.constant 0 : i32
    %c0_i32_0 = arith.constant 0 : i32
    %c0_i32_1 = arith.constant 0 : i32
    return %arg0, %c0_i32, %c0_i32_0 : i32, i32, i32
  }
  func.func @transform_1(%arg0: i32) -> (i32, i32, i32, i32) {
    %c0_i32 = arith.constant 0 : i32
    %c0_i32_0 = arith.constant 0 : i32
    %c0_i32_1 = arith.constant 0 : i32
    %c0_i32_2 = arith.constant 0 : i32
    %c0_i32_3 = arith.constant 0 : i32
    return %c0_i32, %c0_i32_0, %c0_i32_1, %c0_i32_2 : i32, i32, i32, i32
  }
  func.func @transform_2(%arg0: i32) -> (i32, i32) {
    %c0_i32 = arith.constant 0 : i32
    %c0_i32_0 = arith.constant 0 : i32
    %c0_i32_1 = arith.constant 0 : i32
    return %c0_i32, %c0_i32_0 : i32, i32
  }
  func.func @transform_3(%arg0: i32) -> (i32, i32, i32) {
    %c0_i32 = arith.constant 0 : i32
    %c0_i32_0 = arith.constant 0 : i32
    %c0_i32_1 = arith.constant 0 : i32
    %c0_i32_2 = arith.constant 0 : i32
    return %c0_i32, %c0_i32_0, %c0_i32_1 : i32, i32, i32
  }
  func.func @transform_4(%arg0: i32) -> (i32, i32, i32) {
    %c0_i32 = arith.constant 0 : i32
    %c0_i32_0 = arith.constant 0 : i32
    %c0_i32_1 = arith.constant 0 : i32
    %c0_i32_2 = arith.constant 0 : i32
    return %c0_i32, %c0_i32_0, %c0_i32_1 : i32, i32, i32
  }
  func.func @transform_5(%arg0: i32) -> (i32, i32) {
    %c0_i32 = arith.constant 0 : i32
    %c0_i32_0 = arith.constant 0 : i32
    %c0_i32_1 = arith.constant 0 : i32
    return %c0_i32, %c0_i32_0 : i32, i32
  }
  func.func @transform_6(%arg0: i32) -> (i32, i32, i32) {
    %c0_i32 = arith.constant 0 : i32
    %c0_i32_0 = arith.constant 0 : i32
    %c0_i32_1 = arith.constant 0 : i32
    %c0_i32_2 = arith.constant 0 : i32
    return %c0_i32, %c0_i32_0, %c0_i32_1 : i32, i32, i32
  }
  func.func @transform_7(%arg0: i32) -> (i32, i32) {
    %c0_i32 = arith.constant 0 : i32
    %c0_i32_0 = arith.constant 0 : i32
    %c0_i32_1 = arith.constant 0 : i32
    return %c0_i32, %c0_i32_0 : i32, i32
  }
  func.func @transform_8(%arg0: i32) -> (i32, i32, i32) {
    %c0_i32 = arith.constant 0 : i32
    %c0_i32_0 = arith.constant 0 : i32
    %c0_i32_1 = arith.constant 0 : i32
    %c0_i32_2 = arith.constant 0 : i32
    return %c0_i32, %c0_i32_0, %c0_i32_1 : i32, i32, i32
  }
  func.func @transform_9(%arg0: i32) -> (i32, i32) {
    %c0_i32 = arith.constant 0 : i32
    %c0_i32_0 = arith.constant 0 : i32
    %c0_i32_1 = arith.constant 0 : i32
    return %c0_i32, %c0_i32_0 : i32, i32
  }
  func.func @transform_10(%arg0: i32) -> (i32, i32, i32) {
    %c0_i32 = arith.constant 0 : i32
    %c0_i32_0 = arith.constant 0 : i32
    %c0_i32_1 = arith.constant 0 : i32
    %c0_i32_2 = arith.constant 0 : i32
    return %c0_i32, %c0_i32_0, %c0_i32_1 : i32, i32, i32
  }
  func.func @transform_11(%arg0: i32) -> (i32, i32) {
    %c0_i32 = arith.constant 0 : i32
    %c0_i32_0 = arith.constant 0 : i32
    %c0_i32_1 = arith.constant 0 : i32
    return %c0_i32, %c0_i32_0 : i32, i32
  }
  func.func @transform_12(%arg0: i32) -> (i32, i32, i32) {
    %c0_i32 = arith.constant 0 : i32
    %c0_i32_0 = arith.constant 0 : i32
    %c0_i32_1 = arith.constant 0 : i32
    return %arg0, %c0_i32, %c0_i32_0 : i32, i32, i32
  }
}

module attributes {stable_mosaic.version = 11 : i64} {
  func.func @_block_kernel(%arg0: i32, %arg1: memref<1x6x128xf32, #tpu.memory_space<vmem>>, %arg2: memref<3x3x128x64xbf16, #tpu.memory_space<vmem>>, %arg3: memref<1x64xf32, #tpu.memory_space<vmem>>, %arg4: memref<3x2x4xf32, #tpu.memory_space<vmem>>, %arg5: memref<3x64x64xbf16, #tpu.memory_space<vmem>>, %arg6: memref<1x64xf32, #tpu.memory_space<vmem>>, %arg7: memref<3x64x64xbf16, #tpu.memory_space<vmem>>, %arg8: memref<1x64xf32, #tpu.memory_space<vmem>>, %arg9: memref<3x64x64xbf16, #tpu.memory_space<vmem>>, %arg10: memref<1x64xf32, #tpu.memory_space<vmem>>, %arg11: memref<3x64x64xbf16, #tpu.memory_space<vmem>>, %arg12: memref<1x64xf32, #tpu.memory_space<vmem>>, %arg13: memref<1x4x64xf32, #tpu.memory_space<vmem>>, %arg14: memref<4x64xf32, #tpu.memory_space<vmem>>, %arg15: memref<4x64xf32, #tpu.memory_space<vmem>>) attributes {dimension_semantics = [#tpu.dimension_semantics<parallel>], iteration_bounds = array<i64: 2>, scalar_prefetch = 0 : i64, scratch_operands = 2 : i64, tpu.core_type = #tpu.core_type<tc>, window_params = [{transform_indices = @transform_0, window_bounds = array<i64: 1, 6, 128>}, {pipeline_mode = #tpu.pipeline_mode<synchronous>, transform_indices = @transform_1, window_bounds = array<i64: 3, 3, 128, 64>}, {pipeline_mode = #tpu.pipeline_mode<synchronous>, transform_indices = @transform_2, window_bounds = array<i64: 1, 64>}, {pipeline_mode = #tpu.pipeline_mode<synchronous>, transform_indices = @transform_3, window_bounds = array<i64: 3, 2, 4>}, {pipeline_mode = #tpu.pipeline_mode<synchronous>, transform_indices = @transform_4, window_bounds = array<i64: 3, 64, 64>}, {pipeline_mode = #tpu.pipeline_mode<synchronous>, transform_indices = @transform_5, window_bounds = array<i64: 1, 64>}, {pipeline_mode = #tpu.pipeline_mode<synchronous>, transform_indices = @transform_6, window_bounds = array<i64: 3, 64, 64>}, {pipeline_mode = #tpu.pipeline_mode<synchronous>, transform_indices = @transform_7, window_bounds = array<i64: 1, 64>}, {pipeline_mode = #tpu.pipeline_mode<synchronous>, transform_indices = @transform_8, window_bounds = array<i64: 3, 64, 64>}, {pipeline_mode = #tpu.pipeline_mode<synchronous>, transform_indices = @transform_9, window_bounds = array<i64: 1, 64>}, {pipeline_mode = #tpu.pipeline_mode<synchronous>, transform_indices = @transform_10, window_bounds = array<i64: 3, 64, 64>}, {pipeline_mode = #tpu.pipeline_mode<synchronous>, transform_indices = @transform_11, window_bounds = array<i64: 1, 64>}, {transform_indices = @transform_12, window_bounds = array<i64: 1, 4, 64>}]} {
    %cst = arith.constant 0.000000e+00 : f32
    %0 = vector.broadcast %cst : f32 to vector<1x64xf32>
    %c0 = arith.constant 0 : index
    %c0_0 = arith.constant 0 : index
    %c0_1 = arith.constant 0 : index
    %1 = vector.load %arg1[%c0, %c0_0, %c0_1] : memref<1x6x128xf32, #tpu.memory_space<vmem>>, vector<1x4x128xf32>
    %2 = vector.shape_cast %1 : vector<1x4x128xf32> to vector<4x128xf32>
    %3 = arith.truncf %2 : vector<4x128xf32> to vector<4x128xbf16>
    %c0_2 = arith.constant 0 : index
    %c0_3 = arith.constant 0 : index
    %c0_4 = arith.constant 0 : index
    %c0_5 = arith.constant 0 : index
    %4 = vector.load %arg2[%c0_2, %c0_3, %c0_4, %c0_5] : memref<3x3x128x64xbf16, #tpu.memory_space<vmem>>, vector<1x1x128x64xbf16>
    %5 = vector.shape_cast %4 : vector<1x1x128x64xbf16> to vector<128x64xbf16>
    %cst_6 = arith.constant dense<0.000000e+00> : vector<4x64xf32>
    %6 = tpu.matmul %3, %5, %cst_6 {dimension_numbers = #tpu.dot_dimension_numbers<[1], [0], [0], [1], [0, 0, 1, 1], [], []>} : vector<4x128xbf16>, vector<128x64xbf16>, vector<4x64xf32> -> vector<4x64xf32>
    %c0_7 = arith.constant 0 : index
    %c1 = arith.constant 1 : index
    %c0_8 = arith.constant 0 : index
    %7 = vector.load %arg1[%c0_7, %c1, %c0_8] : memref<1x6x128xf32, #tpu.memory_space<vmem>>, vector<1x4x128xf32>
    %8 = vector.shape_cast %7 : vector<1x4x128xf32> to vector<4x128xf32>
    %9 = arith.truncf %8 : vector<4x128xf32> to vector<4x128xbf16>
    %c0_9 = arith.constant 0 : index
    %c1_10 = arith.constant 1 : index
    %c0_11 = arith.constant 0 : index
    %c0_12 = arith.constant 0 : index
    %10 = vector.load %arg2[%c0_9, %c1_10, %c0_11, %c0_12] : memref<3x3x128x64xbf16, #tpu.memory_space<vmem>>, vector<1x1x128x64xbf16>
    %11 = vector.shape_cast %10 : vector<1x1x128x64xbf16> to vector<128x64xbf16>
    %cst_13 = arith.constant dense<0.000000e+00> : vector<4x64xf32>
    %12 = tpu.matmul %9, %11, %cst_13 {dimension_numbers = #tpu.dot_dimension_numbers<[1], [0], [0], [1], [0, 0, 1, 1], [], []>} : vector<4x128xbf16>, vector<128x64xbf16>, vector<4x64xf32> -> vector<4x64xf32>
    %13 = arith.addf %6, %12 : vector<4x64xf32>
    %c0_14 = arith.constant 0 : index
    %c2 = arith.constant 2 : index
    %c0_15 = arith.constant 0 : index
    %14 = vector.load %arg1[%c0_14, %c2, %c0_15] : memref<1x6x128xf32, #tpu.memory_space<vmem>>, vector<1x4x128xf32>
    %15 = vector.shape_cast %14 : vector<1x4x128xf32> to vector<4x128xf32>
    %16 = arith.truncf %15 : vector<4x128xf32> to vector<4x128xbf16>
    %c0_16 = arith.constant 0 : index
    %c2_17 = arith.constant 2 : index
    %c0_18 = arith.constant 0 : index
    %c0_19 = arith.constant 0 : index
    %17 = vector.load %arg2[%c0_16, %c2_17, %c0_18, %c0_19] : memref<3x3x128x64xbf16, #tpu.memory_space<vmem>>, vector<1x1x128x64xbf16>
    %18 = vector.shape_cast %17 : vector<1x1x128x64xbf16> to vector<128x64xbf16>
    %cst_20 = arith.constant dense<0.000000e+00> : vector<4x64xf32>
    %19 = tpu.matmul %16, %18, %cst_20 {dimension_numbers = #tpu.dot_dimension_numbers<[1], [0], [0], [1], [0, 0, 1, 1], [], []>} : vector<4x128xbf16>, vector<128x64xbf16>, vector<4x64xf32> -> vector<4x64xf32>
    %20 = arith.addf %13, %19 : vector<4x64xf32>
    %c0_21 = arith.constant 0 : index
    %c0_22 = arith.constant 0 : index
    %c0_23 = arith.constant 0 : index
    %21 = vector.load %arg1[%c0_21, %c0_22, %c0_23] : memref<1x6x128xf32, #tpu.memory_space<vmem>>, vector<1x4x128xf32>
    %22 = vector.shape_cast %21 : vector<1x4x128xf32> to vector<4x128xf32>
    %23 = arith.truncf %22 : vector<4x128xf32> to vector<4x128xbf16>
    %c1_24 = arith.constant 1 : index
    %c0_25 = arith.constant 0 : index
    %c0_26 = arith.constant 0 : index
    %c0_27 = arith.constant 0 : index
    %24 = vector.load %arg2[%c1_24, %c0_25, %c0_26, %c0_27] : memref<3x3x128x64xbf16, #tpu.memory_space<vmem>>, vector<1x1x128x64xbf16>
    %25 = vector.shape_cast %24 : vector<1x1x128x64xbf16> to vector<128x64xbf16>
    %cst_28 = arith.constant dense<0.000000e+00> : vector<4x64xf32>
    %26 = tpu.matmul %23, %25, %cst_28 {dimension_numbers = #tpu.dot_dimension_numbers<[1], [0], [0], [1], [0, 0, 1, 1], [], []>} : vector<4x128xbf16>, vector<128x64xbf16>, vector<4x64xf32> -> vector<4x64xf32>
    %c0_29 = arith.constant 0 : index
    %c1_30 = arith.constant 1 : index
    %c0_31 = arith.constant 0 : index
    %27 = vector.load %arg1[%c0_29, %c1_30, %c0_31] : memref<1x6x128xf32, #tpu.memory_space<vmem>>, vector<1x4x128xf32>
    %28 = vector.shape_cast %27 : vector<1x4x128xf32> to vector<4x128xf32>
    %29 = arith.truncf %28 : vector<4x128xf32> to vector<4x128xbf16>
    %c1_32 = arith.constant 1 : index
    %c1_33 = arith.constant 1 : index
    %c0_34 = arith.constant 0 : index
    %c0_35 = arith.constant 0 : index
    %30 = vector.load %arg2[%c1_32, %c1_33, %c0_34, %c0_35] : memref<3x3x128x64xbf16, #tpu.memory_space<vmem>>, vector<1x1x128x64xbf16>
    %31 = vector.shape_cast %30 : vector<1x1x128x64xbf16> to vector<128x64xbf16>
    %cst_36 = arith.constant dense<0.000000e+00> : vector<4x64xf32>
    %32 = tpu.matmul %29, %31, %cst_36 {dimension_numbers = #tpu.dot_dimension_numbers<[1], [0], [0], [1], [0, 0, 1, 1], [], []>} : vector<4x128xbf16>, vector<128x64xbf16>, vector<4x64xf32> -> vector<4x64xf32>
    %33 = arith.addf %26, %32 : vector<4x64xf32>
    %c0_37 = arith.constant 0 : index
    %c2_38 = arith.constant 2 : index
    %c0_39 = arith.constant 0 : index
    %34 = vector.load %arg1[%c0_37, %c2_38, %c0_39] : memref<1x6x128xf32, #tpu.memory_space<vmem>>, vector<1x4x128xf32>
    %35 = vector.shape_cast %34 : vector<1x4x128xf32> to vector<4x128xf32>
    %36 = arith.truncf %35 : vector<4x128xf32> to vector<4x128xbf16>
    %c1_40 = arith.constant 1 : index
    %c2_41 = arith.constant 2 : index
    %c0_42 = arith.constant 0 : index
    %c0_43 = arith.constant 0 : index
    %37 = vector.load %arg2[%c1_40, %c2_41, %c0_42, %c0_43] : memref<3x3x128x64xbf16, #tpu.memory_space<vmem>>, vector<1x1x128x64xbf16>
    %38 = vector.shape_cast %37 : vector<1x1x128x64xbf16> to vector<128x64xbf16>
    %cst_44 = arith.constant dense<0.000000e+00> : vector<4x64xf32>
    %39 = tpu.matmul %36, %38, %cst_44 {dimension_numbers = #tpu.dot_dimension_numbers<[1], [0], [0], [1], [0, 0, 1, 1], [], []>} : vector<4x128xbf16>, vector<128x64xbf16>, vector<4x64xf32> -> vector<4x64xf32>
    %40 = arith.addf %33, %39 : vector<4x64xf32>
    %c0_45 = arith.constant 0 : index
    %c0_46 = arith.constant 0 : index
    %c0_47 = arith.constant 0 : index
    %41 = vector.load %arg1[%c0_45, %c0_46, %c0_47] : memref<1x6x128xf32, #tpu.memory_space<vmem>>, vector<1x4x128xf32>
    %42 = vector.shape_cast %41 : vector<1x4x128xf32> to vector<4x128xf32>
    %43 = arith.truncf %42 : vector<4x128xf32> to vector<4x128xbf16>
    %c2_48 = arith.constant 2 : index
    %c0_49 = arith.constant 0 : index
    %c0_50 = arith.constant 0 : index
    %c0_51 = arith.constant 0 : index
    %44 = vector.load %arg2[%c2_48, %c0_49, %c0_50, %c0_51] : memref<3x3x128x64xbf16, #tpu.memory_space<vmem>>, vector<1x1x128x64xbf16>
    %45 = vector.shape_cast %44 : vector<1x1x128x64xbf16> to vector<128x64xbf16>
    %cst_52 = arith.constant dense<0.000000e+00> : vector<4x64xf32>
    %46 = tpu.matmul %43, %45, %cst_52 {dimension_numbers = #tpu.dot_dimension_numbers<[1], [0], [0], [1], [0, 0, 1, 1], [], []>} : vector<4x128xbf16>, vector<128x64xbf16>, vector<4x64xf32> -> vector<4x64xf32>
    %c0_53 = arith.constant 0 : index
    %c1_54 = arith.constant 1 : index
    %c0_55 = arith.constant 0 : index
    %47 = vector.load %arg1[%c0_53, %c1_54, %c0_55] : memref<1x6x128xf32, #tpu.memory_space<vmem>>, vector<1x4x128xf32>
    %48 = vector.shape_cast %47 : vector<1x4x128xf32> to vector<4x128xf32>
    %49 = arith.truncf %48 : vector<4x128xf32> to vector<4x128xbf16>
    %c2_56 = arith.constant 2 : index
    %c1_57 = arith.constant 1 : index
    %c0_58 = arith.constant 0 : index
    %c0_59 = arith.constant 0 : index
    %50 = vector.load %arg2[%c2_56, %c1_57, %c0_58, %c0_59] : memref<3x3x128x64xbf16, #tpu.memory_space<vmem>>, vector<1x1x128x64xbf16>
    %51 = vector.shape_cast %50 : vector<1x1x128x64xbf16> to vector<128x64xbf16>
    %cst_60 = arith.constant dense<0.000000e+00> : vector<4x64xf32>
    %52 = tpu.matmul %49, %51, %cst_60 {dimension_numbers = #tpu.dot_dimension_numbers<[1], [0], [0], [1], [0, 0, 1, 1], [], []>} : vector<4x128xbf16>, vector<128x64xbf16>, vector<4x64xf32> -> vector<4x64xf32>
    %53 = arith.addf %46, %52 : vector<4x64xf32>
    %c0_61 = arith.constant 0 : index
    %c2_62 = arith.constant 2 : index
    %c0_63 = arith.constant 0 : index
    %54 = vector.load %arg1[%c0_61, %c2_62, %c0_63] : memref<1x6x128xf32, #tpu.memory_space<vmem>>, vector<1x4x128xf32>
    %55 = vector.shape_cast %54 : vector<1x4x128xf32> to vector<4x128xf32>
    %56 = arith.truncf %55 : vector<4x128xf32> to vector<4x128xbf16>
    %c2_64 = arith.constant 2 : index
    %c2_65 = arith.constant 2 : index
    %c0_66 = arith.constant 0 : index
    %c0_67 = arith.constant 0 : index
    %57 = vector.load %arg2[%c2_64, %c2_65, %c0_66, %c0_67] : memref<3x3x128x64xbf16, #tpu.memory_space<vmem>>, vector<1x1x128x64xbf16>
    %58 = vector.shape_cast %57 : vector<1x1x128x64xbf16> to vector<128x64xbf16>
    %cst_68 = arith.constant dense<0.000000e+00> : vector<4x64xf32>
    %59 = tpu.matmul %56, %58, %cst_68 {dimension_numbers = #tpu.dot_dimension_numbers<[1], [0], [0], [1], [0, 0, 1, 1], [], []>} : vector<4x128xbf16>, vector<128x64xbf16>, vector<4x64xf32> -> vector<4x64xf32>
    %60 = arith.addf %53, %59 : vector<4x64xf32>
    %61 = arith.maximumf %20, %40 : vector<4x64xf32>
    %62 = arith.maximumf %61, %60 : vector<4x64xf32>
    %c0_69 = arith.constant 0 : index
    %c0_70 = arith.constant 0 : index
    %c0_71 = arith.constant 0 : index
    %63 = vector.load %arg4[%c0_69, %c0_70, %c0_71] : memref<3x2x4xf32, #tpu.memory_space<vmem>>, vector<1x2x4xf32>
    %64 = vector.shape_cast %63 : vector<1x2x4xf32> to vector<2x4xf32>
    %cst_72 = arith.constant dense<0.000000e+00> : vector<2x64xf32>
    %65 = tpu.matmul %64, %62, %cst_72 {dimension_numbers = #tpu.dot_dimension_numbers<[1], [0], [0], [1], [0, 0, 1, 1], [], []>} : vector<2x4xf32>, vector<4x64xf32>, vector<2x64xf32> -> vector<2x64xf32>
    %c1_73 = arith.constant 1 : index
    %c0_74 = arith.constant 0 : index
    %c0_75 = arith.constant 0 : index
    %66 = vector.load %arg4[%c1_73, %c0_74, %c0_75] : memref<3x2x4xf32, #tpu.memory_space<vmem>>, vector<1x2x4xf32>
    %67 = vector.shape_cast %66 : vector<1x2x4xf32> to vector<2x4xf32>
    %cst_76 = arith.constant dense<0.000000e+00> : vector<2x64xf32>
    %68 = tpu.matmul %67, %62, %cst_76 {dimension_numbers = #tpu.dot_dimension_numbers<[1], [0], [0], [1], [0, 0, 1, 1], [], []>} : vector<2x4xf32>, vector<4x64xf32>, vector<2x64xf32> -> vector<2x64xf32>
    %c2_77 = arith.constant 2 : index
    %c0_78 = arith.constant 0 : index
    %c0_79 = arith.constant 0 : index
    %69 = vector.load %arg4[%c2_77, %c0_78, %c0_79] : memref<3x2x4xf32, #tpu.memory_space<vmem>>, vector<1x2x4xf32>
    %70 = vector.shape_cast %69 : vector<1x2x4xf32> to vector<2x4xf32>
    %cst_80 = arith.constant dense<0.000000e+00> : vector<2x64xf32>
    %71 = tpu.matmul %70, %62, %cst_80 {dimension_numbers = #tpu.dot_dimension_numbers<[1], [0], [0], [1], [0, 0, 1, 1], [], []>} : vector<2x4xf32>, vector<4x64xf32>, vector<2x64xf32> -> vector<2x64xf32>
    %72 = arith.maximumf %65, %68 : vector<2x64xf32>
    %73 = arith.maximumf %72, %71 : vector<2x64xf32>
    %c0_81 = arith.constant 0 : index
    %c0_82 = arith.constant 0 : index
    %74 = vector.load %arg3[%c0_81, %c0_82] : memref<1x64xf32, #tpu.memory_space<vmem>>, vector<1x64xf32>
    %75 = vector.broadcast %74 : vector<1x64xf32> to vector<2x64xf32>
    %76 = arith.addf %73, %75 : vector<2x64xf32>
    %c0_83 = arith.constant 0 : index
    %c0_84 = arith.constant 0 : index
    %77 = vector.load %arg14[%c0_83, %c0_84] : memref<4x64xf32, #tpu.memory_space<vmem>>, vector<1x64xf32>
    tpu.vector_store %arg14[%c0_83, %c0_84], %0 {strides = array<i32>} : memref<4x64xf32, #tpu.memory_space<vmem>>, vector<1x64xf32>,
    %c3 = arith.constant 3 : index
    %c0_85 = arith.constant 0 : index
    %78 = vector.load %arg14[%c3, %c0_85] : memref<4x64xf32, #tpu.memory_space<vmem>>, vector<1x64xf32>
    tpu.vector_store %arg14[%c3, %c0_85], %0 {strides = array<i32>} : memref<4x64xf32, #tpu.memory_space<vmem>>, vector<1x64xf32>,
    %c1_86 = arith.constant 1 : index
    %c0_87 = arith.constant 0 : index
    %79 = vector.load %arg14[%c1_86, %c0_87] : memref<4x64xf32, #tpu.memory_space<vmem>>, vector<2x64xf32>
    tpu.vector_store %arg14[%c1_86, %c0_87], %76 {strides = array<i32>} : memref<4x64xf32, #tpu.memory_space<vmem>>, vector<2x64xf32>,
    %cst_88 = arith.constant 0.000000e+00 : f32
    %80 = vector.broadcast %cst_88 : f32 to vector<1x64xf32>
    %c0_89 = arith.constant 0 : index
    %c0_90 = arith.constant 0 : index
    %81 = vector.load %arg14[%c0_89, %c0_90] : memref<4x64xf32, #tpu.memory_space<vmem>>, vector<2x64xf32>
    %cst_91 = arith.constant 0.000000e+00 : f32
    %82 = vector.broadcast %cst_91 : f32 to vector<2x64xf32>
    %83 = arith.maximumf %81, %82 : vector<2x64xf32>
    %84 = arith.truncf %83 : vector<2x64xf32> to vector<2x64xbf16>
    %c0_92 = arith.constant 0 : index
    %c0_93 = arith.constant 0 : index
    %c0_94 = arith.constant 0 : index
    %85 = vector.load %arg5[%c0_92, %c0_93, %c0_94] : memref<3x64x64xbf16, #tpu.memory_space<vmem>>, vector<1x64x64xbf16>
    %86 = vector.shape_cast %85 : vector<1x64x64xbf16> to vector<64x64xbf16>
    %cst_95 = arith.constant dense<0.000000e+00> : vector<2x64xf32>
    %87 = tpu.matmul %84, %86, %cst_95 {dimension_numbers = #tpu.dot_dimension_numbers<[1], [0], [0], [1], [0, 0, 1, 1], [], []>} : vector<2x64xbf16>, vector<64x64xbf16>, vector<2x64xf32> -> vector<2x64xf32>
    %c1_96 = arith.constant 1 : index
    %c0_97 = arith.constant 0 : index
    %88 = vector.load %arg14[%c1_96, %c0_97] : memref<4x64xf32, #tpu.memory_space<vmem>>, vector<2x64xf32>
    %cst_98 = arith.constant 0.000000e+00 : f32
    %89 = vector.broadcast %cst_98 : f32 to vector<2x64xf32>
    %90 = arith.maximumf %88, %89 : vector<2x64xf32>
    %91 = arith.truncf %90 : vector<2x64xf32> to vector<2x64xbf16>
    %c1_99 = arith.constant 1 : index
    %c0_100 = arith.constant 0 : index
    %c0_101 = arith.constant 0 : index
    %92 = vector.load %arg5[%c1_99, %c0_100, %c0_101] : memref<3x64x64xbf16, #tpu.memory_space<vmem>>, vector<1x64x64xbf16>
    %93 = vector.shape_cast %92 : vector<1x64x64xbf16> to vector<64x64xbf16>
    %cst_102 = arith.constant dense<0.000000e+00> : vector<2x64xf32>
    %94 = tpu.matmul %91, %93, %cst_102 {dimension_numbers = #tpu.dot_dimension_numbers<[1], [0], [0], [1], [0, 0, 1, 1], [], []>} : vector<2x64xbf16>, vector<64x64xbf16>, vector<2x64xf32> -> vector<2x64xf32>
    %95 = arith.addf %87, %94 : vector<2x64xf32>
    %c2_103 = arith.constant 2 : index
    %c0_104 = arith.constant 0 : index
    %96 = vector.load %arg14[%c2_103, %c0_104] : memref<4x64xf32, #tpu.memory_space<vmem>>, vector<2x64xf32>
    %cst_105 = arith.constant 0.000000e+00 : f32
    %97 = vector.broadcast %cst_105 : f32 to vector<2x64xf32>
    %98 = arith.maximumf %96, %97 : vector<2x64xf32>
    %99 = arith.truncf %98 : vector<2x64xf32> to vector<2x64xbf16>
    %c2_106 = arith.constant 2 : index
    %c0_107 = arith.constant 0 : index
    %c0_108 = arith.constant 0 : index
    %100 = vector.load %arg5[%c2_106, %c0_107, %c0_108] : memref<3x64x64xbf16, #tpu.memory_space<vmem>>, vector<1x64x64xbf16>
    %101 = vector.shape_cast %100 : vector<1x64x64xbf16> to vector<64x64xbf16>
    %cst_109 = arith.constant dense<0.000000e+00> : vector<2x64xf32>
    %102 = tpu.matmul %99, %101, %cst_109 {dimension_numbers = #tpu.dot_dimension_numbers<[1], [0], [0], [1], [0, 0, 1, 1], [], []>} : vector<2x64xbf16>, vector<64x64xbf16>, vector<2x64xf32> -> vector<2x64xf32>
    %103 = arith.addf %95, %102 : vector<2x64xf32>
    %c0_110 = arith.constant 0 : index
    %c0_111 = arith.constant 0 : index
    %104 = vector.load %arg6[%c0_110, %c0_111] : memref<1x64xf32, #tpu.memory_space<vmem>>, vector<1x64xf32>
    %105 = vector.broadcast %104 : vector<1x64xf32> to vector<2x64xf32>
    %106 = arith.addf %103, %105 : vector<2x64xf32>
    %c0_112 = arith.constant 0 : index
    %c0_113 = arith.constant 0 : index
    %107 = vector.load %arg15[%c0_112, %c0_113] : memref<4x64xf32, #tpu.memory_space<vmem>>, vector<1x64xf32>
    tpu.vector_store %arg15[%c0_112, %c0_113], %80 {strides = array<i32>} : memref<4x64xf32, #tpu.memory_space<vmem>>, vector<1x64xf32>,
    %c3_114 = arith.constant 3 : index
    %c0_115 = arith.constant 0 : index
    %108 = vector.load %arg15[%c3_114, %c0_115] : memref<4x64xf32, #tpu.memory_space<vmem>>, vector<1x64xf32>
    tpu.vector_store %arg15[%c3_114, %c0_115], %80 {strides = array<i32>} : memref<4x64xf32, #tpu.memory_space<vmem>>, vector<1x64xf32>,
    %cst_116 = arith.constant 0.000000e+00 : f32
    %109 = vector.broadcast %cst_116 : f32 to vector<2x64xf32>
    %110 = arith.maximumf %106, %109 : vector<2x64xf32>
    %c1_117 = arith.constant 1 : index
    %c0_118 = arith.constant 0 : index
    %111 = vector.load %arg15[%c1_117, %c0_118] : memref<4x64xf32, #tpu.memory_space<vmem>>, vector<2x64xf32>
    tpu.vector_store %arg15[%c1_117, %c0_118], %110 {strides = array<i32>} : memref<4x64xf32, #tpu.memory_space<vmem>>, vector<2x64xf32>,
    %c0_119 = arith.constant 0 : index
    %c0_120 = arith.constant 0 : index
    %112 = vector.load %arg15[%c0_119, %c0_120] : memref<4x64xf32, #tpu.memory_space<vmem>>, vector<2x64xf32>
    %113 = arith.truncf %112 : vector<2x64xf32> to vector<2x64xbf16>
    %c0_121 = arith.constant 0 : index
    %c0_122 = arith.constant 0 : index
    %c0_123 = arith.constant 0 : index
    %114 = vector.load %arg7[%c0_121, %c0_122, %c0_123] : memref<3x64x64xbf16, #tpu.memory_space<vmem>>, vector<1x64x64xbf16>
    %115 = vector.shape_cast %114 : vector<1x64x64xbf16> to vector<64x64xbf16>
    %cst_124 = arith.constant dense<0.000000e+00> : vector<2x64xf32>
    %116 = tpu.matmul %113, %115, %cst_124 {dimension_numbers = #tpu.dot_dimension_numbers<[1], [0], [0], [1], [0, 0, 1, 1], [], []>} : vector<2x64xbf16>, vector<64x64xbf16>, vector<2x64xf32> -> vector<2x64xf32>
    %c1_125 = arith.constant 1 : index
    %c0_126 = arith.constant 0 : index
    %117 = vector.load %arg15[%c1_125, %c0_126] : memref<4x64xf32, #tpu.memory_space<vmem>>, vector<2x64xf32>
    %118 = arith.truncf %117 : vector<2x64xf32> to vector<2x64xbf16>
    %c1_127 = arith.constant 1 : index
    %c0_128 = arith.constant 0 : index
    %c0_129 = arith.constant 0 : index
    %119 = vector.load %arg7[%c1_127, %c0_128, %c0_129] : memref<3x64x64xbf16, #tpu.memory_space<vmem>>, vector<1x64x64xbf16>
    %120 = vector.shape_cast %119 : vector<1x64x64xbf16> to vector<64x64xbf16>
    %cst_130 = arith.constant dense<0.000000e+00> : vector<2x64xf32>
    %121 = tpu.matmul %118, %120, %cst_130 {dimension_numbers = #tpu.dot_dimension_numbers<[1], [0], [0], [1], [0, 0, 1, 1], [], []>} : vector<2x64xbf16>, vector<64x64xbf16>, vector<2x64xf32> -> vector<2x64xf32>
    %122 = arith.addf %116, %121 : vector<2x64xf32>
    %c2_131 = arith.constant 2 : index
    %c0_132 = arith.constant 0 : index
    %123 = vector.load %arg15[%c2_131, %c0_132] : memref<4x64xf32, #tpu.memory_space<vmem>>, vector<2x64xf32>
    %124 = arith.truncf %123 : vector<2x64xf32> to vector<2x64xbf16>
    %c2_133 = arith.constant 2 : index
    %c0_134 = arith.constant 0 : index
    %c0_135 = arith.constant 0 : index
    %125 = vector.load %arg7[%c2_133, %c0_134, %c0_135] : memref<3x64x64xbf16, #tpu.memory_space<vmem>>, vector<1x64x64xbf16>
    %126 = vector.shape_cast %125 : vector<1x64x64xbf16> to vector<64x64xbf16>
    %cst_136 = arith.constant dense<0.000000e+00> : vector<2x64xf32>
    %127 = tpu.matmul %124, %126, %cst_136 {dimension_numbers = #tpu.dot_dimension_numbers<[1], [0], [0], [1], [0, 0, 1, 1], [], []>} : vector<2x64xbf16>, vector<64x64xbf16>, vector<2x64xf32> -> vector<2x64xf32>
    %128 = arith.addf %122, %127 : vector<2x64xf32>
    %c0_137 = arith.constant 0 : index
    %c0_138 = arith.constant 0 : index
    %129 = vector.load %arg8[%c0_137, %c0_138] : memref<1x64xf32, #tpu.memory_space<vmem>>, vector<1x64xf32>
    %130 = vector.broadcast %129 : vector<1x64xf32> to vector<2x64xf32>
    %131 = arith.addf %128, %130 : vector<2x64xf32>
    %c1_139 = arith.constant 1 : index
    %c0_140 = arith.constant 0 : index
    %132 = vector.load %arg14[%c1_139, %c0_140] : memref<4x64xf32, #tpu.memory_space<vmem>>, vector<2x64xf32>
    %133 = arith.addf %131, %132 : vector<2x64xf32>
    %c1_141 = arith.constant 1 : index
    %c0_142 = arith.constant 0 : index
    %134 = vector.load %arg14[%c1_141, %c0_142] : memref<4x64xf32, #tpu.memory_space<vmem>>, vector<2x64xf32>
    tpu.vector_store %arg14[%c1_141, %c0_142], %133 {strides = array<i32>} : memref<4x64xf32, #tpu.memory_space<vmem>>, vector<2x64xf32>,
    %cst_143 = arith.constant 0.000000e+00 : f32
    %135 = vector.broadcast %cst_143 : f32 to vector<1x64xf32>
    %c0_144 = arith.constant 0 : index
    %c0_145 = arith.constant 0 : index
    %136 = vector.load %arg14[%c0_144, %c0_145] : memref<4x64xf32, #tpu.memory_space<vmem>>, vector<2x64xf32>
    %cst_146 = arith.constant 0.000000e+00 : f32
    %137 = vector.broadcast %cst_146 : f32 to vector<2x64xf32>
    %138 = arith.maximumf %136, %137 : vector<2x64xf32>
    %139 = arith.truncf %138 : vector<2x64xf32> to vector<2x64xbf16>
    %c0_147 = arith.constant 0 : index
    %c0_148 = arith.constant 0 : index
    %c0_149 = arith.constant 0 : index
    %140 = vector.load %arg9[%c0_147, %c0_148, %c0_149] : memref<3x64x64xbf16, #tpu.memory_space<vmem>>, vector<1x64x64xbf16>
    %141 = vector.shape_cast %140 : vector<1x64x64xbf16> to vector<64x64xbf16>
    %cst_150 = arith.constant dense<0.000000e+00> : vector<2x64xf32>
    %142 = tpu.matmul %139, %141, %cst_150 {dimension_numbers = #tpu.dot_dimension_numbers<[1], [0], [0], [1], [0, 0, 1, 1], [], []>} : vector<2x64xbf16>, vector<64x64xbf16>, vector<2x64xf32> -> vector<2x64xf32>
    %c1_151 = arith.constant 1 : index
    %c0_152 = arith.constant 0 : index
    %143 = vector.load %arg14[%c1_151, %c0_152] : memref<4x64xf32, #tpu.memory_space<vmem>>, vector<2x64xf32>
    %cst_153 = arith.constant 0.000000e+00 : f32
    %144 = vector.broadcast %cst_153 : f32 to vector<2x64xf32>
    %145 = arith.maximumf %143, %144 : vector<2x64xf32>
    %146 = arith.truncf %145 : vector<2x64xf32> to vector<2x64xbf16>
    %c1_154 = arith.constant 1 : index
    %c0_155 = arith.constant 0 : index
    %c0_156 = arith.constant 0 : index
    %147 = vector.load %arg9[%c1_154, %c0_155, %c0_156] : memref<3x64x64xbf16, #tpu.memory_space<vmem>>, vector<1x64x64xbf16>
    %148 = vector.shape_cast %147 : vector<1x64x64xbf16> to vector<64x64xbf16>
    %cst_157 = arith.constant dense<0.000000e+00> : vector<2x64xf32>
    %149 = tpu.matmul %146, %148, %cst_157 {dimension_numbers = #tpu.dot_dimension_numbers<[1], [0], [0], [1], [0, 0, 1, 1], [], []>} : vector<2x64xbf16>, vector<64x64xbf16>, vector<2x64xf32> -> vector<2x64xf32>
    %150 = arith.addf %142, %149 : vector<2x64xf32>
    %c2_158 = arith.constant 2 : index
    %c0_159 = arith.constant 0 : index
    %151 = vector.load %arg14[%c2_158, %c0_159] : memref<4x64xf32, #tpu.memory_space<vmem>>, vector<2x64xf32>
    %cst_160 = arith.constant 0.000000e+00 : f32
    %152 = vector.broadcast %cst_160 : f32 to vector<2x64xf32>
    %153 = arith.maximumf %151, %152 : vector<2x64xf32>
    %154 = arith.truncf %153 : vector<2x64xf32> to vector<2x64xbf16>
    %c2_161 = arith.constant 2 : index
    %c0_162 = arith.constant 0 : index
    %c0_163 = arith.constant 0 : index
    %155 = vector.load %arg9[%c2_161, %c0_162, %c0_163] : memref<3x64x64xbf16, #tpu.memory_space<vmem>>, vector<1x64x64xbf16>
    %156 = vector.shape_cast %155 : vector<1x64x64xbf16> to vector<64x64xbf16>
    %cst_164 = arith.constant dense<0.000000e+00> : vector<2x64xf32>
    %157 = tpu.matmul %154, %156, %cst_164 {dimension_numbers = #tpu.dot_dimension_numbers<[1], [0], [0], [1], [0, 0, 1, 1], [], []>} : vector<2x64xbf16>, vector<64x64xbf16>, vector<2x64xf32> -> vector<2x64xf32>
    %158 = arith.addf %150, %157 : vector<2x64xf32>
    %c0_165 = arith.constant 0 : index
    %c0_166 = arith.constant 0 : index
    %159 = vector.load %arg10[%c0_165, %c0_166] : memref<1x64xf32, #tpu.memory_space<vmem>>, vector<1x64xf32>
    %160 = vector.broadcast %159 : vector<1x64xf32> to vector<2x64xf32>
    %161 = arith.addf %158, %160 : vector<2x64xf32>
    %c0_167 = arith.constant 0 : index
    %c0_168 = arith.constant 0 : index
    %162 = vector.load %arg15[%c0_167, %c0_168] : memref<4x64xf32, #tpu.memory_space<vmem>>, vector<1x64xf32>
    tpu.vector_store %arg15[%c0_167, %c0_168], %135 {strides = array<i32>} : memref<4x64xf32, #tpu.memory_space<vmem>>, vector<1x64xf32>,
    %c3_169 = arith.constant 3 : index
    %c0_170 = arith.constant 0 : index
    %163 = vector.load %arg15[%c3_169, %c0_170] : memref<4x64xf32, #tpu.memory_space<vmem>>, vector<1x64xf32>
    tpu.vector_store %arg15[%c3_169, %c0_170], %135 {strides = array<i32>} : memref<4x64xf32, #tpu.memory_space<vmem>>, vector<1x64xf32>,
    %cst_171 = arith.constant 0.000000e+00 : f32
    %164 = vector.broadcast %cst_171 : f32 to vector<2x64xf32>
    %165 = arith.maximumf %161, %164 : vector<2x64xf32>
    %c1_172 = arith.constant 1 : index
    %c0_173 = arith.constant 0 : index
    %166 = vector.load %arg15[%c1_172, %c0_173] : memref<4x64xf32, #tpu.memory_space<vmem>>, vector<2x64xf32>
    tpu.vector_store %arg15[%c1_172, %c0_173], %165 {strides = array<i32>} : memref<4x64xf32, #tpu.memory_space<vmem>>, vector<2x64xf32>,
    %c0_174 = arith.constant 0 : index
    %c0_175 = arith.constant 0 : index
    %167 = vector.load %arg15[%c0_174, %c0_175] : memref<4x64xf32, #tpu.memory_space<vmem>>, vector<2x64xf32>
    %168 = arith.truncf %167 : vector<2x64xf32> to vector<2x64xbf16>
    %c0_176 = arith.constant 0 : index
    %c0_177 = arith.constant 0 : index
    %c0_178 = arith.constant 0 : index
    %169 = vector.load %arg11[%c0_176, %c0_177, %c0_178] : memref<3x64x64xbf16, #tpu.memory_space<vmem>>, vector<1x64x64xbf16>
    %170 = vector.shape_cast %169 : vector<1x64x64xbf16> to vector<64x64xbf16>
    %cst_179 = arith.constant dense<0.000000e+00> : vector<2x64xf32>
    %171 = tpu.matmul %168, %170, %cst_179 {dimension_numbers = #tpu.dot_dimension_numbers<[1], [0], [0], [1], [0, 0, 1, 1], [], []>} : vector<2x64xbf16>, vector<64x64xbf16>, vector<2x64xf32> -> vector<2x64xf32>
    %c1_180 = arith.constant 1 : index
    %c0_181 = arith.constant 0 : index
    %172 = vector.load %arg15[%c1_180, %c0_181] : memref<4x64xf32, #tpu.memory_space<vmem>>, vector<2x64xf32>
    %173 = arith.truncf %172 : vector<2x64xf32> to vector<2x64xbf16>
    %c1_182 = arith.constant 1 : index
    %c0_183 = arith.constant 0 : index
    %c0_184 = arith.constant 0 : index
    %174 = vector.load %arg11[%c1_182, %c0_183, %c0_184] : memref<3x64x64xbf16, #tpu.memory_space<vmem>>, vector<1x64x64xbf16>
    %175 = vector.shape_cast %174 : vector<1x64x64xbf16> to vector<64x64xbf16>
    %cst_185 = arith.constant dense<0.000000e+00> : vector<2x64xf32>
    %176 = tpu.matmul %173, %175, %cst_185 {dimension_numbers = #tpu.dot_dimension_numbers<[1], [0], [0], [1], [0, 0, 1, 1], [], []>} : vector<2x64xbf16>, vector<64x64xbf16>, vector<2x64xf32> -> vector<2x64xf32>
    %177 = arith.addf %171, %176 : vector<2x64xf32>
    %c2_186 = arith.constant 2 : index
    %c0_187 = arith.constant 0 : index
    %178 = vector.load %arg15[%c2_186, %c0_187] : memref<4x64xf32, #tpu.memory_space<vmem>>, vector<2x64xf32>
    %179 = arith.truncf %178 : vector<2x64xf32> to vector<2x64xbf16>
    %c2_188 = arith.constant 2 : index
    %c0_189 = arith.constant 0 : index
    %c0_190 = arith.constant 0 : index
    %180 = vector.load %arg11[%c2_188, %c0_189, %c0_190] : memref<3x64x64xbf16, #tpu.memory_space<vmem>>, vector<1x64x64xbf16>
    %181 = vector.shape_cast %180 : vector<1x64x64xbf16> to vector<64x64xbf16>
    %cst_191 = arith.constant dense<0.000000e+00> : vector<2x64xf32>
    %182 = tpu.matmul %179, %181, %cst_191 {dimension_numbers = #tpu.dot_dimension_numbers<[1], [0], [0], [1], [0, 0, 1, 1], [], []>} : vector<2x64xbf16>, vector<64x64xbf16>, vector<2x64xf32> -> vector<2x64xf32>
    %183 = arith.addf %177, %182 : vector<2x64xf32>
    %c0_192 = arith.constant 0 : index
    %c0_193 = arith.constant 0 : index
    %184 = vector.load %arg12[%c0_192, %c0_193] : memref<1x64xf32, #tpu.memory_space<vmem>>, vector<1x64xf32>
    %185 = vector.broadcast %184 : vector<1x64xf32> to vector<2x64xf32>
    %186 = arith.addf %183, %185 : vector<2x64xf32>
    %c1_194 = arith.constant 1 : index
    %c0_195 = arith.constant 0 : index
    %187 = vector.load %arg14[%c1_194, %c0_195] : memref<4x64xf32, #tpu.memory_space<vmem>>, vector<2x64xf32>
    %188 = arith.addf %186, %187 : vector<2x64xf32>
    %c0_196 = arith.constant 0 : index
    %c0_197 = arith.constant 0 : index
    %c0_198 = arith.constant 0 : index
    %189 = vector.load %arg13[%c0_196, %c0_197, %c0_198] : memref<1x4x64xf32, #tpu.memory_space<vmem>>, vector<1x1x64xf32>
    %190 = vector.shape_cast %189 : vector<1x1x64xf32> to vector<1x64xf32>
    %191 = vector.shape_cast %0 : vector<1x64xf32> to vector<1x1x64xf32>
    tpu.vector_store %arg13[%c0_196, %c0_197, %c0_198], %191 {strides = array<i32>} : memref<1x4x64xf32, #tpu.memory_space<vmem>>, vector<1x1x64xf32>,
    %c0_199 = arith.constant 0 : index
    %c3_200 = arith.constant 3 : index
    %c0_201 = arith.constant 0 : index
    %192 = vector.load %arg13[%c0_199, %c3_200, %c0_201] : memref<1x4x64xf32, #tpu.memory_space<vmem>>, vector<1x1x64xf32>
    %193 = vector.shape_cast %192 : vector<1x1x64xf32> to vector<1x64xf32>
    %194 = vector.shape_cast %0 : vector<1x64xf32> to vector<1x1x64xf32>
    tpu.vector_store %arg13[%c0_199, %c3_200, %c0_201], %194 {strides = array<i32>} : memref<1x4x64xf32, #tpu.memory_space<vmem>>, vector<1x1x64xf32>,
    %c0_202 = arith.constant 0 : index
    %c1_203 = arith.constant 1 : index
    %c0_204 = arith.constant 0 : index
    %195 = vector.load %arg13[%c0_202, %c1_203, %c0_204] : memref<1x4x64xf32, #tpu.memory_space<vmem>>, vector<1x2x64xf32>
    %196 = vector.shape_cast %195 : vector<1x2x64xf32> to vector<2x64xf32>
    %197 = vector.shape_cast %188 : vector<2x64xf32> to vector<1x2x64xf32>
    tpu.vector_store %arg13[%c0_202, %c1_203, %c0_204], %197 {strides = array<i32>} : memref<1x4x64xf32, #tpu.memory_space<vmem>>, vector<1x2x64xf32>,
    return
  }
  func.func @transform_0(%arg0: i32) -> (i32, i32, i32) {
    %c0_i32 = arith.constant 0 : i32
    %c0_i32_0 = arith.constant 0 : i32
    %c0_i32_1 = arith.constant 0 : i32
    return %arg0, %c0_i32, %c0_i32_0 : i32, i32, i32
  }
  func.func @transform_1(%arg0: i32) -> (i32, i32, i32, i32) {
    %c0_i32 = arith.constant 0 : i32
    %c0_i32_0 = arith.constant 0 : i32
    %c0_i32_1 = arith.constant 0 : i32
    %c0_i32_2 = arith.constant 0 : i32
    %c0_i32_3 = arith.constant 0 : i32
    return %c0_i32, %c0_i32_0, %c0_i32_1, %c0_i32_2 : i32, i32, i32, i32
  }
  func.func @transform_2(%arg0: i32) -> (i32, i32) {
    %c0_i32 = arith.constant 0 : i32
    %c0_i32_0 = arith.constant 0 : i32
    %c0_i32_1 = arith.constant 0 : i32
    return %c0_i32, %c0_i32_0 : i32, i32
  }
  func.func @transform_3(%arg0: i32) -> (i32, i32, i32) {
    %c0_i32 = arith.constant 0 : i32
    %c0_i32_0 = arith.constant 0 : i32
    %c0_i32_1 = arith.constant 0 : i32
    %c0_i32_2 = arith.constant 0 : i32
    return %c0_i32, %c0_i32_0, %c0_i32_1 : i32, i32, i32
  }
  func.func @transform_4(%arg0: i32) -> (i32, i32, i32) {
    %c0_i32 = arith.constant 0 : i32
    %c0_i32_0 = arith.constant 0 : i32
    %c0_i32_1 = arith.constant 0 : i32
    %c0_i32_2 = arith.constant 0 : i32
    return %c0_i32, %c0_i32_0, %c0_i32_1 : i32, i32, i32
  }
  func.func @transform_5(%arg0: i32) -> (i32, i32) {
    %c0_i32 = arith.constant 0 : i32
    %c0_i32_0 = arith.constant 0 : i32
    %c0_i32_1 = arith.constant 0 : i32
    return %c0_i32, %c0_i32_0 : i32, i32
  }
  func.func @transform_6(%arg0: i32) -> (i32, i32, i32) {
    %c0_i32 = arith.constant 0 : i32
    %c0_i32_0 = arith.constant 0 : i32
    %c0_i32_1 = arith.constant 0 : i32
    %c0_i32_2 = arith.constant 0 : i32
    return %c0_i32, %c0_i32_0, %c0_i32_1 : i32, i32, i32
  }
  func.func @transform_7(%arg0: i32) -> (i32, i32) {
    %c0_i32 = arith.constant 0 : i32
    %c0_i32_0 = arith.constant 0 : i32
    %c0_i32_1 = arith.constant 0 : i32
    return %c0_i32, %c0_i32_0 : i32, i32
  }
  func.func @transform_8(%arg0: i32) -> (i32, i32, i32) {
    %c0_i32 = arith.constant 0 : i32
    %c0_i32_0 = arith.constant 0 : i32
    %c0_i32_1 = arith.constant 0 : i32
    %c0_i32_2 = arith.constant 0 : i32
    return %c0_i32, %c0_i32_0, %c0_i32_1 : i32, i32, i32
  }
  func.func @transform_9(%arg0: i32) -> (i32, i32) {
    %c0_i32 = arith.constant 0 : i32
    %c0_i32_0 = arith.constant 0 : i32
    %c0_i32_1 = arith.constant 0 : i32
    return %c0_i32, %c0_i32_0 : i32, i32
  }
  func.func @transform_10(%arg0: i32) -> (i32, i32, i32) {
    %c0_i32 = arith.constant 0 : i32
    %c0_i32_0 = arith.constant 0 : i32
    %c0_i32_1 = arith.constant 0 : i32
    %c0_i32_2 = arith.constant 0 : i32
    return %c0_i32, %c0_i32_0, %c0_i32_1 : i32, i32, i32
  }
  func.func @transform_11(%arg0: i32) -> (i32, i32) {
    %c0_i32 = arith.constant 0 : i32
    %c0_i32_0 = arith.constant 0 : i32
    %c0_i32_1 = arith.constant 0 : i32
    return %c0_i32, %c0_i32_0 : i32, i32
  }
  func.func @transform_12(%arg0: i32) -> (i32, i32, i32) {
    %c0_i32 = arith.constant 0 : i32
    %c0_i32_0 = arith.constant 0 : i32
    %c0_i32_1 = arith.constant 0 : i32
    return %arg0, %c0_i32, %c0_i32_0 : i32, i32, i32
  }
}

module attributes {stable_mosaic.version = 11 : i64} {
  func.func @_linear_relu_kernel(%arg0: i32, %arg1: memref<2x128xf32, #tpu.memory_space<vmem>>, %arg2: memref<128x32xbf16, #tpu.memory_space<vmem>>, %arg3: memref<1x32xf32, #tpu.memory_space<vmem>>, %arg4: memref<2x32xf32, #tpu.memory_space<vmem>>) attributes {dimension_semantics = [#tpu.dimension_semantics<arbitrary>], iteration_bounds = array<i64: 1>, scalar_prefetch = 0 : i64, scratch_operands = 0 : i64, tpu.core_type = #tpu.core_type<tc>, window_params = [{pipeline_mode = #tpu.pipeline_mode<synchronous>, transform_indices = @transform_0, window_bounds = array<i64: 2, 128>}, {pipeline_mode = #tpu.pipeline_mode<synchronous>, transform_indices = @transform_1, window_bounds = array<i64: 128, 32>}, {pipeline_mode = #tpu.pipeline_mode<synchronous>, transform_indices = @transform_2, window_bounds = array<i64: 1, 32>}, {pipeline_mode = #tpu.pipeline_mode<synchronous>, transform_indices = @transform_3, window_bounds = array<i64: 2, 32>}]} {
    %c0 = arith.constant 0 : index
    %c0_0 = arith.constant 0 : index
    %0 = vector.load %arg1[%c0, %c0_0] : memref<2x128xf32, #tpu.memory_space<vmem>>, vector<2x128xf32>
    %cst = arith.constant 0.000000e+00 : f32
    %1 = vector.broadcast %cst : f32 to vector<2x128xf32>
    %2 = arith.maximumf %0, %1 : vector<2x128xf32>
    %3 = arith.truncf %2 : vector<2x128xf32> to vector<2x128xbf16>
    %c0_1 = arith.constant 0 : index
    %c0_2 = arith.constant 0 : index
    %4 = vector.load %arg2[%c0_1, %c0_2] : memref<128x32xbf16, #tpu.memory_space<vmem>>, vector<128x32xbf16>
    %cst_3 = arith.constant dense<0.000000e+00> : vector<2x32xf32>
    %5 = tpu.matmul %3, %4, %cst_3 {dimension_numbers = #tpu.dot_dimension_numbers<[1], [0], [0], [1], [0, 0, 1, 1], [], []>} : vector<2x128xbf16>, vector<128x32xbf16>, vector<2x32xf32> -> vector<2x32xf32>
    %c0_4 = arith.constant 0 : index
    %c0_5 = arith.constant 0 : index
    %6 = vector.load %arg3[%c0_4, %c0_5] : memref<1x32xf32, #tpu.memory_space<vmem>>, vector<1x32xf32>
    %7 = vector.broadcast %6 : vector<1x32xf32> to vector<2x32xf32>
    %8 = arith.addf %5, %7 : vector<2x32xf32>
    %cst_6 = arith.constant 0.000000e+00 : f32
    %9 = vector.broadcast %cst_6 : f32 to vector<2x32xf32>
    %10 = arith.maximumf %8, %9 : vector<2x32xf32>
    %c0_7 = arith.constant 0 : index
    %c0_8 = arith.constant 0 : index
    %11 = vector.load %arg4[%c0_7, %c0_8] : memref<2x32xf32, #tpu.memory_space<vmem>>, vector<2x32xf32>
    tpu.vector_store %arg4[%c0_7, %c0_8], %10 {strides = array<i32>} : memref<2x32xf32, #tpu.memory_space<vmem>>, vector<2x32xf32>,
    return
  }
  func.func @transform_0(%arg0: i32) -> (i32, i32) {
    %c0_i32 = arith.constant 0 : i32
    %c0_i32_0 = arith.constant 0 : i32
    %c0_i32_1 = arith.constant 0 : i32
    return %c0_i32, %c0_i32_0 : i32, i32
  }
  func.func @transform_1(%arg0: i32) -> (i32, i32) {
    %c0_i32 = arith.constant 0 : i32
    %c0_i32_0 = arith.constant 0 : i32
    %c0_i32_1 = arith.constant 0 : i32
    return %c0_i32, %c0_i32_0 : i32, i32
  }
  func.func @transform_2(%arg0: i32) -> (i32, i32) {
    %c0_i32 = arith.constant 0 : i32
    %c0_i32_0 = arith.constant 0 : i32
    %c0_i32_1 = arith.constant 0 : i32
    return %c0_i32, %c0_i32_0 : i32, i32
  }
  func.func @transform_3(%arg0: i32) -> (i32, i32) {
    %c0_i32 = arith.constant 0 : i32
    %c0_i32_0 = arith.constant 0 : i32
    %c0_i32_1 = arith.constant 0 : i32
    return %c0_i32, %c0_i32_0 : i32, i32
  }
}

</mosaic_0001>

<llo_original>
// kernel: impala_cnn_forward.4
$region0: #{impala_cnn_forward.4}
  #allocation0 [shape = 'u32[]', space=smem, size = 0x4, offset = 0x4, fixed_abs, tag = 'smem constant byte address 0x4 - core index']
  #allocation1 [shape = 'u32[144,128]{1,0:T(1,128)}', space=vmem, size = 0x12000, scoped, tag = 'internal scratch']
  #allocation2 [shape = 'f32[10,128]{1,0:T(8,128)}', space=vmem, size = 0x2000, scoped, tag = 'scratch operand']
  #allocation3 [shape = 'f32[10,128]{1,0:T(8,128)}', space=vmem, size = 0x2000, scoped, tag = 'scratch operand']
  %s0 = inlined_call_operand.vmem [shape: f32[2,18,64], index: 0, kind: input, shape index: {}]
  %s1 = inlined_call_operand.vmem [shape: bf16[3,3,64,128], index: 1, kind: input, shape index: {}]
  %s2 = inlined_call_operand.vmem [shape: f32[1,128], index: 2, kind: input, shape index: {}]
  %s3 = inlined_call_operand.vmem [shape: f32[3,8,16], index: 3, kind: input, shape index: {}]
  %s4 = inlined_call_operand.hbm [shape: bf16[3,128,128], index: 4, kind: input, shape index: {}]
  %s5 = inlined_call_operand.hbm [shape: f32[1,128], index: 5, kind: input, shape index: {}]
  %s6 = inlined_call_operand.hbm [shape: bf16[3,128,128], index: 6, kind: input, shape index: {}]
  %s7 = inlined_call_operand.hbm [shape: f32[1,128], index: 7, kind: input, shape index: {}]
  %s8 = inlined_call_operand.hbm [shape: bf16[3,128,128], index: 8, kind: input, shape index: {}]
  %s9 = inlined_call_operand.hbm [shape: f32[1,128], index: 9, kind: input, shape index: {}]
  %s10 = inlined_call_operand.hbm [shape: bf16[3,128,128], index: 10, kind: input, shape index: {}]
  %s11 = inlined_call_operand.hbm [shape: f32[1,128], index: 11, kind: input, shape index: {}]
  %s12 = inlined_call_operand.vmem [shape: f32[2,10,128], index: 12, kind: output, shape index: {}]
  %s13 = sld [smem:[#allocation0]]
  $region113: #{impala_cnn_forward.4} parent=0
    _
  %s15 = ssub.s32 1, %s13
  %s16 = scalar_select 0, %s15, %s13
  $region1: #{impala_cnn_forward.4} parent=0
    #allocation4 [shape = 'u8[98304]{0}', space=vmem, size = 0x18000, scoped, tag = 'input window, operand 4, single buffered']
    #allocation5 [shape = 's32[2]{0}', space=sflag, size = 0x8, scoped, tag = 'scoped memory for impala_cnn_forward.4']
    #allocation6 [shape = 'u8[512]{0}', space=vmem, size = 0x400, scoped, tag = 'input window, operand 5, single buffered']
    #allocation7 [shape = 's32[1]{0}', space=sflag, size = 0x4, scoped, tag = 'scoped memory for impala_cnn_forward.4']
    #allocation8 [shape = 'u8[98304]{0}', space=vmem, size = 0x18000, scoped, tag = 'input window, operand 6, single buffered']
    #allocation9 [shape = 'u8[512]{0}', space=vmem, size = 0x400, scoped, tag = 'input window, operand 7, single buffered']
    #allocation10 [shape = 's32[1]{0}', space=sflag, size = 0x4, scoped, tag = 'scoped memory for impala_cnn_forward.4']
    #allocation11 [shape = 'u8[98304]{0}', space=vmem, size = 0x18000, scoped, tag = 'input window, operand 8, single buffered']
    #allocation12 [shape = 'u8[512]{0}', space=vmem, size = 0x400, scoped, tag = 'input window, operand 9, single buffered']
    #allocation13 [shape = 's32[1]{0}', space=sflag, size = 0x4, scoped, tag = 'scoped memory for impala_cnn_forward.4']
    #allocation14 [shape = 'u8[98304]{0}', space=vmem, size = 0x18000, scoped, tag = 'input window, operand 10, single buffered']
    #allocation15 [shape = 'u8[512]{0}', space=vmem, size = 0x400, scoped, tag = 'input window, operand 11, single buffered']
    #allocation16 [shape = 's32[1]{0}', space=sflag, size = 0x4, scoped, tag = 'scoped memory for impala_cnn_forward.4']
    %17 = vsyncpa [#allocation5], 0
    %18 = vsyncpa [#allocation7], 0
    %19 = vsyncpa [#allocation10], 0
    %20 = vsyncpa [#allocation13], 0
    %21 = vsyncpa [#allocation16], 0
    loop: start=0, step=1, limit=4
    $region2: #{impala_cnn_forward.4} parent=1 // loop_pre_header
      _
    $region3: #{impala_cnn_forward.4} parent=1 // loop_header
      %s23 = sphi 0, %s27
      %p24 = scmp.ge.s32.totalorder %s23, 4
      %s33 = sphi 0, %s35
      %s36 = sphi 0, %s33
      %s37 = sphi 0, %s36
      %s53 = sphi 0, %s37
      %s57 = sphi 0, %s57
      %s59 = sphi 0, %s57
      %s60 = sphi 0, %s59
      %s74 = sphi 0, %s60
      %s78 = sphi 0, %s78
      %s80 = sphi 0, %s78
      %s81 = sphi 0, %s80
      %s95 = sphi 0, %s81
      %s99 = sphi 0, %s99
      %s101 = sphi 0, %s99
      %s102 = sphi 0, %s101
      %s116 = sphi 0, %s102
      %s120 = sphi 0, %s120
      %s122 = sphi 0, %s120
      %s123 = sphi 0, %s122
      %s137 = sphi 0, %s123
      %s141 = sphi 0, %s141
      %s143 = sphi 0, %s141
      %s144 = sphi 0, %s143
      %s158 = sphi 0, %s144
      %s162 = sphi 0, %s162
      %s164 = sphi 0, %s162
      %s165 = sphi 0, %s164
      %s179 = sphi 0, %s165
      %s183 = sphi 0, %s183
      %s185 = sphi 0, %s183
      %s186 = sphi 0, %s185
      %s200 = sphi 0, %s186
      %s204 = sphi 0, %s204
      %s206 = sphi 0, %s204
      %s207 = sphi 0, %s206
      %s221 = sphi 0, %s207
      %s225 = sphi 0, %s225
      %s227 = sphi 0, %s225
      %s228 = sphi 0, %s227
      %s242 = sphi 0, %s228
      %s246 = sphi 0, %s246
      %s248 = sphi 0, %s246
      %s249 = sphi 0, %s248
      %s263 = sphi 0, %s249
      %s267 = sphi 0, %s267
      %s269 = sphi 0, %s267
      %s270 = sphi 0, %s269
      %s284 = sphi 0, %s270
      %s290 = sphi 0, %s292
      %s293 = sphi 0, %s290
      %s294 = sphi 0, %s293
      %s310 = sphi 0, %s294
    $region4: #{impala_cnn_forward.4} parent=1 // loop_header_branch
      %26 = sbr.rel (%p24) target = $region8
    $region5: #{impala_cnn_forward.4} parent=1 // loop_body
      %s28 = ssub.s32 %s23, 1
      %s29 = ssub.s32 %s23, 2
      %s30 = sadd.s32 %s23, 1
      %s31 = ssub.s32 %s23, %s30
      %p32 = scmp.eq.s32.totalorder %s31, 0
      %s34 = sadd.s32 %s33, 1
      %s35 = scalar_select %p32, %s33, %s34
      %p38 = pneg %p32
      %p39 = scmp.eq.s32.totalorder %s23, 1
      %p40 = por %p38, %p39
      %p41 = scmp.ne.s32.totalorder %s33, %s36
      %p42 = scmp.eq.s32.totalorder %s23, 0
      %p43 = por %p41, %p42
      %p44 = scmp.ne.s32.totalorder %s33, %s36
      %p45 = scmp.eq.s32.totalorder %s28, 1
      %p46 = por %p44, %p45
      %p47 = scmp.ne.s32.totalorder %s36, %s37
      %p48 = scmp.eq.s32.totalorder %s28, 0
      %p49 = por %p47, %p48
      %p50 = scmp.ne.s32.totalorder %s36, %s37
      %p51 = scmp.eq.s32.totalorder %s29, 1
      %p52 = por %p50, %p51
      %p54 = scmp.ne.s32.totalorder %s37, %s53
      %p55 = scmp.eq.s32.totalorder %s29, 0
      %p56 = por %p54, %p55
      %s58 = sadd.s32 %s57, 1
      %p61 = scmp.eq.s32.totalorder %s23, 1
      %p62 = scmp.ne.s32.totalorder %s57, %s59
      %p63 = scmp.eq.s32.totalorder %s23, 0
      %p64 = por %p62, %p63
      %p65 = scmp.ne.s32.totalorder %s57, %s59
      %p66 = scmp.eq.s32.totalorder %s28, 1
      %p67 = por %p65, %p66
      %p68 = scmp.ne.s32.totalorder %s59, %s60
      %p69 = scmp.eq.s32.totalorder %s28, 0
      %p70 = por %p68, %p69
      %p71 = scmp.ne.s32.totalorder %s59, %s60
      %p72 = scmp.eq.s32.totalorder %s29, 1
      %p73 = por %p71, %p72
      %p75 = scmp.ne.s32.totalorder %s60, %s74
      %p76 = scmp.eq.s32.totalorder %s29, 0
      %p77 = por %p75, %p76
      %s79 = sadd.s32 %s78, 1
      %p82 = scmp.eq.s32.totalorder %s23, 1
      %p83 = scmp.ne.s32.totalorder %s78, %s80
      %p84 = scmp.eq.s32.totalorder %s23, 0
      %p85 = por %p83, %p84
      %p86 = scmp.ne.s32.totalorder %s78, %s80
      %p87 = scmp.eq.s32.totalorder %s28, 1
      %p88 = por %p86, %p87
      %p89 = scmp.ne.s32.totalorder %s80, %s81
      %p90 = scmp.eq.s32.totalorder %s28, 0
      %p91 = por %p89, %p90
      %p92 = scmp.ne.s32.totalorder %s80, %s81
      %p93 = scmp.eq.s32.totalorder %s29, 1
      %p94 = por %p92, %p93
      %p96 = scmp.ne.s32.totalorder %s81, %s95
      %p97 = scmp.eq.s32.totalorder %s29, 0
      %p98 = por %p96, %p97
      %s100 = sadd.s32 %s99, 1
      %p103 = scmp.eq.s32.totalorder %s23, 1
      %p104 = scmp.ne.s32.totalorder %s99, %s101
      %p105 = scmp.eq.s32.totalorder %s23, 0
      %p106 = por %p104, %p105
      %p107 = scmp.ne.s32.totalorder %s99, %s101
      %p108 = scmp.eq.s32.totalorder %s28, 1
      %p109 = por %p107, %p108
      %p110 = scmp.ne.s32.totalorder %s101, %s102
      %p111 = scmp.eq.s32.totalorder %s28, 0
      %p112 = por %p110, %p111
      %p113 = scmp.ne.s32.totalorder %s101, %s102
      %p114 = scmp.eq.s32.totalorder %s29, 1
      %p115 = por %p113, %p114
      %p117 = scmp.ne.s32.totalorder %s102, %s116
      %p118 = scmp.eq.s32.totalorder %s29, 0
      %p119 = por %p117, %p118
      %s121 = sadd.s32 %s120, 1
      %p124 = scmp.eq.s32.totalorder %s23, 1
      %p125 = scmp.ne.s32.totalorder %s120, %s122
      %p126 = scmp.eq.s32.totalorder %s23, 0
      %p127 = por %p125, %p126
      %p128 = scmp.ne.s32.totalorder %s120, %s122
      %p129 = scmp.eq.s32.totalorder %s28, 1
      %p130 = por %p128, %p129
      %p131 = scmp.ne.s32.totalorder %s122, %s123
      %p132 = scmp.eq.s32.totalorder %s28, 0
      %p133 = por %p131, %p132
      %p134 = scmp.ne.s32.totalorder %s122, %s123
      %p135 = scmp.eq.s32.totalorder %s29, 1
      %p136 = por %p134, %p135
      %p138 = scmp.ne.s32.totalorder %s123, %s137
      %p139 = scmp.eq.s32.totalorder %s29, 0
      %p140 = por %p138, %p139
      %s142 = sadd.s32 %s141, 1
      %p145 = scmp.eq.s32.totalorder %s23, 1
      %p146 = scmp.ne.s32.totalorder %s141, %s143
      %p147 = scmp.eq.s32.totalorder %s23, 0
      %p148 = por %p146, %p147
      %p149 = scmp.ne.s32.totalorder %s141, %s143
      %p150 = scmp.eq.s32.totalorder %s28, 1
      %p151 = por %p149, %p150
      %p152 = scmp.ne.s32.totalorder %s143, %s144
      %p153 = scmp.eq.s32.totalorder %s28, 0
      %p154 = por %p152, %p153
      %p155 = scmp.ne.s32.totalorder %s143, %s144
      %p156 = scmp.eq.s32.totalorder %s29, 1
      %p157 = por %p155, %p156
      %p159 = scmp.ne.s32.totalorder %s144, %s158
      %p160 = scmp.eq.s32.totalorder %s29, 0
      %p161 = por %p159, %p160
      %s163 = sadd.s32 %s162, 1
      %p166 = scmp.eq.s32.totalorder %s23, 1
      %p167 = scmp.ne.s32.totalorder %s162, %s164
      %p168 = scmp.eq.s32.totalorder %s23, 0
      %p169 = por %p167, %p168
      %p170 = scmp.ne.s32.totalorder %s162, %s164
      %p171 = scmp.eq.s32.totalorder %s28, 1
      %p172 = por %p170, %p171
      %p173 = scmp.ne.s32.totalorder %s164, %s165
      %p174 = scmp.eq.s32.totalorder %s28, 0
      %p175 = por %p173, %p174
      %p176 = scmp.ne.s32.totalorder %s164, %s165
      %p177 = scmp.eq.s32.totalorder %s29, 1
      %p178 = por %p176, %p177
      %p180 = scmp.ne.s32.totalorder %s165, %s179
      %p181 = scmp.eq.s32.totalorder %s29, 0
      %p182 = por %p180, %p181
      %s184 = sadd.s32 %s183, 1
      %p187 = scmp.eq.s32.totalorder %s23, 1
      %p188 = scmp.ne.s32.totalorder %s183, %s185
      %p189 = scmp.eq.s32.totalorder %s23, 0
      %p190 = por %p188, %p189
      %p191 = scmp.ne.s32.totalorder %s183, %s185
      %p192 = scmp.eq.s32.totalorder %s28, 1
      %p193 = por %p191, %p192
      %p194 = scmp.ne.s32.totalorder %s185, %s186
      %p195 = scmp.eq.s32.totalorder %s28, 0
      %p196 = por %p194, %p195
      %p197 = scmp.ne.s32.totalorder %s185, %s186
      %p198 = scmp.eq.s32.totalorder %s29, 1
      %p199 = por %p197, %p198
      %p201 = scmp.ne.s32.totalorder %s186, %s200
      %p202 = scmp.eq.s32.totalorder %s29, 0
      %p203 = por %p201, %p202
      %s205 = sadd.s32 %s204, 1
      %p208 = scmp.eq.s32.totalorder %s23, 1
      %p209 = scmp.ne.s32.totalorder %s204, %s206
      %p210 = scmp.eq.s32.totalorder %s23, 0
      %p211 = por %p209, %p210
      %p212 = scmp.ne.s32.totalorder %s204, %s206
      %p213 = scmp.eq.s32.totalorder %s28, 1
      %p214 = por %p212, %p213
      %p215 = scmp.ne.s32.totalorder %s206, %s207
      %p216 = scmp.eq.s32.totalorder %s28, 0
      %p217 = por %p215, %p216
      %p218 = scmp.ne.s32.totalorder %s206, %s207
      %p219 = scmp.eq.s32.totalorder %s29, 1
      %p220 = por %p218, %p219
      %p222 = scmp.ne.s32.totalorder %s207, %s221
      %p223 = scmp.eq.s32.totalorder %s29, 0
      %p224 = por %p222, %p223
      %s226 = sadd.s32 %s225, 1
      %p229 = scmp.eq.s32.totalorder %s23, 1
      %p230 = scmp.ne.s32.totalorder %s225, %s227
      %p231 = scmp.eq.s32.totalorder %s23, 0
      %p232 = por %p230, %p231
      %p233 = scmp.ne.s32.totalorder %s225, %s227
      %p234 = scmp.eq.s32.totalorder %s28, 1
      %p235 = por %p233, %p234
      %p236 = scmp.ne.s32.totalorder %s227, %s228
      %p237 = scmp.eq.s32.totalorder %s28, 0
      %p238 = por %p236, %p237
      %p239 = scmp.ne.s32.totalorder %s227, %s228
      %p240 = scmp.eq.s32.totalorder %s29, 1
      %p241 = por %p239, %p240
      %p243 = scmp.ne.s32.totalorder %s228, %s242
      %p244 = scmp.eq.s32.totalorder %s29, 0
      %p245 = por %p243, %p244
      %s247 = sadd.s32 %s246, 1
      %p250 = scmp.eq.s32.totalorder %s23, 1
      %p251 = scmp.ne.s32.totalorder %s246, %s248
      %p252 = scmp.eq.s32.totalorder %s23, 0
      %p253 = por %p251, %p252
      %p254 = scmp.ne.s32.totalorder %s246, %s248
      %p255 = scmp.eq.s32.totalorder %s28, 1
      %p256 = por %p254, %p255
      %p257 = scmp.ne.s32.totalorder %s248, %s249
      %p258 = scmp.eq.s32.totalorder %s28, 0
      %p259 = por %p257, %p258
      %p260 = scmp.ne.s32.totalorder %s248, %s249
      %p261 = scmp.eq.s32.totalorder %s29, 1
      %p262 = por %p260, %p261
      %p264 = scmp.ne.s32.totalorder %s249, %s263
      %p265 = scmp.eq.s32.totalorder %s29, 0
      %p266 = por %p264, %p265
      %s268 = sadd.s32 %s267, 1
      %p271 = scmp.eq.s32.totalorder %s23, 1
      %p272 = scmp.ne.s32.totalorder %s267, %s269
      %p273 = scmp.eq.s32.totalorder %s23, 0
      %p274 = por %p272, %p273
      %p275 = scmp.ne.s32.totalorder %s267, %s269
      %p276 = scmp.eq.s32.totalorder %s28, 1
      %p277 = por %p275, %p276
      %p278 = scmp.ne.s32.totalorder %s269, %s270
      %p279 = scmp.eq.s32.totalorder %s28, 0
      %p280 = por %p278, %p279
      %p281 = scmp.ne.s32.totalorder %s269, %s270
      %p282 = scmp.eq.s32.totalorder %s29, 1
      %p283 = por %p281, %p282
      %p285 = scmp.ne.s32.totalorder %s270, %s284
      %p286 = scmp.eq.s32.totalorder %s29, 0
      %p287 = por %p285, %p286
      %s288 = ssub.s32 %s23, %s30
      %p289 = scmp.eq.s32.totalorder %s288, 0
      %s291 = sadd.s32 %s290, 1
      %s292 = scalar_select %p289, %s290, %s291
      %p295 = pneg %p289
      %p296 = scmp.eq.s32.totalorder %s23, 1
      %p297 = por %p295, %p296
      %p298 = scmp.ne.s32.totalorder %s290, %s293
      %p299 = scmp.eq.s32.totalorder %s23, 0
      %p300 = por %p298, %p299
      %p301 = scmp.ne.s32.totalorder %s290, %s293
      %p302 = scmp.eq.s32.totalorder %s28, 1
      %p303 = por %p301, %p302
      %p304 = scmp.ne.s32.totalorder %s293, %s294
      %p305 = scmp.eq.s32.totalorder %s28, 0
      %p306 = por %p304, %p305
      %p307 = scmp.ne.s32.totalorder %s293, %s294
      %p308 = scmp.eq.s32.totalorder %s29, 1
      %p309 = por %p307, %p308
      %p311 = scmp.ne.s32.totalorder %s294, %s310
      %p312 = scmp.eq.s32.totalorder %s29, 0
      %p313 = por %p311, %p312
      %p314 = scmp.le.s32.totalorder 1, %s23
      %p315 = scmp.lt.s32.totalorder %s23, 3
      %p316 = pnand %p314, %p315
      %p317 = pneg %p316
      // Predicated region
      $region9: #{impala_cnn_forward.4} parent=5 // pred_check
        _
      $region10: #{impala_cnn_forward.4} parent=5 // pred_check_branch
        %319 = sbr.rel (%p316) target = $region12
      $region11: #{impala_cnn_forward.4} parent=5 // pred_region
        %s320 = ssub.s32 %s23, 1
        // Predicated region
        $region13: #{impala_cnn_forward.4} parent=11 // pred_check
          %p321 = pneg %p70
        $region14: #{impala_cnn_forward.4} parent=11 // pred_check_branch
          %323 = sbr.rel (%p321) target = $region16
        $region15: #{impala_cnn_forward.4} parent=11 // pred_region
          _
        $region16: #{impala_cnn_forward.4} parent=11 // pred_fallthru
          _
        // Predicated region
        $region17: #{impala_cnn_forward.4} parent=11 // pred_check
          %p324 = pneg %p91
        $region18: #{impala_cnn_forward.4} parent=11 // pred_check_branch
          %326 = sbr.rel (%p324) target = $region20
        $region19: #{impala_cnn_forward.4} parent=11 // pred_region
          _
        $region20: #{impala_cnn_forward.4} parent=11 // pred_fallthru
          _
        // Predicated region
        $region21: #{impala_cnn_forward.4} parent=11 // pred_check
          %p327 = pneg %p112
        $region22: #{impala_cnn_forward.4} parent=11 // pred_check_branch
          %329 = sbr.rel (%p327) target = $region24
        $region23: #{impala_cnn_forward.4} parent=11 // pred_region
          _
        $region24: #{impala_cnn_forward.4} parent=11 // pred_fallthru
          _
        // Predicated region
        $region25: #{impala_cnn_forward.4} parent=11 // pred_check
          %p330 = pneg %p133
        $region26: #{impala_cnn_forward.4} parent=11 // pred_check_branch
          %332 = sbr.rel (%p330) target = $region28
        $region27: #{impala_cnn_forward.4} parent=11 // pred_region
          %s334 = ssub.s32 3072, 3072
          %335 = vsyncadd [#allocation5], %s334
          %s336 = sshll.u32 [#allocation4], 4
          %s337 = int_to_ptr.vmem [resolvable:$true] %s336
          %342 = dma.hbm_to_vmem [thread:$0]  %s4, 3072, %s337, [#allocation5], 64, 64, 4
        $region28: #{impala_cnn_forward.4} parent=11 // pred_fallthru
          _
        // Predicated region
        $region29: #{impala_cnn_forward.4} parent=11 // pred_check
          %p343 = pneg %p154
        $region30: #{impala_cnn_forward.4} parent=11 // pred_check_branch
          %345 = sbr.rel (%p343) target = $region32
        $region31: #{impala_cnn_forward.4} parent=11 // pred_region
          %s347 = ssub.s32 16, 16
          %348 = vsyncadd [#allocation7], %s347
          %s350 = sshll.u32 [#allocation6], 4
          %s351 = int_to_ptr.vmem [resolvable:$true] %s350
          %353 = dma.hbm_to_vmem [thread:$0]  %s5, 16, %s351, [#allocation7]
        $region32: #{impala_cnn_forward.4} parent=11 // pred_fallthru
          _
        // Predicated region
        $region33: #{impala_cnn_forward.4} parent=11 // pred_check
          %p354 = pneg %p175
        $region34: #{impala_cnn_forward.4} parent=11 // pred_check_branch
          %356 = sbr.rel (%p354) target = $region36
        $region35: #{impala_cnn_forward.4} parent=11 // pred_region
          %s358 = ssub.s32 3072, 3072
          %359 = vsyncadd [#allocation7], %s358
          %s360 = sshll.u32 [#allocation8], 4
          %s361 = int_to_ptr.vmem [resolvable:$true] %s360
          %366 = dma.hbm_to_vmem [thread:$0]  %s6, 3072, %s361, [#allocation7], 64, 64, 4
        $region36: #{impala_cnn_forward.4} parent=11 // pred_fallthru
          _
        // Predicated region
        $region37: #{impala_cnn_forward.4} parent=11 // pred_check
          %p367 = pneg %p196
        $region38: #{impala_cnn_forward.4} parent=11 // pred_check_branch
          %369 = sbr.rel (%p367) target = $region40
        $region39: #{impala_cnn_forward.4} parent=11 // pred_region
          %s371 = ssub.s32 16, 16
          %372 = vsyncadd [#allocation10], %s371
          %s374 = sshll.u32 [#allocation9], 4
          %s375 = int_to_ptr.vmem [resolvable:$true] %s374
          %377 = dma.hbm_to_vmem [thread:$0]  %s7, 16, %s375, [#allocation10]
        $region40: #{impala_cnn_forward.4} parent=11 // pred_fallthru
          _
        // Predicated region
        $region41: #{impala_cnn_forward.4} parent=11 // pred_check
          %p378 = pneg %p217
        $region42: #{impala_cnn_forward.4} parent=11 // pred_check_branch
          %380 = sbr.rel (%p378) target = $region44
        $region43: #{impala_cnn_forward.4} parent=11 // pred_region
          %s382 = ssub.s32 3072, 3072
          %383 = vsyncadd [#allocation10], %s382
          %s384 = sshll.u32 [#allocation11], 4
          %s385 = int_to_ptr.vmem [resolvable:$true] %s384
          %390 = dma.hbm_to_vmem [thread:$0]  %s8, 3072, %s385, [#allocation10], 64, 64, 4
        $region44: #{impala_cnn_forward.4} parent=11 // pred_fallthru
          _
        // Predicated region
        $region45: #{impala_cnn_forward.4} parent=11 // pred_check
          %p391 = pneg %p238
        $region46: #{impala_cnn_forward.4} parent=11 // pred_check_branch
          %393 = sbr.rel (%p391) target = $region48
        $region47: #{impala_cnn_forward.4} parent=11 // pred_region
          %s395 = ssub.s32 16, 16
          %396 = vsyncadd [#allocation13], %s395
          %s398 = sshll.u32 [#allocation12], 4
          %s399 = int_to_ptr.vmem [resolvable:$true] %s398
          %401 = dma.hbm_to_vmem [thread:$0]  %s9, 16, %s399, [#allocation13]
        $region48: #{impala_cnn_forward.4} parent=11 // pred_fallthru
          _
        // Predicated region
        $region49: #{impala_cnn_forward.4} parent=11 // pred_check
          %p402 = pneg %p259
        $region50: #{impala_cnn_forward.4} parent=11 // pred_check_branch
          %404 = sbr.rel (%p402) target = $region52
        $region51: #{impala_cnn_forward.4} parent=11 // pred_region
          %s406 = ssub.s32 3072, 3072
          %407 = vsyncadd [#allocation13], %s406
          %s408 = sshll.u32 [#allocation14], 4
          %s409 = int_to_ptr.vmem [resolvable:$true] %s408
          %414 = dma.hbm_to_vmem [thread:$0]  %s10, 3072, %s409, [#allocation13], 64, 64, 4
        $region52: #{impala_cnn_forward.4} parent=11 // pred_fallthru
          _
        // Predicated region
        $region53: #{impala_cnn_forward.4} parent=11 // pred_check
          %p415 = pneg %p280
        $region54: #{impala_cnn_forward.4} parent=11 // pred_check_branch
          %417 = sbr.rel (%p415) target = $region56
        $region55: #{impala_cnn_forward.4} parent=11 // pred_region
          %s419 = ssub.s32 16, 16
          %420 = vsyncadd [#allocation16], %s419
          %s422 = sshll.u32 [#allocation15], 4
          %s423 = int_to_ptr.vmem [resolvable:$true] %s422
          %425 = dma.hbm_to_vmem [thread:$0]  %s11, 16, %s423, [#allocation16]
        $region56: #{impala_cnn_forward.4} parent=11 // pred_fallthru
          _
      $region12: #{impala_cnn_forward.4} parent=5 // pred_fallthru
        _
      %p426 = scmp.lt.s32.totalorder %s23, 2
      // Predicated region
      $region57: #{impala_cnn_forward.4} parent=5 // pred_check
        %p427 = pneg %p426
      $region58: #{impala_cnn_forward.4} parent=5 // pred_check_branch
        %429 = sbr.rel (%p427) target = $region60
      $region59: #{impala_cnn_forward.4} parent=5 // pred_region
        // Predicated region
        $region61: #{impala_cnn_forward.4} parent=59 // pred_check
          %p430 = pneg %p43
        $region62: #{impala_cnn_forward.4} parent=59 // pred_check_branch
          %432 = sbr.rel (%p430) target = $region64
        $region63: #{impala_cnn_forward.4} parent=59 // pred_region
          %p433 = scmp.lt.s32.totalorder %s23, 1
          %s434 = scalar_select %p433, %s23, 1
          %s435 = smul.addr %s434, 3
          %s436 = smul.addr %s435, 8
          %s437 = scalar_lea.vmem %s0, %s436
        $region64: #{impala_cnn_forward.4} parent=59 // pred_fallthru
          _
      $region60: #{impala_cnn_forward.4} parent=5 // pred_fallthru
        _
      %p438 = scmp.le.s32.totalorder 1, %s23
      %p439 = scmp.lt.s32.totalorder %s23, 3
      %p440 = pnand %p438, %p439
      %p441 = pneg %p440
      // Predicated region
      $region65: #{impala_cnn_forward.4} parent=5 // pred_check
        _
      $region66: #{impala_cnn_forward.4} parent=5 // pred_check_branch
        %443 = sbr.rel (%p440) target = $region68
      $region67: #{impala_cnn_forward.4} parent=5 // pred_region
        %s444 = ssub.s32 %s23, 1
        // Predicated region
        $region69: #{impala_cnn_forward.4} parent=67 // pred_check
          %p445 = pneg %p133
        $region70: #{impala_cnn_forward.4} parent=67 // pred_check_branch
          %447 = sbr.rel (%p445) target = $region72
        $region71: #{impala_cnn_forward.4} parent=67 // pred_region
          %448 = dma.done [#allocation5], 3072
        $region72: #{impala_cnn_forward.4} parent=67 // pred_fallthru
          _
        // Predicated region
        $region73: #{impala_cnn_forward.4} parent=67 // pred_check
          %p449 = pneg %p154
        $region74: #{impala_cnn_forward.4} parent=67 // pred_check_branch
          %451 = sbr.rel (%p449) target = $region76
        $region75: #{impala_cnn_forward.4} parent=67 // pred_region
          %452 = dma.done [#allocation7], 16
        $region76: #{impala_cnn_forward.4} parent=67 // pred_fallthru
          _
        // Predicated region
        $region77: #{impala_cnn_forward.4} parent=67 // pred_check
          %p453 = pneg %p175
        $region78: #{impala_cnn_forward.4} parent=67 // pred_check_branch
          %455 = sbr.rel (%p453) target = $region80
        $region79: #{impala_cnn_forward.4} parent=67 // pred_region
          %456 = dma.done [#allocation7], 3072
        $region80: #{impala_cnn_forward.4} parent=67 // pred_fallthru
          _
        // Predicated region
        $region81: #{impala_cnn_forward.4} parent=67 // pred_check
          %p457 = pneg %p196
        $region82: #{impala_cnn_forward.4} parent=67 // pred_check_branch
          %459 = sbr.rel (%p457) target = $region84
        $region83: #{impala_cnn_forward.4} parent=67 // pred_region
          %460 = dma.done [#allocation10], 16
        $region84: #{impala_cnn_forward.4} parent=67 // pred_fallthru
          _
        // Predicated region
        $region85: #{impala_cnn_forward.4} parent=67 // pred_check
          %p461 = pneg %p217
        $region86: #{impala_cnn_forward.4} parent=67 // pred_check_branch
          %463 = sbr.rel (%p461) target = $region88
        $region87: #{impala_cnn_forward.4} parent=67 // pred_region
          %464 = dma.done [#allocation10], 3072
        $region88: #{impala_cnn_forward.4} parent=67 // pred_fallthru
          _
        // Predicated region
        $region89: #{impala_cnn_forward.4} parent=67 // pred_check
          %p465 = pneg %p238
        $region90: #{impala_cnn_forward.4} parent=67 // pred_check_branch
          %467 = sbr.rel (%p465) target = $region92
        $region91: #{impala_cnn_forward.4} parent=67 // pred_region
          %468 = dma.done [#allocation13], 16
        $region92: #{impala_cnn_forward.4} parent=67 // pred_fallthru
          _
        // Predicated region
        $region93: #{impala_cnn_forward.4} parent=67 // pred_check
          %p469 = pneg %p259
        $region94: #{impala_cnn_forward.4} parent=67 // pred_check_branch
          %471 = sbr.rel (%p469) target = $region96
        $region95: #{impala_cnn_forward.4} parent=67 // pred_region
          %472 = dma.done [#allocation13], 3072
        $region96: #{impala_cnn_forward.4} parent=67 // pred_fallthru
          _
        // Predicated region
        $region97: #{impala_cnn_forward.4} parent=67 // pred_check
          %p473 = pneg %p280
        $region98: #{impala_cnn_forward.4} parent=67 // pred_check_branch
          %475 = sbr.rel (%p473) target = $region100
        $region99: #{impala_cnn_forward.4} parent=67 // pred_region
          %476 = dma.done [#allocation16], 16
        $region100: #{impala_cnn_forward.4} parent=67 // pred_fallthru
          _
        %p477 = scmp.lt.s32.totalorder %s28, 1
        %s478 = scalar_select %p477, %s28, 1
        %s479 = smul.addr %s478, 3
        %s480 = smul.addr %s479, 8
        %s481 = scalar_lea.vmem %s0, %s480
        %p482 = pneg %p49
        %p483 = pneg %p46
        %p484 = pneg %p70
        %p485 = pneg %p67
        %p486 = pneg %p91
        %p487 = pneg %p88
        %p488 = pneg %p112
        %p489 = pneg %p109
        %p490 = pneg %p133
        %p491 = pneg %p130
        %p492 = pneg %p154
        %p493 = pneg %p151
        %p494 = pneg %p175
        %p495 = pneg %p172
        %p496 = pneg %p196
        %p497 = pneg %p193
        %p498 = pneg %p217
        %p499 = pneg %p214
        %p500 = pneg %p238
        %p501 = pneg %p235
        %p502 = pneg %p259
        %p503 = pneg %p256
        %p504 = pneg %p280
        %p505 = pneg %p277
        %p506 = pneg %p306
        %p507 = pneg %p303
        %p508 = scmp.lt.s32.totalorder %s28, 1
        %s509 = scalar_select %p508, %s28, 1
        %s510 = smul.addr %s509, 2
        %s511 = smul.addr %s510, 8
        %s512 = scalar_lea.vmem %s12, %s511
        %p513 = scmp.lt.s32.totalorder %s28, 1
        %s514 = scalar_select %p513, %s28, 1
        %s515 = smul.addr %s514, 3
        %s516 = smul.addr %s515, 8
        %s517 = scalar_lea.vmem %s0, %s516
        %p518 = scmp.lt.s32.totalorder %s28, 1
        %s519 = scalar_select %p518, %s28, 1
        %s520 = smul.addr %s519, 2
        %s521 = smul.addr %s520, 8
        %s522 = scalar_lea.vmem %s12, %s521
        %v524 = vld [vmem:[%s517] sm:$0xff]
        %v525 = vld [vmem:[%s517 + $0x8] sm:$0xff]
        %v526 = vpack.c.bf16 %v525, %v524
        %v527 = vld [vmem:[%s1] sm:$0xf]
        %v528 = vld [vmem:[%s1 + $0x4] sm:$0xf]
        %v529 = vld [vmem:[%s1 + $0x8] sm:$0xf]
        %v530 = vld [vmem:[%s1 + $0xc] sm:$0xf]
        %v531 = vld [vmem:[%s1 + $0x10] sm:$0xf]
        %v532 = vld [vmem:[%s1 + $0x14] sm:$0xf]
        %v533 = vld [vmem:[%s1 + $0x18] sm:$0xf]
        %v534 = vld [vmem:[%s1 + $0x1c] sm:$0xf]
        %v535 = vld [vmem:[%s517 + $0x1] sm:$0xff]
        %v536 = vld [vmem:[%s517 + $0x9] sm:$0xff]
        %v537 = vpack.c.bf16 %v536, %v535
        %s538 = scalar_lea.vmem %s1, 32
        %v539 = vld [vmem:[%s538] sm:$0xf]
        %v540 = vld [vmem:[%s538 + $0x4] sm:$0xf]
        %v541 = vld [vmem:[%s538 + $0x8] sm:$0xf]
        %v542 = vld [vmem:[%s538 + $0xc] sm:$0xf]
        %v543 = vld [vmem:[%s538 + $0x10] sm:$0xf]
        %v544 = vld [vmem:[%s538 + $0x14] sm:$0xf]
        %v545 = vld [vmem:[%s538 + $0x18] sm:$0xf]
        %v546 = vld [vmem:[%s538 + $0x1c] sm:$0xf]
        %v555 = vunpack.c.l.b16 %v539
        %v556 = vunpack.c.l.b16 %v540
        %v557 = vunpack.c.l.b16 %v541
        %v558 = vunpack.c.l.b16 %v542
        %v559 = vunpack.c.l.b16 %v543
        %v560 = vunpack.c.l.b16 %v544
        %v561 = vunpack.c.l.b16 %v545
        %v562 = vunpack.c.l.b16 %v546
        %v563 = vpack.c.b16 %v556, %v555
        %v564 = vpack.c.b16 %v558, %v557
        %v565 = vpack.c.b16 %v560, %v559
        %v566 = vpack.c.b16 %v562, %v561
        %vm571 = vcmask 523264
        %v573 = vsel %vm571, %v537, 0
        %575 = vmatprep.subr.bf16.mxu0 0
        %576 = vmatpush1.bf16.msra.mxu0 %v563
        %577 = vmatprep.subr.bf16.mxu0 0
        %578 = vmatpush1.bf16.msra.mxu0 %v564
        %579 = vmatprep.subr.bf16.mxu0 0
        %580 = vmatpush1.bf16.msra.mxu0 %v565
        %581 = vmatprep.subr.bf16.mxu0 0
        %582 = vmatpush1.bf16.msra.mxu0 %v566
        %583 = vmatprep.subr.bf16.mxu0 0
        %584 = vmatpush1.bf16.msra.mxu0 0
        %585 = vmatprep.subr.bf16.mxu0 0
        %586 = vmatpush1.bf16.msra.mxu0 0
        %587 = vmatprep.subr.bf16.mxu0 0
        %588 = vmatpush1.bf16.msra.mxu0 0
        %589 = vmatprep.subr.bf16.mxu0 0
        %590 = vmatpush1.bf16.msra.mxu0 0
        %591 = vmatprep.subr.bf16.mxu0 0
        %592 = vmatpush1.bf16.msra.mxu0 0
        %593 = vmatprep.subr.bf16.mxu0 0
        %594 = vmatpush1.bf16.msra.mxu0 0
        %595 = vmatprep.subr.bf16.mxu0 0
        %596 = vmatpush1.bf16.msra.mxu0 0
        %597 = vmatprep.subr.bf16.mxu0 0
        %598 = vmatpush1.bf16.msra.mxu0 0
        %599 = vmatprep.subr.bf16.mxu0 0
        %600 = vmatpush1.bf16.msra.mxu0 0
        %601 = vmatprep.subr.bf16.mxu0 0
        %602 = vmatpush1.bf16.msra.mxu0 0
        %603 = vmatprep.subr.bf16.mxu0 0
        %604 = vmatpush1.bf16.msra.mxu0 0
        %605 = vmatprep.subr.bf16.mxu0 0
        %606 = vmatpush1.bf16.msra.mxu0 0
        %607 = vmatprep.mubr.bf16.mxu0 0
        %608 = vmatmul.mubr.bf16.gmra.mrb[0].mxu0 %v573
        %v609 = vpop.f32.mrb[0].mxu0
        %v610 = vadd.f32 0.0, %v609
        %v611 = vpop.f32.mrb[0].mxu0
        %v612 = vpop.f32.mrb[0].mxu0
        %v613 = vadd.f32 0.0, %v612
        %v614 = vpop.f32.mrb[0].mxu0
        %615 = vdwg.mxu0
        %v624 = vunpack.c.l.b16 %v527
        %v625 = vunpack.c.l.b16 %v528
        %v626 = vunpack.c.l.b16 %v529
        %v627 = vunpack.c.l.b16 %v530
        %v628 = vunpack.c.l.b16 %v531
        %v629 = vunpack.c.l.b16 %v532
        %v630 = vunpack.c.l.b16 %v533
        %v631 = vunpack.c.l.b16 %v534
        %v632 = vpack.c.b16 %v625, %v624
        %v633 = vpack.c.b16 %v627, %v626
        %v634 = vpack.c.b16 %v629, %v628
        %v635 = vpack.c.b16 %v631, %v630
        %v641 = vsel %vm571, %v526, 0
        %643 = vmatprep.subr.bf16.mxu0 0
        %644 = vmatpush1.bf16.msra.mxu0 %v632
        %645 = vmatprep.subr.bf16.mxu0 0
        %646 = vmatpush1.bf16.msra.mxu0 %v633
        %647 = vmatprep.subr.bf16.mxu0 0
        %648 = vmatpush1.bf16.msra.mxu0 %v634
        %649 = vmatprep.subr.bf16.mxu0 0
        %650 = vmatpush1.bf16.msra.mxu0 %v635
        %651 = vmatprep.subr.bf16.mxu0 0
        %652 = vmatpush1.bf16.msra.mxu0 0
        %653 = vmatprep.subr.bf16.mxu0 0
        %654 = vmatpush1.bf16.msra.mxu0 0
        %655 = vmatprep.subr.bf16.mxu0 0
        %656 = vmatpush1.bf16.msra.mxu0 0
        %657 = vmatprep.subr.bf16.mxu0 0
        %658 = vmatpush1.bf16.msra.mxu0 0
        %659 = vmatprep.subr.bf16.mxu0 0
        %660 = vmatpush1.bf16.msra.mxu0 0
        %661 = vmatprep.subr.bf16.mxu0 0
        %662 = vmatpush1.bf16.msra.mxu0 0
        %663 = vmatprep.subr.bf16.mxu0 0
        %664 = vmatpush1.bf16.msra.mxu0 0
        %665 = vmatprep.subr.bf16.mxu0 0
        %666 = vmatpush1.bf16.msra.mxu0 0
        %667 = vmatprep.subr.bf16.mxu0 0
        %668 = vmatpush1.bf16.msra.mxu0 0
        %669 = vmatprep.subr.bf16.mxu0 0
        %670 = vmatpush1.bf16.msra.mxu0 0
        %671 = vmatprep.subr.bf16.mxu0 0
        %672 = vmatpush1.bf16.msra.mxu0 0
        %673 = vmatprep.subr.bf16.mxu0 0
        %674 = vmatpush1.bf16.msra.mxu0 0
        %675 = vmatprep.mubr.bf16.mxu0 0
        %676 = vmatmul.mubr.bf16.gmra.mrb[0].mxu0 %v641
        %v677 = vpop.f32.mrb[0].mxu0
        %v678 = vadd.f32 %v610, %v677
        %v679 = vpop.f32.mrb[0].mxu0
        %v680 = vpop.f32.mrb[0].mxu0
        %v681 = vadd.f32 %v613, %v680
        %v682 = vpop.f32.mrb[0].mxu0
        %683 = vdwg.mxu0
        %v684 = vld [vmem:[%s517 + $0x2] sm:$0xff]
        %v685 = vld [vmem:[%s517 + $0xa] sm:$0xff]
        %v686 = vpack.c.bf16 %v685, %v684
        %s687 = scalar_lea.vmem %s1, 64
        %v688 = vld [vmem:[%s687] sm:$0xf]
        %v689 = vld [vmem:[%s687 + $0x4] sm:$0xf]
        %v690 = vld [vmem:[%s687 + $0x8] sm:$0xf]
        %v691 = vld [vmem:[%s687 + $0xc] sm:$0xf]
        %v692 = vld [vmem:[%s687 + $0x10] sm:$0xf]
        %v693 = vld [vmem:[%s687 + $0x14] sm:$0xf]
        %v694 = vld [vmem:[%s687 + $0x18] sm:$0xf]
        %v695 = vld [vmem:[%s687 + $0x1c] sm:$0xf]
        %v704 = vunpack.c.l.b16 %v688
        %v705 = vunpack.c.l.b16 %v689
        %v706 = vunpack.c.l.b16 %v690
        %v707 = vunpack.c.l.b16 %v691
        %v708 = vunpack.c.l.b16 %v692
        %v709 = vunpack.c.l.b16 %v693
        %v710 = vunpack.c.l.b16 %v694
        %v711 = vunpack.c.l.b16 %v695
        %v712 = vpack.c.b16 %v705, %v704
        %v713 = vpack.c.b16 %v707, %v706
        %v714 = vpack.c.b16 %v709, %v708
        %v715 = vpack.c.b16 %v711, %v710
        %v721 = vsel %vm571, %v686, 0
        %723 = vmatprep.subr.bf16.mxu0 0
        %724 = vmatpush1.bf16.msra.mxu0 %v712
        %725 = vmatprep.subr.bf16.mxu0 0
        %726 = vmatpush1.bf16.msra.mxu0 %v713
        %727 = vmatprep.subr.bf16.mxu0 0
        %728 = vmatpush1.bf16.msra.mxu0 %v714
        %729 = vmatprep.subr.bf16.mxu0 0
        %730 = vmatpush1.bf16.msra.mxu0 %v715
        %731 = vmatprep.subr.bf16.mxu0 0
        %732 = vmatpush1.bf16.msra.mxu0 0
        %733 = vmatprep.subr.bf16.mxu0 0
        %734 = vmatpush1.bf16.msra.mxu0 0
        %735 = vmatprep.subr.bf16.mxu0 0
        %736 = vmatpush1.bf16.msra.mxu0 0
        %737 = vmatprep.subr.bf16.mxu0 0
        %738 = vmatpush1.bf16.msra.mxu0 0
        %739 = vmatprep.subr.bf16.mxu0 0
        %740 = vmatpush1.bf16.msra.mxu0 0
        %741 = vmatprep.subr.bf16.mxu0 0
        %742 = vmatpush1.bf16.msra.mxu0 0
        %743 = vmatprep.subr.bf16.mxu0 0
        %744 = vmatpush1.bf16.msra.mxu0 0
        %745 = vmatprep.subr.bf16.mxu0 0
        %746 = vmatpush1.bf16.msra.mxu0 0
        %747 = vmatprep.subr.bf16.mxu0 0
        %748 = vmatpush1.bf16.msra.mxu0 0
        %749 = vmatprep.subr.bf16.mxu0 0
        %750 = vmatpush1.bf16.msra.mxu0 0
        %751 = vmatprep.subr.bf16.mxu0 0
        %752 = vmatpush1.bf16.msra.mxu0 0
        %753 = vmatprep.subr.bf16.mxu0 0
        %754 = vmatpush1.bf16.msra.mxu0 0
        %755 = vmatprep.mubr.bf16.mxu0 0
        %756 = vmatmul.mubr.bf16.gmra.mrb[0].mxu0 %v721
        %v757 = vpop.f32.mrb[0].mxu0
        %v758 = vadd.f32 0.0, %v757
        %v759 = vpop.f32.mrb[0].mxu0
        %v760 = vpop.f32.mrb[0].mxu0
        %v761 = vadd.f32 0.0, %v760
        %v762 = vpop.f32.mrb[0].mxu0
        %763 = vdwg.mxu0
        %v764 = vadd.f32 %v678, %v758
        %v765 = vadd.f32 %v681, %v761
        %s766 = scalar_lea.vmem %s1, 96
        %v767 = vld [vmem:[%s766] sm:$0xf]
        %v768 = vld [vmem:[%s766 + $0x4] sm:$0xf]
        %v769 = vld [vmem:[%s766 + $0x8] sm:$0xf]
        %v770 = vld [vmem:[%s766 + $0xc] sm:$0xf]
        %v771 = vld [vmem:[%s766 + $0x10] sm:$0xf]
        %v772 = vld [vmem:[%s766 + $0x14] sm:$0xf]
        %v773 = vld [vmem:[%s766 + $0x18] sm:$0xf]
        %v774 = vld [vmem:[%s766 + $0x1c] sm:$0xf]
        %s775 = scalar_lea.vmem %s1, 128
        %v776 = vld [vmem:[%s775] sm:$0xf]
        %v777 = vld [vmem:[%s775 + $0x4] sm:$0xf]
        %v778 = vld [vmem:[%s775 + $0x8] sm:$0xf]
        %v779 = vld [vmem:[%s775 + $0xc] sm:$0xf]
        %v780 = vld [vmem:[%s775 + $0x10] sm:$0xf]
        %v781 = vld [vmem:[%s775 + $0x14] sm:$0xf]
        %v782 = vld [vmem:[%s775 + $0x18] sm:$0xf]
        %v783 = vld [vmem:[%s775 + $0x1c] sm:$0xf]
        %v792 = vunpack.c.l.b16 %v776
        %v793 = vunpack.c.l.b16 %v777
        %v794 = vunpack.c.l.b16 %v778
        %v795 = vunpack.c.l.b16 %v779
        %v796 = vunpack.c.l.b16 %v780
        %v797 = vunpack.c.l.b16 %v781
        %v798 = vunpack.c.l.b16 %v782
        %v799 = vunpack.c.l.b16 %v783
        %v800 = vpack.c.b16 %v793, %v792
        %v801 = vpack.c.b16 %v795, %v794
        %v802 = vpack.c.b16 %v797, %v796
        %v803 = vpack.c.b16 %v799, %v798
        %808 = vmatprep.subr.bf16.mxu0 0
        %809 = vmatpush1.bf16.msra.mxu0 %v800
        %810 = vmatprep.subr.bf16.mxu0 0
        %811 = vmatpush1.bf16.msra.mxu0 %v801
        %812 = vmatprep.subr.bf16.mxu0 0
        %813 = vmatpush1.bf16.msra.mxu0 %v802
        %814 = vmatprep.subr.bf16.mxu0 0
        %815 = vmatpush1.bf16.msra.mxu0 %v803
        %816 = vmatprep.subr.bf16.mxu0 0
        %817 = vmatpush1.bf16.msra.mxu0 0
        %818 = vmatprep.subr.bf16.mxu0 0
        %819 = vmatpush1.bf16.msra.mxu0 0
        %820 = vmatprep.subr.bf16.mxu0 0
        %821 = vmatpush1.bf16.msra.mxu0 0
        %822 = vmatprep.subr.bf16.mxu0 0
        %823 = vmatpush1.bf16.msra.mxu0 0
        %824 = vmatprep.subr.bf16.mxu0 0
        %825 = vmatpush1.bf16.msra.mxu0 0
        %826 = vmatprep.subr.bf16.mxu0 0
        %827 = vmatpush1.bf16.msra.mxu0 0
        %828 = vmatprep.subr.bf16.mxu0 0
        %829 = vmatpush1.bf16.msra.mxu0 0
        %830 = vmatprep.subr.bf16.mxu0 0
        %831 = vmatpush1.bf16.msra.mxu0 0
        %832 = vmatprep.subr.bf16.mxu0 0
        %833 = vmatpush1.bf16.msra.mxu0 0
        %834 = vmatprep.subr.bf16.mxu0 0
        %835 = vmatpush1.bf16.msra.mxu0 0
        %836 = vmatprep.subr.bf16.mxu0 0
        %837 = vmatpush1.bf16.msra.mxu0 0
        %838 = vmatprep.subr.bf16.mxu0 0
        %839 = vmatpush1.bf16.msra.mxu0 0
        %840 = vmatprep.mubr.bf16.mxu0 0
        %841 = vmatmul.mubr.bf16.gmra.mrb[0].mxu0 %v573
        %v842 = vpop.f32.mrb[0].mxu0
        %v843 = vadd.f32 0.0, %v842
        %v844 = vpop.f32.mrb[0].mxu0
        %v845 = vpop.f32.mrb[0].mxu0
        %v846 = vadd.f32 0.0, %v845
        %v847 = vpop.f32.mrb[0].mxu0
        %848 = vdwg.mxu0
        %v857 = vunpack.c.l.b16 %v767
        %v858 = vunpack.c.l.b16 %v768
        %v859 = vunpack.c.l.b16 %v769
        %v860 = vunpack.c.l.b16 %v770
        %v861 = vunpack.c.l.b16 %v771
        %v862 = vunpack.c.l.b16 %v772
        %v863 = vunpack.c.l.b16 %v773
        %v864 = vunpack.c.l.b16 %v774
        %v865 = vpack.c.b16 %v858, %v857
        %v866 = vpack.c.b16 %v860, %v859
        %v867 = vpack.c.b16 %v862, %v861
        %v868 = vpack.c.b16 %v864, %v863
        %873 = vmatprep.subr.bf16.mxu0 0
        %874 = vmatpush1.bf16.msra.mxu0 %v865
        %875 = vmatprep.subr.bf16.mxu0 0
        %876 = vmatpush1.bf16.msra.mxu0 %v866
        %877 = vmatprep.subr.bf16.mxu0 0
        %878 = vmatpush1.bf16.msra.mxu0 %v867
        %879 = vmatprep.subr.bf16.mxu0 0
        %880 = vmatpush1.bf16.msra.mxu0 %v868
        %881 = vmatprep.subr.bf16.mxu0 0
        %882 = vmatpush1.bf16.msra.mxu0 0
        %883 = vmatprep.subr.bf16.mxu0 0
        %884 = vmatpush1.bf16.msra.mxu0 0
        %885 = vmatprep.subr.bf16.mxu0 0
        %886 = vmatpush1.bf16.msra.mxu0 0
        %887 = vmatprep.subr.bf16.mxu0 0
        %888 = vmatpush1.bf16.msra.mxu0 0
        %889 = vmatprep.subr.bf16.mxu0 0
        %890 = vmatpush1.bf16.msra.mxu0 0
        %891 = vmatprep.subr.bf16.mxu0 0
        %892 = vmatpush1.bf16.msra.mxu0 0
        %893 = vmatprep.subr.bf16.mxu0 0
        %894 = vmatpush1.bf16.msra.mxu0 0
        %895 = vmatprep.subr.bf16.mxu0 0
        %896 = vmatpush1.bf16.msra.mxu0 0
        %897 = vmatprep.subr.bf16.mxu0 0
        %898 = vmatpush1.bf16.msra.mxu0 0
        %899 = vmatprep.subr.bf16.mxu0 0
        %900 = vmatpush1.bf16.msra.mxu0 0
        %901 = vmatprep.subr.bf16.mxu0 0
        %902 = vmatpush1.bf16.msra.mxu0 0
        %903 = vmatprep.subr.bf16.mxu0 0
        %904 = vmatpush1.bf16.msra.mxu0 0
        %905 = vmatprep.mubr.bf16.mxu0 0
        %906 = vmatmul.mubr.bf16.gmra.mrb[0].mxu0 %v641
        %v907 = vpop.f32.mrb[0].mxu0
        %v908 = vadd.f32 %v843, %v907
        %v909 = vpop.f32.mrb[0].mxu0
        %v910 = vpop.f32.mrb[0].mxu0
        %v911 = vadd.f32 %v846, %v910
        %v912 = vpop.f32.mrb[0].mxu0
        %913 = vdwg.mxu0
        %s914 = scalar_lea.vmem %s1, 160
        %v915 = vld [vmem:[%s914] sm:$0xf]
        %v916 = vld [vmem:[%s914 + $0x4] sm:$0xf]
        %v917 = vld [vmem:[%s914 + $0x8] sm:$0xf]
        %v918 = vld [vmem:[%s914 + $0xc] sm:$0xf]
        %v919 = vld [vmem:[%s914 + $0x10] sm:$0xf]
        %v920 = vld [vmem:[%s914 + $0x14] sm:$0xf]
        %v921 = vld [vmem:[%s914 + $0x18] sm:$0xf]
        %v922 = vld [vmem:[%s914 + $0x1c] sm:$0xf]
        %v931 = vunpack.c.l.b16 %v915
        %v932 = vunpack.c.l.b16 %v916
        %v933 = vunpack.c.l.b16 %v917
        %v934 = vunpack.c.l.b16 %v918
        %v935 = vunpack.c.l.b16 %v919
        %v936 = vunpack.c.l.b16 %v920
        %v937 = vunpack.c.l.b16 %v921
        %v938 = vunpack.c.l.b16 %v922
        %v939 = vpack.c.b16 %v932, %v931
        %v940 = vpack.c.b16 %v934, %v933
        %v941 = vpack.c.b16 %v936, %v935
        %v942 = vpack.c.b16 %v938, %v937
        %947 = vmatprep.subr.bf16.mxu0 0
        %948 = vmatpush1.bf16.msra.mxu0 %v939
        %949 = vmatprep.subr.bf16.mxu0 0
        %950 = vmatpush1.bf16.msra.mxu0 %v940
        %951 = vmatprep.subr.bf16.mxu0 0
        %952 = vmatpush1.bf16.msra.mxu0 %v941
        %953 = vmatprep.subr.bf16.mxu0 0
        %954 = vmatpush1.bf16.msra.mxu0 %v942
        %955 = vmatprep.subr.bf16.mxu0 0
        %956 = vmatpush1.bf16.msra.mxu0 0
        %957 = vmatprep.subr.bf16.mxu0 0
        %958 = vmatpush1.bf16.msra.mxu0 0
        %959 = vmatprep.subr.bf16.mxu0 0
        %960 = vmatpush1.bf16.msra.mxu0 0
        %961 = vmatprep.subr.bf16.mxu0 0
        %962 = vmatpush1.bf16.msra.mxu0 0
        %963 = vmatprep.subr.bf16.mxu0 0
        %964 = vmatpush1.bf16.msra.mxu0 0
        %965 = vmatprep.subr.bf16.mxu0 0
        %966 = vmatpush1.bf16.msra.mxu0 0
        %967 = vmatprep.subr.bf16.mxu0 0
        %968 = vmatpush1.bf16.msra.mxu0 0
        %969 = vmatprep.subr.bf16.mxu0 0
        %970 = vmatpush1.bf16.msra.mxu0 0
        %971 = vmatprep.subr.bf16.mxu0 0
        %972 = vmatpush1.bf16.msra.mxu0 0
        %973 = vmatprep.subr.bf16.mxu0 0
        %974 = vmatpush1.bf16.msra.mxu0 0
        %975 = vmatprep.subr.bf16.mxu0 0
        %976 = vmatpush1.bf16.msra.mxu0 0
        %977 = vmatprep.subr.bf16.mxu0 0
        %978 = vmatpush1.bf16.msra.mxu0 0
        %979 = vmatprep.mubr.bf16.mxu0 0
        %980 = vmatmul.mubr.bf16.gmra.mrb[0].mxu0 %v721
        %v981 = vpop.f32.mrb[0].mxu0
        %v982 = vadd.f32 0.0, %v981
        %v983 = vpop.f32.mrb[0].mxu0
        %v984 = vpop.f32.mrb[0].mxu0
        %v985 = vadd.f32 0.0, %v984
        %v986 = vpop.f32.mrb[0].mxu0
        %987 = vdwg.mxu0
        %v988 = vadd.f32 %v908, %v982
        %v989 = vadd.f32 %v911, %v985
        %s990 = scalar_lea.vmem %s1, 192
        %v991 = vld [vmem:[%s990] sm:$0xf]
        %v992 = vld [vmem:[%s990 + $0x4] sm:$0xf]
        %v993 = vld [vmem:[%s990 + $0x8] sm:$0xf]
        %v994 = vld [vmem:[%s990 + $0xc] sm:$0xf]
        %v995 = vld [vmem:[%s990 + $0x10] sm:$0xf]
        %v996 = vld [vmem:[%s990 + $0x14] sm:$0xf]
        %v997 = vld [vmem:[%s990 + $0x18] sm:$0xf]
        %v998 = vld [vmem:[%s990 + $0x1c] sm:$0xf]
        %s999 = scalar_lea.vmem %s1, 224
        %v1000 = vld [vmem:[%s999] sm:$0xf]
        %v1001 = vld [vmem:[%s999 + $0x4] sm:$0xf]
        %v1002 = vld [vmem:[%s999 + $0x8] sm:$0xf]
        %v1003 = vld [vmem:[%s999 + $0xc] sm:$0xf]
        %v1004 = vld [vmem:[%s999 + $0x10] sm:$0xf]
        %v1005 = vld [vmem:[%s999 + $0x14] sm:$0xf]
        %v1006 = vld [vmem:[%s999 + $0x18] sm:$0xf]
        %v1007 = vld [vmem:[%s999 + $0x1c] sm:$0xf]
        %v1016 = vunpack.c.l.b16 %v1000
        %v1017 = vunpack.c.l.b16 %v1001
        %v1018 = vunpack.c.l.b16 %v1002
        %v1019 = vunpack.c.l.b16 %v1003
        %v1020 = vunpack.c.l.b16 %v1004
        %v1021 = vunpack.c.l.b16 %v1005
        %v1022 = vunpack.c.l.b16 %v1006
        %v1023 = vunpack.c.l.b16 %v1007
        %v1024 = vpack.c.b16 %v1017, %v1016
        %v1025 = vpack.c.b16 %v1019, %v1018
        %v1026 = vpack.c.b16 %v1021, %v1020
        %v1027 = vpack.c.b16 %v1023, %v1022
        %1032 = vmatprep.subr.bf16.mxu0 0
        %1033 = vmatpush1.bf16.msra.mxu0 %v1024
        %1034 = vmatprep.subr.bf16.mxu0 0
        %1035 = vmatpush1.bf16.msra.mxu0 %v1025
        %1036 = vmatprep.subr.bf16.mxu0 0
        %1037 = vmatpush1.bf16.msra.mxu0 %v1026
        %1038 = vmatprep.subr.bf16.mxu0 0
        %1039 = vmatpush1.bf16.msra.mxu0 %v1027
        %1040 = vmatprep.subr.bf16.mxu0 0
        %1041 = vmatpush1.bf16.msra.mxu0 0
        %1042 = vmatprep.subr.bf16.mxu0 0
        %1043 = vmatpush1.bf16.msra.mxu0 0
        %1044 = vmatprep.subr.bf16.mxu0 0
        %1045 = vmatpush1.bf16.msra.mxu0 0
        %1046 = vmatprep.subr.bf16.mxu0 0
        %1047 = vmatpush1.bf16.msra.mxu0 0
        %1048 = vmatprep.subr.bf16.mxu0 0
        %1049 = vmatpush1.bf16.msra.mxu0 0
        %1050 = vmatprep.subr.bf16.mxu0 0
        %1051 = vmatpush1.bf16.msra.mxu0 0
        %1052 = vmatprep.subr.bf16.mxu0 0
        %1053 = vmatpush1.bf16.msra.mxu0 0
        %1054 = vmatprep.subr.bf16.mxu0 0
        %1055 = vmatpush1.bf16.msra.mxu0 0
        %1056 = vmatprep.subr.bf16.mxu0 0
        %1057 = vmatpush1.bf16.msra.mxu0 0
        %1058 = vmatprep.subr.bf16.mxu0 0
        %1059 = vmatpush1.bf16.msra.mxu0 0
        %1060 = vmatprep.subr.bf16.mxu0 0
        %1061 = vmatpush1.bf16.msra.mxu0 0
        %1062 = vmatprep.subr.bf16.mxu0 0
        %1063 = vmatpush1.bf16.msra.mxu0 0
        %1064 = vmatprep.mubr.bf16.mxu0 0
        %1065 = vmatmul.mubr.bf16.gmra.mrb[0].mxu0 %v573
        %v1066 = vpop.f32.mrb[0].mxu0
        %v1067 = vadd.f32 0.0, %v1066
        %v1068 = vpop.f32.mrb[0].mxu0
        %v1069 = vpop.f32.mrb[0].mxu0
        %v1070 = vadd.f32 0.0, %v1069
        %v1071 = vpop.f32.mrb[0].mxu0
        %1072 = vdwg.mxu0
        %v1081 = vunpack.c.l.b16 %v991
        %v1082 = vunpack.c.l.b16 %v992
        %v1083 = vunpack.c.l.b16 %v993
        %v1084 = vunpack.c.l.b16 %v994
        %v1085 = vunpack.c.l.b16 %v995
        %v1086 = vunpack.c.l.b16 %v996
        %v1087 = vunpack.c.l.b16 %v997
        %v1088 = vunpack.c.l.b16 %v998
        %v1089 = vpack.c.b16 %v1082, %v1081
        %v1090 = vpack.c.b16 %v1084, %v1083
        %v1091 = vpack.c.b16 %v1086, %v1085
        %v1092 = vpack.c.b16 %v1088, %v1087
        %1097 = vmatprep.subr.bf16.mxu0 0
        %1098 = vmatpush1.bf16.msra.mxu0 %v1089
        %1099 = vmatprep.subr.bf16.mxu0 0
        %1100 = vmatpush1.bf16.msra.mxu0 %v1090
        %1101 = vmatprep.subr.bf16.mxu0 0
        %1102 = vmatpush1.bf16.msra.mxu0 %v1091
        %1103 = vmatprep.subr.bf16.mxu0 0
        %1104 = vmatpush1.bf16.msra.mxu0 %v1092
        %1105 = vmatprep.subr.bf16.mxu0 0
        %1106 = vmatpush1.bf16.msra.mxu0 0
        %1107 = vmatprep.subr.bf16.mxu0 0
        %1108 = vmatpush1.bf16.msra.mxu0 0
        %1109 = vmatprep.subr.bf16.mxu0 0
        %1110 = vmatpush1.bf16.msra.mxu0 0
        %1111 = vmatprep.subr.bf16.mxu0 0
        %1112 = vmatpush1.bf16.msra.mxu0 0
        %1113 = vmatprep.subr.bf16.mxu0 0
        %1114 = vmatpush1.bf16.msra.mxu0 0
        %1115 = vmatprep.subr.bf16.mxu0 0
        %1116 = vmatpush1.bf16.msra.mxu0 0
        %1117 = vmatprep.subr.bf16.mxu0 0
        %1118 = vmatpush1.bf16.msra.mxu0 0
        %1119 = vmatprep.subr.bf16.mxu0 0
        %1120 = vmatpush1.bf16.msra.mxu0 0
        %1121 = vmatprep.subr.bf16.mxu0 0
        %1122 = vmatpush1.bf16.msra.mxu0 0
        %1123 = vmatprep.subr.bf16.mxu0 0
        %1124 = vmatpush1.bf16.msra.mxu0 0
        %1125 = vmatprep.subr.bf16.mxu0 0
        %1126 = vmatpush1.bf16.msra.mxu0 0
        %1127 = vmatprep.subr.bf16.mxu0 0
        %1128 = vmatpush1.bf16.msra.mxu0 0
        %1129 = vmatprep.mubr.bf16.mxu0 0
        %1130 = vmatmul.mubr.bf16.gmra.mrb[0].mxu0 %v641
        %v1131 = vpop.f32.mrb[0].mxu0
        %v1132 = vadd.f32 %v1067, %v1131
        %v1133 = vpop.f32.mrb[0].mxu0
        %v1134 = vpop.f32.mrb[0].mxu0
        %v1135 = vadd.f32 %v1070, %v1134
        %v1136 = vpop.f32.mrb[0].mxu0
        %1137 = vdwg.mxu0
        %s1138 = scalar_lea.vmem %s1, 256
        %v1139 = vld [vmem:[%s1138] sm:$0xf]
        %v1140 = vld [vmem:[%s1138 + $0x4] sm:$0xf]
        %v1141 = vld [vmem:[%s1138 + $0x8] sm:$0xf]
        %v1142 = vld [vmem:[%s1138 + $0xc] sm:$0xf]
        %v1143 = vld [vmem:[%s1138 + $0x10] sm:$0xf]
        %v1144 = vld [vmem:[%s1138 + $0x14] sm:$0xf]
        %v1145 = vld [vmem:[%s1138 + $0x18] sm:$0xf]
        %v1146 = vld [vmem:[%s1138 + $0x1c] sm:$0xf]
        %v1155 = vunpack.c.l.b16 %v1139
        %v1156 = vunpack.c.l.b16 %v1140
        %v1157 = vunpack.c.l.b16 %v1141
        %v1158 = vunpack.c.l.b16 %v1142
        %v1159 = vunpack.c.l.b16 %v1143
        %v1160 = vunpack.c.l.b16 %v1144
        %v1161 = vunpack.c.l.b16 %v1145
        %v1162 = vunpack.c.l.b16 %v1146
        %v1163 = vpack.c.b16 %v1156, %v1155
        %v1164 = vpack.c.b16 %v1158, %v1157
        %v1165 = vpack.c.b16 %v1160, %v1159
        %v1166 = vpack.c.b16 %v1162, %v1161
        %1171 = vmatprep.subr.bf16.mxu0 0
        %1172 = vmatpush1.bf16.msra.mxu0 %v1163
        %1173 = vmatprep.subr.bf16.mxu0 0
        %1174 = vmatpush1.bf16.msra.mxu0 %v1164
        %1175 = vmatprep.subr.bf16.mxu0 0
        %1176 = vmatpush1.bf16.msra.mxu0 %v1165
        %1177 = vmatprep.subr.bf16.mxu0 0
        %1178 = vmatpush1.bf16.msra.mxu0 %v1166
        %1179 = vmatprep.subr.bf16.mxu0 0
        %1180 = vmatpush1.bf16.msra.mxu0 0
        %1181 = vmatprep.subr.bf16.mxu0 0
        %1182 = vmatpush1.bf16.msra.mxu0 0
        %1183 = vmatprep.subr.bf16.mxu0 0
        %1184 = vmatpush1.bf16.msra.mxu0 0
        %1185 = vmatprep.subr.bf16.mxu0 0
        %1186 = vmatpush1.bf16.msra.mxu0 0
        %1187 = vmatprep.subr.bf16.mxu0 0
        %1188 = vmatpush1.bf16.msra.mxu0 0
        %1189 = vmatprep.subr.bf16.mxu0 0
        %1190 = vmatpush1.bf16.msra.mxu0 0
        %1191 = vmatprep.subr.bf16.mxu0 0
        %1192 = vmatpush1.bf16.msra.mxu0 0
        %1193 = vmatprep.subr.bf16.mxu0 0
        %1194 = vmatpush1.bf16.msra.mxu0 0
        %1195 = vmatprep.subr.bf16.mxu0 0
        %1196 = vmatpush1.bf16.msra.mxu0 0
        %1197 = vmatprep.subr.bf16.mxu0 0
        %1198 = vmatpush1.bf16.msra.mxu0 0
        %1199 = vmatprep.subr.bf16.mxu0 0
        %1200 = vmatpush1.bf16.msra.mxu0 0
        %1201 = vmatprep.subr.bf16.mxu0 0
        %1202 = vmatpush1.bf16.msra.mxu0 0
        %1203 = vmatprep.mubr.bf16.mxu0 0
        %1204 = vmatmul.mubr.bf16.gmra.mrb[0].mxu0 %v721
        %v1205 = vpop.f32.mrb[0].mxu0
        %v1206 = vadd.f32 0.0, %v1205
        %v1207 = vpop.f32.mrb[0].mxu0
        %v1208 = vpop.f32.mrb[0].mxu0
        %v1209 = vadd.f32 0.0, %v1208
        %v1210 = vpop.f32.mrb[0].mxu0
        %1211 = vdwg.mxu0
        %v1212 = vadd.f32 %v1132, %v1206
        %v1213 = vadd.f32 %v1135, %v1209
        %v1214 = vmax.f32 %v764, %v988
        %v1215 = vmax.f32 %v765, %v989
        %v1216 = vmax.f32 %v1214, %v1212
        %v1217 = vmax.f32 %v1215, %v1213
        %v1218 = vld [vmem:[%s3] sm:$0xff]
        %vm1219 = vcmask 130048
        %v1221 = vsel %vm1219, %v1218, 0
        %1223 = vmatprep.subr.mxu0 0.0
        %1224 = vmatpush1.msra.mxu0 %v1216
        %1225 = vmatprep.subr.mxu0 0.0
        %1226 = vmatpush1.msra.mxu0 %v1217
        %1227 = vmatprep.subr.mxu0 0.0
        %1228 = vmatpush1.msra.mxu0 0.0
        %1229 = vmatprep.subr.mxu0 0.0
        %1230 = vmatpush1.msra.mxu0 0.0
        %1231 = vmatprep.subr.mxu0 0.0
        %1232 = vmatpush1.msra.mxu0 0.0
        %1233 = vmatprep.subr.mxu0 0.0
        %1234 = vmatpush1.msra.mxu0 0.0
        %1235 = vmatprep.subr.mxu0 0.0
        %1236 = vmatpush1.msra.mxu0 0.0
        %1237 = vmatprep.subr.mxu0 0.0
        %1238 = vmatpush1.msra.mxu0 0.0
        %1239 = vmatprep.subr.mxu0 0.0
        %1240 = vmatpush1.msra.mxu0 0.0
        %1241 = vmatprep.subr.mxu0 0.0
        %1242 = vmatpush1.msra.mxu0 0.0
        %1243 = vmatprep.subr.mxu0 0.0
        %1244 = vmatpush1.msra.mxu0 0.0
        %1245 = vmatprep.subr.mxu0 0.0
        %1246 = vmatpush1.msra.mxu0 0.0
        %1247 = vmatprep.subr.mxu0 0.0
        %1248 = vmatpush1.msra.mxu0 0.0
        %1249 = vmatprep.subr.mxu0 0.0
        %1250 = vmatpush1.msra.mxu0 0.0
        %1251 = vmatprep.subr.mxu0 0.0
        %1252 = vmatpush1.msra.mxu0 0.0
        %1253 = vmatprep.subr.mxu0 0.0
        %1254 = vmatpush1.msra.mxu0 0.0
        %1255 = vmatprep.subr.mxu0 0.0
        %1256 = vmatpush1.msra.mxu0 0.0
        %1257 = vmatprep.subr.mxu0 0.0
        %1258 = vmatpush1.msra.mxu0 0.0
        %1259 = vmatprep.subr.mxu0 0.0
        %1260 = vmatpush1.msra.mxu0 0.0
        %1261 = vmatprep.subr.mxu0 0.0
        %1262 = vmatpush1.msra.mxu0 0.0
        %1263 = vmatprep.subr.mxu0 0.0
        %1264 = vmatpush1.msra.mxu0 0.0
        %1265 = vmatprep.subr.mxu0 0.0
        %1266 = vmatpush1.msra.mxu0 0.0
        %1267 = vmatprep.subr.mxu0 0.0
        %1268 = vmatpush1.msra.mxu0 0.0
        %1269 = vmatprep.subr.mxu0 0.0
        %1270 = vmatpush1.msra.mxu0 0.0
        %1271 = vmatprep.subr.mxu0 0.0
        %1272 = vmatpush1.msra.mxu0 0.0
        %1273 = vmatprep.subr.mxu0 0.0
        %1274 = vmatpush1.msra.mxu0 0.0
        %1275 = vmatprep.subr.mxu0 0.0
        %1276 = vmatpush1.msra.mxu0 0.0
        %1277 = vmatprep.subr.mxu0 0.0
        %1278 = vmatpush1.msra.mxu0 0.0
        %1279 = vmatprep.subr.mxu0 0.0
        %1280 = vmatpush1.msra.mxu0 0.0
        %1281 = vmatprep.subr.mxu0 0.0
        %1282 = vmatpush1.msra.mxu0 0.0
        %1283 = vmatprep.subr.mxu0 0.0
        %1284 = vmatpush1.msra.mxu0 0.0
        %1285 = vmatprep.subr.mxu0 0.0
        %1286 = vmatpush1.msra.mxu0 0.0
        %1287 = vmatprep.mubr.f32.mxu0 0.0
        %1288 = vmatmul.mubr.f32.gmra.mrb[0].mxu0 %v1221
        %v1289 = vpop.f32.mrb[0].mxu0
        %v1290 = vadd.f32 0.0, %v1289
        %v1291 = vpop.f32.mrb[0].mxu0
        %1292 = vdwg.mxu0
        %s1293 = scalar_lea.vmem %s3, 8
        %v1294 = vld [vmem:[%s1293] sm:$0xff]
        %v1296 = vsel %vm1219, %v1294, 0
        %1298 = vmatprep.subr.mxu0 0.0
        %1299 = vmatpush1.msra.mxu0 %v1216
        %1300 = vmatprep.subr.mxu0 0.0
        %1301 = vmatpush1.msra.mxu0 %v1217
        %1302 = vmatprep.subr.mxu0 0.0
        %1303 = vmatpush1.msra.mxu0 0.0
        %1304 = vmatprep.subr.mxu0 0.0
        %1305 = vmatpush1.msra.mxu0 0.0
        %1306 = vmatprep.subr.mxu0 0.0
        %1307 = vmatpush1.msra.mxu0 0.0
        %1308 = vmatprep.subr.mxu0 0.0
        %1309 = vmatpush1.msra.mxu0 0.0
        %1310 = vmatprep.subr.mxu0 0.0
        %1311 = vmatpush1.msra.mxu0 0.0
        %1312 = vmatprep.subr.mxu0 0.0
        %1313 = vmatpush1.msra.mxu0 0.0
        %1314 = vmatprep.subr.mxu0 0.0
        %1315 = vmatpush1.msra.mxu0 0.0
        %1316 = vmatprep.subr.mxu0 0.0
        %1317 = vmatpush1.msra.mxu0 0.0
        %1318 = vmatprep.subr.mxu0 0.0
        %1319 = vmatpush1.msra.mxu0 0.0
        %1320 = vmatprep.subr.mxu0 0.0
        %1321 = vmatpush1.msra.mxu0 0.0
        %1322 = vmatprep.subr.mxu0 0.0
        %1323 = vmatpush1.msra.mxu0 0.0
        %1324 = vmatprep.subr.mxu0 0.0
        %1325 = vmatpush1.msra.mxu0 0.0
        %1326 = vmatprep.subr.mxu0 0.0
        %1327 = vmatpush1.msra.mxu0 0.0
        %1328 = vmatprep.subr.mxu0 0.0
        %1329 = vmatpush1.msra.mxu0 0.0
        %1330 = vmatprep.subr.mxu0 0.0
        %1331 = vmatpush1.msra.mxu0 0.0
        %1332 = vmatprep.subr.mxu0 0.0
        %1333 = vmatpush1.msra.mxu0 0.0
        %1334 = vmatprep.subr.mxu0 0.0
        %1335 = vmatpush1.msra.mxu0 0.0
        %1336 = vmatprep.subr.mxu0 0.0
        %1337 = vmatpush1.msra.mxu0 0.0
        %1338 = vmatprep.subr.mxu0 0.0
        %1339 = vmatpush1.msra.mxu0 0.0
        %1340 = vmatprep.subr.mxu0 0.0
        %1341 = vmatpush1.msra.mxu0 0.0
        %1342 = vmatprep.subr.mxu0 0.0
        %1343 = vmatpush1.msra.mxu0 0.0
        %1344 = vmatprep.subr.mxu0 0.0
        %1345 = vmatpush1.msra.mxu0 0.0
        %1346 = vmatprep.subr.mxu0 0.0
        %1347 = vmatpush1.msra.mxu0 0.0
        %1348 = vmatprep.subr.mxu0 0.0
        %1349 = vmatpush1.msra.mxu0 0.0
        %1350 = vmatprep.subr.mxu0 0.0
        %1351 = vmatpush1.msra.mxu0 0.0
        %1352 = vmatprep.subr.mxu0 0.0
        %1353 = vmatpush1.msra.mxu0 0.0
        %1354 = vmatprep.subr.mxu0 0.0
        %1355 = vmatpush1.msra.mxu0 0.0
        %1356 = vmatprep.subr.mxu0 0.0
        %1357 = vmatpush1.msra.mxu0 0.0
        %1358 = vmatprep.subr.mxu0 0.0
        %1359 = vmatpush1.msra.mxu0 0.0
        %1360 = vmatprep.subr.mxu0 0.0
        %1361 = vmatpush1.msra.mxu0 0.0
        %1362 = vmatprep.mubr.f32.mxu0 0.0
        %1363 = vmatmul.mubr.f32.gmra.mrb[0].mxu0 %v1296
        %v1364 = vpop.f32.mrb[0].mxu0
        %v1365 = vadd.f32 0.0, %v1364
        %v1366 = vpop.f32.mrb[0].mxu0
        %1367 = vdwg.mxu0
        %s1368 = scalar_lea.vmem %s3, 16
        %v1369 = vld [vmem:[%s1368] sm:$0xff]
        %v1371 = vsel %vm1219, %v1369, 0
        %1373 = vmatprep.subr.mxu0 0.0
        %1374 = vmatpush1.msra.mxu0 %v1216
        %1375 = vmatprep.subr.mxu0 0.0
        %1376 = vmatpush1.msra.mxu0 %v1217
        %1377 = vmatprep.subr.mxu0 0.0
        %1378 = vmatpush1.msra.mxu0 0.0
        %1379 = vmatprep.subr.mxu0 0.0
        %1380 = vmatpush1.msra.mxu0 0.0
        %1381 = vmatprep.subr.mxu0 0.0
        %1382 = vmatpush1.msra.mxu0 0.0
        %1383 = vmatprep.subr.mxu0 0.0
        %1384 = vmatpush1.msra.mxu0 0.0
        %1385 = vmatprep.subr.mxu0 0.0
        %1386 = vmatpush1.msra.mxu0 0.0
        %1387 = vmatprep.subr.mxu0 0.0
        %1388 = vmatpush1.msra.mxu0 0.0
        %1389 = vmatprep.subr.mxu0 0.0
        %1390 = vmatpush1.msra.mxu0 0.0
        %1391 = vmatprep.subr.mxu0 0.0
        %1392 = vmatpush1.msra.mxu0 0.0
        %1393 = vmatprep.subr.mxu0 0.0
        %1394 = vmatpush1.msra.mxu0 0.0
        %1395 = vmatprep.subr.mxu0 0.0
        %1396 = vmatpush1.msra.mxu0 0.0
        %1397 = vmatprep.subr.mxu0 0.0
        %1398 = vmatpush1.msra.mxu0 0.0
        %1399 = vmatprep.subr.mxu0 0.0
        %1400 = vmatpush1.msra.mxu0 0.0
        %1401 = vmatprep.subr.mxu0 0.0
        %1402 = vmatpush1.msra.mxu0 0.0
        %1403 = vmatprep.subr.mxu0 0.0
        %1404 = vmatpush1.msra.mxu0 0.0
        %1405 = vmatprep.subr.mxu0 0.0
        %1406 = vmatpush1.msra.mxu0 0.0
        %1407 = vmatprep.subr.mxu0 0.0
        %1408 = vmatpush1.msra.mxu0 0.0
        %1409 = vmatprep.subr.mxu0 0.0
        %1410 = vmatpush1.msra.mxu0 0.0
        %1411 = vmatprep.subr.mxu0 0.0
        %1412 = vmatpush1.msra.mxu0 0.0
        %1413 = vmatprep.subr.mxu0 0.0
        %1414 = vmatpush1.msra.mxu0 0.0
        %1415 = vmatprep.subr.mxu0 0.0
        %1416 = vmatpush1.msra.mxu0 0.0
        %1417 = vmatprep.subr.mxu0 0.0
        %1418 = vmatpush1.msra.mxu0 0.0
        %1419 = vmatprep.subr.mxu0 0.0
        %1420 = vmatpush1.msra.mxu0 0.0
        %1421 = vmatprep.subr.mxu0 0.0
        %1422 = vmatpush1.msra.mxu0 0.0
        %1423 = vmatprep.subr.mxu0 0.0
        %1424 = vmatpush1.msra.mxu0 0.0
        %1425 = vmatprep.subr.mxu0 0.0
        %1426 = vmatpush1.msra.mxu0 0.0
        %1427 = vmatprep.subr.mxu0 0.0
        %1428 = vmatpush1.msra.mxu0 0.0
        %1429 = vmatprep.subr.mxu0 0.0
        %1430 = vmatpush1.msra.mxu0 0.0
        %1431 = vmatprep.subr.mxu0 0.0
        %1432 = vmatpush1.msra.mxu0 0.0
        %1433 = vmatprep.subr.mxu0 0.0
        %1434 = vmatpush1.msra.mxu0 0.0
        %1435 = vmatprep.subr.mxu0 0.0
        %1436 = vmatpush1.msra.mxu0 0.0
        %1437 = vmatprep.mubr.f32.mxu0 0.0
        %1438 = vmatmul.mubr.f32.gmra.mrb[0].mxu0 %v1371
        %v1439 = vpop.f32.mrb[0].mxu0
        %v1440 = vadd.f32 0.0, %v1439
        %v1441 = vpop.f32.mrb[0].mxu0
        %1442 = vdwg.mxu0
        %v1443 = vmax.f32 %v1290, %v1365
        %v1444 = vmax.f32 %v1443, %v1440
        %v1445 = vld [vmem:[%s2] sm:$0x1]
        %v1447 = vlaneseq
        %v1448 = vshrl.u32 %v1447, 7
        %v1449 = vsub.s32 0, %v1448
        %v1450 = vrot.slane %v1445, %v1449
        %v1452 = vadd.f32 %v1444, %v1450
        %1453 = vst [vmem:[#allocation2] sm:$0x1] 0.0
        %1454 = vst [vmem:[#allocation2 + $0x9] sm:$0x1] 0.0
        %1455 = vst [vmem:[#allocation2 + $0x1] sm:$0xff] %v1452
        %v1456 = vld [vmem:[#allocation2] sm:$0xff]
        %v1457 = vmax.f32 %v1456, 0.0
        %v1458 = vpack.c.bf16 %v1457, %v1457
        %v1459 = vld [vmem:[#allocation4] sm:$0xf]
        %v1460 = vld [vmem:[#allocation4 + $0x4] sm:$0xf]
        %v1461 = vld [vmem:[#allocation4 + $0x8] sm:$0xf]
        %v1462 = vld [vmem:[#allocation4 + $0xc] sm:$0xf]
        %v1463 = vld [vmem:[#allocation4 + $0x10] sm:$0xf]
        %v1464 = vld [vmem:[#allocation4 + $0x14] sm:$0xf]
        %v1465 = vld [vmem:[#allocation4 + $0x18] sm:$0xf]
        %v1466 = vld [vmem:[#allocation4 + $0x1c] sm:$0xf]
        %v1467 = vld [vmem:[#allocation4 + $0x20] sm:$0xf]
        %v1468 = vld [vmem:[#allocation4 + $0x24] sm:$0xf]
        %v1469 = vld [vmem:[#allocation4 + $0x28] sm:$0xf]
        %v1470 = vld [vmem:[#allocation4 + $0x2c] sm:$0xf]
        %v1471 = vld [vmem:[#allocation4 + $0x30] sm:$0xf]
        %v1472 = vld [vmem:[#allocation4 + $0x34] sm:$0xf]
        %v1473 = vld [vmem:[#allocation4 + $0x38] sm:$0xf]
        %v1474 = vld [vmem:[#allocation4 + $0x3c] sm:$0xf]
        %v1475 = vld [vmem:[#allocation2 + $0x1] sm:$0xff]
        %v1476 = vmax.f32 %v1475, 0.0
        %v1477 = vpack.c.bf16 %v1476, %v1476
        %s1478 = scalar_lea.vmem [#allocation4], 64
        %v1479 = vld [vmem:[%s1478] sm:$0xf]
        %v1480 = vld [vmem:[%s1478 + $0x4] sm:$0xf]
        %v1481 = vld [vmem:[%s1478 + $0x8] sm:$0xf]
        %v1482 = vld [vmem:[%s1478 + $0xc] sm:$0xf]
        %v1483 = vld [vmem:[%s1478 + $0x10] sm:$0xf]
        %v1484 = vld [vmem:[%s1478 + $0x14] sm:$0xf]
        %v1485 = vld [vmem:[%s1478 + $0x18] sm:$0xf]
        %v1486 = vld [vmem:[%s1478 + $0x1c] sm:$0xf]
        %v1487 = vld [vmem:[%s1478 + $0x20] sm:$0xf]
        %v1488 = vld [vmem:[%s1478 + $0x24] sm:$0xf]
        %v1489 = vld [vmem:[%s1478 + $0x28] sm:$0xf]
        %v1490 = vld [vmem:[%s1478 + $0x2c] sm:$0xf]
        %v1491 = vld [vmem:[%s1478 + $0x30] sm:$0xf]
        %v1492 = vld [vmem:[%s1478 + $0x34] sm:$0xf]
        %v1493 = vld [vmem:[%s1478 + $0x38] sm:$0xf]
        %v1494 = vld [vmem:[%s1478 + $0x3c] sm:$0xf]
        %v1511 = vunpack.c.l.b16 %v1479
        %v1512 = vunpack.c.l.b16 %v1480
        %v1513 = vunpack.c.l.b16 %v1481
        %v1514 = vunpack.c.l.b16 %v1482
        %v1515 = vunpack.c.l.b16 %v1483
        %v1516 = vunpack.c.l.b16 %v1484
        %v1517 = vunpack.c.l.b16 %v1485
        %v1518 = vunpack.c.l.b16 %v1486
        %v1519 = vunpack.c.l.b16 %v1487
        %v1520 = vunpack.c.l.b16 %v1488
        %v1521 = vunpack.c.l.b16 %v1489
        %v1522 = vunpack.c.l.b16 %v1490
        %v1523 = vunpack.c.l.b16 %v1491
        %v1524 = vunpack.c.l.b16 %v1492
        %v1525 = vunpack.c.l.b16 %v1493
        %v1526 = vunpack.c.l.b16 %v1494
        %v1527 = vpack.c.b16 %v1512, %v1511
        %v1528 = vpack.c.b16 %v1514, %v1513
        %v1529 = vpack.c.b16 %v1516, %v1515
        %v1530 = vpack.c.b16 %v1518, %v1517
        %v1531 = vpack.c.b16 %v1520, %v1519
        %v1532 = vpack.c.b16 %v1522, %v1521
        %v1533 = vpack.c.b16 %v1524, %v1523
        %v1534 = vpack.c.b16 %v1526, %v1525
        %1543 = vmatprep.subr.bf16.mxu0 0
        %1544 = vmatpush1.bf16.msra.mxu0 %v1527
        %1545 = vmatprep.subr.bf16.mxu0 0
        %1546 = vmatpush1.bf16.msra.mxu0 %v1528
        %1547 = vmatprep.subr.bf16.mxu0 0
        %1548 = vmatpush1.bf16.msra.mxu0 %v1529
        %1549 = vmatprep.subr.bf16.mxu0 0
        %1550 = vmatpush1.bf16.msra.mxu0 %v1530
        %1551 = vmatprep.subr.bf16.mxu0 0
        %1552 = vmatpush1.bf16.msra.mxu0 %v1531
        %1553 = vmatprep.subr.bf16.mxu0 0
        %1554 = vmatpush1.bf16.msra.mxu0 %v1532
        %1555 = vmatprep.subr.bf16.mxu0 0
        %1556 = vmatpush1.bf16.msra.mxu0 %v1533
        %1557 = vmatprep.subr.bf16.mxu0 0
        %1558 = vmatpush1.bf16.msra.mxu0 %v1534
        %1559 = vmatprep.subr.bf16.mxu0 0
        %1560 = vmatpush1.bf16.msra.mxu0 0
        %1561 = vmatprep.subr.bf16.mxu0 0
        %1562 = vmatpush1.bf16.msra.mxu0 0
        %1563 = vmatprep.subr.bf16.mxu0 0
        %1564 = vmatpush1.bf16.msra.mxu0 0
        %1565 = vmatprep.subr.bf16.mxu0 0
        %1566 = vmatpush1.bf16.msra.mxu0 0
        %1567 = vmatprep.subr.bf16.mxu0 0
        %1568 = vmatpush1.bf16.msra.mxu0 0
        %1569 = vmatprep.subr.bf16.mxu0 0
        %1570 = vmatpush1.bf16.msra.mxu0 0
        %1571 = vmatprep.subr.bf16.mxu0 0
        %1572 = vmatpush1.bf16.msra.mxu0 0
        %1573 = vmatprep.subr.bf16.mxu0 0
        %1574 = vmatpush1.bf16.msra.mxu0 0
        %1575 = vmatprep.mubr.bf16.mxu0 0
        %1576 = vmatmul.mubr.bf16.gmra.mrb[0].mxu0 %v1477
        %v1577 = vpop.f32.mrb[0].mxu0
        %v1578 = vadd.f32 0.0, %v1577
        %v1579 = vpop.f32.mrb[0].mxu0
        %v1580 = vpop.f32.mrb[0].mxu0
        %v1581 = vpop.f32.mrb[0].mxu0
        %1582 = vdwg.mxu0
        %v1599 = vunpack.c.l.b16 %v1459
        %v1600 = vunpack.c.l.b16 %v1460
        %v1601 = vunpack.c.l.b16 %v1461
        %v1602 = vunpack.c.l.b16 %v1462
        %v1603 = vunpack.c.l.b16 %v1463
        %v1604 = vunpack.c.l.b16 %v1464
        %v1605 = vunpack.c.l.b16 %v1465
        %v1606 = vunpack.c.l.b16 %v1466
        %v1607 = vunpack.c.l.b16 %v1467
        %v1608 = vunpack.c.l.b16 %v1468
        %v1609 = vunpack.c.l.b16 %v1469
        %v1610 = vunpack.c.l.b16 %v1470
        %v1611 = vunpack.c.l.b16 %v1471
        %v1612 = vunpack.c.l.b16 %v1472
        %v1613 = vunpack.c.l.b16 %v1473
        %v1614 = vunpack.c.l.b16 %v1474
        %v1615 = vpack.c.b16 %v1600, %v1599
        %v1616 = vpack.c.b16 %v1602, %v1601
        %v1617 = vpack.c.b16 %v1604, %v1603
        %v1618 = vpack.c.b16 %v1606, %v1605
        %v1619 = vpack.c.b16 %v1608, %v1607
        %v1620 = vpack.c.b16 %v1610, %v1609
        %v1621 = vpack.c.b16 %v1612, %v1611
        %v1622 = vpack.c.b16 %v1614, %v1613
        %1631 = vmatprep.subr.bf16.mxu0 0
        %1632 = vmatpush1.bf16.msra.mxu0 %v1615
        %1633 = vmatprep.subr.bf16.mxu0 0
        %1634 = vmatpush1.bf16.msra.mxu0 %v1616
        %1635 = vmatprep.subr.bf16.mxu0 0
        %1636 = vmatpush1.bf16.msra.mxu0 %v1617
        %1637 = vmatprep.subr.bf16.mxu0 0
        %1638 = vmatpush1.bf16.msra.mxu0 %v1618
        %1639 = vmatprep.subr.bf16.mxu0 0
        %1640 = vmatpush1.bf16.msra.mxu0 %v1619
        %1641 = vmatprep.subr.bf16.mxu0 0
        %1642 = vmatpush1.bf16.msra.mxu0 %v1620
        %1643 = vmatprep.subr.bf16.mxu0 0
        %1644 = vmatpush1.bf16.msra.mxu0 %v1621
        %1645 = vmatprep.subr.bf16.mxu0 0
        %1646 = vmatpush1.bf16.msra.mxu0 %v1622
        %1647 = vmatprep.subr.bf16.mxu0 0
        %1648 = vmatpush1.bf16.msra.mxu0 0
        %1649 = vmatprep.subr.bf16.mxu0 0
        %1650 = vmatpush1.bf16.msra.mxu0 0
        %1651 = vmatprep.subr.bf16.mxu0 0
        %1652 = vmatpush1.bf16.msra.mxu0 0
        %1653 = vmatprep.subr.bf16.mxu0 0
        %1654 = vmatpush1.bf16.msra.mxu0 0
        %1655 = vmatprep.subr.bf16.mxu0 0
        %1656 = vmatpush1.bf16.msra.mxu0 0
        %1657 = vmatprep.subr.bf16.mxu0 0
        %1658 = vmatpush1.bf16.msra.mxu0 0
        %1659 = vmatprep.subr.bf16.mxu0 0
        %1660 = vmatpush1.bf16.msra.mxu0 0
        %1661 = vmatprep.subr.bf16.mxu0 0
        %1662 = vmatpush1.bf16.msra.mxu0 0
        %1663 = vmatprep.mubr.bf16.mxu0 0
        %1664 = vmatmul.mubr.bf16.gmra.mrb[0].mxu0 %v1458
        %v1665 = vpop.f32.mrb[0].mxu0
        %v1666 = vadd.f32 %v1578, %v1665
        %v1667 = vpop.f32.mrb[0].mxu0
        %v1668 = vpop.f32.mrb[0].mxu0
        %v1669 = vpop.f32.mrb[0].mxu0
        %1670 = vdwg.mxu0
        %v1671 = vld [vmem:[#allocation2 + $0x2] sm:$0xff]
        %v1672 = vmax.f32 %v1671, 0.0
        %v1673 = vpack.c.bf16 %v1672, %v1672
        %s1674 = scalar_lea.vmem [#allocation4], 128
        %v1675 = vld [vmem:[%s1674] sm:$0xf]
        %v1676 = vld [vmem:[%s1674 + $0x4] sm:$0xf]
        %v1677 = vld [vmem:[%s1674 + $0x8] sm:$0xf]
        %v1678 = vld [vmem:[%s1674 + $0xc] sm:$0xf]
        %v1679 = vld [vmem:[%s1674 + $0x10] sm:$0xf]
        %v1680 = vld [vmem:[%s1674 + $0x14] sm:$0xf]
        %v1681 = vld [vmem:[%s1674 + $0x18] sm:$0xf]
        %v1682 = vld [vmem:[%s1674 + $0x1c] sm:$0xf]
        %v1683 = vld [vmem:[%s1674 + $0x20] sm:$0xf]
        %v1684 = vld [vmem:[%s1674 + $0x24] sm:$0xf]
        %v1685 = vld [vmem:[%s1674 + $0x28] sm:$0xf]
        %v1686 = vld [vmem:[%s1674 + $0x2c] sm:$0xf]
        %v1687 = vld [vmem:[%s1674 + $0x30] sm:$0xf]
        %v1688 = vld [vmem:[%s1674 + $0x34] sm:$0xf]
        %v1689 = vld [vmem:[%s1674 + $0x38] sm:$0xf]
        %v1690 = vld [vmem:[%s1674 + $0x3c] sm:$0xf]
        %v1707 = vunpack.c.l.b16 %v1675
        %v1708 = vunpack.c.l.b16 %v1676
        %v1709 = vunpack.c.l.b16 %v1677
        %v1710 = vunpack.c.l.b16 %v1678
        %v1711 = vunpack.c.l.b16 %v1679
        %v1712 = vunpack.c.l.b16 %v1680
        %v1713 = vunpack.c.l.b16 %v1681
        %v1714 = vunpack.c.l.b16 %v1682
        %v1715 = vunpack.c.l.b16 %v1683
        %v1716 = vunpack.c.l.b16 %v1684
        %v1717 = vunpack.c.l.b16 %v1685
        %v1718 = vunpack.c.l.b16 %v1686
        %v1719 = vunpack.c.l.b16 %v1687
        %v1720 = vunpack.c.l.b16 %v1688
        %v1721 = vunpack.c.l.b16 %v1689
        %v1722 = vunpack.c.l.b16 %v1690
        %v1723 = vpack.c.b16 %v1708, %v1707
        %v1724 = vpack.c.b16 %v1710, %v1709
        %v1725 = vpack.c.b16 %v1712, %v1711
        %v1726 = vpack.c.b16 %v1714, %v1713
        %v1727 = vpack.c.b16 %v1716, %v1715
        %v1728 = vpack.c.b16 %v1718, %v1717
        %v1729 = vpack.c.b16 %v1720, %v1719
        %v1730 = vpack.c.b16 %v1722, %v1721
        %1739 = vmatprep.subr.bf16.mxu0 0
        %1740 = vmatpush1.bf16.msra.mxu0 %v1723
        %1741 = vmatprep.subr.bf16.mxu0 0
        %1742 = vmatpush1.bf16.msra.mxu0 %v1724
        %1743 = vmatprep.subr.bf16.mxu0 0
        %1744 = vmatpush1.bf16.msra.mxu0 %v1725
        %1745 = vmatprep.subr.bf16.mxu0 0
        %1746 = vmatpush1.bf16.msra.mxu0 %v1726
        %1747 = vmatprep.subr.bf16.mxu0 0
        %1748 = vmatpush1.bf16.msra.mxu0 %v1727
        %1749 = vmatprep.subr.bf16.mxu0 0
        %1750 = vmatpush1.bf16.msra.mxu0 %v1728
        %1751 = vmatprep.subr.bf16.mxu0 0
        %1752 = vmatpush1.bf16.msra.mxu0 %v1729
        %1753 = vmatprep.subr.bf16.mxu0 0
        %1754 = vmatpush1.bf16.msra.mxu0 %v1730
        %1755 = vmatprep.subr.bf16.mxu0 0
        %1756 = vmatpush1.bf16.msra.mxu0 0
        %1757 = vmatprep.subr.bf16.mxu0 0
        %1758 = vmatpush1.bf16.msra.mxu0 0
        %1759 = vmatprep.subr.bf16.mxu0 0
        %1760 = vmatpush1.bf16.msra.mxu0 0
        %1761 = vmatprep.subr.bf16.mxu0 0
        %1762 = vmatpush1.bf16.msra.mxu0 0
        %1763 = vmatprep.subr.bf16.mxu0 0
        %1764 = vmatpush1.bf16.msra.mxu0 0
        %1765 = vmatprep.subr.bf16.mxu0 0
        %1766 = vmatpush1.bf16.msra.mxu0 0
        %1767 = vmatprep.subr.bf16.mxu0 0
        %1768 = vmatpush1.bf16.msra.mxu0 0
        %1769 = vmatprep.subr.bf16.mxu0 0
        %1770 = vmatpush1.bf16.msra.mxu0 0
        %1771 = vmatprep.mubr.bf16.mxu0 0
        %1772 = vmatmul.mubr.bf16.gmra.mrb[0].mxu0 %v1673
        %v1773 = vpop.f32.mrb[0].mxu0
        %v1774 = vadd.f32 0.0, %v1773
        %v1775 = vpop.f32.mrb[0].mxu0
        %v1776 = vpop.f32.mrb[0].mxu0
        %v1777 = vpop.f32.mrb[0].mxu0
        %1778 = vdwg.mxu0
        %v1779 = vadd.f32 %v1666, %v1774
        %v1780 = vld [vmem:[#allocation6] sm:$0x1]
        %v1782 = vlaneseq
        %v1783 = vshrl.u32 %v1782, 7
        %v1784 = vsub.s32 0, %v1783
        %v1785 = vrot.slane %v1780, %v1784
        %v1787 = vadd.f32 %v1779, %v1785
        %1788 = vst [vmem:[#allocation3] sm:$0x1] 0.0
        %1789 = vst [vmem:[#allocation3 + $0x9] sm:$0x1] 0.0
        %v1790 = vmax.f32 %v1787, 0.0
        %1791 = vst [vmem:[#allocation3 + $0x1] sm:$0xff] %v1790
        %v1792 = vld [vmem:[#allocation3] sm:$0xff]
        %v1793 = vpack.c.bf16 %v1792, %v1792
        %v1794 = vld [vmem:[#allocation8] sm:$0xf]
        %v1795 = vld [vmem:[#allocation8 + $0x4] sm:$0xf]
        %v1796 = vld [vmem:[#allocation8 + $0x8] sm:$0xf]
        %v1797 = vld [vmem:[#allocation8 + $0xc] sm:$0xf]
        %v1798 = vld [vmem:[#allocation8 + $0x10] sm:$0xf]
        %v1799 = vld [vmem:[#allocation8 + $0x14] sm:$0xf]
        %v1800 = vld [vmem:[#allocation8 + $0x18] sm:$0xf]
        %v1801 = vld [vmem:[#allocation8 + $0x1c] sm:$0xf]
        %v1802 = vld [vmem:[#allocation8 + $0x20] sm:$0xf]
        %v1803 = vld [vmem:[#allocation8 + $0x24] sm:$0xf]
        %v1804 = vld [vmem:[#allocation8 + $0x28] sm:$0xf]
        %v1805 = vld [vmem:[#allocation8 + $0x2c] sm:$0xf]
        %v1806 = vld [vmem:[#allocation8 + $0x30] sm:$0xf]
        %v1807 = vld [vmem:[#allocation8 + $0x34] sm:$0xf]
        %v1808 = vld [vmem:[#allocation8 + $0x38] sm:$0xf]
        %v1809 = vld [vmem:[#allocation8 + $0x3c] sm:$0xf]
        %v1810 = vld [vmem:[#allocation3 + $0x1] sm:$0xff]
        %v1811 = vpack.c.bf16 %v1810, %v1810
        %s1812 = scalar_lea.vmem [#allocation8], 64
        %v1813 = vld [vmem:[%s1812] sm:$0xf]
        %v1814 = vld [vmem:[%s1812 + $0x4] sm:$0xf]
        %v1815 = vld [vmem:[%s1812 + $0x8] sm:$0xf]
        %v1816 = vld [vmem:[%s1812 + $0xc] sm:$0xf]
        %v1817 = vld [vmem:[%s1812 + $0x10] sm:$0xf]
        %v1818 = vld [vmem:[%s1812 + $0x14] sm:$0xf]
        %v1819 = vld [vmem:[%s1812 + $0x18] sm:$0xf]
        %v1820 = vld [vmem:[%s1812 + $0x1c] sm:$0xf]
        %v1821 = vld [vmem:[%s1812 + $0x20] sm:$0xf]
        %v1822 = vld [vmem:[%s1812 + $0x24] sm:$0xf]
        %v1823 = vld [vmem:[%s1812 + $0x28] sm:$0xf]
        %v1824 = vld [vmem:[%s1812 + $0x2c] sm:$0xf]
        %v1825 = vld [vmem:[%s1812 + $0x30] sm:$0xf]
        %v1826 = vld [vmem:[%s1812 + $0x34] sm:$0xf]
        %v1827 = vld [vmem:[%s1812 + $0x38] sm:$0xf]
        %v1828 = vld [vmem:[%s1812 + $0x3c] sm:$0xf]
        %v1845 = vunpack.c.l.b16 %v1813
        %v1846 = vunpack.c.l.b16 %v1814
        %v1847 = vunpack.c.l.b16 %v1815
        %v1848 = vunpack.c.l.b16 %v1816
        %v1849 = vunpack.c.l.b16 %v1817
        %v1850 = vunpack.c.l.b16 %v1818
        %v1851 = vunpack.c.l.b16 %v1819
        %v1852 = vunpack.c.l.b16 %v1820
        %v1853 = vunpack.c.l.b16 %v1821
        %v1854 = vunpack.c.l.b16 %v1822
        %v1855 = vunpack.c.l.b16 %v1823
        %v1856 = vunpack.c.l.b16 %v1824
        %v1857 = vunpack.c.l.b16 %v1825
        %v1858 = vunpack.c.l.b16 %v1826
        %v1859 = vunpack.c.l.b16 %v1827
        %v1860 = vunpack.c.l.b16 %v1828
        %v1861 = vpack.c.b16 %v1846, %v1845
        %v1862 = vpack.c.b16 %v1848, %v1847
        %v1863 = vpack.c.b16 %v1850, %v1849
        %v1864 = vpack.c.b16 %v1852, %v1851
        %v1865 = vpack.c.b16 %v1854, %v1853
        %v1866 = vpack.c.b16 %v1856, %v1855
        %v1867 = vpack.c.b16 %v1858, %v1857
        %v1868 = vpack.c.b16 %v1860, %v1859
        %1877 = vmatprep.subr.bf16.mxu0 0
        %1878 = vmatpush1.bf16.msra.mxu0 %v1861
        %1879 = vmatprep.subr.bf16.mxu0 0
        %1880 = vmatpush1.bf16.msra.mxu0 %v1862
        %1881 = vmatprep.subr.bf16.mxu0 0
        %1882 = vmatpush1.bf16.msra.mxu0 %v1863
        %1883 = vmatprep.subr.bf16.mxu0 0
        %1884 = vmatpush1.bf16.msra.mxu0 %v1864
        %1885 = vmatprep.subr.bf16.mxu0 0
        %1886 = vmatpush1.bf16.msra.mxu0 %v1865
        %1887 = vmatprep.subr.bf16.mxu0 0
        %1888 = vmatpush1.bf16.msra.mxu0 %v1866
        %1889 = vmatprep.subr.bf16.mxu0 0
        %1890 = vmatpush1.bf16.msra.mxu0 %v1867
        %1891 = vmatprep.subr.bf16.mxu0 0
        %1892 = vmatpush1.bf16.msra.mxu0 %v1868
        %1893 = vmatprep.subr.bf16.mxu0 0
        %1894 = vmatpush1.bf16.msra.mxu0 0
        %1895 = vmatprep.subr.bf16.mxu0 0
        %1896 = vmatpush1.bf16.msra.mxu0 0
        %1897 = vmatprep.subr.bf16.mxu0 0
        %1898 = vmatpush1.bf16.msra.mxu0 0
        %1899 = vmatprep.subr.bf16.mxu0 0
        %1900 = vmatpush1.bf16.msra.mxu0 0
        %1901 = vmatprep.subr.bf16.mxu0 0
        %1902 = vmatpush1.bf16.msra.mxu0 0
        %1903 = vmatprep.subr.bf16.mxu0 0
        %1904 = vmatpush1.bf16.msra.mxu0 0
        %1905 = vmatprep.subr.bf16.mxu0 0
        %1906 = vmatpush1.bf16.msra.mxu0 0
        %1907 = vmatprep.subr.bf16.mxu0 0
        %1908 = vmatpush1.bf16.msra.mxu0 0
        %1909 = vmatprep.mubr.bf16.mxu0 0
        %1910 = vmatmul.mubr.bf16.gmra.mrb[0].mxu0 %v1811
        %v1911 = vpop.f32.mrb[0].mxu0
        %v1912 = vadd.f32 0.0, %v1911
        %v1913 = vpop.f32.mrb[0].mxu0
        %v1914 = vpop.f32.mrb[0].mxu0
        %v1915 = vpop.f32.mrb[0].mxu0
        %1916 = vdwg.mxu0
        %v1933 = vunpack.c.l.b16 %v1794
        %v1934 = vunpack.c.l.b16 %v1795
        %v1935 = vunpack.c.l.b16 %v1796
        %v1936 = vunpack.c.l.b16 %v1797
        %v1937 = vunpack.c.l.b16 %v1798
        %v1938 = vunpack.c.l.b16 %v1799
        %v1939 = vunpack.c.l.b16 %v1800
        %v1940 = vunpack.c.l.b16 %v1801
        %v1941 = vunpack.c.l.b16 %v1802
        %v1942 = vunpack.c.l.b16 %v1803
        %v1943 = vunpack.c.l.b16 %v1804
        %v1944 = vunpack.c.l.b16 %v1805
        %v1945 = vunpack.c.l.b16 %v1806
        %v1946 = vunpack.c.l.b16 %v1807
        %v1947 = vunpack.c.l.b16 %v1808
        %v1948 = vunpack.c.l.b16 %v1809
        %v1949 = vpack.c.b16 %v1934, %v1933
        %v1950 = vpack.c.b16 %v1936, %v1935
        %v1951 = vpack.c.b16 %v1938, %v1937
        %v1952 = vpack.c.b16 %v1940, %v1939
        %v1953 = vpack.c.b16 %v1942, %v1941
        %v1954 = vpack.c.b16 %v1944, %v1943
        %v1955 = vpack.c.b16 %v1946, %v1945
        %v1956 = vpack.c.b16 %v1948, %v1947
        %1965 = vmatprep.subr.bf16.mxu0 0
        %1966 = vmatpush1.bf16.msra.mxu0 %v1949
        %1967 = vmatprep.subr.bf16.mxu0 0
        %1968 = vmatpush1.bf16.msra.mxu0 %v1950
        %1969 = vmatprep.subr.bf16.mxu0 0
        %1970 = vmatpush1.bf16.msra.mxu0 %v1951
        %1971 = vmatprep.subr.bf16.mxu0 0
        %1972 = vmatpush1.bf16.msra.mxu0 %v1952
        %1973 = vmatprep.subr.bf16.mxu0 0
        %1974 = vmatpush1.bf16.msra.mxu0 %v1953
        %1975 = vmatprep.subr.bf16.mxu0 0
        %1976 = vmatpush1.bf16.msra.mxu0 %v1954
        %1977 = vmatprep.subr.bf16.mxu0 0
        %1978 = vmatpush1.bf16.msra.mxu0 %v1955
        %1979 = vmatprep.subr.bf16.mxu0 0
        %1980 = vmatpush1.bf16.msra.mxu0 %v1956
        %1981 = vmatprep.subr.bf16.mxu0 0
        %1982 = vmatpush1.bf16.msra.mxu0 0
        %1983 = vmatprep.subr.bf16.mxu0 0
        %1984 = vmatpush1.bf16.msra.mxu0 0
        %1985 = vmatprep.subr.bf16.mxu0 0
        %1986 = vmatpush1.bf16.msra.mxu0 0
        %1987 = vmatprep.subr.bf16.mxu0 0
        %1988 = vmatpush1.bf16.msra.mxu0 0
        %1989 = vmatprep.subr.bf16.mxu0 0
        %1990 = vmatpush1.bf16.msra.mxu0 0
        %1991 = vmatprep.subr.bf16.mxu0 0
        %1992 = vmatpush1.bf16.msra.mxu0 0
        %1993 = vmatprep.subr.bf16.mxu0 0
        %1994 = vmatpush1.bf16.msra.mxu0 0
        %1995 = vmatprep.subr.bf16.mxu0 0
        %1996 = vmatpush1.bf16.msra.mxu0 0
        %1997 = vmatprep.mubr.bf16.mxu0 0
        %1998 = vmatmul.mubr.bf16.gmra.mrb[0].mxu0 %v1793
        %v1999 = vpop.f32.mrb[0].mxu0
        %v2000 = vadd.f32 %v1912, %v1999
        %v2001 = vpop.f32.mrb[0].mxu0
        %v2002 = vpop.f32.mrb[0].mxu0
        %v2003 = vpop.f32.mrb[0].mxu0
        %2004 = vdwg.mxu0
        %v2005 = vld [vmem:[#allocation3 + $0x2] sm:$0xff]
        %v2006 = vpack.c.bf16 %v2005, %v2005
        %s2007 = scalar_lea.vmem [#allocation8], 128
        %v2008 = vld [vmem:[%s2007] sm:$0xf]
        %v2009 = vld [vmem:[%s2007 + $0x4] sm:$0xf]
        %v2010 = vld [vmem:[%s2007 + $0x8] sm:$0xf]
        %v2011 = vld [vmem:[%s2007 + $0xc] sm:$0xf]
        %v2012 = vld [vmem:[%s2007 + $0x10] sm:$0xf]
        %v2013 = vld [vmem:[%s2007 + $0x14] sm:$0xf]
        %v2014 = vld [vmem:[%s2007 + $0x18] sm:$0xf]
        %v2015 = vld [vmem:[%s2007 + $0x1c] sm:$0xf]
        %v2016 = vld [vmem:[%s2007 + $0x20] sm:$0xf]
        %v2017 = vld [vmem:[%s2007 + $0x24] sm:$0xf]
        %v2018 = vld [vmem:[%s2007 + $0x28] sm:$0xf]
        %v2019 = vld [vmem:[%s2007 + $0x2c] sm:$0xf]
        %v2020 = vld [vmem:[%s2007 + $0x30] sm:$0xf]
        %v2021 = vld [vmem:[%s2007 + $0x34] sm:$0xf]
        %v2022 = vld [vmem:[%s2007 + $0x38] sm:$0xf]
        %v2023 = vld [vmem:[%s2007 + $0x3c] sm:$0xf]
        %v2040 = vunpack.c.l.b16 %v2008
        %v2041 = vunpack.c.l.b16 %v2009
        %v2042 = vunpack.c.l.b16 %v2010
        %v2043 = vunpack.c.l.b16 %v2011
        %v2044 = vunpack.c.l.b16 %v2012
        %v2045 = vunpack.c.l.b16 %v2013
        %v2046 = vunpack.c.l.b16 %v2014
        %v2047 = vunpack.c.l.b16 %v2015
        %v2048 = vunpack.c.l.b16 %v2016
        %v2049 = vunpack.c.l.b16 %v2017
        %v2050 = vunpack.c.l.b16 %v2018
        %v2051 = vunpack.c.l.b16 %v2019
        %v2052 = vunpack.c.l.b16 %v2020
        %v2053 = vunpack.c.l.b16 %v2021
        %v2054 = vunpack.c.l.b16 %v2022
        %v2055 = vunpack.c.l.b16 %v2023
        %v2056 = vpack.c.b16 %v2041, %v2040
        %v2057 = vpack.c.b16 %v2043, %v2042
        %v2058 = vpack.c.b16 %v2045, %v2044
        %v2059 = vpack.c.b16 %v2047, %v2046
        %v2060 = vpack.c.b16 %v2049, %v2048
        %v2061 = vpack.c.b16 %v2051, %v2050
        %v2062 = vpack.c.b16 %v2053, %v2052
        %v2063 = vpack.c.b16 %v2055, %v2054
        %2072 = vmatprep.subr.bf16.mxu0 0
        %2073 = vmatpush1.bf16.msra.mxu0 %v2056
        %2074 = vmatprep.subr.bf16.mxu0 0
        %2075 = vmatpush1.bf16.msra.mxu0 %v2057
        %2076 = vmatprep.subr.bf16.mxu0 0
        %2077 = vmatpush1.bf16.msra.mxu0 %v2058
        %2078 = vmatprep.subr.bf16.mxu0 0
        %2079 = vmatpush1.bf16.msra.mxu0 %v2059
        %2080 = vmatprep.subr.bf16.mxu0 0
        %2081 = vmatpush1.bf16.msra.mxu0 %v2060
        %2082 = vmatprep.subr.bf16.mxu0 0
        %2083 = vmatpush1.bf16.msra.mxu0 %v2061
        %2084 = vmatprep.subr.bf16.mxu0 0
        %2085 = vmatpush1.bf16.msra.mxu0 %v2062
        %2086 = vmatprep.subr.bf16.mxu0 0
        %2087 = vmatpush1.bf16.msra.mxu0 %v2063
        %2088 = vmatprep.subr.bf16.mxu0 0
        %2089 = vmatpush1.bf16.msra.mxu0 0
        %2090 = vmatprep.subr.bf16.mxu0 0
        %2091 = vmatpush1.bf16.msra.mxu0 0
        %2092 = vmatprep.subr.bf16.mxu0 0
        %2093 = vmatpush1.bf16.msra.mxu0 0
        %2094 = vmatprep.subr.bf16.mxu0 0
        %2095 = vmatpush1.bf16.msra.mxu0 0
        %2096 = vmatprep.subr.bf16.mxu0 0
        %2097 = vmatpush1.bf16.msra.mxu0 0
        %2098 = vmatprep.subr.bf16.mxu0 0
        %2099 = vmatpush1.bf16.msra.mxu0 0
        %2100 = vmatprep.subr.bf16.mxu0 0
        %2101 = vmatpush1.bf16.msra.mxu0 0
        %2102 = vmatprep.subr.bf16.mxu0 0
        %2103 = vmatpush1.bf16.msra.mxu0 0
        %2104 = vmatprep.mubr.bf16.mxu0 0
        %2105 = vmatmul.mubr.bf16.gmra.mrb[0].mxu0 %v2006
        %v2106 = vpop.f32.mrb[0].mxu0
        %v2107 = vadd.f32 0.0, %v2106
        %v2108 = vpop.f32.mrb[0].mxu0
        %v2109 = vpop.f32.mrb[0].mxu0
        %v2110 = vpop.f32.mrb[0].mxu0
        %2111 = vdwg.mxu0
        %v2112 = vadd.f32 %v2000, %v2107
        %v2113 = vld [vmem:[#allocation9] sm:$0x1]
        %v2115 = vlaneseq
        %v2116 = vshrl.u32 %v2115, 7
        %v2117 = vsub.s32 0, %v2116
        %v2118 = vrot.slane %v2113, %v2117
        %v2120 = vadd.f32 %v2112, %v2118
        %v2121 = vld [vmem:[#allocation2 + $0x1] sm:$0xff]
        %v2122 = vadd.f32 %v2120, %v2121
        %2123 = vst [vmem:[#allocation2 + $0x1] sm:$0xff] %v2122
        %v2124 = vld [vmem:[#allocation2] sm:$0xff]
        %v2125 = vmax.f32 %v2124, 0.0
        %v2126 = vpack.c.bf16 %v2125, %v2125
        %v2127 = vld [vmem:[#allocation11] sm:$0xf]
        %v2128 = vld [vmem:[#allocation11 + $0x4] sm:$0xf]
        %v2129 = vld [vmem:[#allocation11 + $0x8] sm:$0xf]
        %v2130 = vld [vmem:[#allocation11 + $0xc] sm:$0xf]
        %v2131 = vld [vmem:[#allocation11 + $0x10] sm:$0xf]
        %v2132 = vld [vmem:[#allocation11 + $0x14] sm:$0xf]
        %v2133 = vld [vmem:[#allocation11 + $0x18] sm:$0xf]
        %v2134 = vld [vmem:[#allocation11 + $0x1c] sm:$0xf]
        %v2135 = vld [vmem:[#allocation11 + $0x20] sm:$0xf]
        %v2136 = vld [vmem:[#allocation11 + $0x24] sm:$0xf]
        %v2137 = vld [vmem:[#allocation11 + $0x28] sm:$0xf]
        %v2138 = vld [vmem:[#allocation11 + $0x2c] sm:$0xf]
        %v2139 = vld [vmem:[#allocation11 + $0x30] sm:$0xf]
        %v2140 = vld [vmem:[#allocation11 + $0x34] sm:$0xf]
        %v2141 = vld [vmem:[#allocation11 + $0x38] sm:$0xf]
        %v2142 = vld [vmem:[#allocation11 + $0x3c] sm:$0xf]
        %v2143 = vld [vmem:[#allocation2 + $0x1] sm:$0xff]
        %v2144 = vmax.f32 %v2143, 0.0
        %v2145 = vpack.c.bf16 %v2144, %v2144
        %s2146 = scalar_lea.vmem [#allocation11], 64
        %v2147 = vld [vmem:[%s2146] sm:$0xf]
        %v2148 = vld [vmem:[%s2146 + $0x4] sm:$0xf]
        %v2149 = vld [vmem:[%s2146 + $0x8] sm:$0xf]
        %v2150 = vld [vmem:[%s2146 + $0xc] sm:$0xf]
        %v2151 = vld [vmem:[%s2146 + $0x10] sm:$0xf]
        %v2152 = vld [vmem:[%s2146 + $0x14] sm:$0xf]
        %v2153 = vld [vmem:[%s2146 + $0x18] sm:$0xf]
        %v2154 = vld [vmem:[%s2146 + $0x1c] sm:$0xf]
        %v2155 = vld [vmem:[%s2146 + $0x20] sm:$0xf]
        %v2156 = vld [vmem:[%s2146 + $0x24] sm:$0xf]
        %v2157 = vld [vmem:[%s2146 + $0x28] sm:$0xf]
        %v2158 = vld [vmem:[%s2146 + $0x2c] sm:$0xf]
        %v2159 = vld [vmem:[%s2146 + $0x30] sm:$0xf]
        %v2160 = vld [vmem:[%s2146 + $0x34] sm:$0xf]
        %v2161 = vld [vmem:[%s2146 + $0x38] sm:$0xf]
        %v2162 = vld [vmem:[%s2146 + $0x3c] sm:$0xf]
        %v2179 = vunpack.c.l.b16 %v2147
        %v2180 = vunpack.c.l.b16 %v2148
        %v2181 = vunpack.c.l.b16 %v2149
        %v2182 = vunpack.c.l.b16 %v2150
        %v2183 = vunpack.c.l.b16 %v2151
        %v2184 = vunpack.c.l.b16 %v2152
        %v2185 = vunpack.c.l.b16 %v2153
        %v2186 = vunpack.c.l.b16 %v2154
        %v2187 = vunpack.c.l.b16 %v2155
        %v2188 = vunpack.c.l.b16 %v2156
        %v2189 = vunpack.c.l.b16 %v2157
        %v2190 = vunpack.c.l.b16 %v2158
        %v2191 = vunpack.c.l.b16 %v2159
        %v2192 = vunpack.c.l.b16 %v2160
        %v2193 = vunpack.c.l.b16 %v2161
        %v2194 = vunpack.c.l.b16 %v2162
        %v2195 = vpack.c.b16 %v2180, %v2179
        %v2196 = vpack.c.b16 %v2182, %v2181
        %v2197 = vpack.c.b16 %v2184, %v2183
        %v2198 = vpack.c.b16 %v2186, %v2185
        %v2199 = vpack.c.b16 %v2188, %v2187
        %v2200 = vpack.c.b16 %v2190, %v2189
        %v2201 = vpack.c.b16 %v2192, %v2191
        %v2202 = vpack.c.b16 %v2194, %v2193
        %2211 = vmatprep.subr.bf16.mxu0 0
        %2212 = vmatpush1.bf16.msra.mxu0 %v2195
        %2213 = vmatprep.subr.bf16.mxu0 0
        %2214 = vmatpush1.bf16.msra.mxu0 %v2196
        %2215 = vmatprep.subr.bf16.mxu0 0
        %2216 = vmatpush1.bf16.msra.mxu0 %v2197
        %2217 = vmatprep.subr.bf16.mxu0 0
        %2218 = vmatpush1.bf16.msra.mxu0 %v2198
        %2219 = vmatprep.subr.bf16.mxu0 0
        %2220 = vmatpush1.bf16.msra.mxu0 %v2199
        %2221 = vmatprep.subr.bf16.mxu0 0
        %2222 = vmatpush1.bf16.msra.mxu0 %v2200
        %2223 = vmatprep.subr.bf16.mxu0 0
        %2224 = vmatpush1.bf16.msra.mxu0 %v2201
        %2225 = vmatprep.subr.bf16.mxu0 0
        %2226 = vmatpush1.bf16.msra.mxu0 %v2202
        %2227 = vmatprep.subr.bf16.mxu0 0
        %2228 = vmatpush1.bf16.msra.mxu0 0
        %2229 = vmatprep.subr.bf16.mxu0 0
        %2230 = vmatpush1.bf16.msra.mxu0 0
        %2231 = vmatprep.subr.bf16.mxu0 0
        %2232 = vmatpush1.bf16.msra.mxu0 0
        %2233 = vmatprep.subr.bf16.mxu0 0
        %2234 = vmatpush1.bf16.msra.mxu0 0
        %2235 = vmatprep.subr.bf16.mxu0 0
        %2236 = vmatpush1.bf16.msra.mxu0 0
        %2237 = vmatprep.subr.bf16.mxu0 0
        %2238 = vmatpush1.bf16.msra.mxu0 0
        %2239 = vmatprep.subr.bf16.mxu0 0
        %2240 = vmatpush1.bf16.msra.mxu0 0
        %2241 = vmatprep.subr.bf16.mxu0 0
        %2242 = vmatpush1.bf16.msra.mxu0 0
        %2243 = vmatprep.mubr.bf16.mxu0 0
        %2244 = vmatmul.mubr.bf16.gmra.mrb[0].mxu0 %v2145
        %v2245 = vpop.f32.mrb[0].mxu0
        %v2246 = vadd.f32 0.0, %v2245
        %v2247 = vpop.f32.mrb[0].mxu0
        %v2248 = vpop.f32.mrb[0].mxu0
        %v2249 = vpop.f32.mrb[0].mxu0
        %2250 = vdwg.mxu0
        %v2267 = vunpack.c.l.b16 %v2127
        %v2268 = vunpack.c.l.b16 %v2128
        %v2269 = vunpack.c.l.b16 %v2129
        %v2270 = vunpack.c.l.b16 %v2130
        %v2271 = vunpack.c.l.b16 %v2131
        %v2272 = vunpack.c.l.b16 %v2132
        %v2273 = vunpack.c.l.b16 %v2133
        %v2274 = vunpack.c.l.b16 %v2134
        %v2275 = vunpack.c.l.b16 %v2135
        %v2276 = vunpack.c.l.b16 %v2136
        %v2277 = vunpack.c.l.b16 %v2137
        %v2278 = vunpack.c.l.b16 %v2138
        %v2279 = vunpack.c.l.b16 %v2139
        %v2280 = vunpack.c.l.b16 %v2140
        %v2281 = vunpack.c.l.b16 %v2141
        %v2282 = vunpack.c.l.b16 %v2142
        %v2283 = vpack.c.b16 %v2268, %v2267
        %v2284 = vpack.c.b16 %v2270, %v2269
        %v2285 = vpack.c.b16 %v2272, %v2271
        %v2286 = vpack.c.b16 %v2274, %v2273
        %v2287 = vpack.c.b16 %v2276, %v2275
        %v2288 = vpack.c.b16 %v2278, %v2277
        %v2289 = vpack.c.b16 %v2280, %v2279
        %v2290 = vpack.c.b16 %v2282, %v2281
        %2299 = vmatprep.subr.bf16.mxu0 0
        %2300 = vmatpush1.bf16.msra.mxu0 %v2283
        %2301 = vmatprep.subr.bf16.mxu0 0
        %2302 = vmatpush1.bf16.msra.mxu0 %v2284
        %2303 = vmatprep.subr.bf16.mxu0 0
        %2304 = vmatpush1.bf16.msra.mxu0 %v2285
        %2305 = vmatprep.subr.bf16.mxu0 0
        %2306 = vmatpush1.bf16.msra.mxu0 %v2286
        %2307 = vmatprep.subr.bf16.mxu0 0
        %2308 = vmatpush1.bf16.msra.mxu0 %v2287
        %2309 = vmatprep.subr.bf16.mxu0 0
        %2310 = vmatpush1.bf16.msra.mxu0 %v2288
        %2311 = vmatprep.subr.bf16.mxu0 0
        %2312 = vmatpush1.bf16.msra.mxu0 %v2289
        %2313 = vmatprep.subr.bf16.mxu0 0
        %2314 = vmatpush1.bf16.msra.mxu0 %v2290
        %2315 = vmatprep.subr.bf16.mxu0 0
        %2316 = vmatpush1.bf16.msra.mxu0 0
        %2317 = vmatprep.subr.bf16.mxu0 0
        %2318 = vmatpush1.bf16.msra.mxu0 0
        %2319 = vmatprep.subr.bf16.mxu0 0
        %2320 = vmatpush1.bf16.msra.mxu0 0
        %2321 = vmatprep.subr.bf16.mxu0 0
        %2322 = vmatpush1.bf16.msra.mxu0 0
        %2323 = vmatprep.subr.bf16.mxu0 0
        %2324 = vmatpush1.bf16.msra.mxu0 0
        %2325 = vmatprep.subr.bf16.mxu0 0
        %2326 = vmatpush1.bf16.msra.mxu0 0
        %2327 = vmatprep.subr.bf16.mxu0 0
        %2328 = vmatpush1.bf16.msra.mxu0 0
        %2329 = vmatprep.subr.bf16.mxu0 0
        %2330 = vmatpush1.bf16.msra.mxu0 0
        %2331 = vmatprep.mubr.bf16.mxu0 0
        %2332 = vmatmul.mubr.bf16.gmra.mrb[0].mxu0 %v2126
        %v2333 = vpop.f32.mrb[0].mxu0
        %v2334 = vadd.f32 %v2246, %v2333
        %v2335 = vpop.f32.mrb[0].mxu0
        %v2336 = vpop.f32.mrb[0].mxu0
        %v2337 = vpop.f32.mrb[0].mxu0
        %2338 = vdwg.mxu0
        %v2339 = vld [vmem:[#allocation2 + $0x2] sm:$0xff]
        %v2340 = vmax.f32 %v2339, 0.0
        %v2341 = vpack.c.bf16 %v2340, %v2340
        %s2342 = scalar_lea.vmem [#allocation11], 128
        %v2343 = vld [vmem:[%s2342] sm:$0xf]
        %v2344 = vld [vmem:[%s2342 + $0x4] sm:$0xf]
        %v2345 = vld [vmem:[%s2342 + $0x8] sm:$0xf]
        %v2346 = vld [vmem:[%s2342 + $0xc] sm:$0xf]
        %v2347 = vld [vmem:[%s2342 + $0x10] sm:$0xf]
        %v2348 = vld [vmem:[%s2342 + $0x14] sm:$0xf]
        %v2349 = vld [vmem:[%s2342 + $0x18] sm:$0xf]
        %v2350 = vld [vmem:[%s2342 + $0x1c] sm:$0xf]
        %v2351 = vld [vmem:[%s2342 + $0x20] sm:$0xf]
        %v2352 = vld [vmem:[%s2342 + $0x24] sm:$0xf]
        %v2353 = vld [vmem:[%s2342 + $0x28] sm:$0xf]
        %v2354 = vld [vmem:[%s2342 + $0x2c] sm:$0xf]
        %v2355 = vld [vmem:[%s2342 + $0x30] sm:$0xf]
        %v2356 = vld [vmem:[%s2342 + $0x34] sm:$0xf]
        %v2357 = vld [vmem:[%s2342 + $0x38] sm:$0xf]
        %v2358 = vld [vmem:[%s2342 + $0x3c] sm:$0xf]
        %v2375 = vunpack.c.l.b16 %v2343
        %v2376 = vunpack.c.l.b16 %v2344
        %v2377 = vunpack.c.l.b16 %v2345
        %v2378 = vunpack.c.l.b16 %v2346
        %v2379 = vunpack.c.l.b16 %v2347
        %v2380 = vunpack.c.l.b16 %v2348
        %v2381 = vunpack.c.l.b16 %v2349
        %v2382 = vunpack.c.l.b16 %v2350
        %v2383 = vunpack.c.l.b16 %v2351
        %v2384 = vunpack.c.l.b16 %v2352
        %v2385 = vunpack.c.l.b16 %v2353
        %v2386 = vunpack.c.l.b16 %v2354
        %v2387 = vunpack.c.l.b16 %v2355
        %v2388 = vunpack.c.l.b16 %v2356
        %v2389 = vunpack.c.l.b16 %v2357
        %v2390 = vunpack.c.l.b16 %v2358
        %v2391 = vpack.c.b16 %v2376, %v2375
        %v2392 = vpack.c.b16 %v2378, %v2377
        %v2393 = vpack.c.b16 %v2380, %v2379
        %v2394 = vpack.c.b16 %v2382, %v2381
        %v2395 = vpack.c.b16 %v2384, %v2383
        %v2396 = vpack.c.b16 %v2386, %v2385
        %v2397 = vpack.c.b16 %v2388, %v2387
        %v2398 = vpack.c.b16 %v2390, %v2389
        %2407 = vmatprep.subr.bf16.mxu0 0
        %2408 = vmatpush1.bf16.msra.mxu0 %v2391
        %2409 = vmatprep.subr.bf16.mxu0 0
        %2410 = vmatpush1.bf16.msra.mxu0 %v2392
        %2411 = vmatprep.subr.bf16.mxu0 0
        %2412 = vmatpush1.bf16.msra.mxu0 %v2393
        %2413 = vmatprep.subr.bf16.mxu0 0
        %2414 = vmatpush1.bf16.msra.mxu0 %v2394
        %2415 = vmatprep.subr.bf16.mxu0 0
        %2416 = vmatpush1.bf16.msra.mxu0 %v2395
        %2417 = vmatprep.subr.bf16.mxu0 0
        %2418 = vmatpush1.bf16.msra.mxu0 %v2396
        %2419 = vmatprep.subr.bf16.mxu0 0
        %2420 = vmatpush1.bf16.msra.mxu0 %v2397
        %2421 = vmatprep.subr.bf16.mxu0 0
        %2422 = vmatpush1.bf16.msra.mxu0 %v2398
        %2423 = vmatprep.subr.bf16.mxu0 0
        %2424 = vmatpush1.bf16.msra.mxu0 0
        %2425 = vmatprep.subr.bf16.mxu0 0
        %2426 = vmatpush1.bf16.msra.mxu0 0
        %2427 = vmatprep.subr.bf16.mxu0 0
        %2428 = vmatpush1.bf16.msra.mxu0 0
        %2429 = vmatprep.subr.bf16.mxu0 0
        %2430 = vmatpush1.bf16.msra.mxu0 0
        %2431 = vmatprep.subr.bf16.mxu0 0
        %2432 = vmatpush1.bf16.msra.mxu0 0
        %2433 = vmatprep.subr.bf16.mxu0 0
        %2434 = vmatpush1.bf16.msra.mxu0 0
        %2435 = vmatprep.subr.bf16.mxu0 0
        %2436 = vmatpush1.bf16.msra.mxu0 0
        %2437 = vmatprep.subr.bf16.mxu0 0
        %2438 = vmatpush1.bf16.msra.mxu0 0
        %2439 = vmatprep.mubr.bf16.mxu0 0
        %2440 = vmatmul.mubr.bf16.gmra.mrb[0].mxu0 %v2341
        %v2441 = vpop.f32.mrb[0].mxu0
        %v2442 = vadd.f32 0.0, %v2441
        %v2443 = vpop.f32.mrb[0].mxu0
        %v2444 = vpop.f32.mrb[0].mxu0
        %v2445 = vpop.f32.mrb[0].mxu0
        %2446 = vdwg.mxu0
        %v2447 = vadd.f32 %v2334, %v2442
        %v2448 = vld [vmem:[#allocation12] sm:$0x1]
        %v2450 = vlaneseq
        %v2451 = vshrl.u32 %v2450, 7
        %v2452 = vsub.s32 0, %v2451
        %v2453 = vrot.slane %v2448, %v2452
        %v2455 = vadd.f32 %v2447, %v2453
        %2456 = vst [vmem:[#allocation3] sm:$0x1] 0.0
        %2457 = vst [vmem:[#allocation3 + $0x9] sm:$0x1] 0.0
        %v2458 = vmax.f32 %v2455, 0.0
        %2459 = vst [vmem:[#allocation3 + $0x1] sm:$0xff] %v2458
        %v2460 = vld [vmem:[#allocation3] sm:$0xff]
        %v2461 = vpack.c.bf16 %v2460, %v2460
        %v2462 = vld [vmem:[#allocation14] sm:$0xf]
        %v2463 = vld [vmem:[#allocation14 + $0x4] sm:$0xf]
        %v2464 = vld [vmem:[#allocation14 + $0x8] sm:$0xf]
        %v2465 = vld [vmem:[#allocation14 + $0xc] sm:$0xf]
        %v2466 = vld [vmem:[#allocation14 + $0x10] sm:$0xf]
        %v2467 = vld [vmem:[#allocation14 + $0x14] sm:$0xf]
        %v2468 = vld [vmem:[#allocation14 + $0x18] sm:$0xf]
        %v2469 = vld [vmem:[#allocation14 + $0x1c] sm:$0xf]
        %v2470 = vld [vmem:[#allocation14 + $0x20] sm:$0xf]
        %v2471 = vld [vmem:[#allocation14 + $0x24] sm:$0xf]
        %v2472 = vld [vmem:[#allocation14 + $0x28] sm:$0xf]
        %v2473 = vld [vmem:[#allocation14 + $0x2c] sm:$0xf]
        %v2474 = vld [vmem:[#allocation14 + $0x30] sm:$0xf]
        %v2475 = vld [vmem:[#allocation14 + $0x34] sm:$0xf]
        %v2476 = vld [vmem:[#allocation14 + $0x38] sm:$0xf]
        %v2477 = vld [vmem:[#allocation14 + $0x3c] sm:$0xf]
        %v2478 = vld [vmem:[#allocation3 + $0x1] sm:$0xff]
        %v2479 = vpack.c.bf16 %v2478, %v2478
        %s2480 = scalar_lea.vmem [#allocation14], 64
        %v2481 = vld [vmem:[%s2480] sm:$0xf]
        %v2482 = vld [vmem:[%s2480 + $0x4] sm:$0xf]
        %v2483 = vld [vmem:[%s2480 + $0x8] sm:$0xf]
        %v2484 = vld [vmem:[%s2480 + $0xc] sm:$0xf]
        %v2485 = vld [vmem:[%s2480 + $0x10] sm:$0xf]
        %v2486 = vld [vmem:[%s2480 + $0x14] sm:$0xf]
        %v2487 = vld [vmem:[%s2480 + $0x18] sm:$0xf]
        %v2488 = vld [vmem:[%s2480 + $0x1c] sm:$0xf]
        %v2489 = vld [vmem:[%s2480 + $0x20] sm:$0xf]
        %v2490 = vld [vmem:[%s2480 + $0x24] sm:$0xf]
        %v2491 = vld [vmem:[%s2480 + $0x28] sm:$0xf]
        %v2492 = vld [vmem:[%s2480 + $0x2c] sm:$0xf]
        %v2493 = vld [vmem:[%s2480 + $0x30] sm:$0xf]
        %v2494 = vld [vmem:[%s2480 + $0x34] sm:$0xf]
        %v2495 = vld [vmem:[%s2480 + $0x38] sm:$0xf]
        %v2496 = vld [vmem:[%s2480 + $0x3c] sm:$0xf]
        %v2513 = vunpack.c.l.b16 %v2481
        %v2514 = vunpack.c.l.b16 %v2482
        %v2515 = vunpack.c.l.b16 %v2483
        %v2516 = vunpack.c.l.b16 %v2484
        %v2517 = vunpack.c.l.b16 %v2485
        %v2518 = vunpack.c.l.b16 %v2486
        %v2519 = vunpack.c.l.b16 %v2487
        %v2520 = vunpack.c.l.b16 %v2488
        %v2521 = vunpack.c.l.b16 %v2489
        %v2522 = vunpack.c.l.b16 %v2490
        %v2523 = vunpack.c.l.b16 %v2491
        %v2524 = vunpack.c.l.b16 %v2492
        %v2525 = vunpack.c.l.b16 %v2493
        %v2526 = vunpack.c.l.b16 %v2494
        %v2527 = vunpack.c.l.b16 %v2495
        %v2528 = vunpack.c.l.b16 %v2496
        %v2529 = vpack.c.b16 %v2514, %v2513
        %v2530 = vpack.c.b16 %v2516, %v2515
        %v2531 = vpack.c.b16 %v2518, %v2517
        %v2532 = vpack.c.b16 %v2520, %v2519
        %v2533 = vpack.c.b16 %v2522, %v2521
        %v2534 = vpack.c.b16 %v2524, %v2523
        %v2535 = vpack.c.b16 %v2526, %v2525
        %v2536 = vpack.c.b16 %v2528, %v2527
        %2545 = vmatprep.subr.bf16.mxu0 0
        %2546 = vmatpush1.bf16.msra.mxu0 %v2529
        %2547 = vmatprep.subr.bf16.mxu0 0
        %2548 = vmatpush1.bf16.msra.mxu0 %v2530
        %2549 = vmatprep.subr.bf16.mxu0 0
        %2550 = vmatpush1.bf16.msra.mxu0 %v2531
        %2551 = vmatprep.subr.bf16.mxu0 0
        %2552 = vmatpush1.bf16.msra.mxu0 %v2532
        %2553 = vmatprep.subr.bf16.mxu0 0
        %2554 = vmatpush1.bf16.msra.mxu0 %v2533
        %2555 = vmatprep.subr.bf16.mxu0 0
        %2556 = vmatpush1.bf16.msra.mxu0 %v2534
        %2557 = vmatprep.subr.bf16.mxu0 0
        %2558 = vmatpush1.bf16.msra.mxu0 %v2535
        %2559 = vmatprep.subr.bf16.mxu0 0
        %2560 = vmatpush1.bf16.msra.mxu0 %v2536
        %2561 = vmatprep.subr.bf16.mxu0 0
        %2562 = vmatpush1.bf16.msra.mxu0 0
        %2563 = vmatprep.subr.bf16.mxu0 0
        %2564 = vmatpush1.bf16.msra.mxu0 0
        %2565 = vmatprep.subr.bf16.mxu0 0
        %2566 = vmatpush1.bf16.msra.mxu0 0
        %2567 = vmatprep.subr.bf16.mxu0 0
        %2568 = vmatpush1.bf16.msra.mxu0 0
        %2569 = vmatprep.subr.bf16.mxu0 0
        %2570 = vmatpush1.bf16.msra.mxu0 0
        %2571 = vmatprep.subr.bf16.mxu0 0
        %2572 = vmatpush1.bf16.msra.mxu0 0
        %2573 = vmatprep.subr.bf16.mxu0 0
        %2574 = vmatpush1.bf16.msra.mxu0 0
        %2575 = vmatprep.subr.bf16.mxu0 0
        %2576 = vmatpush1.bf16.msra.mxu0 0
        %2577 = vmatprep.mubr.bf16.mxu0 0
        %2578 = vmatmul.mubr.bf16.gmra.mrb[0].mxu0 %v2479
        %v2579 = vpop.f32.mrb[0].mxu0
        %v2580 = vadd.f32 0.0, %v2579
        %v2581 = vpop.f32.mrb[0].mxu0
        %v2582 = vpop.f32.mrb[0].mxu0
        %v2583 = vpop.f32.mrb[0].mxu0
        %2584 = vdwg.mxu0
        %v2601 = vunpack.c.l.b16 %v2462
        %v2602 = vunpack.c.l.b16 %v2463
        %v2603 = vunpack.c.l.b16 %v2464
        %v2604 = vunpack.c.l.b16 %v2465
        %v2605 = vunpack.c.l.b16 %v2466
        %v2606 = vunpack.c.l.b16 %v2467
        %v2607 = vunpack.c.l.b16 %v2468
        %v2608 = vunpack.c.l.b16 %v2469
        %v2609 = vunpack.c.l.b16 %v2470
        %v2610 = vunpack.c.l.b16 %v2471
        %v2611 = vunpack.c.l.b16 %v2472
        %v2612 = vunpack.c.l.b16 %v2473
        %v2613 = vunpack.c.l.b16 %v2474
        %v2614 = vunpack.c.l.b16 %v2475
        %v2615 = vunpack.c.l.b16 %v2476
        %v2616 = vunpack.c.l.b16 %v2477
        %v2617 = vpack.c.b16 %v2602, %v2601
        %v2618 = vpack.c.b16 %v2604, %v2603
        %v2619 = vpack.c.b16 %v2606, %v2605
        %v2620 = vpack.c.b16 %v2608, %v2607
        %v2621 = vpack.c.b16 %v2610, %v2609
        %v2622 = vpack.c.b16 %v2612, %v2611
        %v2623 = vpack.c.b16 %v2614, %v2613
        %v2624 = vpack.c.b16 %v2616, %v2615
        %2633 = vmatprep.subr.bf16.mxu0 0
        %2634 = vmatpush1.bf16.msra.mxu0 %v2617
        %2635 = vmatprep.subr.bf16.mxu0 0
        %2636 = vmatpush1.bf16.msra.mxu0 %v2618
        %2637 = vmatprep.subr.bf16.mxu0 0
        %2638 = vmatpush1.bf16.msra.mxu0 %v2619
        %2639 = vmatprep.subr.bf16.mxu0 0
        %2640 = vmatpush1.bf16.msra.mxu0 %v2620
        %2641 = vmatprep.subr.bf16.mxu0 0
        %2642 = vmatpush1.bf16.msra.mxu0 %v2621
        %2643 = vmatprep.subr.bf16.mxu0 0
        %2644 = vmatpush1.bf16.msra.mxu0 %v2622
        %2645 = vmatprep.subr.bf16.mxu0 0
        %2646 = vmatpush1.bf16.msra.mxu0 %v2623
        %2647 = vmatprep.subr.bf16.mxu0 0
        %2648 = vmatpush1.bf16.msra.mxu0 %v2624
        %2649 = vmatprep.subr.bf16.mxu0 0
        %2650 = vmatpush1.bf16.msra.mxu0 0
        %2651 = vmatprep.subr.bf16.mxu0 0
        %2652 = vmatpush1.bf16.msra.mxu0 0
        %2653 = vmatprep.subr.bf16.mxu0 0
        %2654 = vmatpush1.bf16.msra.mxu0 0
        %2655 = vmatprep.subr.bf16.mxu0 0
        %2656 = vmatpush1.bf16.msra.mxu0 0
        %2657 = vmatprep.subr.bf16.mxu0 0
        %2658 = vmatpush1.bf16.msra.mxu0 0
        %2659 = vmatprep.subr.bf16.mxu0 0
        %2660 = vmatpush1.bf16.msra.mxu0 0
        %2661 = vmatprep.subr.bf16.mxu0 0
        %2662 = vmatpush1.bf16.msra.mxu0 0
        %2663 = vmatprep.subr.bf16.mxu0 0
        %2664 = vmatpush1.bf16.msra.mxu0 0
        %2665 = vmatprep.mubr.bf16.mxu0 0
        %2666 = vmatmul.mubr.bf16.gmra.mrb[0].mxu0 %v2461
        %v2667 = vpop.f32.mrb[0].mxu0
        %v2668 = vadd.f32 %v2580, %v2667
        %v2669 = vpop.f32.mrb[0].mxu0
        %v2670 = vpop.f32.mrb[0].mxu0
        %v2671 = vpop.f32.mrb[0].mxu0
        %2672 = vdwg.mxu0
        %v2673 = vld [vmem:[#allocation3 + $0x2] sm:$0xff]
        %v2674 = vpack.c.bf16 %v2673, %v2673
        %s2675 = scalar_lea.vmem [#allocation14], 128
        %v2676 = vld [vmem:[%s2675] sm:$0xf]
        %v2677 = vld [vmem:[%s2675 + $0x4] sm:$0xf]
        %v2678 = vld [vmem:[%s2675 + $0x8] sm:$0xf]
        %v2679 = vld [vmem:[%s2675 + $0xc] sm:$0xf]
        %v2680 = vld [vmem:[%s2675 + $0x10] sm:$0xf]
        %v2681 = vld [vmem:[%s2675 + $0x14] sm:$0xf]
        %v2682 = vld [vmem:[%s2675 + $0x18] sm:$0xf]
        %v2683 = vld [vmem:[%s2675 + $0x1c] sm:$0xf]
        %v2684 = vld [vmem:[%s2675 + $0x20] sm:$0xf]
        %v2685 = vld [vmem:[%s2675 + $0x24] sm:$0xf]
        %v2686 = vld [vmem:[%s2675 + $0x28] sm:$0xf]
        %v2687 = vld [vmem:[%s2675 + $0x2c] sm:$0xf]
        %v2688 = vld [vmem:[%s2675 + $0x30] sm:$0xf]
        %v2689 = vld [vmem:[%s2675 + $0x34] sm:$0xf]
        %v2690 = vld [vmem:[%s2675 + $0x38] sm:$0xf]
        %v2691 = vld [vmem:[%s2675 + $0x3c] sm:$0xf]
        %v2708 = vunpack.c.l.b16 %v2676
        %v2709 = vunpack.c.l.b16 %v2677
        %v2710 = vunpack.c.l.b16 %v2678
        %v2711 = vunpack.c.l.b16 %v2679
        %v2712 = vunpack.c.l.b16 %v2680
        %v2713 = vunpack.c.l.b16 %v2681
        %v2714 = vunpack.c.l.b16 %v2682
        %v2715 = vunpack.c.l.b16 %v2683
        %v2716 = vunpack.c.l.b16 %v2684
        %v2717 = vunpack.c.l.b16 %v2685
        %v2718 = vunpack.c.l.b16 %v2686
        %v2719 = vunpack.c.l.b16 %v2687
        %v2720 = vunpack.c.l.b16 %v2688
        %v2721 = vunpack.c.l.b16 %v2689
        %v2722 = vunpack.c.l.b16 %v2690
        %v2723 = vunpack.c.l.b16 %v2691
        %v2724 = vpack.c.b16 %v2709, %v2708
        %v2725 = vpack.c.b16 %v2711, %v2710
        %v2726 = vpack.c.b16 %v2713, %v2712
        %v2727 = vpack.c.b16 %v2715, %v2714
        %v2728 = vpack.c.b16 %v2717, %v2716
        %v2729 = vpack.c.b16 %v2719, %v2718
        %v2730 = vpack.c.b16 %v2721, %v2720
        %v2731 = vpack.c.b16 %v2723, %v2722
        %2740 = vmatprep.subr.bf16.mxu0 0
        %2741 = vmatpush1.bf16.msra.mxu0 %v2724
        %2742 = vmatprep.subr.bf16.mxu0 0
        %2743 = vmatpush1.bf16.msra.mxu0 %v2725
        %2744 = vmatprep.subr.bf16.mxu0 0
        %2745 = vmatpush1.bf16.msra.mxu0 %v2726
        %2746 = vmatprep.subr.bf16.mxu0 0
        %2747 = vmatpush1.bf16.msra.mxu0 %v2727
        %2748 = vmatprep.subr.bf16.mxu0 0
        %2749 = vmatpush1.bf16.msra.mxu0 %v2728
        %2750 = vmatprep.subr.bf16.mxu0 0
        %2751 = vmatpush1.bf16.msra.mxu0 %v2729
        %2752 = vmatprep.subr.bf16.mxu0 0
        %2753 = vmatpush1.bf16.msra.mxu0 %v2730
        %2754 = vmatprep.subr.bf16.mxu0 0
        %2755 = vmatpush1.bf16.msra.mxu0 %v2731
        %2756 = vmatprep.subr.bf16.mxu0 0
        %2757 = vmatpush1.bf16.msra.mxu0 0
        %2758 = vmatprep.subr.bf16.mxu0 0
        %2759 = vmatpush1.bf16.msra.mxu0 0
        %2760 = vmatprep.subr.bf16.mxu0 0
        %2761 = vmatpush1.bf16.msra.mxu0 0
        %2762 = vmatprep.subr.bf16.mxu0 0
        %2763 = vmatpush1.bf16.msra.mxu0 0
        %2764 = vmatprep.subr.bf16.mxu0 0
        %2765 = vmatpush1.bf16.msra.mxu0 0
        %2766 = vmatprep.subr.bf16.mxu0 0
        %2767 = vmatpush1.bf16.msra.mxu0 0
        %2768 = vmatprep.subr.bf16.mxu0 0
        %2769 = vmatpush1.bf16.msra.mxu0 0
        %2770 = vmatprep.subr.bf16.mxu0 0
        %2771 = vmatpush1.bf16.msra.mxu0 0
        %2772 = vmatprep.mubr.bf16.mxu0 0
        %2773 = vmatmul.mubr.bf16.gmra.mrb[0].mxu0 %v2674
        %v2774 = vpop.f32.mrb[0].mxu0
        %v2775 = vadd.f32 0.0, %v2774
        %v2776 = vpop.f32.mrb[0].mxu0
        %v2777 = vpop.f32.mrb[0].mxu0
        %v2778 = vpop.f32.mrb[0].mxu0
        %2779 = vdwg.mxu0
        %v2780 = vadd.f32 %v2668, %v2775
        %v2781 = vld [vmem:[#allocation15] sm:$0x1]
        %v2783 = vlaneseq
        %v2784 = vshrl.u32 %v2783, 7
        %v2785 = vsub.s32 0, %v2784
        %v2786 = vrot.slane %v2781, %v2785
        %v2788 = vadd.f32 %v2780, %v2786
        %v2789 = vld [vmem:[#allocation2 + $0x1] sm:$0xff]
        %v2790 = vadd.f32 %v2788, %v2789
        %2791 = vst [vmem:[%s522] sm:$0x1] 0.0
        %2792 = vst [vmem:[%s522 + $0x9] sm:$0x1] 0.0
        %2793 = vst [vmem:[%s522 + $0x1] sm:$0xff] %v2790
        %p2794 = scmp.lt.s32.totalorder %s28, 1
        %s2795 = scalar_select %p2794, %s28, 1
        %s2796 = smul.addr %s2795, 2
        %s2797 = smul.addr %s2796, 8
        %s2798 = scalar_lea.vmem %s12, %s2797
        // Predicated region
        $region101: #{impala_cnn_forward.4} parent=67 // pred_check
          %p2799 = pneg %p303
        $region102: #{impala_cnn_forward.4} parent=67 // pred_check_branch
          %2801 = sbr.rel (%p2799) target = $region104
        $region103: #{impala_cnn_forward.4} parent=67 // pred_region
          _
        $region104: #{impala_cnn_forward.4} parent=67 // pred_fallthru
          _
      $region68: #{impala_cnn_forward.4} parent=5 // pred_fallthru
        _
      %p2802 = scmp.le.s32.totalorder 2, %s23
      // Predicated region
      $region105: #{impala_cnn_forward.4} parent=5 // pred_check
        %p2803 = pneg %p2802
      $region106: #{impala_cnn_forward.4} parent=5 // pred_check_branch
        %2805 = sbr.rel (%p2803) target = $region108
      $region107: #{impala_cnn_forward.4} parent=5 // pred_region
        %s2806 = ssub.s32 %s23, 2
        // Predicated region
        $region109: #{impala_cnn_forward.4} parent=107 // pred_check
          %p2807 = pneg %p309
        $region110: #{impala_cnn_forward.4} parent=107 // pred_check_branch
          %2809 = sbr.rel (%p2807) target = $region112
        $region111: #{impala_cnn_forward.4} parent=107 // pred_region
          %p2810 = scmp.lt.s32.totalorder %s29, 1
          %s2811 = scalar_select %p2810, %s29, 1
          %s2812 = smul.addr %s2811, 2
          %s2813 = smul.addr %s2812, 8
          %s2814 = scalar_lea.vmem %s12, %s2813
        $region112: #{impala_cnn_forward.4} parent=107 // pred_fallthru
          _
      $region108: #{impala_cnn_forward.4} parent=5 // pred_fallthru
        _
    $region6: #{impala_cnn_forward.4} parent=1 // loop_footer
      %s27 = sadd.s32 1, %s23
    $region7: #{impala_cnn_forward.4} parent=1 // loop_footer_branch
      %22 = sbr.rel target = $region3
    $region8: #{impala_cnn_forward.4} parent=1 // loop_exit
      _
    %2815 = vsyncpa [#allocation5], 1
    %s2816 = scalar_lea.sflag [#allocation5], 1
    %2817 = vsyncpa %s2816, 1
    %2818 = vsyncpa [#allocation7], 1
    %2819 = vsyncpa [#allocation10], 1
    %2820 = vsyncpa [#allocation13], 1
    %2821 = vsyncpa [#allocation16], 1

// kernel: impala_cnn_forward.7
$region0: #{impala_cnn_forward.7}
  #allocation0 [shape = 'u32[]', space=smem, size = 0x4, offset = 0x4, fixed_abs, tag = 'smem constant byte address 0x4 - core index']
  #allocation1 [shape = 'u32[144,128]{1,0:T(1,128)}', space=vmem, size = 0x12000, scoped, tag = 'internal scratch']
  %s0 = inlined_call_operand.vmem [shape: f32[2,128], index: 0, kind: input, shape index: {}]
  %s1 = inlined_call_operand.vmem [shape: bf16[128,32], index: 1, kind: input, shape index: {}]
  %s2 = inlined_call_operand.vmem [shape: f32[1,32], index: 2, kind: input, shape index: {}]
  %s3 = inlined_call_operand.hbm [shape: f32[2,32], index: 3, kind: output, shape index: {}]
  %s4 = sld [smem:[#allocation0]]
  $region22: #{impala_cnn_forward.7} parent=0
    _
  %s6 = ssub.s32 1, %s4
  %s7 = scalar_select 0, %s6, %s4
  $region1: #{impala_cnn_forward.7} parent=0
    #allocation2 [shape = 'u8[1024]{0}', space=vmem, size = 0x400, scoped, tag = 'output window, operand 0, single buffered']
    #allocation3 [shape = 's32[1]{0}', space=sflag, size = 0x4, scoped, tag = 'scoped memory for impala_cnn_forward.7']
    %8 = vsyncpa [#allocation3], 0
    // Predicated region
    $region2: #{impala_cnn_forward.7} parent=1 // pred_check
      _
    $region3: #{impala_cnn_forward.7} parent=1 // pred_check_branch
      %10 = sbr.rel (0) target = $region5
    $region4: #{impala_cnn_forward.7} parent=1 // pred_region
      _
    $region5: #{impala_cnn_forward.7} parent=1 // pred_fallthru
      _
    // Predicated region
    $region6: #{impala_cnn_forward.7} parent=1 // pred_check
      _
    $region7: #{impala_cnn_forward.7} parent=1 // pred_check_branch
      %12 = sbr.rel (0) target = $region9
    $region8: #{impala_cnn_forward.7} parent=1 // pred_region
      _
    $region9: #{impala_cnn_forward.7} parent=1 // pred_fallthru
      _
    // Predicated region
    $region10: #{impala_cnn_forward.7} parent=1 // pred_check
      _
    $region11: #{impala_cnn_forward.7} parent=1 // pred_check_branch
      %14 = sbr.rel (0) target = $region13
    $region12: #{impala_cnn_forward.7} parent=1 // pred_region
      _
    $region13: #{impala_cnn_forward.7} parent=1 // pred_fallthru
      _
    %v16 = vld [vmem:[%s0] sm:$0x3]
    %v17 = vmax.f32 %v16, 0.0
    %v18 = vpack.c.bf16 %v17, %v17
    %v19 = vld [vmem:[%s1] sm:$0xf]
    %v20 = vld [vmem:[%s1 + $0x4] sm:$0xf]
    %v21 = vld [vmem:[%s1 + $0x8] sm:$0xf]
    %v22 = vld [vmem:[%s1 + $0xc] sm:$0xf]
    %v23 = vld [vmem:[%s1 + $0x10] sm:$0xf]
    %v24 = vld [vmem:[%s1 + $0x14] sm:$0xf]
    %v25 = vld [vmem:[%s1 + $0x18] sm:$0xf]
    %v26 = vld [vmem:[%s1 + $0x1c] sm:$0xf]
    %v27 = vld [vmem:[%s1 + $0x20] sm:$0xf]
    %v28 = vld [vmem:[%s1 + $0x24] sm:$0xf]
    %v29 = vld [vmem:[%s1 + $0x28] sm:$0xf]
    %v30 = vld [vmem:[%s1 + $0x2c] sm:$0xf]
    %v31 = vld [vmem:[%s1 + $0x30] sm:$0xf]
    %v32 = vld [vmem:[%s1 + $0x34] sm:$0xf]
    %v33 = vld [vmem:[%s1 + $0x38] sm:$0xf]
    %v34 = vld [vmem:[%s1 + $0x3c] sm:$0xf]
    %v35 = vld [vmem:[%s2] sm:$0x1]
    %v37 = vlaneseq
    %v38 = vshrl.u32 %v37, 7
    %v39 = vsub.s32 0, %v38
    %v40 = vrot.slane %v35, %v39
    %v58 = vunpack.c.l.b16 %v19
    %v59 = vunpack.c.l.b16 %v20
    %v60 = vunpack.c.l.b16 %v21
    %v61 = vunpack.c.l.b16 %v22
    %v62 = vunpack.c.l.b16 %v23
    %v63 = vunpack.c.l.b16 %v24
    %v64 = vunpack.c.l.b16 %v25
    %v65 = vunpack.c.l.b16 %v26
    %v66 = vunpack.c.l.b16 %v27
    %v67 = vunpack.c.l.b16 %v28
    %v68 = vunpack.c.l.b16 %v29
    %v69 = vunpack.c.l.b16 %v30
    %v70 = vunpack.c.l.b16 %v31
    %v71 = vunpack.c.l.b16 %v32
    %v72 = vunpack.c.l.b16 %v33
    %v73 = vunpack.c.l.b16 %v34
    %v74 = vpack.c.b16 %v59, %v58
    %v75 = vpack.c.b16 %v61, %v60
    %v76 = vpack.c.b16 %v63, %v62
    %v77 = vpack.c.b16 %v65, %v64
    %v78 = vpack.c.b16 %v67, %v66
    %v79 = vpack.c.b16 %v69, %v68
    %v80 = vpack.c.b16 %v71, %v70
    %v81 = vpack.c.b16 %v73, %v72
    %90 = vmatprep.subr.bf16.mxu0 0
    %91 = vmatpush1.bf16.msra.mxu0 %v74
    %92 = vmatprep.subr.bf16.mxu0 0
    %93 = vmatpush1.bf16.msra.mxu0 %v75
    %94 = vmatprep.subr.bf16.mxu0 0
    %95 = vmatpush1.bf16.msra.mxu0 %v76
    %96 = vmatprep.subr.bf16.mxu0 0
    %97 = vmatpush1.bf16.msra.mxu0 %v77
    %98 = vmatprep.subr.bf16.mxu0 0
    %99 = vmatpush1.bf16.msra.mxu0 %v78
    %100 = vmatprep.subr.bf16.mxu0 0
    %101 = vmatpush1.bf16.msra.mxu0 %v79
    %102 = vmatprep.subr.bf16.mxu0 0
    %103 = vmatpush1.bf16.msra.mxu0 %v80
    %104 = vmatprep.subr.bf16.mxu0 0
    %105 = vmatpush1.bf16.msra.mxu0 %v81
    %106 = vmatprep.subr.bf16.mxu0 0
    %107 = vmatpush1.bf16.msra.mxu0 0
    %108 = vmatprep.subr.bf16.mxu0 0
    %109 = vmatpush1.bf16.msra.mxu0 0
    %110 = vmatprep.subr.bf16.mxu0 0
    %111 = vmatpush1.bf16.msra.mxu0 0
    %112 = vmatprep.subr.bf16.mxu0 0
    %113 = vmatpush1.bf16.msra.mxu0 0
    %114 = vmatprep.subr.bf16.mxu0 0
    %115 = vmatpush1.bf16.msra.mxu0 0
    %116 = vmatprep.subr.bf16.mxu0 0
    %117 = vmatpush1.bf16.msra.mxu0 0
    %118 = vmatprep.subr.bf16.mxu0 0
    %119 = vmatpush1.bf16.msra.mxu0 0
    %120 = vmatprep.subr.bf16.mxu0 0
    %121 = vmatpush1.bf16.msra.mxu0 0
    %122 = vmatprep.mubr.bf16.mxu0 0
    %123 = vmatmul.mubr.bf16.gmra.mrb[0].mxu0 %v18
    %v124 = vpop.f32.mrb[0].mxu0
    %v125 = vadd.f32 %v40, %v124
    %v126 = vpop.f32.mrb[0].mxu0
    %v127 = vpop.f32.mrb[0].mxu0
    %v128 = vpop.f32.mrb[0].mxu0
    %129 = vdwg.mxu0
    %v130 = vmax.f32 %v125, 0.0
    %vm131 = vcmask 254976
    %132 = vst.msk [vmem:[#allocation2] sm:$0x3] %vm131, %v130
    // Predicated region
    $region14: #{impala_cnn_forward.7} parent=1 // pred_check
      _
    $region15: #{impala_cnn_forward.7} parent=1 // pred_check_branch
      %134 = sbr.rel (0) target = $region17
    $region16: #{impala_cnn_forward.7} parent=1 // pred_region
      %s136 = ssub.s32 32, 32
      %137 = vsyncadd [#allocation3], %s136
      %s139 = sshll.u32 [#allocation2], 4
      %s140 = int_to_ptr.vmem [resolvable:$true] %s139
      %142 = dma.vmem_to_hbm [thread:$0]  %s140, 32, %s3, [#allocation3]
    $region17: #{impala_cnn_forward.7} parent=1 // pred_fallthru
      _
    // Predicated region
    $region18: #{impala_cnn_forward.7} parent=1 // pred_check
      _
    $region19: #{impala_cnn_forward.7} parent=1 // pred_check_branch
      %144 = sbr.rel (0) target = $region21
    $region20: #{impala_cnn_forward.7} parent=1 // pred_region
      %145 = dma.done [#allocation3], 32
    $region21: #{impala_cnn_forward.7} parent=1 // pred_fallthru
      _
    %146 = vsyncpa [#allocation3], 1

// kernel: impala_cnn_forward.6
$region0: #{impala_cnn_forward.6}
  #allocation0 [shape = 'u32[]', space=smem, size = 0x4, offset = 0x4, fixed_abs, tag = 'smem constant byte address 0x4 - core index']
  #allocation1 [shape = 'u32[144,128]{1,0:T(1,128)}', space=vmem, size = 0x12000, scoped, tag = 'internal scratch']
  #allocation2 [shape = 'f32[4,64]{1,0:T(4,128)}', space=vmem, size = 0x800, scoped, tag = 'scratch operand']
  #allocation3 [shape = 'f32[4,64]{1,0:T(4,128)}', space=vmem, size = 0x800, scoped, tag = 'scratch operand']
  %s0 = inlined_call_operand.vmem [shape: f32[2,6,128], index: 0, kind: input, shape index: {}]
  %s1 = inlined_call_operand.vmem [shape: bf16[3,3,128,64], index: 1, kind: input, shape index: {}]
  %s2 = inlined_call_operand.vmem [shape: f32[1,64], index: 2, kind: input, shape index: {}]
  %s3 = inlined_call_operand.vmem [shape: f32[3,2,4], index: 3, kind: input, shape index: {}]
  %s4 = inlined_call_operand.vmem [shape: bf16[3,64,64], index: 4, kind: input, shape index: {}]
  %s5 = inlined_call_operand.vmem [shape: f32[1,64], index: 5, kind: input, shape index: {}]
  %s6 = inlined_call_operand.vmem [shape: bf16[3,64,64], index: 6, kind: input, shape index: {}]
  %s7 = inlined_call_operand.vmem [shape: f32[1,64], index: 7, kind: input, shape index: {}]
  %s8 = inlined_call_operand.vmem [shape: bf16[3,64,64], index: 8, kind: input, shape index: {}]
  %s9 = inlined_call_operand.vmem [shape: f32[1,64], index: 9, kind: input, shape index: {}]
  %s10 = inlined_call_operand.vmem [shape: bf16[3,64,64], index: 10, kind: input, shape index: {}]
  %s11 = inlined_call_operand.vmem [shape: f32[1,64], index: 11, kind: input, shape index: {}]
  %s12 = inlined_call_operand.vmem [shape: f32[2,4,64], index: 12, kind: output, shape index: {}]
  %s13 = sld [smem:[#allocation0]]
  $region81: #{impala_cnn_forward.6} parent=0
    _
  %s15 = ssub.s32 1, %s13
  %s16 = scalar_select 0, %s15, %s13
  loop: start=0, step=1, limit=4
  $region2: #{impala_cnn_forward.6} parent=0 // loop_pre_header
    _
  $region3: #{impala_cnn_forward.6} parent=0 // loop_header
    %s18 = sphi 0, %s22
    %p19 = scmp.ge.s32.totalorder %s18, 4
    %s28 = sphi 0, %s30
    %s31 = sphi 0, %s28
    %s32 = sphi 0, %s31
    %s48 = sphi 0, %s32
    %s52 = sphi 0, %s52
    %s54 = sphi 0, %s52
    %s55 = sphi 0, %s54
    %s69 = sphi 0, %s55
    %s73 = sphi 0, %s73
    %s75 = sphi 0, %s73
    %s76 = sphi 0, %s75
    %s90 = sphi 0, %s76
    %s94 = sphi 0, %s94
    %s96 = sphi 0, %s94
    %s97 = sphi 0, %s96
    %s111 = sphi 0, %s97
    %s115 = sphi 0, %s115
    %s117 = sphi 0, %s115
    %s118 = sphi 0, %s117
    %s132 = sphi 0, %s118
    %s136 = sphi 0, %s136
    %s138 = sphi 0, %s136
    %s139 = sphi 0, %s138
    %s153 = sphi 0, %s139
    %s157 = sphi 0, %s157
    %s159 = sphi 0, %s157
    %s160 = sphi 0, %s159
    %s174 = sphi 0, %s160
    %s178 = sphi 0, %s178
    %s180 = sphi 0, %s178
    %s181 = sphi 0, %s180
    %s195 = sphi 0, %s181
    %s199 = sphi 0, %s199
    %s201 = sphi 0, %s199
    %s202 = sphi 0, %s201
    %s216 = sphi 0, %s202
    %s220 = sphi 0, %s220
    %s222 = sphi 0, %s220
    %s223 = sphi 0, %s222
    %s237 = sphi 0, %s223
    %s241 = sphi 0, %s241
    %s243 = sphi 0, %s241
    %s244 = sphi 0, %s243
    %s258 = sphi 0, %s244
    %s262 = sphi 0, %s262
    %s264 = sphi 0, %s262
    %s265 = sphi 0, %s264
    %s279 = sphi 0, %s265
    %s285 = sphi 0, %s287
    %s288 = sphi 0, %s285
    %s289 = sphi 0, %s288
    %s305 = sphi 0, %s289
  $region4: #{impala_cnn_forward.6} parent=0 // loop_header_branch
    %21 = sbr.rel (%p19) target = $region8
  $region5: #{impala_cnn_forward.6} parent=0 // loop_body
    %s23 = ssub.s32 %s18, 1
    %s24 = ssub.s32 %s18, 2
    %s25 = sadd.s32 %s18, 1
    %s26 = ssub.s32 %s18, %s25
    %p27 = scmp.eq.s32.totalorder %s26, 0
    %s29 = sadd.s32 %s28, 1
    %s30 = scalar_select %p27, %s28, %s29
    %p33 = pneg %p27
    %p34 = scmp.eq.s32.totalorder %s18, 1
    %p35 = por %p33, %p34
    %p36 = scmp.ne.s32.totalorder %s28, %s31
    %p37 = scmp.eq.s32.totalorder %s18, 0
    %p38 = por %p36, %p37
    %p39 = scmp.ne.s32.totalorder %s28, %s31
    %p40 = scmp.eq.s32.totalorder %s23, 1
    %p41 = por %p39, %p40
    %p42 = scmp.ne.s32.totalorder %s31, %s32
    %p43 = scmp.eq.s32.totalorder %s23, 0
    %p44 = por %p42, %p43
    %p45 = scmp.ne.s32.totalorder %s31, %s32
    %p46 = scmp.eq.s32.totalorder %s24, 1
    %p47 = por %p45, %p46
    %p49 = scmp.ne.s32.totalorder %s32, %s48
    %p50 = scmp.eq.s32.totalorder %s24, 0
    %p51 = por %p49, %p50
    %s53 = sadd.s32 %s52, 1
    %p56 = scmp.eq.s32.totalorder %s18, 1
    %p57 = scmp.ne.s32.totalorder %s52, %s54
    %p58 = scmp.eq.s32.totalorder %s18, 0
    %p59 = por %p57, %p58
    %p60 = scmp.ne.s32.totalorder %s52, %s54
    %p61 = scmp.eq.s32.totalorder %s23, 1
    %p62 = por %p60, %p61
    %p63 = scmp.ne.s32.totalorder %s54, %s55
    %p64 = scmp.eq.s32.totalorder %s23, 0
    %p65 = por %p63, %p64
    %p66 = scmp.ne.s32.totalorder %s54, %s55
    %p67 = scmp.eq.s32.totalorder %s24, 1
    %p68 = por %p66, %p67
    %p70 = scmp.ne.s32.totalorder %s55, %s69
    %p71 = scmp.eq.s32.totalorder %s24, 0
    %p72 = por %p70, %p71
    %s74 = sadd.s32 %s73, 1
    %p77 = scmp.eq.s32.totalorder %s18, 1
    %p78 = scmp.ne.s32.totalorder %s73, %s75
    %p79 = scmp.eq.s32.totalorder %s18, 0
    %p80 = por %p78, %p79
    %p81 = scmp.ne.s32.totalorder %s73, %s75
    %p82 = scmp.eq.s32.totalorder %s23, 1
    %p83 = por %p81, %p82
    %p84 = scmp.ne.s32.totalorder %s75, %s76
    %p85 = scmp.eq.s32.totalorder %s23, 0
    %p86 = por %p84, %p85
    %p87 = scmp.ne.s32.totalorder %s75, %s76
    %p88 = scmp.eq.s32.totalorder %s24, 1
    %p89 = por %p87, %p88
    %p91 = scmp.ne.s32.totalorder %s76, %s90
    %p92 = scmp.eq.s32.totalorder %s24, 0
    %p93 = por %p91, %p92
    %s95 = sadd.s32 %s94, 1
    %p98 = scmp.eq.s32.totalorder %s18, 1
    %p99 = scmp.ne.s32.totalorder %s94, %s96
    %p100 = scmp.eq.s32.totalorder %s18, 0
    %p101 = por %p99, %p100
    %p102 = scmp.ne.s32.totalorder %s94, %s96
    %p103 = scmp.eq.s32.totalorder %s23, 1
    %p104 = por %p102, %p103
    %p105 = scmp.ne.s32.totalorder %s96, %s97
    %p106 = scmp.eq.s32.totalorder %s23, 0
    %p107 = por %p105, %p106
    %p108 = scmp.ne.s32.totalorder %s96, %s97
    %p109 = scmp.eq.s32.totalorder %s24, 1
    %p110 = por %p108, %p109
    %p112 = scmp.ne.s32.totalorder %s97, %s111
    %p113 = scmp.eq.s32.totalorder %s24, 0
    %p114 = por %p112, %p113
    %s116 = sadd.s32 %s115, 1
    %p119 = scmp.eq.s32.totalorder %s18, 1
    %p120 = scmp.ne.s32.totalorder %s115, %s117
    %p121 = scmp.eq.s32.totalorder %s18, 0
    %p122 = por %p120, %p121
    %p123 = scmp.ne.s32.totalorder %s115, %s117
    %p124 = scmp.eq.s32.totalorder %s23, 1
    %p125 = por %p123, %p124
    %p126 = scmp.ne.s32.totalorder %s117, %s118
    %p127 = scmp.eq.s32.totalorder %s23, 0
    %p128 = por %p126, %p127
    %p129 = scmp.ne.s32.totalorder %s117, %s118
    %p130 = scmp.eq.s32.totalorder %s24, 1
    %p131 = por %p129, %p130
    %p133 = scmp.ne.s32.totalorder %s118, %s132
    %p134 = scmp.eq.s32.totalorder %s24, 0
    %p135 = por %p133, %p134
    %s137 = sadd.s32 %s136, 1
    %p140 = scmp.eq.s32.totalorder %s18, 1
    %p141 = scmp.ne.s32.totalorder %s136, %s138
    %p142 = scmp.eq.s32.totalorder %s18, 0
    %p143 = por %p141, %p142
    %p144 = scmp.ne.s32.totalorder %s136, %s138
    %p145 = scmp.eq.s32.totalorder %s23, 1
    %p146 = por %p144, %p145
    %p147 = scmp.ne.s32.totalorder %s138, %s139
    %p148 = scmp.eq.s32.totalorder %s23, 0
    %p149 = por %p147, %p148
    %p150 = scmp.ne.s32.totalorder %s138, %s139
    %p151 = scmp.eq.s32.totalorder %s24, 1
    %p152 = por %p150, %p151
    %p154 = scmp.ne.s32.totalorder %s139, %s153
    %p155 = scmp.eq.s32.totalorder %s24, 0
    %p156 = por %p154, %p155
    %s158 = sadd.s32 %s157, 1
    %p161 = scmp.eq.s32.totalorder %s18, 1
    %p162 = scmp.ne.s32.totalorder %s157, %s159
    %p163 = scmp.eq.s32.totalorder %s18, 0
    %p164 = por %p162, %p163
    %p165 = scmp.ne.s32.totalorder %s157, %s159
    %p166 = scmp.eq.s32.totalorder %s23, 1
    %p167 = por %p165, %p166
    %p168 = scmp.ne.s32.totalorder %s159, %s160
    %p169 = scmp.eq.s32.totalorder %s23, 0
    %p170 = por %p168, %p169
    %p171 = scmp.ne.s32.totalorder %s159, %s160
    %p172 = scmp.eq.s32.totalorder %s24, 1
    %p173 = por %p171, %p172
    %p175 = scmp.ne.s32.totalorder %s160, %s174
    %p176 = scmp.eq.s32.totalorder %s24, 0
    %p177 = por %p175, %p176
    %s179 = sadd.s32 %s178, 1
    %p182 = scmp.eq.s32.totalorder %s18, 1
    %p183 = scmp.ne.s32.totalorder %s178, %s180
    %p184 = scmp.eq.s32.totalorder %s18, 0
    %p185 = por %p183, %p184
    %p186 = scmp.ne.s32.totalorder %s178, %s180
    %p187 = scmp.eq.s32.totalorder %s23, 1
    %p188 = por %p186, %p187
    %p189 = scmp.ne.s32.totalorder %s180, %s181
    %p190 = scmp.eq.s32.totalorder %s23, 0
    %p191 = por %p189, %p190
    %p192 = scmp.ne.s32.totalorder %s180, %s181
    %p193 = scmp.eq.s32.totalorder %s24, 1
    %p194 = por %p192, %p193
    %p196 = scmp.ne.s32.totalorder %s181, %s195
    %p197 = scmp.eq.s32.totalorder %s24, 0
    %p198 = por %p196, %p197
    %s200 = sadd.s32 %s199, 1
    %p203 = scmp.eq.s32.totalorder %s18, 1
    %p204 = scmp.ne.s32.totalorder %s199, %s201
    %p205 = scmp.eq.s32.totalorder %s18, 0
    %p206 = por %p204, %p205
    %p207 = scmp.ne.s32.totalorder %s199, %s201
    %p208 = scmp.eq.s32.totalorder %s23, 1
    %p209 = por %p207, %p208
    %p210 = scmp.ne.s32.totalorder %s201, %s202
    %p211 = scmp.eq.s32.totalorder %s23, 0
    %p212 = por %p210, %p211
    %p213 = scmp.ne.s32.totalorder %s201, %s202
    %p214 = scmp.eq.s32.totalorder %s24, 1
    %p215 = por %p213, %p214
    %p217 = scmp.ne.s32.totalorder %s202, %s216
    %p218 = scmp.eq.s32.totalorder %s24, 0
    %p219 = por %p217, %p218
    %s221 = sadd.s32 %s220, 1
    %p224 = scmp.eq.s32.totalorder %s18, 1
    %p225 = scmp.ne.s32.totalorder %s220, %s222
    %p226 = scmp.eq.s32.totalorder %s18, 0
    %p227 = por %p225, %p226
    %p228 = scmp.ne.s32.totalorder %s220, %s222
    %p229 = scmp.eq.s32.totalorder %s23, 1
    %p230 = por %p228, %p229
    %p231 = scmp.ne.s32.totalorder %s222, %s223
    %p232 = scmp.eq.s32.totalorder %s23, 0
    %p233 = por %p231, %p232
    %p234 = scmp.ne.s32.totalorder %s222, %s223
    %p235 = scmp.eq.s32.totalorder %s24, 1
    %p236 = por %p234, %p235
    %p238 = scmp.ne.s32.totalorder %s223, %s237
    %p239 = scmp.eq.s32.totalorder %s24, 0
    %p240 = por %p238, %p239
    %s242 = sadd.s32 %s241, 1
    %p245 = scmp.eq.s32.totalorder %s18, 1
    %p246 = scmp.ne.s32.totalorder %s241, %s243
    %p247 = scmp.eq.s32.totalorder %s18, 0
    %p248 = por %p246, %p247
    %p249 = scmp.ne.s32.totalorder %s241, %s243
    %p250 = scmp.eq.s32.totalorder %s23, 1
    %p251 = por %p249, %p250
    %p252 = scmp.ne.s32.totalorder %s243, %s244
    %p253 = scmp.eq.s32.totalorder %s23, 0
    %p254 = por %p252, %p253
    %p255 = scmp.ne.s32.totalorder %s243, %s244
    %p256 = scmp.eq.s32.totalorder %s24, 1
    %p257 = por %p255, %p256
    %p259 = scmp.ne.s32.totalorder %s244, %s258
    %p260 = scmp.eq.s32.totalorder %s24, 0
    %p261 = por %p259, %p260
    %s263 = sadd.s32 %s262, 1
    %p266 = scmp.eq.s32.totalorder %s18, 1
    %p267 = scmp.ne.s32.totalorder %s262, %s264
    %p268 = scmp.eq.s32.totalorder %s18, 0
    %p269 = por %p267, %p268
    %p270 = scmp.ne.s32.totalorder %s262, %s264
    %p271 = scmp.eq.s32.totalorder %s23, 1
    %p272 = por %p270, %p271
    %p273 = scmp.ne.s32.totalorder %s264, %s265
    %p274 = scmp.eq.s32.totalorder %s23, 0
    %p275 = por %p273, %p274
    %p276 = scmp.ne.s32.totalorder %s264, %s265
    %p277 = scmp.eq.s32.totalorder %s24, 1
    %p278 = por %p276, %p277
    %p280 = scmp.ne.s32.totalorder %s265, %s279
    %p281 = scmp.eq.s32.totalorder %s24, 0
    %p282 = por %p280, %p281
    %s283 = ssub.s32 %s18, %s25
    %p284 = scmp.eq.s32.totalorder %s283, 0
    %s286 = sadd.s32 %s285, 1
    %s287 = scalar_select %p284, %s285, %s286
    %p290 = pneg %p284
    %p291 = scmp.eq.s32.totalorder %s18, 1
    %p292 = por %p290, %p291
    %p293 = scmp.ne.s32.totalorder %s285, %s288
    %p294 = scmp.eq.s32.totalorder %s18, 0
    %p295 = por %p293, %p294
    %p296 = scmp.ne.s32.totalorder %s285, %s288
    %p297 = scmp.eq.s32.totalorder %s23, 1
    %p298 = por %p296, %p297
    %p299 = scmp.ne.s32.totalorder %s288, %s289
    %p300 = scmp.eq.s32.totalorder %s23, 0
    %p301 = por %p299, %p300
    %p302 = scmp.ne.s32.totalorder %s288, %s289
    %p303 = scmp.eq.s32.totalorder %s24, 1
    %p304 = por %p302, %p303
    %p306 = scmp.ne.s32.totalorder %s289, %s305
    %p307 = scmp.eq.s32.totalorder %s24, 0
    %p308 = por %p306, %p307
    %p309 = scmp.le.s32.totalorder 1, %s18
    %p310 = scmp.lt.s32.totalorder %s18, 3
    %p311 = pnand %p309, %p310
    %p312 = pneg %p311
    // Predicated region
    $region9: #{impala_cnn_forward.6} parent=5 // pred_check
      _
    $region10: #{impala_cnn_forward.6} parent=5 // pred_check_branch
      %314 = sbr.rel (%p311) target = $region12
    $region11: #{impala_cnn_forward.6} parent=5 // pred_region
      %s315 = ssub.s32 %s18, 1
      // Predicated region
      $region13: #{impala_cnn_forward.6} parent=11 // pred_check
        %p316 = pneg %p65
      $region14: #{impala_cnn_forward.6} parent=11 // pred_check_branch
        %318 = sbr.rel (%p316) target = $region16
      $region15: #{impala_cnn_forward.6} parent=11 // pred_region
        _
      $region16: #{impala_cnn_forward.6} parent=11 // pred_fallthru
        _
      // Predicated region
      $region17: #{impala_cnn_forward.6} parent=11 // pred_check
        %p319 = pneg %p86
      $region18: #{impala_cnn_forward.6} parent=11 // pred_check_branch
        %321 = sbr.rel (%p319) target = $region20
      $region19: #{impala_cnn_forward.6} parent=11 // pred_region
        _
      $region20: #{impala_cnn_forward.6} parent=11 // pred_fallthru
        _
      // Predicated region
      $region21: #{impala_cnn_forward.6} parent=11 // pred_check
        %p322 = pneg %p107
      $region22: #{impala_cnn_forward.6} parent=11 // pred_check_branch
        %324 = sbr.rel (%p322) target = $region24
      $region23: #{impala_cnn_forward.6} parent=11 // pred_region
        _
      $region24: #{impala_cnn_forward.6} parent=11 // pred_fallthru
        _
      // Predicated region
      $region25: #{impala_cnn_forward.6} parent=11 // pred_check
        %p325 = pneg %p128
      $region26: #{impala_cnn_forward.6} parent=11 // pred_check_branch
        %327 = sbr.rel (%p325) target = $region28
      $region27: #{impala_cnn_forward.6} parent=11 // pred_region
        _
      $region28: #{impala_cnn_forward.6} parent=11 // pred_fallthru
        _
      // Predicated region
      $region29: #{impala_cnn_forward.6} parent=11 // pred_check
        %p328 = pneg %p149
      $region30: #{impala_cnn_forward.6} parent=11 // pred_check_branch
        %330 = sbr.rel (%p328) target = $region32
      $region31: #{impala_cnn_forward.6} parent=11 // pred_region
        _
      $region32: #{impala_cnn_forward.6} parent=11 // pred_fallthru
        _
      // Predicated region
      $region33: #{impala_cnn_forward.6} parent=11 // pred_check
        %p331 = pneg %p170
      $region34: #{impala_cnn_forward.6} parent=11 // pred_check_branch
        %333 = sbr.rel (%p331) target = $region36
      $region35: #{impala_cnn_forward.6} parent=11 // pred_region
        _
      $region36: #{impala_cnn_forward.6} parent=11 // pred_fallthru
        _
      // Predicated region
      $region37: #{impala_cnn_forward.6} parent=11 // pred_check
        %p334 = pneg %p191
      $region38: #{impala_cnn_forward.6} parent=11 // pred_check_branch
        %336 = sbr.rel (%p334) target = $region40
      $region39: #{impala_cnn_forward.6} parent=11 // pred_region
        _
      $region40: #{impala_cnn_forward.6} parent=11 // pred_fallthru
        _
      // Predicated region
      $region41: #{impala_cnn_forward.6} parent=11 // pred_check
        %p337 = pneg %p212
      $region42: #{impala_cnn_forward.6} parent=11 // pred_check_branch
        %339 = sbr.rel (%p337) target = $region44
      $region43: #{impala_cnn_forward.6} parent=11 // pred_region
        _
      $region44: #{impala_cnn_forward.6} parent=11 // pred_fallthru
        _
      // Predicated region
      $region45: #{impala_cnn_forward.6} parent=11 // pred_check
        %p340 = pneg %p233
      $region46: #{impala_cnn_forward.6} parent=11 // pred_check_branch
        %342 = sbr.rel (%p340) target = $region48
      $region47: #{impala_cnn_forward.6} parent=11 // pred_region
        _
      $region48: #{impala_cnn_forward.6} parent=11 // pred_fallthru
        _
      // Predicated region
      $region49: #{impala_cnn_forward.6} parent=11 // pred_check
        %p343 = pneg %p254
      $region50: #{impala_cnn_forward.6} parent=11 // pred_check_branch
        %345 = sbr.rel (%p343) target = $region52
      $region51: #{impala_cnn_forward.6} parent=11 // pred_region
        _
      $region52: #{impala_cnn_forward.6} parent=11 // pred_fallthru
        _
      // Predicated region
      $region53: #{impala_cnn_forward.6} parent=11 // pred_check
        %p346 = pneg %p275
      $region54: #{impala_cnn_forward.6} parent=11 // pred_check_branch
        %348 = sbr.rel (%p346) target = $region56
      $region55: #{impala_cnn_forward.6} parent=11 // pred_region
        _
      $region56: #{impala_cnn_forward.6} parent=11 // pred_fallthru
        _
    $region12: #{impala_cnn_forward.6} parent=5 // pred_fallthru
      _
    %p349 = scmp.lt.s32.totalorder %s18, 2
    // Predicated region
    $region57: #{impala_cnn_forward.6} parent=5 // pred_check
      %p350 = pneg %p349
    $region58: #{impala_cnn_forward.6} parent=5 // pred_check_branch
      %352 = sbr.rel (%p350) target = $region60
    $region59: #{impala_cnn_forward.6} parent=5 // pred_region
      // Predicated region
      $region61: #{impala_cnn_forward.6} parent=59 // pred_check
        %p353 = pneg %p38
      $region62: #{impala_cnn_forward.6} parent=59 // pred_check_branch
        %355 = sbr.rel (%p353) target = $region64
      $region63: #{impala_cnn_forward.6} parent=59 // pred_region
        %p356 = scmp.lt.s32.totalorder %s18, 1
        %s357 = scalar_select %p356, %s18, 1
        %s358 = smul.addr %s357, 8
        %s359 = scalar_lea.vmem %s0, %s358
      $region64: #{impala_cnn_forward.6} parent=59 // pred_fallthru
        _
    $region60: #{impala_cnn_forward.6} parent=5 // pred_fallthru
      _
    %p360 = scmp.le.s32.totalorder 1, %s18
    %p361 = scmp.lt.s32.totalorder %s18, 3
    %p362 = pnand %p360, %p361
    %p363 = pneg %p362
    // Predicated region
    $region65: #{impala_cnn_forward.6} parent=5 // pred_check
      _
    $region66: #{impala_cnn_forward.6} parent=5 // pred_check_branch
      %365 = sbr.rel (%p362) target = $region68
    $region67: #{impala_cnn_forward.6} parent=5 // pred_region
      %s366 = ssub.s32 %s18, 1
      %p367 = scmp.lt.s32.totalorder %s23, 1
      %s368 = scalar_select %p367, %s23, 1
      %s369 = smul.addr %s368, 8
      %s370 = scalar_lea.vmem %s0, %s369
      %p371 = pneg %p44
      %p372 = pneg %p41
      %p373 = pneg %p65
      %p374 = pneg %p62
      %p375 = pneg %p86
      %p376 = pneg %p83
      %p377 = pneg %p107
      %p378 = pneg %p104
      %p379 = pneg %p128
      %p380 = pneg %p125
      %p381 = pneg %p149
      %p382 = pneg %p146
      %p383 = pneg %p170
      %p384 = pneg %p167
      %p385 = pneg %p191
      %p386 = pneg %p188
      %p387 = pneg %p212
      %p388 = pneg %p209
      %p389 = pneg %p233
      %p390 = pneg %p230
      %p391 = pneg %p254
      %p392 = pneg %p251
      %p393 = pneg %p275
      %p394 = pneg %p272
      %p395 = pneg %p301
      %p396 = pneg %p298
      %p397 = scmp.lt.s32.totalorder %s23, 1
      %s398 = scalar_select %p397, %s23, 1
      %s399 = smul.addr %s398, 4
      %s400 = scalar_lea.vmem %s12, %s399
      %p401 = scmp.lt.s32.totalorder %s23, 1
      %s402 = scalar_select %p401, %s23, 1
      %s403 = smul.addr %s402, 8
      %s404 = scalar_lea.vmem %s0, %s403
      %p405 = scmp.lt.s32.totalorder %s23, 1
      %s406 = scalar_select %p405, %s23, 1
      %s407 = smul.addr %s406, 4
      %s408 = scalar_lea.vmem %s12, %s407
      %v410 = vld [vmem:[%s404] sm:$0xf]
      %v411 = vpack.c.bf16 %v410, %v410
      %v412 = vld [vmem:[%s1] sm:$0xf]
      %v413 = vld [vmem:[%s1 + $0x4] sm:$0xf]
      %v414 = vld [vmem:[%s1 + $0x8] sm:$0xf]
      %v415 = vld [vmem:[%s1 + $0xc] sm:$0xf]
      %v416 = vld [vmem:[%s1 + $0x10] sm:$0xf]
      %v417 = vld [vmem:[%s1 + $0x14] sm:$0xf]
      %v418 = vld [vmem:[%s1 + $0x18] sm:$0xf]
      %v419 = vld [vmem:[%s1 + $0x1c] sm:$0xf]
      %v420 = vld [vmem:[%s1 + $0x20] sm:$0xf]
      %v421 = vld [vmem:[%s1 + $0x24] sm:$0xf]
      %v422 = vld [vmem:[%s1 + $0x28] sm:$0xf]
      %v423 = vld [vmem:[%s1 + $0x2c] sm:$0xf]
      %v424 = vld [vmem:[%s1 + $0x30] sm:$0xf]
      %v425 = vld [vmem:[%s1 + $0x34] sm:$0xf]
      %v426 = vld [vmem:[%s1 + $0x38] sm:$0xf]
      %v427 = vld [vmem:[%s1 + $0x3c] sm:$0xf]
      %v428 = vld [vmem:[%s404 + $0x1] sm:$0xf]
      %v429 = vpack.c.bf16 %v428, %v428
      %s430 = scalar_lea.vmem %s1, 64
      %v431 = vld [vmem:[%s430] sm:$0xf]
      %v432 = vld [vmem:[%s430 + $0x4] sm:$0xf]
      %v433 = vld [vmem:[%s430 + $0x8] sm:$0xf]
      %v434 = vld [vmem:[%s430 + $0xc] sm:$0xf]
      %v435 = vld [vmem:[%s430 + $0x10] sm:$0xf]
      %v436 = vld [vmem:[%s430 + $0x14] sm:$0xf]
      %v437 = vld [vmem:[%s430 + $0x18] sm:$0xf]
      %v438 = vld [vmem:[%s430 + $0x1c] sm:$0xf]
      %v439 = vld [vmem:[%s430 + $0x20] sm:$0xf]
      %v440 = vld [vmem:[%s430 + $0x24] sm:$0xf]
      %v441 = vld [vmem:[%s430 + $0x28] sm:$0xf]
      %v442 = vld [vmem:[%s430 + $0x2c] sm:$0xf]
      %v443 = vld [vmem:[%s430 + $0x30] sm:$0xf]
      %v444 = vld [vmem:[%s430 + $0x34] sm:$0xf]
      %v445 = vld [vmem:[%s430 + $0x38] sm:$0xf]
      %v446 = vld [vmem:[%s430 + $0x3c] sm:$0xf]
      %v463 = vunpack.c.l.b16 %v431
      %v464 = vunpack.c.l.b16 %v432
      %v465 = vunpack.c.l.b16 %v433
      %v466 = vunpack.c.l.b16 %v434
      %v467 = vunpack.c.l.b16 %v435
      %v468 = vunpack.c.l.b16 %v436
      %v469 = vunpack.c.l.b16 %v437
      %v470 = vunpack.c.l.b16 %v438
      %v471 = vunpack.c.l.b16 %v439
      %v472 = vunpack.c.l.b16 %v440
      %v473 = vunpack.c.l.b16 %v441
      %v474 = vunpack.c.l.b16 %v442
      %v475 = vunpack.c.l.b16 %v443
      %v476 = vunpack.c.l.b16 %v444
      %v477 = vunpack.c.l.b16 %v445
      %v478 = vunpack.c.l.b16 %v446
      %v479 = vpack.c.b16 %v464, %v463
      %v480 = vpack.c.b16 %v466, %v465
      %v481 = vpack.c.b16 %v468, %v467
      %v482 = vpack.c.b16 %v470, %v469
      %v483 = vpack.c.b16 %v472, %v471
      %v484 = vpack.c.b16 %v474, %v473
      %v485 = vpack.c.b16 %v476, %v475
      %v486 = vpack.c.b16 %v478, %v477
      %495 = vmatprep.subr.bf16.mxu0 0
      %496 = vmatpush1.bf16.msra.mxu0 %v479
      %497 = vmatprep.subr.bf16.mxu0 0
      %498 = vmatpush1.bf16.msra.mxu0 %v480
      %499 = vmatprep.subr.bf16.mxu0 0
      %500 = vmatpush1.bf16.msra.mxu0 %v481
      %501 = vmatprep.subr.bf16.mxu0 0
      %502 = vmatpush1.bf16.msra.mxu0 %v482
      %503 = vmatprep.subr.bf16.mxu0 0
      %504 = vmatpush1.bf16.msra.mxu0 %v483
      %505 = vmatprep.subr.bf16.mxu0 0
      %506 = vmatpush1.bf16.msra.mxu0 %v484
      %507 = vmatprep.subr.bf16.mxu0 0
      %508 = vmatpush1.bf16.msra.mxu0 %v485
      %509 = vmatprep.subr.bf16.mxu0 0
      %510 = vmatpush1.bf16.msra.mxu0 %v486
      %511 = vmatprep.subr.bf16.mxu0 0
      %512 = vmatpush1.bf16.msra.mxu0 0
      %513 = vmatprep.subr.bf16.mxu0 0
      %514 = vmatpush1.bf16.msra.mxu0 0
      %515 = vmatprep.subr.bf16.mxu0 0
      %516 = vmatpush1.bf16.msra.mxu0 0
      %517 = vmatprep.subr.bf16.mxu0 0
      %518 = vmatpush1.bf16.msra.mxu0 0
      %519 = vmatprep.subr.bf16.mxu0 0
      %520 = vmatpush1.bf16.msra.mxu0 0
      %521 = vmatprep.subr.bf16.mxu0 0
      %522 = vmatpush1.bf16.msra.mxu0 0
      %523 = vmatprep.subr.bf16.mxu0 0
      %524 = vmatpush1.bf16.msra.mxu0 0
      %525 = vmatprep.subr.bf16.mxu0 0
      %526 = vmatpush1.bf16.msra.mxu0 0
      %527 = vmatprep.mubr.bf16.mxu0 0
      %528 = vmatmul.mubr.bf16.gmra.mrb[0].mxu0 %v429
      %v529 = vpop.f32.mrb[0].mxu0
      %v530 = vadd.f32 0.0, %v529
      %v531 = vpop.f32.mrb[0].mxu0
      %v532 = vpop.f32.mrb[0].mxu0
      %v533 = vpop.f32.mrb[0].mxu0
      %534 = vdwg.mxu0
      %v551 = vunpack.c.l.b16 %v412
      %v552 = vunpack.c.l.b16 %v413
      %v553 = vunpack.c.l.b16 %v414
      %v554 = vunpack.c.l.b16 %v415
      %v555 = vunpack.c.l.b16 %v416
      %v556 = vunpack.c.l.b16 %v417
      %v557 = vunpack.c.l.b16 %v418
      %v558 = vunpack.c.l.b16 %v419
      %v559 = vunpack.c.l.b16 %v420
      %v560 = vunpack.c.l.b16 %v421
      %v561 = vunpack.c.l.b16 %v422
      %v562 = vunpack.c.l.b16 %v423
      %v563 = vunpack.c.l.b16 %v424
      %v564 = vunpack.c.l.b16 %v425
      %v565 = vunpack.c.l.b16 %v426
      %v566 = vunpack.c.l.b16 %v427
      %v567 = vpack.c.b16 %v552, %v551
      %v568 = vpack.c.b16 %v554, %v553
      %v569 = vpack.c.b16 %v556, %v555
      %v570 = vpack.c.b16 %v558, %v557
      %v571 = vpack.c.b16 %v560, %v559
      %v572 = vpack.c.b16 %v562, %v561
      %v573 = vpack.c.b16 %v564, %v563
      %v574 = vpack.c.b16 %v566, %v565
      %583 = vmatprep.subr.bf16.mxu0 0
      %584 = vmatpush1.bf16.msra.mxu0 %v567
      %585 = vmatprep.subr.bf16.mxu0 0
      %586 = vmatpush1.bf16.msra.mxu0 %v568
      %587 = vmatprep.subr.bf16.mxu0 0
      %588 = vmatpush1.bf16.msra.mxu0 %v569
      %589 = vmatprep.subr.bf16.mxu0 0
      %590 = vmatpush1.bf16.msra.mxu0 %v570
      %591 = vmatprep.subr.bf16.mxu0 0
      %592 = vmatpush1.bf16.msra.mxu0 %v571
      %593 = vmatprep.subr.bf16.mxu0 0
      %594 = vmatpush1.bf16.msra.mxu0 %v572
      %595 = vmatprep.subr.bf16.mxu0 0
      %596 = vmatpush1.bf16.msra.mxu0 %v573
      %597 = vmatprep.subr.bf16.mxu0 0
      %598 = vmatpush1.bf16.msra.mxu0 %v574
      %599 = vmatprep.subr.bf16.mxu0 0
      %600 = vmatpush1.bf16.msra.mxu0 0
      %601 = vmatprep.subr.bf16.mxu0 0
      %602 = vmatpush1.bf16.msra.mxu0 0
      %603 = vmatprep.subr.bf16.mxu0 0
      %604 = vmatpush1.bf16.msra.mxu0 0
      %605 = vmatprep.subr.bf16.mxu0 0
      %606 = vmatpush1.bf16.msra.mxu0 0
      %607 = vmatprep.subr.bf16.mxu0 0
      %608 = vmatpush1.bf16.msra.mxu0 0
      %609 = vmatprep.subr.bf16.mxu0 0
      %610 = vmatpush1.bf16.msra.mxu0 0
      %611 = vmatprep.subr.bf16.mxu0 0
      %612 = vmatpush1.bf16.msra.mxu0 0
      %613 = vmatprep.subr.bf16.mxu0 0
      %614 = vmatpush1.bf16.msra.mxu0 0
      %615 = vmatprep.mubr.bf16.mxu0 0
      %616 = vmatmul.mubr.bf16.gmra.mrb[0].mxu0 %v411
      %v617 = vpop.f32.mrb[0].mxu0
      %v618 = vadd.f32 %v530, %v617
      %v619 = vpop.f32.mrb[0].mxu0
      %v620 = vpop.f32.mrb[0].mxu0
      %v621 = vpop.f32.mrb[0].mxu0
      %622 = vdwg.mxu0
      %v623 = vld [vmem:[%s404 + $0x2] sm:$0xf]
      %v624 = vpack.c.bf16 %v623, %v623
      %s625 = scalar_lea.vmem %s1, 128
      %v626 = vld [vmem:[%s625] sm:$0xf]
      %v627 = vld [vmem:[%s625 + $0x4] sm:$0xf]
      %v628 = vld [vmem:[%s625 + $0x8] sm:$0xf]
      %v629 = vld [vmem:[%s625 + $0xc] sm:$0xf]
      %v630 = vld [vmem:[%s625 + $0x10] sm:$0xf]
      %v631 = vld [vmem:[%s625 + $0x14] sm:$0xf]
      %v632 = vld [vmem:[%s625 + $0x18] sm:$0xf]
      %v633 = vld [vmem:[%s625 + $0x1c] sm:$0xf]
      %v634 = vld [vmem:[%s625 + $0x20] sm:$0xf]
      %v635 = vld [vmem:[%s625 + $0x24] sm:$0xf]
      %v636 = vld [vmem:[%s625 + $0x28] sm:$0xf]
      %v637 = vld [vmem:[%s625 + $0x2c] sm:$0xf]
      %v638 = vld [vmem:[%s625 + $0x30] sm:$0xf]
      %v639 = vld [vmem:[%s625 + $0x34] sm:$0xf]
      %v640 = vld [vmem:[%s625 + $0x38] sm:$0xf]
      %v641 = vld [vmem:[%s625 + $0x3c] sm:$0xf]
      %v658 = vunpack.c.l.b16 %v626
      %v659 = vunpack.c.l.b16 %v627
      %v660 = vunpack.c.l.b16 %v628
      %v661 = vunpack.c.l.b16 %v629
      %v662 = vunpack.c.l.b16 %v630
      %v663 = vunpack.c.l.b16 %v631
      %v664 = vunpack.c.l.b16 %v632
      %v665 = vunpack.c.l.b16 %v633
      %v666 = vunpack.c.l.b16 %v634
      %v667 = vunpack.c.l.b16 %v635
      %v668 = vunpack.c.l.b16 %v636
      %v669 = vunpack.c.l.b16 %v637
      %v670 = vunpack.c.l.b16 %v638
      %v671 = vunpack.c.l.b16 %v639
      %v672 = vunpack.c.l.b16 %v640
      %v673 = vunpack.c.l.b16 %v641
      %v674 = vpack.c.b16 %v659, %v658
      %v675 = vpack.c.b16 %v661, %v660
      %v676 = vpack.c.b16 %v663, %v662
      %v677 = vpack.c.b16 %v665, %v664
      %v678 = vpack.c.b16 %v667, %v666
      %v679 = vpack.c.b16 %v669, %v668
      %v680 = vpack.c.b16 %v671, %v670
      %v681 = vpack.c.b16 %v673, %v672
      %690 = vmatprep.subr.bf16.mxu0 0
      %691 = vmatpush1.bf16.msra.mxu0 %v674
      %692 = vmatprep.subr.bf16.mxu0 0
      %693 = vmatpush1.bf16.msra.mxu0 %v675
      %694 = vmatprep.subr.bf16.mxu0 0
      %695 = vmatpush1.bf16.msra.mxu0 %v676
      %696 = vmatprep.subr.bf16.mxu0 0
      %697 = vmatpush1.bf16.msra.mxu0 %v677
      %698 = vmatprep.subr.bf16.mxu0 0
      %699 = vmatpush1.bf16.msra.mxu0 %v678
      %700 = vmatprep.subr.bf16.mxu0 0
      %701 = vmatpush1.bf16.msra.mxu0 %v679
      %702 = vmatprep.subr.bf16.mxu0 0
      %703 = vmatpush1.bf16.msra.mxu0 %v680
      %704 = vmatprep.subr.bf16.mxu0 0
      %705 = vmatpush1.bf16.msra.mxu0 %v681
      %706 = vmatprep.subr.bf16.mxu0 0
      %707 = vmatpush1.bf16.msra.mxu0 0
      %708 = vmatprep.subr.bf16.mxu0 0
      %709 = vmatpush1.bf16.msra.mxu0 0
      %710 = vmatprep.subr.bf16.mxu0 0
      %711 = vmatpush1.bf16.msra.mxu0 0
      %712 = vmatprep.subr.bf16.mxu0 0
      %713 = vmatpush1.bf16.msra.mxu0 0
      %714 = vmatprep.subr.bf16.mxu0 0
      %715 = vmatpush1.bf16.msra.mxu0 0
      %716 = vmatprep.subr.bf16.mxu0 0
      %717 = vmatpush1.bf16.msra.mxu0 0
      %718 = vmatprep.subr.bf16.mxu0 0
      %719 = vmatpush1.bf16.msra.mxu0 0
      %720 = vmatprep.subr.bf16.mxu0 0
      %721 = vmatpush1.bf16.msra.mxu0 0
      %722 = vmatprep.mubr.bf16.mxu0 0
      %723 = vmatmul.mubr.bf16.gmra.mrb[0].mxu0 %v624
      %v724 = vpop.f32.mrb[0].mxu0
      %v725 = vadd.f32 0.0, %v724
      %v726 = vpop.f32.mrb[0].mxu0
      %v727 = vpop.f32.mrb[0].mxu0
      %v728 = vpop.f32.mrb[0].mxu0
      %729 = vdwg.mxu0
      %v730 = vadd.f32 %v618, %v725
      %s731 = scalar_lea.vmem %s1, 192
      %v732 = vld [vmem:[%s731] sm:$0xf]
      %v733 = vld [vmem:[%s731 + $0x4] sm:$0xf]
      %v734 = vld [vmem:[%s731 + $0x8] sm:$0xf]
      %v735 = vld [vmem:[%s731 + $0xc] sm:$0xf]
      %v736 = vld [vmem:[%s731 + $0x10] sm:$0xf]
      %v737 = vld [vmem:[%s731 + $0x14] sm:$0xf]
      %v738 = vld [vmem:[%s731 + $0x18] sm:$0xf]
      %v739 = vld [vmem:[%s731 + $0x1c] sm:$0xf]
      %v740 = vld [vmem:[%s731 + $0x20] sm:$0xf]
      %v741 = vld [vmem:[%s731 + $0x24] sm:$0xf]
      %v742 = vld [vmem:[%s731 + $0x28] sm:$0xf]
      %v743 = vld [vmem:[%s731 + $0x2c] sm:$0xf]
      %v744 = vld [vmem:[%s731 + $0x30] sm:$0xf]
      %v745 = vld [vmem:[%s731 + $0x34] sm:$0xf]
      %v746 = vld [vmem:[%s731 + $0x38] sm:$0xf]
      %v747 = vld [vmem:[%s731 + $0x3c] sm:$0xf]
      %s748 = scalar_lea.vmem %s1, 256
      %v749 = vld [vmem:[%s748] sm:$0xf]
      %v750 = vld [vmem:[%s748 + $0x4] sm:$0xf]
      %v751 = vld [vmem:[%s748 + $0x8] sm:$0xf]
      %v752 = vld [vmem:[%s748 + $0xc] sm:$0xf]
      %v753 = vld [vmem:[%s748 + $0x10] sm:$0xf]
      %v754 = vld [vmem:[%s748 + $0x14] sm:$0xf]
      %v755 = vld [vmem:[%s748 + $0x18] sm:$0xf]
      %v756 = vld [vmem:[%s748 + $0x1c] sm:$0xf]
      %v757 = vld [vmem:[%s748 + $0x20] sm:$0xf]
      %v758 = vld [vmem:[%s748 + $0x24] sm:$0xf]
      %v759 = vld [vmem:[%s748 + $0x28] sm:$0xf]
      %v760 = vld [vmem:[%s748 + $0x2c] sm:$0xf]
      %v761 = vld [vmem:[%s748 + $0x30] sm:$0xf]
      %v762 = vld [vmem:[%s748 + $0x34] sm:$0xf]
      %v763 = vld [vmem:[%s748 + $0x38] sm:$0xf]
      %v764 = vld [vmem:[%s748 + $0x3c] sm:$0xf]
      %v781 = vunpack.c.l.b16 %v749
      %v782 = vunpack.c.l.b16 %v750
      %v783 = vunpack.c.l.b16 %v751
      %v784 = vunpack.c.l.b16 %v752
      %v785 = vunpack.c.l.b16 %v753
      %v786 = vunpack.c.l.b16 %v754
      %v787 = vunpack.c.l.b16 %v755
      %v788 = vunpack.c.l.b16 %v756
      %v789 = vunpack.c.l.b16 %v757
      %v790 = vunpack.c.l.b16 %v758
      %v791 = vunpack.c.l.b16 %v759
      %v792 = vunpack.c.l.b16 %v760
      %v793 = vunpack.c.l.b16 %v761
      %v794 = vunpack.c.l.b16 %v762
      %v795 = vunpack.c.l.b16 %v763
      %v796 = vunpack.c.l.b16 %v764
      %v797 = vpack.c.b16 %v782, %v781
      %v798 = vpack.c.b16 %v784, %v783
      %v799 = vpack.c.b16 %v786, %v785
      %v800 = vpack.c.b16 %v788, %v787
      %v801 = vpack.c.b16 %v790, %v789
      %v802 = vpack.c.b16 %v792, %v791
      %v803 = vpack.c.b16 %v794, %v793
      %v804 = vpack.c.b16 %v796, %v795
      %813 = vmatprep.subr.bf16.mxu0 0
      %814 = vmatpush1.bf16.msra.mxu0 %v797
      %815 = vmatprep.subr.bf16.mxu0 0
      %816 = vmatpush1.bf16.msra.mxu0 %v798
      %817 = vmatprep.subr.bf16.mxu0 0
      %818 = vmatpush1.bf16.msra.mxu0 %v799
      %819 = vmatprep.subr.bf16.mxu0 0
      %820 = vmatpush1.bf16.msra.mxu0 %v800
      %821 = vmatprep.subr.bf16.mxu0 0
      %822 = vmatpush1.bf16.msra.mxu0 %v801
      %823 = vmatprep.subr.bf16.mxu0 0
      %824 = vmatpush1.bf16.msra.mxu0 %v802
      %825 = vmatprep.subr.bf16.mxu0 0
      %826 = vmatpush1.bf16.msra.mxu0 %v803
      %827 = vmatprep.subr.bf16.mxu0 0
      %828 = vmatpush1.bf16.msra.mxu0 %v804
      %829 = vmatprep.subr.bf16.mxu0 0
      %830 = vmatpush1.bf16.msra.mxu0 0
      %831 = vmatprep.subr.bf16.mxu0 0
      %832 = vmatpush1.bf16.msra.mxu0 0
      %833 = vmatprep.subr.bf16.mxu0 0
      %834 = vmatpush1.bf16.msra.mxu0 0
      %835 = vmatprep.subr.bf16.mxu0 0
      %836 = vmatpush1.bf16.msra.mxu0 0
      %837 = vmatprep.subr.bf16.mxu0 0
      %838 = vmatpush1.bf16.msra.mxu0 0
      %839 = vmatprep.subr.bf16.mxu0 0
      %840 = vmatpush1.bf16.msra.mxu0 0
      %841 = vmatprep.subr.bf16.mxu0 0
      %842 = vmatpush1.bf16.msra.mxu0 0
      %843 = vmatprep.subr.bf16.mxu0 0
      %844 = vmatpush1.bf16.msra.mxu0 0
      %845 = vmatprep.mubr.bf16.mxu0 0
      %846 = vmatmul.mubr.bf16.gmra.mrb[0].mxu0 %v429
      %v847 = vpop.f32.mrb[0].mxu0
      %v848 = vadd.f32 0.0, %v847
      %v849 = vpop.f32.mrb[0].mxu0
      %v850 = vpop.f32.mrb[0].mxu0
      %v851 = vpop.f32.mrb[0].mxu0
      %852 = vdwg.mxu0
      %v869 = vunpack.c.l.b16 %v732
      %v870 = vunpack.c.l.b16 %v733
      %v871 = vunpack.c.l.b16 %v734
      %v872 = vunpack.c.l.b16 %v735
      %v873 = vunpack.c.l.b16 %v736
      %v874 = vunpack.c.l.b16 %v737
      %v875 = vunpack.c.l.b16 %v738
      %v876 = vunpack.c.l.b16 %v739
      %v877 = vunpack.c.l.b16 %v740
      %v878 = vunpack.c.l.b16 %v741
      %v879 = vunpack.c.l.b16 %v742
      %v880 = vunpack.c.l.b16 %v743
      %v881 = vunpack.c.l.b16 %v744
      %v882 = vunpack.c.l.b16 %v745
      %v883 = vunpack.c.l.b16 %v746
      %v884 = vunpack.c.l.b16 %v747
      %v885 = vpack.c.b16 %v870, %v869
      %v886 = vpack.c.b16 %v872, %v871
      %v887 = vpack.c.b16 %v874, %v873
      %v888 = vpack.c.b16 %v876, %v875
      %v889 = vpack.c.b16 %v878, %v877
      %v890 = vpack.c.b16 %v880, %v879
      %v891 = vpack.c.b16 %v882, %v881
      %v892 = vpack.c.b16 %v884, %v883
      %901 = vmatprep.subr.bf16.mxu0 0
      %902 = vmatpush1.bf16.msra.mxu0 %v885
      %903 = vmatprep.subr.bf16.mxu0 0
      %904 = vmatpush1.bf16.msra.mxu0 %v886
      %905 = vmatprep.subr.bf16.mxu0 0
      %906 = vmatpush1.bf16.msra.mxu0 %v887
      %907 = vmatprep.subr.bf16.mxu0 0
      %908 = vmatpush1.bf16.msra.mxu0 %v888
      %909 = vmatprep.subr.bf16.mxu0 0
      %910 = vmatpush1.bf16.msra.mxu0 %v889
      %911 = vmatprep.subr.bf16.mxu0 0
      %912 = vmatpush1.bf16.msra.mxu0 %v890
      %913 = vmatprep.subr.bf16.mxu0 0
      %914 = vmatpush1.bf16.msra.mxu0 %v891
      %915 = vmatprep.subr.bf16.mxu0 0
      %916 = vmatpush1.bf16.msra.mxu0 %v892
      %917 = vmatprep.subr.bf16.mxu0 0
      %918 = vmatpush1.bf16.msra.mxu0 0
      %919 = vmatprep.subr.bf16.mxu0 0
      %920 = vmatpush1.bf16.msra.mxu0 0
      %921 = vmatprep.subr.bf16.mxu0 0
      %922 = vmatpush1.bf16.msra.mxu0 0
      %923 = vmatprep.subr.bf16.mxu0 0
      %924 = vmatpush1.bf16.msra.mxu0 0
      %925 = vmatprep.subr.bf16.mxu0 0
      %926 = vmatpush1.bf16.msra.mxu0 0
      %927 = vmatprep.subr.bf16.mxu0 0
      %928 = vmatpush1.bf16.msra.mxu0 0
      %929 = vmatprep.subr.bf16.mxu0 0
      %930 = vmatpush1.bf16.msra.mxu0 0
      %931 = vmatprep.subr.bf16.mxu0 0
      %932 = vmatpush1.bf16.msra.mxu0 0
      %933 = vmatprep.mubr.bf16.mxu0 0
      %934 = vmatmul.mubr.bf16.gmra.mrb[0].mxu0 %v411
      %v935 = vpop.f32.mrb[0].mxu0
      %v936 = vadd.f32 %v848, %v935
      %v937 = vpop.f32.mrb[0].mxu0
      %v938 = vpop.f32.mrb[0].mxu0
      %v939 = vpop.f32.mrb[0].mxu0
      %940 = vdwg.mxu0
      %s941 = scalar_lea.vmem %s1, 320
      %v942 = vld [vmem:[%s941] sm:$0xf]
      %v943 = vld [vmem:[%s941 + $0x4] sm:$0xf]
      %v944 = vld [vmem:[%s941 + $0x8] sm:$0xf]
      %v945 = vld [vmem:[%s941 + $0xc] sm:$0xf]
      %v946 = vld [vmem:[%s941 + $0x10] sm:$0xf]
      %v947 = vld [vmem:[%s941 + $0x14] sm:$0xf]
      %v948 = vld [vmem:[%s941 + $0x18] sm:$0xf]
      %v949 = vld [vmem:[%s941 + $0x1c] sm:$0xf]
      %v950 = vld [vmem:[%s941 + $0x20] sm:$0xf]
      %v951 = vld [vmem:[%s941 + $0x24] sm:$0xf]
      %v952 = vld [vmem:[%s941 + $0x28] sm:$0xf]
      %v953 = vld [vmem:[%s941 + $0x2c] sm:$0xf]
      %v954 = vld [vmem:[%s941 + $0x30] sm:$0xf]
      %v955 = vld [vmem:[%s941 + $0x34] sm:$0xf]
      %v956 = vld [vmem:[%s941 + $0x38] sm:$0xf]
      %v957 = vld [vmem:[%s941 + $0x3c] sm:$0xf]
      %v974 = vunpack.c.l.b16 %v942
      %v975 = vunpack.c.l.b16 %v943
      %v976 = vunpack.c.l.b16 %v944
      %v977 = vunpack.c.l.b16 %v945
      %v978 = vunpack.c.l.b16 %v946
      %v979 = vunpack.c.l.b16 %v947
      %v980 = vunpack.c.l.b16 %v948
      %v981 = vunpack.c.l.b16 %v949
      %v982 = vunpack.c.l.b16 %v950
      %v983 = vunpack.c.l.b16 %v951
      %v984 = vunpack.c.l.b16 %v952
      %v985 = vunpack.c.l.b16 %v953
      %v986 = vunpack.c.l.b16 %v954
      %v987 = vunpack.c.l.b16 %v955
      %v988 = vunpack.c.l.b16 %v956
      %v989 = vunpack.c.l.b16 %v957
      %v990 = vpack.c.b16 %v975, %v974
      %v991 = vpack.c.b16 %v977, %v976
      %v992 = vpack.c.b16 %v979, %v978
      %v993 = vpack.c.b16 %v981, %v980
      %v994 = vpack.c.b16 %v983, %v982
      %v995 = vpack.c.b16 %v985, %v984
      %v996 = vpack.c.b16 %v987, %v986
      %v997 = vpack.c.b16 %v989, %v988
      %1006 = vmatprep.subr.bf16.mxu0 0
      %1007 = vmatpush1.bf16.msra.mxu0 %v990
      %1008 = vmatprep.subr.bf16.mxu0 0
      %1009 = vmatpush1.bf16.msra.mxu0 %v991
      %1010 = vmatprep.subr.bf16.mxu0 0
      %1011 = vmatpush1.bf16.msra.mxu0 %v992
      %1012 = vmatprep.subr.bf16.mxu0 0
      %1013 = vmatpush1.bf16.msra.mxu0 %v993
      %1014 = vmatprep.subr.bf16.mxu0 0
      %1015 = vmatpush1.bf16.msra.mxu0 %v994
      %1016 = vmatprep.subr.bf16.mxu0 0
      %1017 = vmatpush1.bf16.msra.mxu0 %v995
      %1018 = vmatprep.subr.bf16.mxu0 0
      %1019 = vmatpush1.bf16.msra.mxu0 %v996
      %1020 = vmatprep.subr.bf16.mxu0 0
      %1021 = vmatpush1.bf16.msra.mxu0 %v997
      %1022 = vmatprep.subr.bf16.mxu0 0
      %1023 = vmatpush1.bf16.msra.mxu0 0
      %1024 = vmatprep.subr.bf16.mxu0 0
      %1025 = vmatpush1.bf16.msra.mxu0 0
      %1026 = vmatprep.subr.bf16.mxu0 0
      %1027 = vmatpush1.bf16.msra.mxu0 0
      %1028 = vmatprep.subr.bf16.mxu0 0
      %1029 = vmatpush1.bf16.msra.mxu0 0
      %1030 = vmatprep.subr.bf16.mxu0 0
      %1031 = vmatpush1.bf16.msra.mxu0 0
      %1032 = vmatprep.subr.bf16.mxu0 0
      %1033 = vmatpush1.bf16.msra.mxu0 0
      %1034 = vmatprep.subr.bf16.mxu0 0
      %1035 = vmatpush1.bf16.msra.mxu0 0
      %1036 = vmatprep.subr.bf16.mxu0 0
      %1037 = vmatpush1.bf16.msra.mxu0 0
      %1038 = vmatprep.mubr.bf16.mxu0 0
      %1039 = vmatmul.mubr.bf16.gmra.mrb[0].mxu0 %v624
      %v1040 = vpop.f32.mrb[0].mxu0
      %v1041 = vadd.f32 0.0, %v1040
      %v1042 = vpop.f32.mrb[0].mxu0
      %v1043 = vpop.f32.mrb[0].mxu0
      %v1044 = vpop.f32.mrb[0].mxu0
      %1045 = vdwg.mxu0
      %v1046 = vadd.f32 %v936, %v1041
      %s1047 = scalar_lea.vmem %s1, 384
      %v1048 = vld [vmem:[%s1047] sm:$0xf]
      %v1049 = vld [vmem:[%s1047 + $0x4] sm:$0xf]
      %v1050 = vld [vmem:[%s1047 + $0x8] sm:$0xf]
      %v1051 = vld [vmem:[%s1047 + $0xc] sm:$0xf]
      %v1052 = vld [vmem:[%s1047 + $0x10] sm:$0xf]
      %v1053 = vld [vmem:[%s1047 + $0x14] sm:$0xf]
      %v1054 = vld [vmem:[%s1047 + $0x18] sm:$0xf]
      %v1055 = vld [vmem:[%s1047 + $0x1c] sm:$0xf]
      %v1056 = vld [vmem:[%s1047 + $0x20] sm:$0xf]
      %v1057 = vld [vmem:[%s1047 + $0x24] sm:$0xf]
      %v1058 = vld [vmem:[%s1047 + $0x28] sm:$0xf]
      %v1059 = vld [vmem:[%s1047 + $0x2c] sm:$0xf]
      %v1060 = vld [vmem:[%s1047 + $0x30] sm:$0xf]
      %v1061 = vld [vmem:[%s1047 + $0x34] sm:$0xf]
      %v1062 = vld [vmem:[%s1047 + $0x38] sm:$0xf]
      %v1063 = vld [vmem:[%s1047 + $0x3c] sm:$0xf]
      %s1064 = scalar_lea.vmem %s1, 448
      %v1065 = vld [vmem:[%s1064] sm:$0xf]
      %v1066 = vld [vmem:[%s1064 + $0x4] sm:$0xf]
      %v1067 = vld [vmem:[%s1064 + $0x8] sm:$0xf]
      %v1068 = vld [vmem:[%s1064 + $0xc] sm:$0xf]
      %v1069 = vld [vmem:[%s1064 + $0x10] sm:$0xf]
      %v1070 = vld [vmem:[%s1064 + $0x14] sm:$0xf]
      %v1071 = vld [vmem:[%s1064 + $0x18] sm:$0xf]
      %v1072 = vld [vmem:[%s1064 + $0x1c] sm:$0xf]
      %v1073 = vld [vmem:[%s1064 + $0x20] sm:$0xf]
      %v1074 = vld [vmem:[%s1064 + $0x24] sm:$0xf]
      %v1075 = vld [vmem:[%s1064 + $0x28] sm:$0xf]
      %v1076 = vld [vmem:[%s1064 + $0x2c] sm:$0xf]
      %v1077 = vld [vmem:[%s1064 + $0x30] sm:$0xf]
      %v1078 = vld [vmem:[%s1064 + $0x34] sm:$0xf]
      %v1079 = vld [vmem:[%s1064 + $0x38] sm:$0xf]
      %v1080 = vld [vmem:[%s1064 + $0x3c] sm:$0xf]
      %v1097 = vunpack.c.l.b16 %v1065
      %v1098 = vunpack.c.l.b16 %v1066
      %v1099 = vunpack.c.l.b16 %v1067
      %v1100 = vunpack.c.l.b16 %v1068
      %v1101 = vunpack.c.l.b16 %v1069
      %v1102 = vunpack.c.l.b16 %v1070
      %v1103 = vunpack.c.l.b16 %v1071
      %v1104 = vunpack.c.l.b16 %v1072
      %v1105 = vunpack.c.l.b16 %v1073
      %v1106 = vunpack.c.l.b16 %v1074
      %v1107 = vunpack.c.l.b16 %v1075
      %v1108 = vunpack.c.l.b16 %v1076
      %v1109 = vunpack.c.l.b16 %v1077
      %v1110 = vunpack.c.l.b16 %v1078
      %v1111 = vunpack.c.l.b16 %v1079
      %v1112 = vunpack.c.l.b16 %v1080
      %v1113 = vpack.c.b16 %v1098, %v1097
      %v1114 = vpack.c.b16 %v1100, %v1099
      %v1115 = vpack.c.b16 %v1102, %v1101
      %v1116 = vpack.c.b16 %v1104, %v1103
      %v1117 = vpack.c.b16 %v1106, %v1105
      %v1118 = vpack.c.b16 %v1108, %v1107
      %v1119 = vpack.c.b16 %v1110, %v1109
      %v1120 = vpack.c.b16 %v1112, %v1111
      %1129 = vmatprep.subr.bf16.mxu0 0
      %1130 = vmatpush1.bf16.msra.mxu0 %v1113
      %1131 = vmatprep.subr.bf16.mxu0 0
      %1132 = vmatpush1.bf16.msra.mxu0 %v1114
      %1133 = vmatprep.subr.bf16.mxu0 0
      %1134 = vmatpush1.bf16.msra.mxu0 %v1115
      %1135 = vmatprep.subr.bf16.mxu0 0
      %1136 = vmatpush1.bf16.msra.mxu0 %v1116
      %1137 = vmatprep.subr.bf16.mxu0 0
      %1138 = vmatpush1.bf16.msra.mxu0 %v1117
      %1139 = vmatprep.subr.bf16.mxu0 0
      %1140 = vmatpush1.bf16.msra.mxu0 %v1118
      %1141 = vmatprep.subr.bf16.mxu0 0
      %1142 = vmatpush1.bf16.msra.mxu0 %v1119
      %1143 = vmatprep.subr.bf16.mxu0 0
      %1144 = vmatpush1.bf16.msra.mxu0 %v1120
      %1145 = vmatprep.subr.bf16.mxu0 0
      %1146 = vmatpush1.bf16.msra.mxu0 0
      %1147 = vmatprep.subr.bf16.mxu0 0
      %1148 = vmatpush1.bf16.msra.mxu0 0
      %1149 = vmatprep.subr.bf16.mxu0 0
      %1150 = vmatpush1.bf16.msra.mxu0 0
      %1151 = vmatprep.subr.bf16.mxu0 0
      %1152 = vmatpush1.bf16.msra.mxu0 0
      %1153 = vmatprep.subr.bf16.mxu0 0
      %1154 = vmatpush1.bf16.msra.mxu0 0
      %1155 = vmatprep.subr.bf16.mxu0 0
      %1156 = vmatpush1.bf16.msra.mxu0 0
      %1157 = vmatprep.subr.bf16.mxu0 0
      %1158 = vmatpush1.bf16.msra.mxu0 0
      %1159 = vmatprep.subr.bf16.mxu0 0
      %1160 = vmatpush1.bf16.msra.mxu0 0
      %1161 = vmatprep.mubr.bf16.mxu0 0
      %1162 = vmatmul.mubr.bf16.gmra.mrb[0].mxu0 %v429
      %v1163 = vpop.f32.mrb[0].mxu0
      %v1164 = vadd.f32 0.0, %v1163
      %v1165 = vpop.f32.mrb[0].mxu0
      %v1166 = vpop.f32.mrb[0].mxu0
      %v1167 = vpop.f32.mrb[0].mxu0
      %1168 = vdwg.mxu0
      %v1185 = vunpack.c.l.b16 %v1048
      %v1186 = vunpack.c.l.b16 %v1049
      %v1187 = vunpack.c.l.b16 %v1050
      %v1188 = vunpack.c.l.b16 %v1051
      %v1189 = vunpack.c.l.b16 %v1052
      %v1190 = vunpack.c.l.b16 %v1053
      %v1191 = vunpack.c.l.b16 %v1054
      %v1192 = vunpack.c.l.b16 %v1055
      %v1193 = vunpack.c.l.b16 %v1056
      %v1194 = vunpack.c.l.b16 %v1057
      %v1195 = vunpack.c.l.b16 %v1058
      %v1196 = vunpack.c.l.b16 %v1059
      %v1197 = vunpack.c.l.b16 %v1060
      %v1198 = vunpack.c.l.b16 %v1061
      %v1199 = vunpack.c.l.b16 %v1062
      %v1200 = vunpack.c.l.b16 %v1063
      %v1201 = vpack.c.b16 %v1186, %v1185
      %v1202 = vpack.c.b16 %v1188, %v1187
      %v1203 = vpack.c.b16 %v1190, %v1189
      %v1204 = vpack.c.b16 %v1192, %v1191
      %v1205 = vpack.c.b16 %v1194, %v1193
      %v1206 = vpack.c.b16 %v1196, %v1195
      %v1207 = vpack.c.b16 %v1198, %v1197
      %v1208 = vpack.c.b16 %v1200, %v1199
      %1217 = vmatprep.subr.bf16.mxu0 0
      %1218 = vmatpush1.bf16.msra.mxu0 %v1201
      %1219 = vmatprep.subr.bf16.mxu0 0
      %1220 = vmatpush1.bf16.msra.mxu0 %v1202
      %1221 = vmatprep.subr.bf16.mxu0 0
      %1222 = vmatpush1.bf16.msra.mxu0 %v1203
      %1223 = vmatprep.subr.bf16.mxu0 0
      %1224 = vmatpush1.bf16.msra.mxu0 %v1204
      %1225 = vmatprep.subr.bf16.mxu0 0
      %1226 = vmatpush1.bf16.msra.mxu0 %v1205
      %1227 = vmatprep.subr.bf16.mxu0 0
      %1228 = vmatpush1.bf16.msra.mxu0 %v1206
      %1229 = vmatprep.subr.bf16.mxu0 0
      %1230 = vmatpush1.bf16.msra.mxu0 %v1207
      %1231 = vmatprep.subr.bf16.mxu0 0
      %1232 = vmatpush1.bf16.msra.mxu0 %v1208
      %1233 = vmatprep.subr.bf16.mxu0 0
      %1234 = vmatpush1.bf16.msra.mxu0 0
      %1235 = vmatprep.subr.bf16.mxu0 0
      %1236 = vmatpush1.bf16.msra.mxu0 0
      %1237 = vmatprep.subr.bf16.mxu0 0
      %1238 = vmatpush1.bf16.msra.mxu0 0
      %1239 = vmatprep.subr.bf16.mxu0 0
      %1240 = vmatpush1.bf16.msra.mxu0 0
      %1241 = vmatprep.subr.bf16.mxu0 0
      %1242 = vmatpush1.bf16.msra.mxu0 0
      %1243 = vmatprep.subr.bf16.mxu0 0
      %1244 = vmatpush1.bf16.msra.mxu0 0
      %1245 = vmatprep.subr.bf16.mxu0 0
      %1246 = vmatpush1.bf16.msra.mxu0 0
      %1247 = vmatprep.subr.bf16.mxu0 0
      %1248 = vmatpush1.bf16.msra.mxu0 0
      %1249 = vmatprep.mubr.bf16.mxu0 0
      %1250 = vmatmul.mubr.bf16.gmra.mrb[0].mxu0 %v411
      %v1251 = vpop.f32.mrb[0].mxu0
      %v1252 = vadd.f32 %v1164, %v1251
      %v1253 = vpop.f32.mrb[0].mxu0
      %v1254 = vpop.f32.mrb[0].mxu0
      %v1255 = vpop.f32.mrb[0].mxu0
      %1256 = vdwg.mxu0
      %s1257 = scalar_lea.vmem %s1, 512
      %v1258 = vld [vmem:[%s1257] sm:$0xf]
      %v1259 = vld [vmem:[%s1257 + $0x4] sm:$0xf]
      %v1260 = vld [vmem:[%s1257 + $0x8] sm:$0xf]
      %v1261 = vld [vmem:[%s1257 + $0xc] sm:$0xf]
      %v1262 = vld [vmem:[%s1257 + $0x10] sm:$0xf]
      %v1263 = vld [vmem:[%s1257 + $0x14] sm:$0xf]
      %v1264 = vld [vmem:[%s1257 + $0x18] sm:$0xf]
      %v1265 = vld [vmem:[%s1257 + $0x1c] sm:$0xf]
      %v1266 = vld [vmem:[%s1257 + $0x20] sm:$0xf]
      %v1267 = vld [vmem:[%s1257 + $0x24] sm:$0xf]
      %v1268 = vld [vmem:[%s1257 + $0x28] sm:$0xf]
      %v1269 = vld [vmem:[%s1257 + $0x2c] sm:$0xf]
      %v1270 = vld [vmem:[%s1257 + $0x30] sm:$0xf]
      %v1271 = vld [vmem:[%s1257 + $0x34] sm:$0xf]
      %v1272 = vld [vmem:[%s1257 + $0x38] sm:$0xf]
      %v1273 = vld [vmem:[%s1257 + $0x3c] sm:$0xf]
      %v1290 = vunpack.c.l.b16 %v1258
      %v1291 = vunpack.c.l.b16 %v1259
      %v1292 = vunpack.c.l.b16 %v1260
      %v1293 = vunpack.c.l.b16 %v1261
      %v1294 = vunpack.c.l.b16 %v1262
      %v1295 = vunpack.c.l.b16 %v1263
      %v1296 = vunpack.c.l.b16 %v1264
      %v1297 = vunpack.c.l.b16 %v1265
      %v1298 = vunpack.c.l.b16 %v1266
      %v1299 = vunpack.c.l.b16 %v1267
      %v1300 = vunpack.c.l.b16 %v1268
      %v1301 = vunpack.c.l.b16 %v1269
      %v1302 = vunpack.c.l.b16 %v1270
      %v1303 = vunpack.c.l.b16 %v1271
      %v1304 = vunpack.c.l.b16 %v1272
      %v1305 = vunpack.c.l.b16 %v1273
      %v1306 = vpack.c.b16 %v1291, %v1290
      %v1307 = vpack.c.b16 %v1293, %v1292
      %v1308 = vpack.c.b16 %v1295, %v1294
      %v1309 = vpack.c.b16 %v1297, %v1296
      %v1310 = vpack.c.b16 %v1299, %v1298
      %v1311 = vpack.c.b16 %v1301, %v1300
      %v1312 = vpack.c.b16 %v1303, %v1302
      %v1313 = vpack.c.b16 %v1305, %v1304
      %1322 = vmatprep.subr.bf16.mxu0 0
      %1323 = vmatpush1.bf16.msra.mxu0 %v1306
      %1324 = vmatprep.subr.bf16.mxu0 0
      %1325 = vmatpush1.bf16.msra.mxu0 %v1307
      %1326 = vmatprep.subr.bf16.mxu0 0
      %1327 = vmatpush1.bf16.msra.mxu0 %v1308
      %1328 = vmatprep.subr.bf16.mxu0 0
      %1329 = vmatpush1.bf16.msra.mxu0 %v1309
      %1330 = vmatprep.subr.bf16.mxu0 0
      %1331 = vmatpush1.bf16.msra.mxu0 %v1310
      %1332 = vmatprep.subr.bf16.mxu0 0
      %1333 = vmatpush1.bf16.msra.mxu0 %v1311
      %1334 = vmatprep.subr.bf16.mxu0 0
      %1335 = vmatpush1.bf16.msra.mxu0 %v1312
      %1336 = vmatprep.subr.bf16.mxu0 0
      %1337 = vmatpush1.bf16.msra.mxu0 %v1313
      %1338 = vmatprep.subr.bf16.mxu0 0
      %1339 = vmatpush1.bf16.msra.mxu0 0
      %1340 = vmatprep.subr.bf16.mxu0 0
      %1341 = vmatpush1.bf16.msra.mxu0 0
      %1342 = vmatprep.subr.bf16.mxu0 0
      %1343 = vmatpush1.bf16.msra.mxu0 0
      %1344 = vmatprep.subr.bf16.mxu0 0
      %1345 = vmatpush1.bf16.msra.mxu0 0
      %1346 = vmatprep.subr.bf16.mxu0 0
      %1347 = vmatpush1.bf16.msra.mxu0 0
      %1348 = vmatprep.subr.bf16.mxu0 0
      %1349 = vmatpush1.bf16.msra.mxu0 0
      %1350 = vmatprep.subr.bf16.mxu0 0
      %1351 = vmatpush1.bf16.msra.mxu0 0
      %1352 = vmatprep.subr.bf16.mxu0 0
      %1353 = vmatpush1.bf16.msra.mxu0 0
      %1354 = vmatprep.mubr.bf16.mxu0 0
      %1355 = vmatmul.mubr.bf16.gmra.mrb[0].mxu0 %v624
      %v1356 = vpop.f32.mrb[0].mxu0
      %v1357 = vadd.f32 0.0, %v1356
      %v1358 = vpop.f32.mrb[0].mxu0
      %v1359 = vpop.f32.mrb[0].mxu0
      %v1360 = vpop.f32.mrb[0].mxu0
      %1361 = vdwg.mxu0
      %v1362 = vadd.f32 %v1252, %v1357
      %v1363 = vmax.f32 %v730, %v1046
      %v1364 = vmax.f32 %v1363, %v1362
      %v1365 = vld [vmem:[%s3] sm:$0x3]
      %vm1366 = vcmask 31744
      %v1368 = vsel %vm1366, %v1365, 0
      %vm1370 = vcmask 1043456
      %v1372 = vsel %vm1370, %v1364, 0
      %1374 = vmatprep.subr.mxu0 0.0
      %1375 = vmatpush1.msra.mxu0 %v1372
      %1376 = vmatprep.subr.mxu0 0.0
      %1377 = vmatpush1.msra.mxu0 0.0
      %1378 = vmatprep.subr.mxu0 0.0
      %1379 = vmatpush1.msra.mxu0 0.0
      %1380 = vmatprep.subr.mxu0 0.0
      %1381 = vmatpush1.msra.mxu0 0.0
      %1382 = vmatprep.subr.mxu0 0.0
      %1383 = vmatpush1.msra.mxu0 0.0
      %1384 = vmatprep.subr.mxu0 0.0
      %1385 = vmatpush1.msra.mxu0 0.0
      %1386 = vmatprep.subr.mxu0 0.0
      %1387 = vmatpush1.msra.mxu0 0.0
      %1388 = vmatprep.subr.mxu0 0.0
      %1389 = vmatpush1.msra.mxu0 0.0
      %1390 = vmatprep.subr.mxu0 0.0
      %1391 = vmatpush1.msra.mxu0 0.0
      %1392 = vmatprep.subr.mxu0 0.0
      %1393 = vmatpush1.msra.mxu0 0.0
      %1394 = vmatprep.subr.mxu0 0.0
      %1395 = vmatpush1.msra.mxu0 0.0
      %1396 = vmatprep.subr.mxu0 0.0
      %1397 = vmatpush1.msra.mxu0 0.0
      %1398 = vmatprep.subr.mxu0 0.0
      %1399 = vmatpush1.msra.mxu0 0.0
      %1400 = vmatprep.subr.mxu0 0.0
      %1401 = vmatpush1.msra.mxu0 0.0
      %1402 = vmatprep.subr.mxu0 0.0
      %1403 = vmatpush1.msra.mxu0 0.0
      %1404 = vmatprep.subr.mxu0 0.0
      %1405 = vmatpush1.msra.mxu0 0.0
      %1406 = vmatprep.subr.mxu0 0.0
      %1407 = vmatpush1.msra.mxu0 0.0
      %1408 = vmatprep.subr.mxu0 0.0
      %1409 = vmatpush1.msra.mxu0 0.0
      %1410 = vmatprep.subr.mxu0 0.0
      %1411 = vmatpush1.msra.mxu0 0.0
      %1412 = vmatprep.subr.mxu0 0.0
      %1413 = vmatpush1.msra.mxu0 0.0
      %1414 = vmatprep.subr.mxu0 0.0
      %1415 = vmatpush1.msra.mxu0 0.0
      %1416 = vmatprep.subr.mxu0 0.0
      %1417 = vmatpush1.msra.mxu0 0.0
      %1418 = vmatprep.subr.mxu0 0.0
      %1419 = vmatpush1.msra.mxu0 0.0
      %1420 = vmatprep.subr.mxu0 0.0
      %1421 = vmatpush1.msra.mxu0 0.0
      %1422 = vmatprep.subr.mxu0 0.0
      %1423 = vmatpush1.msra.mxu0 0.0
      %1424 = vmatprep.subr.mxu0 0.0
      %1425 = vmatpush1.msra.mxu0 0.0
      %1426 = vmatprep.subr.mxu0 0.0
      %1427 = vmatpush1.msra.mxu0 0.0
      %1428 = vmatprep.subr.mxu0 0.0
      %1429 = vmatpush1.msra.mxu0 0.0
      %1430 = vmatprep.subr.mxu0 0.0
      %1431 = vmatpush1.msra.mxu0 0.0
      %1432 = vmatprep.subr.mxu0 0.0
      %1433 = vmatpush1.msra.mxu0 0.0
      %1434 = vmatprep.subr.mxu0 0.0
      %1435 = vmatpush1.msra.mxu0 0.0
      %1436 = vmatprep.subr.mxu0 0.0
      %1437 = vmatpush1.msra.mxu0 0.0
      %1438 = vmatprep.mubr.f32.mxu0 0.0
      %1439 = vmatmul.mubr.f32.gmra.mrb[0].mxu0 %v1368
      %v1440 = vpop.f32.mrb[0].mxu0
      %v1441 = vadd.f32 0.0, %v1440
      %v1442 = vpop.f32.mrb[0].mxu0
      %1443 = vdwg.mxu0
      %s1444 = scalar_lea.vmem %s3, 2
      %v1445 = vld [vmem:[%s1444] sm:$0x3]
      %v1447 = vsel %vm1366, %v1445, 0
      %1449 = vmatprep.subr.mxu0 0.0
      %1450 = vmatpush1.msra.mxu0 %v1372
      %1451 = vmatprep.subr.mxu0 0.0
      %1452 = vmatpush1.msra.mxu0 0.0
      %1453 = vmatprep.subr.mxu0 0.0
      %1454 = vmatpush1.msra.mxu0 0.0
      %1455 = vmatprep.subr.mxu0 0.0
      %1456 = vmatpush1.msra.mxu0 0.0
      %1457 = vmatprep.subr.mxu0 0.0
      %1458 = vmatpush1.msra.mxu0 0.0
      %1459 = vmatprep.subr.mxu0 0.0
      %1460 = vmatpush1.msra.mxu0 0.0
      %1461 = vmatprep.subr.mxu0 0.0
      %1462 = vmatpush1.msra.mxu0 0.0
      %1463 = vmatprep.subr.mxu0 0.0
      %1464 = vmatpush1.msra.mxu0 0.0
      %1465 = vmatprep.subr.mxu0 0.0
      %1466 = vmatpush1.msra.mxu0 0.0
      %1467 = vmatprep.subr.mxu0 0.0
      %1468 = vmatpush1.msra.mxu0 0.0
      %1469 = vmatprep.subr.mxu0 0.0
      %1470 = vmatpush1.msra.mxu0 0.0
      %1471 = vmatprep.subr.mxu0 0.0
      %1472 = vmatpush1.msra.mxu0 0.0
      %1473 = vmatprep.subr.mxu0 0.0
      %1474 = vmatpush1.msra.mxu0 0.0
      %1475 = vmatprep.subr.mxu0 0.0
      %1476 = vmatpush1.msra.mxu0 0.0
      %1477 = vmatprep.subr.mxu0 0.0
      %1478 = vmatpush1.msra.mxu0 0.0
      %1479 = vmatprep.subr.mxu0 0.0
      %1480 = vmatpush1.msra.mxu0 0.0
      %1481 = vmatprep.subr.mxu0 0.0
      %1482 = vmatpush1.msra.mxu0 0.0
      %1483 = vmatprep.subr.mxu0 0.0
      %1484 = vmatpush1.msra.mxu0 0.0
      %1485 = vmatprep.subr.mxu0 0.0
      %1486 = vmatpush1.msra.mxu0 0.0
      %1487 = vmatprep.subr.mxu0 0.0
      %1488 = vmatpush1.msra.mxu0 0.0
      %1489 = vmatprep.subr.mxu0 0.0
      %1490 = vmatpush1.msra.mxu0 0.0
      %1491 = vmatprep.subr.mxu0 0.0
      %1492 = vmatpush1.msra.mxu0 0.0
      %1493 = vmatprep.subr.mxu0 0.0
      %1494 = vmatpush1.msra.mxu0 0.0
      %1495 = vmatprep.subr.mxu0 0.0
      %1496 = vmatpush1.msra.mxu0 0.0
      %1497 = vmatprep.subr.mxu0 0.0
      %1498 = vmatpush1.msra.mxu0 0.0
      %1499 = vmatprep.subr.mxu0 0.0
      %1500 = vmatpush1.msra.mxu0 0.0
      %1501 = vmatprep.subr.mxu0 0.0
      %1502 = vmatpush1.msra.mxu0 0.0
      %1503 = vmatprep.subr.mxu0 0.0
      %1504 = vmatpush1.msra.mxu0 0.0
      %1505 = vmatprep.subr.mxu0 0.0
      %1506 = vmatpush1.msra.mxu0 0.0
      %1507 = vmatprep.subr.mxu0 0.0
      %1508 = vmatpush1.msra.mxu0 0.0
      %1509 = vmatprep.subr.mxu0 0.0
      %1510 = vmatpush1.msra.mxu0 0.0
      %1511 = vmatprep.subr.mxu0 0.0
      %1512 = vmatpush1.msra.mxu0 0.0
      %1513 = vmatprep.mubr.f32.mxu0 0.0
      %1514 = vmatmul.mubr.f32.gmra.mrb[0].mxu0 %v1447
      %v1515 = vpop.f32.mrb[0].mxu0
      %v1516 = vadd.f32 0.0, %v1515
      %v1517 = vpop.f32.mrb[0].mxu0
      %1518 = vdwg.mxu0
      %s1519 = scalar_lea.vmem %s3, 4
      %v1520 = vld [vmem:[%s1519] sm:$0x3]
      %v1522 = vsel %vm1366, %v1520, 0
      %1524 = vmatprep.subr.mxu0 0.0
      %1525 = vmatpush1.msra.mxu0 %v1372
      %1526 = vmatprep.subr.mxu0 0.0
      %1527 = vmatpush1.msra.mxu0 0.0
      %1528 = vmatprep.subr.mxu0 0.0
      %1529 = vmatpush1.msra.mxu0 0.0
      %1530 = vmatprep.subr.mxu0 0.0
      %1531 = vmatpush1.msra.mxu0 0.0
      %1532 = vmatprep.subr.mxu0 0.0
      %1533 = vmatpush1.msra.mxu0 0.0
      %1534 = vmatprep.subr.mxu0 0.0
      %1535 = vmatpush1.msra.mxu0 0.0
      %1536 = vmatprep.subr.mxu0 0.0
      %1537 = vmatpush1.msra.mxu0 0.0
      %1538 = vmatprep.subr.mxu0 0.0
      %1539 = vmatpush1.msra.mxu0 0.0
      %1540 = vmatprep.subr.mxu0 0.0
      %1541 = vmatpush1.msra.mxu0 0.0
      %1542 = vmatprep.subr.mxu0 0.0
      %1543 = vmatpush1.msra.mxu0 0.0
      %1544 = vmatprep.subr.mxu0 0.0
      %1545 = vmatpush1.msra.mxu0 0.0
      %1546 = vmatprep.subr.mxu0 0.0
      %1547 = vmatpush1.msra.mxu0 0.0
      %1548 = vmatprep.subr.mxu0 0.0
      %1549 = vmatpush1.msra.mxu0 0.0
      %1550 = vmatprep.subr.mxu0 0.0
      %1551 = vmatpush1.msra.mxu0 0.0
      %1552 = vmatprep.subr.mxu0 0.0
      %1553 = vmatpush1.msra.mxu0 0.0
      %1554 = vmatprep.subr.mxu0 0.0
      %1555 = vmatpush1.msra.mxu0 0.0
      %1556 = vmatprep.subr.mxu0 0.0
      %1557 = vmatpush1.msra.mxu0 0.0
      %1558 = vmatprep.subr.mxu0 0.0
      %1559 = vmatpush1.msra.mxu0 0.0
      %1560 = vmatprep.subr.mxu0 0.0
      %1561 = vmatpush1.msra.mxu0 0.0
      %1562 = vmatprep.subr.mxu0 0.0
      %1563 = vmatpush1.msra.mxu0 0.0
      %1564 = vmatprep.subr.mxu0 0.0
      %1565 = vmatpush1.msra.mxu0 0.0
      %1566 = vmatprep.subr.mxu0 0.0
      %1567 = vmatpush1.msra.mxu0 0.0
      %1568 = vmatprep.subr.mxu0 0.0
      %1569 = vmatpush1.msra.mxu0 0.0
      %1570 = vmatprep.subr.mxu0 0.0
      %1571 = vmatpush1.msra.mxu0 0.0
      %1572 = vmatprep.subr.mxu0 0.0
      %1573 = vmatpush1.msra.mxu0 0.0
      %1574 = vmatprep.subr.mxu0 0.0
      %1575 = vmatpush1.msra.mxu0 0.0
      %1576 = vmatprep.subr.mxu0 0.0
      %1577 = vmatpush1.msra.mxu0 0.0
      %1578 = vmatprep.subr.mxu0 0.0
      %1579 = vmatpush1.msra.mxu0 0.0
      %1580 = vmatprep.subr.mxu0 0.0
      %1581 = vmatpush1.msra.mxu0 0.0
      %1582 = vmatprep.subr.mxu0 0.0
      %1583 = vmatpush1.msra.mxu0 0.0
      %1584 = vmatprep.subr.mxu0 0.0
      %1585 = vmatpush1.msra.mxu0 0.0
      %1586 = vmatprep.subr.mxu0 0.0
      %1587 = vmatpush1.msra.mxu0 0.0
      %1588 = vmatprep.mubr.f32.mxu0 0.0
      %1589 = vmatmul.mubr.f32.gmra.mrb[0].mxu0 %v1522
      %v1590 = vpop.f32.mrb[0].mxu0
      %v1591 = vadd.f32 0.0, %v1590
      %v1592 = vpop.f32.mrb[0].mxu0
      %1593 = vdwg.mxu0
      %v1594 = vmax.f32 %v1441, %v1516
      %v1595 = vmax.f32 %v1594, %v1591
      %v1596 = vld [vmem:[%s2] sm:$0x1]
      %v1598 = vlaneseq
      %v1599 = vshrl.u32 %v1598, 7
      %v1600 = vsub.s32 0, %v1599
      %v1601 = vrot.slane %v1596, %v1600
      %v1603 = vadd.f32 %v1595, %v1601
      %vm1604 = vcmask 516096
      %1605 = vst.msk [vmem:[#allocation2] sm:$0x1] %vm1604, 0.0
      %1606 = vst.msk [vmem:[#allocation2 + $0x3] sm:$0x1] %vm1604, 0.0
      %vm1607 = vcmask 517120
      %1608 = vst.msk [vmem:[#allocation2 + $0x1] sm:$0x3] %vm1607, %v1603
      %v1609 = vld [vmem:[#allocation2] sm:$0x3]
      %v1610 = vmax.f32 %v1609, 0.0
      %v1611 = vpack.c.bf16 %v1610, %v1610
      %v1612 = vld [vmem:[%s4] sm:$0xf]
      %v1613 = vld [vmem:[%s4 + $0x4] sm:$0xf]
      %v1614 = vld [vmem:[%s4 + $0x8] sm:$0xf]
      %v1615 = vld [vmem:[%s4 + $0xc] sm:$0xf]
      %v1616 = vld [vmem:[%s4 + $0x10] sm:$0xf]
      %v1617 = vld [vmem:[%s4 + $0x14] sm:$0xf]
      %v1618 = vld [vmem:[%s4 + $0x18] sm:$0xf]
      %v1619 = vld [vmem:[%s4 + $0x1c] sm:$0xf]
      %v1620 = vld [vmem:[#allocation2 + $0x1] sm:$0x3]
      %v1621 = vmax.f32 %v1620, 0.0
      %v1622 = vpack.c.bf16 %v1621, %v1621
      %s1623 = scalar_lea.vmem %s4, 32
      %v1624 = vld [vmem:[%s1623] sm:$0xf]
      %v1625 = vld [vmem:[%s1623 + $0x4] sm:$0xf]
      %v1626 = vld [vmem:[%s1623 + $0x8] sm:$0xf]
      %v1627 = vld [vmem:[%s1623 + $0xc] sm:$0xf]
      %v1628 = vld [vmem:[%s1623 + $0x10] sm:$0xf]
      %v1629 = vld [vmem:[%s1623 + $0x14] sm:$0xf]
      %v1630 = vld [vmem:[%s1623 + $0x18] sm:$0xf]
      %v1631 = vld [vmem:[%s1623 + $0x1c] sm:$0xf]
      %v1640 = vunpack.c.l.b16 %v1624
      %v1641 = vunpack.c.l.b16 %v1625
      %v1642 = vunpack.c.l.b16 %v1626
      %v1643 = vunpack.c.l.b16 %v1627
      %v1644 = vunpack.c.l.b16 %v1628
      %v1645 = vunpack.c.l.b16 %v1629
      %v1646 = vunpack.c.l.b16 %v1630
      %v1647 = vunpack.c.l.b16 %v1631
      %v1648 = vpack.c.b16 %v1641, %v1640
      %v1649 = vpack.c.b16 %v1643, %v1642
      %v1650 = vpack.c.b16 %v1645, %v1644
      %v1651 = vpack.c.b16 %v1647, %v1646
      %vm1656 = vcmask 523264
      %v1658 = vsel %vm1656, %v1622, 0
      %1660 = vmatprep.subr.bf16.mxu0 0
      %1661 = vmatpush1.bf16.msra.mxu0 %v1648
      %1662 = vmatprep.subr.bf16.mxu0 0
      %1663 = vmatpush1.bf16.msra.mxu0 %v1649
      %1664 = vmatprep.subr.bf16.mxu0 0
      %1665 = vmatpush1.bf16.msra.mxu0 %v1650
      %1666 = vmatprep.subr.bf16.mxu0 0
      %1667 = vmatpush1.bf16.msra.mxu0 %v1651
      %1668 = vmatprep.subr.bf16.mxu0 0
      %1669 = vmatpush1.bf16.msra.mxu0 0
      %1670 = vmatprep.subr.bf16.mxu0 0
      %1671 = vmatpush1.bf16.msra.mxu0 0
      %1672 = vmatprep.subr.bf16.mxu0 0
      %1673 = vmatpush1.bf16.msra.mxu0 0
      %1674 = vmatprep.subr.bf16.mxu0 0
      %1675 = vmatpush1.bf16.msra.mxu0 0
      %1676 = vmatprep.subr.bf16.mxu0 0
      %1677 = vmatpush1.bf16.msra.mxu0 0
      %1678 = vmatprep.subr.bf16.mxu0 0
      %1679 = vmatpush1.bf16.msra.mxu0 0
      %1680 = vmatprep.subr.bf16.mxu0 0
      %1681 = vmatpush1.bf16.msra.mxu0 0
      %1682 = vmatprep.subr.bf16.mxu0 0
      %1683 = vmatpush1.bf16.msra.mxu0 0
      %1684 = vmatprep.subr.bf16.mxu0 0
      %1685 = vmatpush1.bf16.msra.mxu0 0
      %1686 = vmatprep.subr.bf16.mxu0 0
      %1687 = vmatpush1.bf16.msra.mxu0 0
      %1688 = vmatprep.subr.bf16.mxu0 0
      %1689 = vmatpush1.bf16.msra.mxu0 0
      %1690 = vmatprep.subr.bf16.mxu0 0
      %1691 = vmatpush1.bf16.msra.mxu0 0
      %1692 = vmatprep.mubr.bf16.mxu0 0
      %1693 = vmatmul.mubr.bf16.gmra.mrb[0].mxu0 %v1658
      %v1694 = vpop.f32.mrb[0].mxu0
      %v1695 = vadd.f32 0.0, %v1694
      %v1696 = vpop.f32.mrb[0].mxu0
      %v1697 = vpop.f32.mrb[0].mxu0
      %v1698 = vpop.f32.mrb[0].mxu0
      %1699 = vdwg.mxu0
      %v1708 = vunpack.c.l.b16 %v1612
      %v1709 = vunpack.c.l.b16 %v1613
      %v1710 = vunpack.c.l.b16 %v1614
      %v1711 = vunpack.c.l.b16 %v1615
      %v1712 = vunpack.c.l.b16 %v1616
      %v1713 = vunpack.c.l.b16 %v1617
      %v1714 = vunpack.c.l.b16 %v1618
      %v1715 = vunpack.c.l.b16 %v1619
      %v1716 = vpack.c.b16 %v1709, %v1708
      %v1717 = vpack.c.b16 %v1711, %v1710
      %v1718 = vpack.c.b16 %v1713, %v1712
      %v1719 = vpack.c.b16 %v1715, %v1714
      %v1725 = vsel %vm1656, %v1611, 0
      %1727 = vmatprep.subr.bf16.mxu0 0
      %1728 = vmatpush1.bf16.msra.mxu0 %v1716
      %1729 = vmatprep.subr.bf16.mxu0 0
      %1730 = vmatpush1.bf16.msra.mxu0 %v1717
      %1731 = vmatprep.subr.bf16.mxu0 0
      %1732 = vmatpush1.bf16.msra.mxu0 %v1718
      %1733 = vmatprep.subr.bf16.mxu0 0
      %1734 = vmatpush1.bf16.msra.mxu0 %v1719
      %1735 = vmatprep.subr.bf16.mxu0 0
      %1736 = vmatpush1.bf16.msra.mxu0 0
      %1737 = vmatprep.subr.bf16.mxu0 0
      %1738 = vmatpush1.bf16.msra.mxu0 0
      %1739 = vmatprep.subr.bf16.mxu0 0
      %1740 = vmatpush1.bf16.msra.mxu0 0
      %1741 = vmatprep.subr.bf16.mxu0 0
      %1742 = vmatpush1.bf16.msra.mxu0 0
      %1743 = vmatprep.subr.bf16.mxu0 0
      %1744 = vmatpush1.bf16.msra.mxu0 0
      %1745 = vmatprep.subr.bf16.mxu0 0
      %1746 = vmatpush1.bf16.msra.mxu0 0
      %1747 = vmatprep.subr.bf16.mxu0 0
      %1748 = vmatpush1.bf16.msra.mxu0 0
      %1749 = vmatprep.subr.bf16.mxu0 0
      %1750 = vmatpush1.bf16.msra.mxu0 0
      %1751 = vmatprep.subr.bf16.mxu0 0
      %1752 = vmatpush1.bf16.msra.mxu0 0
      %1753 = vmatprep.subr.bf16.mxu0 0
      %1754 = vmatpush1.bf16.msra.mxu0 0
      %1755 = vmatprep.subr.bf16.mxu0 0
      %1756 = vmatpush1.bf16.msra.mxu0 0
      %1757 = vmatprep.subr.bf16.mxu0 0
      %1758 = vmatpush1.bf16.msra.mxu0 0
      %1759 = vmatprep.mubr.bf16.mxu0 0
      %1760 = vmatmul.mubr.bf16.gmra.mrb[0].mxu0 %v1725
      %v1761 = vpop.f32.mrb[0].mxu0
      %v1762 = vadd.f32 %v1695, %v1761
      %v1763 = vpop.f32.mrb[0].mxu0
      %v1764 = vpop.f32.mrb[0].mxu0
      %v1765 = vpop.f32.mrb[0].mxu0
      %1766 = vdwg.mxu0
      %v1767 = vld [vmem:[#allocation2 + $0x2] sm:$0x3]
      %v1768 = vmax.f32 %v1767, 0.0
      %v1769 = vpack.c.bf16 %v1768, %v1768
      %s1770 = scalar_lea.vmem %s4, 64
      %v1771 = vld [vmem:[%s1770] sm:$0xf]
      %v1772 = vld [vmem:[%s1770 + $0x4] sm:$0xf]
      %v1773 = vld [vmem:[%s1770 + $0x8] sm:$0xf]
      %v1774 = vld [vmem:[%s1770 + $0xc] sm:$0xf]
      %v1775 = vld [vmem:[%s1770 + $0x10] sm:$0xf]
      %v1776 = vld [vmem:[%s1770 + $0x14] sm:$0xf]
      %v1777 = vld [vmem:[%s1770 + $0x18] sm:$0xf]
      %v1778 = vld [vmem:[%s1770 + $0x1c] sm:$0xf]
      %v1787 = vunpack.c.l.b16 %v1771
      %v1788 = vunpack.c.l.b16 %v1772
      %v1789 = vunpack.c.l.b16 %v1773
      %v1790 = vunpack.c.l.b16 %v1774
      %v1791 = vunpack.c.l.b16 %v1775
      %v1792 = vunpack.c.l.b16 %v1776
      %v1793 = vunpack.c.l.b16 %v1777
      %v1794 = vunpack.c.l.b16 %v1778
      %v1795 = vpack.c.b16 %v1788, %v1787
      %v1796 = vpack.c.b16 %v1790, %v1789
      %v1797 = vpack.c.b16 %v1792, %v1791
      %v1798 = vpack.c.b16 %v1794, %v1793
      %v1804 = vsel %vm1656, %v1769, 0
      %1806 = vmatprep.subr.bf16.mxu0 0
      %1807 = vmatpush1.bf16.msra.mxu0 %v1795
      %1808 = vmatprep.subr.bf16.mxu0 0
      %1809 = vmatpush1.bf16.msra.mxu0 %v1796
      %1810 = vmatprep.subr.bf16.mxu0 0
      %1811 = vmatpush1.bf16.msra.mxu0 %v1797
      %1812 = vmatprep.subr.bf16.mxu0 0
      %1813 = vmatpush1.bf16.msra.mxu0 %v1798
      %1814 = vmatprep.subr.bf16.mxu0 0
      %1815 = vmatpush1.bf16.msra.mxu0 0
      %1816 = vmatprep.subr.bf16.mxu0 0
      %1817 = vmatpush1.bf16.msra.mxu0 0
      %1818 = vmatprep.subr.bf16.mxu0 0
      %1819 = vmatpush1.bf16.msra.mxu0 0
      %1820 = vmatprep.subr.bf16.mxu0 0
      %1821 = vmatpush1.bf16.msra.mxu0 0
      %1822 = vmatprep.subr.bf16.mxu0 0
      %1823 = vmatpush1.bf16.msra.mxu0 0
      %1824 = vmatprep.subr.bf16.mxu0 0
      %1825 = vmatpush1.bf16.msra.mxu0 0
      %1826 = vmatprep.subr.bf16.mxu0 0
      %1827 = vmatpush1.bf16.msra.mxu0 0
      %1828 = vmatprep.subr.bf16.mxu0 0
      %1829 = vmatpush1.bf16.msra.mxu0 0
      %1830 = vmatprep.subr.bf16.mxu0 0
      %1831 = vmatpush1.bf16.msra.mxu0 0
      %1832 = vmatprep.subr.bf16.mxu0 0
      %1833 = vmatpush1.bf16.msra.mxu0 0
      %1834 = vmatprep.subr.bf16.mxu0 0
      %1835 = vmatpush1.bf16.msra.mxu0 0
      %1836 = vmatprep.subr.bf16.mxu0 0
      %1837 = vmatpush1.bf16.msra.mxu0 0
      %1838 = vmatprep.mubr.bf16.mxu0 0
      %1839 = vmatmul.mubr.bf16.gmra.mrb[0].mxu0 %v1804
      %v1840 = vpop.f32.mrb[0].mxu0
      %v1841 = vadd.f32 0.0, %v1840
      %v1842 = vpop.f32.mrb[0].mxu0
      %v1843 = vpop.f32.mrb[0].mxu0
      %v1844 = vpop.f32.mrb[0].mxu0
      %1845 = vdwg.mxu0
      %v1846 = vadd.f32 %v1762, %v1841
      %v1847 = vld [vmem:[%s5] sm:$0x1]
      %v1849 = vlaneseq
      %v1850 = vshrl.u32 %v1849, 7
      %v1851 = vsub.s32 0, %v1850
      %v1852 = vrot.slane %v1847, %v1851
      %v1854 = vadd.f32 %v1846, %v1852
      %1855 = vst.msk [vmem:[#allocation3] sm:$0x1] %vm1604, 0.0
      %1856 = vst.msk [vmem:[#allocation3 + $0x3] sm:$0x1] %vm1604, 0.0
      %v1857 = vmax.f32 %v1854, 0.0
      %1858 = vst.msk [vmem:[#allocation3 + $0x1] sm:$0x3] %vm1607, %v1857
      %v1859 = vld [vmem:[#allocation3] sm:$0x3]
      %v1860 = vpack.c.bf16 %v1859, %v1859
      %v1861 = vld [vmem:[%s6] sm:$0xf]
      %v1862 = vld [vmem:[%s6 + $0x4] sm:$0xf]
      %v1863 = vld [vmem:[%s6 + $0x8] sm:$0xf]
      %v1864 = vld [vmem:[%s6 + $0xc] sm:$0xf]
      %v1865 = vld [vmem:[%s6 + $0x10] sm:$0xf]
      %v1866 = vld [vmem:[%s6 + $0x14] sm:$0xf]
      %v1867 = vld [vmem:[%s6 + $0x18] sm:$0xf]
      %v1868 = vld [vmem:[%s6 + $0x1c] sm:$0xf]
      %v1869 = vld [vmem:[#allocation3 + $0x1] sm:$0x3]
      %v1870 = vpack.c.bf16 %v1869, %v1869
      %s1871 = scalar_lea.vmem %s6, 32
      %v1872 = vld [vmem:[%s1871] sm:$0xf]
      %v1873 = vld [vmem:[%s1871 + $0x4] sm:$0xf]
      %v1874 = vld [vmem:[%s1871 + $0x8] sm:$0xf]
      %v1875 = vld [vmem:[%s1871 + $0xc] sm:$0xf]
      %v1876 = vld [vmem:[%s1871 + $0x10] sm:$0xf]
      %v1877 = vld [vmem:[%s1871 + $0x14] sm:$0xf]
      %v1878 = vld [vmem:[%s1871 + $0x18] sm:$0xf]
      %v1879 = vld [vmem:[%s1871 + $0x1c] sm:$0xf]
      %v1888 = vunpack.c.l.b16 %v1872
      %v1889 = vunpack.c.l.b16 %v1873
      %v1890 = vunpack.c.l.b16 %v1874
      %v1891 = vunpack.c.l.b16 %v1875
      %v1892 = vunpack.c.l.b16 %v1876
      %v1893 = vunpack.c.l.b16 %v1877
      %v1894 = vunpack.c.l.b16 %v1878
      %v1895 = vunpack.c.l.b16 %v1879
      %v1896 = vpack.c.b16 %v1889, %v1888
      %v1897 = vpack.c.b16 %v1891, %v1890
      %v1898 = vpack.c.b16 %v1893, %v1892
      %v1899 = vpack.c.b16 %v1895, %v1894
      %v1905 = vsel %vm1656, %v1870, 0
      %1907 = vmatprep.subr.bf16.mxu0 0
      %1908 = vmatpush1.bf16.msra.mxu0 %v1896
      %1909 = vmatprep.subr.bf16.mxu0 0
      %1910 = vmatpush1.bf16.msra.mxu0 %v1897
      %1911 = vmatprep.subr.bf16.mxu0 0
      %1912 = vmatpush1.bf16.msra.mxu0 %v1898
      %1913 = vmatprep.subr.bf16.mxu0 0
      %1914 = vmatpush1.bf16.msra.mxu0 %v1899
      %1915 = vmatprep.subr.bf16.mxu0 0
      %1916 = vmatpush1.bf16.msra.mxu0 0
      %1917 = vmatprep.subr.bf16.mxu0 0
      %1918 = vmatpush1.bf16.msra.mxu0 0
      %1919 = vmatprep.subr.bf16.mxu0 0
      %1920 = vmatpush1.bf16.msra.mxu0 0
      %1921 = vmatprep.subr.bf16.mxu0 0
      %1922 = vmatpush1.bf16.msra.mxu0 0
      %1923 = vmatprep.subr.bf16.mxu0 0
      %1924 = vmatpush1.bf16.msra.mxu0 0
      %1925 = vmatprep.subr.bf16.mxu0 0
      %1926 = vmatpush1.bf16.msra.mxu0 0
      %1927 = vmatprep.subr.bf16.mxu0 0
      %1928 = vmatpush1.bf16.msra.mxu0 0
      %1929 = vmatprep.subr.bf16.mxu0 0
      %1930 = vmatpush1.bf16.msra.mxu0 0
      %1931 = vmatprep.subr.bf16.mxu0 0
      %1932 = vmatpush1.bf16.msra.mxu0 0
      %1933 = vmatprep.subr.bf16.mxu0 0
      %1934 = vmatpush1.bf16.msra.mxu0 0
      %1935 = vmatprep.subr.bf16.mxu0 0
      %1936 = vmatpush1.bf16.msra.mxu0 0
      %1937 = vmatprep.subr.bf16.mxu0 0
      %1938 = vmatpush1.bf16.msra.mxu0 0
      %1939 = vmatprep.mubr.bf16.mxu0 0
      %1940 = vmatmul.mubr.bf16.gmra.mrb[0].mxu0 %v1905
      %v1941 = vpop.f32.mrb[0].mxu0
      %v1942 = vadd.f32 0.0, %v1941
      %v1943 = vpop.f32.mrb[0].mxu0
      %v1944 = vpop.f32.mrb[0].mxu0
      %v1945 = vpop.f32.mrb[0].mxu0
      %1946 = vdwg.mxu0
      %v1955 = vunpack.c.l.b16 %v1861
      %v1956 = vunpack.c.l.b16 %v1862
      %v1957 = vunpack.c.l.b16 %v1863
      %v1958 = vunpack.c.l.b16 %v1864
      %v1959 = vunpack.c.l.b16 %v1865
      %v1960 = vunpack.c.l.b16 %v1866
      %v1961 = vunpack.c.l.b16 %v1867
      %v1962 = vunpack.c.l.b16 %v1868
      %v1963 = vpack.c.b16 %v1956, %v1955
      %v1964 = vpack.c.b16 %v1958, %v1957
      %v1965 = vpack.c.b16 %v1960, %v1959
      %v1966 = vpack.c.b16 %v1962, %v1961
      %v1972 = vsel %vm1656, %v1860, 0
      %1974 = vmatprep.subr.bf16.mxu0 0
      %1975 = vmatpush1.bf16.msra.mxu0 %v1963
      %1976 = vmatprep.subr.bf16.mxu0 0
      %1977 = vmatpush1.bf16.msra.mxu0 %v1964
      %1978 = vmatprep.subr.bf16.mxu0 0
      %1979 = vmatpush1.bf16.msra.mxu0 %v1965
      %1980 = vmatprep.subr.bf16.mxu0 0
      %1981 = vmatpush1.bf16.msra.mxu0 %v1966
      %1982 = vmatprep.subr.bf16.mxu0 0
      %1983 = vmatpush1.bf16.msra.mxu0 0
      %1984 = vmatprep.subr.bf16.mxu0 0
      %1985 = vmatpush1.bf16.msra.mxu0 0
      %1986 = vmatprep.subr.bf16.mxu0 0
      %1987 = vmatpush1.bf16.msra.mxu0 0
      %1988 = vmatprep.subr.bf16.mxu0 0
      %1989 = vmatpush1.bf16.msra.mxu0 0
      %1990 = vmatprep.subr.bf16.mxu0 0
      %1991 = vmatpush1.bf16.msra.mxu0 0
      %1992 = vmatprep.subr.bf16.mxu0 0
      %1993 = vmatpush1.bf16.msra.mxu0 0
      %1994 = vmatprep.subr.bf16.mxu0 0
      %1995 = vmatpush1.bf16.msra.mxu0 0
      %1996 = vmatprep.subr.bf16.mxu0 0
      %1997 = vmatpush1.bf16.msra.mxu0 0
      %1998 = vmatprep.subr.bf16.mxu0 0
      %1999 = vmatpush1.bf16.msra.mxu0 0
      %2000 = vmatprep.subr.bf16.mxu0 0
      %2001 = vmatpush1.bf16.msra.mxu0 0
      %2002 = vmatprep.subr.bf16.mxu0 0
      %2003 = vmatpush1.bf16.msra.mxu0 0
      %2004 = vmatprep.subr.bf16.mxu0 0
      %2005 = vmatpush1.bf16.msra.mxu0 0
      %2006 = vmatprep.mubr.bf16.mxu0 0
      %2007 = vmatmul.mubr.bf16.gmra.mrb[0].mxu0 %v1972
      %v2008 = vpop.f32.mrb[0].mxu0
      %v2009 = vadd.f32 %v1942, %v2008
      %v2010 = vpop.f32.mrb[0].mxu0
      %v2011 = vpop.f32.mrb[0].mxu0
      %v2012 = vpop.f32.mrb[0].mxu0
      %2013 = vdwg.mxu0
      %v2014 = vld [vmem:[#allocation3 + $0x2] sm:$0x3]
      %v2015 = vpack.c.bf16 %v2014, %v2014
      %s2016 = scalar_lea.vmem %s6, 64
      %v2017 = vld [vmem:[%s2016] sm:$0xf]
      %v2018 = vld [vmem:[%s2016 + $0x4] sm:$0xf]
      %v2019 = vld [vmem:[%s2016 + $0x8] sm:$0xf]
      %v2020 = vld [vmem:[%s2016 + $0xc] sm:$0xf]
      %v2021 = vld [vmem:[%s2016 + $0x10] sm:$0xf]
      %v2022 = vld [vmem:[%s2016 + $0x14] sm:$0xf]
      %v2023 = vld [vmem:[%s2016 + $0x18] sm:$0xf]
      %v2024 = vld [vmem:[%s2016 + $0x1c] sm:$0xf]
      %v2033 = vunpack.c.l.b16 %v2017
      %v2034 = vunpack.c.l.b16 %v2018
      %v2035 = vunpack.c.l.b16 %v2019
      %v2036 = vunpack.c.l.b16 %v2020
      %v2037 = vunpack.c.l.b16 %v2021
      %v2038 = vunpack.c.l.b16 %v2022
      %v2039 = vunpack.c.l.b16 %v2023
      %v2040 = vunpack.c.l.b16 %v2024
      %v2041 = vpack.c.b16 %v2034, %v2033
      %v2042 = vpack.c.b16 %v2036, %v2035
      %v2043 = vpack.c.b16 %v2038, %v2037
      %v2044 = vpack.c.b16 %v2040, %v2039
      %v2050 = vsel %vm1656, %v2015, 0
      %2052 = vmatprep.subr.bf16.mxu0 0
      %2053 = vmatpush1.bf16.msra.mxu0 %v2041
      %2054 = vmatprep.subr.bf16.mxu0 0
      %2055 = vmatpush1.bf16.msra.mxu0 %v2042
      %2056 = vmatprep.subr.bf16.mxu0 0
      %2057 = vmatpush1.bf16.msra.mxu0 %v2043
      %2058 = vmatprep.subr.bf16.mxu0 0
      %2059 = vmatpush1.bf16.msra.mxu0 %v2044
      %2060 = vmatprep.subr.bf16.mxu0 0
      %2061 = vmatpush1.bf16.msra.mxu0 0
      %2062 = vmatprep.subr.bf16.mxu0 0
      %2063 = vmatpush1.bf16.msra.mxu0 0
      %2064 = vmatprep.subr.bf16.mxu0 0
      %2065 = vmatpush1.bf16.msra.mxu0 0
      %2066 = vmatprep.subr.bf16.mxu0 0
      %2067 = vmatpush1.bf16.msra.mxu0 0
      %2068 = vmatprep.subr.bf16.mxu0 0
      %2069 = vmatpush1.bf16.msra.mxu0 0
      %2070 = vmatprep.subr.bf16.mxu0 0
      %2071 = vmatpush1.bf16.msra.mxu0 0
      %2072 = vmatprep.subr.bf16.mxu0 0
      %2073 = vmatpush1.bf16.msra.mxu0 0
      %2074 = vmatprep.subr.bf16.mxu0 0
      %2075 = vmatpush1.bf16.msra.mxu0 0
      %2076 = vmatprep.subr.bf16.mxu0 0
      %2077 = vmatpush1.bf16.msra.mxu0 0
      %2078 = vmatprep.subr.bf16.mxu0 0
      %2079 = vmatpush1.bf16.msra.mxu0 0
      %2080 = vmatprep.subr.bf16.mxu0 0
      %2081 = vmatpush1.bf16.msra.mxu0 0
      %2082 = vmatprep.subr.bf16.mxu0 0
      %2083 = vmatpush1.bf16.msra.mxu0 0
      %2084 = vmatprep.mubr.bf16.mxu0 0
      %2085 = vmatmul.mubr.bf16.gmra.mrb[0].mxu0 %v2050
      %v2086 = vpop.f32.mrb[0].mxu0
      %v2087 = vadd.f32 0.0, %v2086
      %v2088 = vpop.f32.mrb[0].mxu0
      %v2089 = vpop.f32.mrb[0].mxu0
      %v2090 = vpop.f32.mrb[0].mxu0
      %2091 = vdwg.mxu0
      %v2092 = vadd.f32 %v2009, %v2087
      %v2093 = vld [vmem:[%s7] sm:$0x1]
      %v2095 = vlaneseq
      %v2096 = vshrl.u32 %v2095, 7
      %v2097 = vsub.s32 0, %v2096
      %v2098 = vrot.slane %v2093, %v2097
      %v2100 = vadd.f32 %v2092, %v2098
      %v2101 = vld [vmem:[#allocation2 + $0x1] sm:$0x3]
      %v2102 = vadd.f32 %v2100, %v2101
      %2103 = vst.msk [vmem:[#allocation2 + $0x1] sm:$0x3] %vm1607, %v2102
      %v2104 = vld [vmem:[#allocation2] sm:$0x3]
      %v2105 = vmax.f32 %v2104, 0.0
      %v2106 = vpack.c.bf16 %v2105, %v2105
      %v2107 = vld [vmem:[%s8] sm:$0xf]
      %v2108 = vld [vmem:[%s8 + $0x4] sm:$0xf]
      %v2109 = vld [vmem:[%s8 + $0x8] sm:$0xf]
      %v2110 = vld [vmem:[%s8 + $0xc] sm:$0xf]
      %v2111 = vld [vmem:[%s8 + $0x10] sm:$0xf]
      %v2112 = vld [vmem:[%s8 + $0x14] sm:$0xf]
      %v2113 = vld [vmem:[%s8 + $0x18] sm:$0xf]
      %v2114 = vld [vmem:[%s8 + $0x1c] sm:$0xf]
      %v2115 = vld [vmem:[#allocation2 + $0x1] sm:$0x3]
      %v2116 = vmax.f32 %v2115, 0.0
      %v2117 = vpack.c.bf16 %v2116, %v2116
      %s2118 = scalar_lea.vmem %s8, 32
      %v2119 = vld [vmem:[%s2118] sm:$0xf]
      %v2120 = vld [vmem:[%s2118 + $0x4] sm:$0xf]
      %v2121 = vld [vmem:[%s2118 + $0x8] sm:$0xf]
      %v2122 = vld [vmem:[%s2118 + $0xc] sm:$0xf]
      %v2123 = vld [vmem:[%s2118 + $0x10] sm:$0xf]
      %v2124 = vld [vmem:[%s2118 + $0x14] sm:$0xf]
      %v2125 = vld [vmem:[%s2118 + $0x18] sm:$0xf]
      %v2126 = vld [vmem:[%s2118 + $0x1c] sm:$0xf]
      %v2135 = vunpack.c.l.b16 %v2119
      %v2136 = vunpack.c.l.b16 %v2120
      %v2137 = vunpack.c.l.b16 %v2121
      %v2138 = vunpack.c.l.b16 %v2122
      %v2139 = vunpack.c.l.b16 %v2123
      %v2140 = vunpack.c.l.b16 %v2124
      %v2141 = vunpack.c.l.b16 %v2125
      %v2142 = vunpack.c.l.b16 %v2126
      %v2143 = vpack.c.b16 %v2136, %v2135
      %v2144 = vpack.c.b16 %v2138, %v2137
      %v2145 = vpack.c.b16 %v2140, %v2139
      %v2146 = vpack.c.b16 %v2142, %v2141
      %v2152 = vsel %vm1656, %v2117, 0
      %2154 = vmatprep.subr.bf16.mxu0 0
      %2155 = vmatpush1.bf16.msra.mxu0 %v2143
      %2156 = vmatprep.subr.bf16.mxu0 0
      %2157 = vmatpush1.bf16.msra.mxu0 %v2144
      %2158 = vmatprep.subr.bf16.mxu0 0
      %2159 = vmatpush1.bf16.msra.mxu0 %v2145
      %2160 = vmatprep.subr.bf16.mxu0 0
      %2161 = vmatpush1.bf16.msra.mxu0 %v2146
      %2162 = vmatprep.subr.bf16.mxu0 0
      %2163 = vmatpush1.bf16.msra.mxu0 0
      %2164 = vmatprep.subr.bf16.mxu0 0
      %2165 = vmatpush1.bf16.msra.mxu0 0
      %2166 = vmatprep.subr.bf16.mxu0 0
      %2167 = vmatpush1.bf16.msra.mxu0 0
      %2168 = vmatprep.subr.bf16.mxu0 0
      %2169 = vmatpush1.bf16.msra.mxu0 0
      %2170 = vmatprep.subr.bf16.mxu0 0
      %2171 = vmatpush1.bf16.msra.mxu0 0
      %2172 = vmatprep.subr.bf16.mxu0 0
      %2173 = vmatpush1.bf16.msra.mxu0 0
      %2174 = vmatprep.subr.bf16.mxu0 0
      %2175 = vmatpush1.bf16.msra.mxu0 0
      %2176 = vmatprep.subr.bf16.mxu0 0
      %2177 = vmatpush1.bf16.msra.mxu0 0
      %2178 = vmatprep.subr.bf16.mxu0 0
      %2179 = vmatpush1.bf16.msra.mxu0 0
      %2180 = vmatprep.subr.bf16.mxu0 0
      %2181 = vmatpush1.bf16.msra.mxu0 0
      %2182 = vmatprep.subr.bf16.mxu0 0
      %2183 = vmatpush1.bf16.msra.mxu0 0
      %2184 = vmatprep.subr.bf16.mxu0 0
      %2185 = vmatpush1.bf16.msra.mxu0 0
      %2186 = vmatprep.mubr.bf16.mxu0 0
      %2187 = vmatmul.mubr.bf16.gmra.mrb[0].mxu0 %v2152
      %v2188 = vpop.f32.mrb[0].mxu0
      %v2189 = vadd.f32 0.0, %v2188
      %v2190 = vpop.f32.mrb[0].mxu0
      %v2191 = vpop.f32.mrb[0].mxu0
      %v2192 = vpop.f32.mrb[0].mxu0
      %2193 = vdwg.mxu0
      %v2202 = vunpack.c.l.b16 %v2107
      %v2203 = vunpack.c.l.b16 %v2108
      %v2204 = vunpack.c.l.b16 %v2109
      %v2205 = vunpack.c.l.b16 %v2110
      %v2206 = vunpack.c.l.b16 %v2111
      %v2207 = vunpack.c.l.b16 %v2112
      %v2208 = vunpack.c.l.b16 %v2113
      %v2209 = vunpack.c.l.b16 %v2114
      %v2210 = vpack.c.b16 %v2203, %v2202
      %v2211 = vpack.c.b16 %v2205, %v2204
      %v2212 = vpack.c.b16 %v2207, %v2206
      %v2213 = vpack.c.b16 %v2209, %v2208
      %v2219 = vsel %vm1656, %v2106, 0
      %2221 = vmatprep.subr.bf16.mxu0 0
      %2222 = vmatpush1.bf16.msra.mxu0 %v2210
      %2223 = vmatprep.subr.bf16.mxu0 0
      %2224 = vmatpush1.bf16.msra.mxu0 %v2211
      %2225 = vmatprep.subr.bf16.mxu0 0
      %2226 = vmatpush1.bf16.msra.mxu0 %v2212
      %2227 = vmatprep.subr.bf16.mxu0 0
      %2228 = vmatpush1.bf16.msra.mxu0 %v2213
      %2229 = vmatprep.subr.bf16.mxu0 0
      %2230 = vmatpush1.bf16.msra.mxu0 0
      %2231 = vmatprep.subr.bf16.mxu0 0
      %2232 = vmatpush1.bf16.msra.mxu0 0
      %2233 = vmatprep.subr.bf16.mxu0 0
      %2234 = vmatpush1.bf16.msra.mxu0 0
      %2235 = vmatprep.subr.bf16.mxu0 0
      %2236 = vmatpush1.bf16.msra.mxu0 0
      %2237 = vmatprep.subr.bf16.mxu0 0
      %2238 = vmatpush1.bf16.msra.mxu0 0
      %2239 = vmatprep.subr.bf16.mxu0 0
      %2240 = vmatpush1.bf16.msra.mxu0 0
      %2241 = vmatprep.subr.bf16.mxu0 0
      %2242 = vmatpush1.bf16.msra.mxu0 0
      %2243 = vmatprep.subr.bf16.mxu0 0
      %2244 = vmatpush1.bf16.msra.mxu0 0
      %2245 = vmatprep.subr.bf16.mxu0 0
      %2246 = vmatpush1.bf16.msra.mxu0 0
      %2247 = vmatprep.subr.bf16.mxu0 0
      %2248 = vmatpush1.bf16.msra.mxu0 0
      %2249 = vmatprep.subr.bf16.mxu0 0
      %2250 = vmatpush1.bf16.msra.mxu0 0
      %2251 = vmatprep.subr.bf16.mxu0 0
      %2252 = vmatpush1.bf16.msra.mxu0 0
      %2253 = vmatprep.mubr.bf16.mxu0 0
      %2254 = vmatmul.mubr.bf16.gmra.mrb[0].mxu0 %v2219
      %v2255 = vpop.f32.mrb[0].mxu0
      %v2256 = vadd.f32 %v2189, %v2255
      %v2257 = vpop.f32.mrb[0].mxu0
      %v2258 = vpop.f32.mrb[0].mxu0
      %v2259 = vpop.f32.mrb[0].mxu0
      %2260 = vdwg.mxu0
      %v2261 = vld [vmem:[#allocation2 + $0x2] sm:$0x3]
      %v2262 = vmax.f32 %v2261, 0.0
      %v2263 = vpack.c.bf16 %v2262, %v2262
      %s2264 = scalar_lea.vmem %s8, 64
      %v2265 = vld [vmem:[%s2264] sm:$0xf]
      %v2266 = vld [vmem:[%s2264 + $0x4] sm:$0xf]
      %v2267 = vld [vmem:[%s2264 + $0x8] sm:$0xf]
      %v2268 = vld [vmem:[%s2264 + $0xc] sm:$0xf]
      %v2269 = vld [vmem:[%s2264 + $0x10] sm:$0xf]
      %v2270 = vld [vmem:[%s2264 + $0x14] sm:$0xf]
      %v2271 = vld [vmem:[%s2264 + $0x18] sm:$0xf]
      %v2272 = vld [vmem:[%s2264 + $0x1c] sm:$0xf]
      %v2281 = vunpack.c.l.b16 %v2265
      %v2282 = vunpack.c.l.b16 %v2266
      %v2283 = vunpack.c.l.b16 %v2267
      %v2284 = vunpack.c.l.b16 %v2268
      %v2285 = vunpack.c.l.b16 %v2269
      %v2286 = vunpack.c.l.b16 %v2270
      %v2287 = vunpack.c.l.b16 %v2271
      %v2288 = vunpack.c.l.b16 %v2272
      %v2289 = vpack.c.b16 %v2282, %v2281
      %v2290 = vpack.c.b16 %v2284, %v2283
      %v2291 = vpack.c.b16 %v2286, %v2285
      %v2292 = vpack.c.b16 %v2288, %v2287
      %v2298 = vsel %vm1656, %v2263, 0
      %2300 = vmatprep.subr.bf16.mxu0 0
      %2301 = vmatpush1.bf16.msra.mxu0 %v2289
      %2302 = vmatprep.subr.bf16.mxu0 0
      %2303 = vmatpush1.bf16.msra.mxu0 %v2290
      %2304 = vmatprep.subr.bf16.mxu0 0
      %2305 = vmatpush1.bf16.msra.mxu0 %v2291
      %2306 = vmatprep.subr.bf16.mxu0 0
      %2307 = vmatpush1.bf16.msra.mxu0 %v2292
      %2308 = vmatprep.subr.bf16.mxu0 0
      %2309 = vmatpush1.bf16.msra.mxu0 0
      %2310 = vmatprep.subr.bf16.mxu0 0
      %2311 = vmatpush1.bf16.msra.mxu0 0
      %2312 = vmatprep.subr.bf16.mxu0 0
      %2313 = vmatpush1.bf16.msra.mxu0 0
      %2314 = vmatprep.subr.bf16.mxu0 0
      %2315 = vmatpush1.bf16.msra.mxu0 0
      %2316 = vmatprep.subr.bf16.mxu0 0
      %2317 = vmatpush1.bf16.msra.mxu0 0
      %2318 = vmatprep.subr.bf16.mxu0 0
      %2319 = vmatpush1.bf16.msra.mxu0 0
      %2320 = vmatprep.subr.bf16.mxu0 0
      %2321 = vmatpush1.bf16.msra.mxu0 0
      %2322 = vmatprep.subr.bf16.mxu0 0
      %2323 = vmatpush1.bf16.msra.mxu0 0
      %2324 = vmatprep.subr.bf16.mxu0 0
      %2325 = vmatpush1.bf16.msra.mxu0 0
      %2326 = vmatprep.subr.bf16.mxu0 0
      %2327 = vmatpush1.bf16.msra.mxu0 0
      %2328 = vmatprep.subr.bf16.mxu0 0
      %2329 = vmatpush1.bf16.msra.mxu0 0
      %2330 = vmatprep.subr.bf16.mxu0 0
      %2331 = vmatpush1.bf16.msra.mxu0 0
      %2332 = vmatprep.mubr.bf16.mxu0 0
      %2333 = vmatmul.mubr.bf16.gmra.mrb[0].mxu0 %v2298
      %v2334 = vpop.f32.mrb[0].mxu0
      %v2335 = vadd.f32 0.0, %v2334
      %v2336 = vpop.f32.mrb[0].mxu0
      %v2337 = vpop.f32.mrb[0].mxu0
      %v2338 = vpop.f32.mrb[0].mxu0
      %2339 = vdwg.mxu0
      %v2340 = vadd.f32 %v2256, %v2335
      %v2341 = vld [vmem:[%s9] sm:$0x1]
      %v2343 = vlaneseq
      %v2344 = vshrl.u32 %v2343, 7
      %v2345 = vsub.s32 0, %v2344
      %v2346 = vrot.slane %v2341, %v2345
      %v2348 = vadd.f32 %v2340, %v2346
      %2349 = vst.msk [vmem:[#allocation3] sm:$0x1] %vm1604, 0.0
      %2350 = vst.msk [vmem:[#allocation3 + $0x3] sm:$0x1] %vm1604, 0.0
      %v2351 = vmax.f32 %v2348, 0.0
      %2352 = vst.msk [vmem:[#allocation3 + $0x1] sm:$0x3] %vm1607, %v2351
      %v2353 = vld [vmem:[#allocation3] sm:$0x3]
      %v2354 = vpack.c.bf16 %v2353, %v2353
      %v2355 = vld [vmem:[%s10] sm:$0xf]
      %v2356 = vld [vmem:[%s10 + $0x4] sm:$0xf]
      %v2357 = vld [vmem:[%s10 + $0x8] sm:$0xf]
      %v2358 = vld [vmem:[%s10 + $0xc] sm:$0xf]
      %v2359 = vld [vmem:[%s10 + $0x10] sm:$0xf]
      %v2360 = vld [vmem:[%s10 + $0x14] sm:$0xf]
      %v2361 = vld [vmem:[%s10 + $0x18] sm:$0xf]
      %v2362 = vld [vmem:[%s10 + $0x1c] sm:$0xf]
      %v2363 = vld [vmem:[#allocation3 + $0x1] sm:$0x3]
      %v2364 = vpack.c.bf16 %v2363, %v2363
      %s2365 = scalar_lea.vmem %s10, 32
      %v2366 = vld [vmem:[%s2365] sm:$0xf]
      %v2367 = vld [vmem:[%s2365 + $0x4] sm:$0xf]
      %v2368 = vld [vmem:[%s2365 + $0x8] sm:$0xf]
      %v2369 = vld [vmem:[%s2365 + $0xc] sm:$0xf]
      %v2370 = vld [vmem:[%s2365 + $0x10] sm:$0xf]
      %v2371 = vld [vmem:[%s2365 + $0x14] sm:$0xf]
      %v2372 = vld [vmem:[%s2365 + $0x18] sm:$0xf]
      %v2373 = vld [vmem:[%s2365 + $0x1c] sm:$0xf]
      %v2382 = vunpack.c.l.b16 %v2366
      %v2383 = vunpack.c.l.b16 %v2367
      %v2384 = vunpack.c.l.b16 %v2368
      %v2385 = vunpack.c.l.b16 %v2369
      %v2386 = vunpack.c.l.b16 %v2370
      %v2387 = vunpack.c.l.b16 %v2371
      %v2388 = vunpack.c.l.b16 %v2372
      %v2389 = vunpack.c.l.b16 %v2373
      %v2390 = vpack.c.b16 %v2383, %v2382
      %v2391 = vpack.c.b16 %v2385, %v2384
      %v2392 = vpack.c.b16 %v2387, %v2386
      %v2393 = vpack.c.b16 %v2389, %v2388
      %v2399 = vsel %vm1656, %v2364, 0
      %2401 = vmatprep.subr.bf16.mxu0 0
      %2402 = vmatpush1.bf16.msra.mxu0 %v2390
      %2403 = vmatprep.subr.bf16.mxu0 0
      %2404 = vmatpush1.bf16.msra.mxu0 %v2391
      %2405 = vmatprep.subr.bf16.mxu0 0
      %2406 = vmatpush1.bf16.msra.mxu0 %v2392
      %2407 = vmatprep.subr.bf16.mxu0 0
      %2408 = vmatpush1.bf16.msra.mxu0 %v2393
      %2409 = vmatprep.subr.bf16.mxu0 0
      %2410 = vmatpush1.bf16.msra.mxu0 0
      %2411 = vmatprep.subr.bf16.mxu0 0
      %2412 = vmatpush1.bf16.msra.mxu0 0
      %2413 = vmatprep.subr.bf16.mxu0 0
      %2414 = vmatpush1.bf16.msra.mxu0 0
      %2415 = vmatprep.subr.bf16.mxu0 0
      %2416 = vmatpush1.bf16.msra.mxu0 0
      %2417 = vmatprep.subr.bf16.mxu0 0
      %2418 = vmatpush1.bf16.msra.mxu0 0
      %2419 = vmatprep.subr.bf16.mxu0 0
      %2420 = vmatpush1.bf16.msra.mxu0 0
      %2421 = vmatprep.subr.bf16.mxu0 0
      %2422 = vmatpush1.bf16.msra.mxu0 0
      %2423 = vmatprep.subr.bf16.mxu0 0
      %2424 = vmatpush1.bf16.msra.mxu0 0
      %2425 = vmatprep.subr.bf16.mxu0 0
      %2426 = vmatpush1.bf16.msra.mxu0 0
      %2427 = vmatprep.subr.bf16.mxu0 0
      %2428 = vmatpush1.bf16.msra.mxu0 0
      %2429 = vmatprep.subr.bf16.mxu0 0
      %2430 = vmatpush1.bf16.msra.mxu0 0
      %2431 = vmatprep.subr.bf16.mxu0 0
      %2432 = vmatpush1.bf16.msra.mxu0 0
      %2433 = vmatprep.mubr.bf16.mxu0 0
      %2434 = vmatmul.mubr.bf16.gmra.mrb[0].mxu0 %v2399
      %v2435 = vpop.f32.mrb[0].mxu0
      %v2436 = vadd.f32 0.0, %v2435
      %v2437 = vpop.f32.mrb[0].mxu0
      %v2438 = vpop.f32.mrb[0].mxu0
      %v2439 = vpop.f32.mrb[0].mxu0
      %2440 = vdwg.mxu0
      %v2449 = vunpack.c.l.b16 %v2355
      %v2450 = vunpack.c.l.b16 %v2356
      %v2451 = vunpack.c.l.b16 %v2357
      %v2452 = vunpack.c.l.b16 %v2358
      %v2453 = vunpack.c.l.b16 %v2359
      %v2454 = vunpack.c.l.b16 %v2360
      %v2455 = vunpack.c.l.b16 %v2361
      %v2456 = vunpack.c.l.b16 %v2362
      %v2457 = vpack.c.b16 %v2450, %v2449
      %v2458 = vpack.c.b16 %v2452, %v2451
      %v2459 = vpack.c.b16 %v2454, %v2453
      %v2460 = vpack.c.b16 %v2456, %v2455
      %v2466 = vsel %vm1656, %v2354, 0
      %2468 = vmatprep.subr.bf16.mxu0 0
      %2469 = vmatpush1.bf16.msra.mxu0 %v2457
      %2470 = vmatprep.subr.bf16.mxu0 0
      %2471 = vmatpush1.bf16.msra.mxu0 %v2458
      %2472 = vmatprep.subr.bf16.mxu0 0
      %2473 = vmatpush1.bf16.msra.mxu0 %v2459
      %2474 = vmatprep.subr.bf16.mxu0 0
      %2475 = vmatpush1.bf16.msra.mxu0 %v2460
      %2476 = vmatprep.subr.bf16.mxu0 0
      %2477 = vmatpush1.bf16.msra.mxu0 0
      %2478 = vmatprep.subr.bf16.mxu0 0
      %2479 = vmatpush1.bf16.msra.mxu0 0
      %2480 = vmatprep.subr.bf16.mxu0 0
      %2481 = vmatpush1.bf16.msra.mxu0 0
      %2482 = vmatprep.subr.bf16.mxu0 0
      %2483 = vmatpush1.bf16.msra.mxu0 0
      %2484 = vmatprep.subr.bf16.mxu0 0
      %2485 = vmatpush1.bf16.msra.mxu0 0
      %2486 = vmatprep.subr.bf16.mxu0 0
      %2487 = vmatpush1.bf16.msra.mxu0 0
      %2488 = vmatprep.subr.bf16.mxu0 0
      %2489 = vmatpush1.bf16.msra.mxu0 0
      %2490 = vmatprep.subr.bf16.mxu0 0
      %2491 = vmatpush1.bf16.msra.mxu0 0
      %2492 = vmatprep.subr.bf16.mxu0 0
      %2493 = vmatpush1.bf16.msra.mxu0 0
      %2494 = vmatprep.subr.bf16.mxu0 0
      %2495 = vmatpush1.bf16.msra.mxu0 0
      %2496 = vmatprep.subr.bf16.mxu0 0
      %2497 = vmatpush1.bf16.msra.mxu0 0
      %2498 = vmatprep.subr.bf16.mxu0 0
      %2499 = vmatpush1.bf16.msra.mxu0 0
      %2500 = vmatprep.mubr.bf16.mxu0 0
      %2501 = vmatmul.mubr.bf16.gmra.mrb[0].mxu0 %v2466
      %v2502 = vpop.f32.mrb[0].mxu0
      %v2503 = vadd.f32 %v2436, %v2502
      %v2504 = vpop.f32.mrb[0].mxu0
      %v2505 = vpop.f32.mrb[0].mxu0
      %v2506 = vpop.f32.mrb[0].mxu0
      %2507 = vdwg.mxu0
      %v2508 = vld [vmem:[#allocation3 + $0x2] sm:$0x3]
      %v2509 = vpack.c.bf16 %v2508, %v2508
      %s2510 = scalar_lea.vmem %s10, 64
      %v2511 = vld [vmem:[%s2510] sm:$0xf]
      %v2512 = vld [vmem:[%s2510 + $0x4] sm:$0xf]
      %v2513 = vld [vmem:[%s2510 + $0x8] sm:$0xf]
      %v2514 = vld [vmem:[%s2510 + $0xc] sm:$0xf]
      %v2515 = vld [vmem:[%s2510 + $0x10] sm:$0xf]
      %v2516 = vld [vmem:[%s2510 + $0x14] sm:$0xf]
      %v2517 = vld [vmem:[%s2510 + $0x18] sm:$0xf]
      %v2518 = vld [vmem:[%s2510 + $0x1c] sm:$0xf]
      %v2527 = vunpack.c.l.b16 %v2511
      %v2528 = vunpack.c.l.b16 %v2512
      %v2529 = vunpack.c.l.b16 %v2513
      %v2530 = vunpack.c.l.b16 %v2514
      %v2531 = vunpack.c.l.b16 %v2515
      %v2532 = vunpack.c.l.b16 %v2516
      %v2533 = vunpack.c.l.b16 %v2517
      %v2534 = vunpack.c.l.b16 %v2518
      %v2535 = vpack.c.b16 %v2528, %v2527
      %v2536 = vpack.c.b16 %v2530, %v2529
      %v2537 = vpack.c.b16 %v2532, %v2531
      %v2538 = vpack.c.b16 %v2534, %v2533
      %v2544 = vsel %vm1656, %v2509, 0
      %2546 = vmatprep.subr.bf16.mxu0 0
      %2547 = vmatpush1.bf16.msra.mxu0 %v2535
      %2548 = vmatprep.subr.bf16.mxu0 0
      %2549 = vmatpush1.bf16.msra.mxu0 %v2536
      %2550 = vmatprep.subr.bf16.mxu0 0
      %2551 = vmatpush1.bf16.msra.mxu0 %v2537
      %2552 = vmatprep.subr.bf16.mxu0 0
      %2553 = vmatpush1.bf16.msra.mxu0 %v2538
      %2554 = vmatprep.subr.bf16.mxu0 0
      %2555 = vmatpush1.bf16.msra.mxu0 0
      %2556 = vmatprep.subr.bf16.mxu0 0
      %2557 = vmatpush1.bf16.msra.mxu0 0
      %2558 = vmatprep.subr.bf16.mxu0 0
      %2559 = vmatpush1.bf16.msra.mxu0 0
      %2560 = vmatprep.subr.bf16.mxu0 0
      %2561 = vmatpush1.bf16.msra.mxu0 0
      %2562 = vmatprep.subr.bf16.mxu0 0
      %2563 = vmatpush1.bf16.msra.mxu0 0
      %2564 = vmatprep.subr.bf16.mxu0 0
      %2565 = vmatpush1.bf16.msra.mxu0 0
      %2566 = vmatprep.subr.bf16.mxu0 0
      %2567 = vmatpush1.bf16.msra.mxu0 0
      %2568 = vmatprep.subr.bf16.mxu0 0
      %2569 = vmatpush1.bf16.msra.mxu0 0
      %2570 = vmatprep.subr.bf16.mxu0 0
      %2571 = vmatpush1.bf16.msra.mxu0 0
      %2572 = vmatprep.subr.bf16.mxu0 0
      %2573 = vmatpush1.bf16.msra.mxu0 0
      %2574 = vmatprep.subr.bf16.mxu0 0
      %2575 = vmatpush1.bf16.msra.mxu0 0
      %2576 = vmatprep.subr.bf16.mxu0 0
      %2577 = vmatpush1.bf16.msra.mxu0 0
      %2578 = vmatprep.mubr.bf16.mxu0 0
      %2579 = vmatmul.mubr.bf16.gmra.mrb[0].mxu0 %v2544
      %v2580 = vpop.f32.mrb[0].mxu0
      %v2581 = vadd.f32 0.0, %v2580
      %v2582 = vpop.f32.mrb[0].mxu0
      %v2583 = vpop.f32.mrb[0].mxu0
      %v2584 = vpop.f32.mrb[0].mxu0
      %2585 = vdwg.mxu0
      %v2586 = vadd.f32 %v2503, %v2581
      %v2587 = vld [vmem:[%s11] sm:$0x1]
      %v2589 = vlaneseq
      %v2590 = vshrl.u32 %v2589, 7
      %v2591 = vsub.s32 0, %v2590
      %v2592 = vrot.slane %v2587, %v2591
      %v2594 = vadd.f32 %v2586, %v2592
      %v2595 = vld [vmem:[#allocation2 + $0x1] sm:$0x3]
      %v2596 = vadd.f32 %v2594, %v2595
      %2597 = vst.msk [vmem:[%s408] sm:$0x1] %vm1604, 0.0
      %2598 = vst.msk [vmem:[%s408 + $0x3] sm:$0x1] %vm1604, 0.0
      %2599 = vst.msk [vmem:[%s408 + $0x1] sm:$0x3] %vm1607, %v2596
      %p2600 = scmp.lt.s32.totalorder %s23, 1
      %s2601 = scalar_select %p2600, %s23, 1
      %s2602 = smul.addr %s2601, 4
      %s2603 = scalar_lea.vmem %s12, %s2602
      // Predicated region
      $region69: #{impala_cnn_forward.6} parent=67 // pred_check
        %p2604 = pneg %p298
      $region70: #{impala_cnn_forward.6} parent=67 // pred_check_branch
        %2606 = sbr.rel (%p2604) target = $region72
      $region71: #{impala_cnn_forward.6} parent=67 // pred_region
        _
      $region72: #{impala_cnn_forward.6} parent=67 // pred_fallthru
        _
    $region68: #{impala_cnn_forward.6} parent=5 // pred_fallthru
      _
    %p2607 = scmp.le.s32.totalorder 2, %s18
    // Predicated region
    $region73: #{impala_cnn_forward.6} parent=5 // pred_check
      %p2608 = pneg %p2607
    $region74: #{impala_cnn_forward.6} parent=5 // pred_check_branch
      %2610 = sbr.rel (%p2608) target = $region76
    $region75: #{impala_cnn_forward.6} parent=5 // pred_region
      %s2611 = ssub.s32 %s18, 2
      // Predicated region
      $region77: #{impala_cnn_forward.6} parent=75 // pred_check
        %p2612 = pneg %p304
      $region78: #{impala_cnn_forward.6} parent=75 // pred_check_branch
        %2614 = sbr.rel (%p2612) target = $region80
      $region79: #{impala_cnn_forward.6} parent=75 // pred_region
        %p2615 = scmp.lt.s32.totalorder %s24, 1
        %s2616 = scalar_select %p2615, %s24, 1
        %s2617 = smul.addr %s2616, 4
        %s2618 = scalar_lea.vmem %s12, %s2617
      $region80: #{impala_cnn_forward.6} parent=75 // pred_fallthru
        _
    $region76: #{impala_cnn_forward.6} parent=5 // pred_fallthru
      _
  $region6: #{impala_cnn_forward.6} parent=0 // loop_footer
    %s22 = sadd.s32 1, %s18
  $region7: #{impala_cnn_forward.6} parent=0 // loop_footer_branch
    %17 = sbr.rel target = $region3
  $region8: #{impala_cnn_forward.6} parent=0 // loop_exit
    _

// kernel: impala_cnn_forward.5
$region0: #{impala_cnn_forward.5}
  #allocation0 [shape = 'u32[]', space=smem, size = 0x4, offset = 0x4, fixed_abs, tag = 'smem constant byte address 0x4 - core index']
  #allocation1 [shape = 'u32[144,128]{1,0:T(1,128)}', space=vmem, size = 0x12000, scoped, tag = 'internal scratch']
  #allocation2 [shape = 'f32[6,128]{1,0:T(8,128)}', space=vmem, size = 0x1000, scoped, tag = 'scratch operand']
  #allocation3 [shape = 'f32[6,128]{1,0:T(8,128)}', space=vmem, size = 0x1000, scoped, tag = 'scratch operand']
  %s0 = inlined_call_operand.vmem [shape: f32[2,10,128], index: 0, kind: input, shape index: {}]
  %s1 = inlined_call_operand.vmem [shape: bf16[3,3,128,128], index: 1, kind: input, shape index: {}]
  %s2 = inlined_call_operand.vmem [shape: f32[1,128], index: 2, kind: input, shape index: {}]
  %s3 = inlined_call_operand.vmem [shape: f32[3,4,8], index: 3, kind: input, shape index: {}]
  %s4 = inlined_call_operand.vmem [shape: bf16[3,128,128], index: 4, kind: input, shape index: {}]
  %s5 = inlined_call_operand.vmem [shape: f32[1,128], index: 5, kind: input, shape index: {}]
  %s6 = inlined_call_operand.vmem [shape: bf16[3,128,128], index: 6, kind: input, shape index: {}]
  %s7 = inlined_call_operand.vmem [shape: f32[1,128], index: 7, kind: input, shape index: {}]
  %s8 = inlined_call_operand.vmem [shape: bf16[3,128,128], index: 8, kind: input, shape index: {}]
  %s9 = inlined_call_operand.vmem [shape: f32[1,128], index: 9, kind: input, shape index: {}]
  %s10 = inlined_call_operand.vmem [shape: bf16[3,128,128], index: 10, kind: input, shape index: {}]
  %s11 = inlined_call_operand.vmem [shape: f32[1,128], index: 11, kind: input, shape index: {}]
  %s12 = inlined_call_operand.vmem [shape: f32[2,6,128], index: 12, kind: output, shape index: {}]
  %s13 = sld [smem:[#allocation0]]
  $region81: #{impala_cnn_forward.5} parent=0
    _
  %s15 = ssub.s32 1, %s13
  %s16 = scalar_select 0, %s15, %s13
  loop: start=0, step=1, limit=4
  $region2: #{impala_cnn_forward.5} parent=0 // loop_pre_header
    _
  $region3: #{impala_cnn_forward.5} parent=0 // loop_header
    %s18 = sphi 0, %s22
    %p19 = scmp.ge.s32.totalorder %s18, 4
    %s28 = sphi 0, %s30
    %s31 = sphi 0, %s28
    %s32 = sphi 0, %s31
    %s48 = sphi 0, %s32
    %s52 = sphi 0, %s52
    %s54 = sphi 0, %s52
    %s55 = sphi 0, %s54
    %s69 = sphi 0, %s55
    %s73 = sphi 0, %s73
    %s75 = sphi 0, %s73
    %s76 = sphi 0, %s75
    %s90 = sphi 0, %s76
    %s94 = sphi 0, %s94
    %s96 = sphi 0, %s94
    %s97 = sphi 0, %s96
    %s111 = sphi 0, %s97
    %s115 = sphi 0, %s115
    %s117 = sphi 0, %s115
    %s118 = sphi 0, %s117
    %s132 = sphi 0, %s118
    %s136 = sphi 0, %s136
    %s138 = sphi 0, %s136
    %s139 = sphi 0, %s138
    %s153 = sphi 0, %s139
    %s157 = sphi 0, %s157
    %s159 = sphi 0, %s157
    %s160 = sphi 0, %s159
    %s174 = sphi 0, %s160
    %s178 = sphi 0, %s178
    %s180 = sphi 0, %s178
    %s181 = sphi 0, %s180
    %s195 = sphi 0, %s181
    %s199 = sphi 0, %s199
    %s201 = sphi 0, %s199
    %s202 = sphi 0, %s201
    %s216 = sphi 0, %s202
    %s220 = sphi 0, %s220
    %s222 = sphi 0, %s220
    %s223 = sphi 0, %s222
    %s237 = sphi 0, %s223
    %s241 = sphi 0, %s241
    %s243 = sphi 0, %s241
    %s244 = sphi 0, %s243
    %s258 = sphi 0, %s244
    %s262 = sphi 0, %s262
    %s264 = sphi 0, %s262
    %s265 = sphi 0, %s264
    %s279 = sphi 0, %s265
    %s285 = sphi 0, %s287
    %s288 = sphi 0, %s285
    %s289 = sphi 0, %s288
    %s305 = sphi 0, %s289
  $region4: #{impala_cnn_forward.5} parent=0 // loop_header_branch
    %21 = sbr.rel (%p19) target = $region8
  $region5: #{impala_cnn_forward.5} parent=0 // loop_body
    %s23 = ssub.s32 %s18, 1
    %s24 = ssub.s32 %s18, 2
    %s25 = sadd.s32 %s18, 1
    %s26 = ssub.s32 %s18, %s25
    %p27 = scmp.eq.s32.totalorder %s26, 0
    %s29 = sadd.s32 %s28, 1
    %s30 = scalar_select %p27, %s28, %s29
    %p33 = pneg %p27
    %p34 = scmp.eq.s32.totalorder %s18, 1
    %p35 = por %p33, %p34
    %p36 = scmp.ne.s32.totalorder %s28, %s31
    %p37 = scmp.eq.s32.totalorder %s18, 0
    %p38 = por %p36, %p37
    %p39 = scmp.ne.s32.totalorder %s28, %s31
    %p40 = scmp.eq.s32.totalorder %s23, 1
    %p41 = por %p39, %p40
    %p42 = scmp.ne.s32.totalorder %s31, %s32
    %p43 = scmp.eq.s32.totalorder %s23, 0
    %p44 = por %p42, %p43
    %p45 = scmp.ne.s32.totalorder %s31, %s32
    %p46 = scmp.eq.s32.totalorder %s24, 1
    %p47 = por %p45, %p46
    %p49 = scmp.ne.s32.totalorder %s32, %s48
    %p50 = scmp.eq.s32.totalorder %s24, 0
    %p51 = por %p49, %p50
    %s53 = sadd.s32 %s52, 1
    %p56 = scmp.eq.s32.totalorder %s18, 1
    %p57 = scmp.ne.s32.totalorder %s52, %s54
    %p58 = scmp.eq.s32.totalorder %s18, 0
    %p59 = por %p57, %p58
    %p60 = scmp.ne.s32.totalorder %s52, %s54
    %p61 = scmp.eq.s32.totalorder %s23, 1
    %p62 = por %p60, %p61
    %p63 = scmp.ne.s32.totalorder %s54, %s55
    %p64 = scmp.eq.s32.totalorder %s23, 0
    %p65 = por %p63, %p64
    %p66 = scmp.ne.s32.totalorder %s54, %s55
    %p67 = scmp.eq.s32.totalorder %s24, 1
    %p68 = por %p66, %p67
    %p70 = scmp.ne.s32.totalorder %s55, %s69
    %p71 = scmp.eq.s32.totalorder %s24, 0
    %p72 = por %p70, %p71
    %s74 = sadd.s32 %s73, 1
    %p77 = scmp.eq.s32.totalorder %s18, 1
    %p78 = scmp.ne.s32.totalorder %s73, %s75
    %p79 = scmp.eq.s32.totalorder %s18, 0
    %p80 = por %p78, %p79
    %p81 = scmp.ne.s32.totalorder %s73, %s75
    %p82 = scmp.eq.s32.totalorder %s23, 1
    %p83 = por %p81, %p82
    %p84 = scmp.ne.s32.totalorder %s75, %s76
    %p85 = scmp.eq.s32.totalorder %s23, 0
    %p86 = por %p84, %p85
    %p87 = scmp.ne.s32.totalorder %s75, %s76
    %p88 = scmp.eq.s32.totalorder %s24, 1
    %p89 = por %p87, %p88
    %p91 = scmp.ne.s32.totalorder %s76, %s90
    %p92 = scmp.eq.s32.totalorder %s24, 0
    %p93 = por %p91, %p92
    %s95 = sadd.s32 %s94, 1
    %p98 = scmp.eq.s32.totalorder %s18, 1
    %p99 = scmp.ne.s32.totalorder %s94, %s96
    %p100 = scmp.eq.s32.totalorder %s18, 0
    %p101 = por %p99, %p100
    %p102 = scmp.ne.s32.totalorder %s94, %s96
    %p103 = scmp.eq.s32.totalorder %s23, 1
    %p104 = por %p102, %p103
    %p105 = scmp.ne.s32.totalorder %s96, %s97
    %p106 = scmp.eq.s32.totalorder %s23, 0
    %p107 = por %p105, %p106
    %p108 = scmp.ne.s32.totalorder %s96, %s97
    %p109 = scmp.eq.s32.totalorder %s24, 1
    %p110 = por %p108, %p109
    %p112 = scmp.ne.s32.totalorder %s97, %s111
    %p113 = scmp.eq.s32.totalorder %s24, 0
    %p114 = por %p112, %p113
    %s116 = sadd.s32 %s115, 1
    %p119 = scmp.eq.s32.totalorder %s18, 1
    %p120 = scmp.ne.s32.totalorder %s115, %s117
    %p121 = scmp.eq.s32.totalorder %s18, 0
    %p122 = por %p120, %p121
    %p123 = scmp.ne.s32.totalorder %s115, %s117
    %p124 = scmp.eq.s32.totalorder %s23, 1
    %p125 = por %p123, %p124
    %p126 = scmp.ne.s32.totalorder %s117, %s118
    %p127 = scmp.eq.s32.totalorder %s23, 0
    %p128 = por %p126, %p127
    %p129 = scmp.ne.s32.totalorder %s117, %s118
    %p130 = scmp.eq.s32.totalorder %s24, 1
    %p131 = por %p129, %p130
    %p133 = scmp.ne.s32.totalorder %s118, %s132
    %p134 = scmp.eq.s32.totalorder %s24, 0
    %p135 = por %p133, %p134
    %s137 = sadd.s32 %s136, 1
    %p140 = scmp.eq.s32.totalorder %s18, 1
    %p141 = scmp.ne.s32.totalorder %s136, %s138
    %p142 = scmp.eq.s32.totalorder %s18, 0
    %p143 = por %p141, %p142
    %p144 = scmp.ne.s32.totalorder %s136, %s138
    %p145 = scmp.eq.s32.totalorder %s23, 1
    %p146 = por %p144, %p145
    %p147 = scmp.ne.s32.totalorder %s138, %s139
    %p148 = scmp.eq.s32.totalorder %s23, 0
    %p149 = por %p147, %p148
    %p150 = scmp.ne.s32.totalorder %s138, %s139
    %p151 = scmp.eq.s32.totalorder %s24, 1
    %p152 = por %p150, %p151
    %p154 = scmp.ne.s32.totalorder %s139, %s153
    %p155 = scmp.eq.s32.totalorder %s24, 0
    %p156 = por %p154, %p155
    %s158 = sadd.s32 %s157, 1
    %p161 = scmp.eq.s32.totalorder %s18, 1
    %p162 = scmp.ne.s32.totalorder %s157, %s159
    %p163 = scmp.eq.s32.totalorder %s18, 0
    %p164 = por %p162, %p163
    %p165 = scmp.ne.s32.totalorder %s157, %s159
    %p166 = scmp.eq.s32.totalorder %s23, 1
    %p167 = por %p165, %p166
    %p168 = scmp.ne.s32.totalorder %s159, %s160
    %p169 = scmp.eq.s32.totalorder %s23, 0
    %p170 = por %p168, %p169
    %p171 = scmp.ne.s32.totalorder %s159, %s160
    %p172 = scmp.eq.s32.totalorder %s24, 1
    %p173 = por %p171, %p172
    %p175 = scmp.ne.s32.totalorder %s160, %s174
    %p176 = scmp.eq.s32.totalorder %s24, 0
    %p177 = por %p175, %p176
    %s179 = sadd.s32 %s178, 1
    %p182 = scmp.eq.s32.totalorder %s18, 1
    %p183 = scmp.ne.s32.totalorder %s178, %s180
    %p184 = scmp.eq.s32.totalorder %s18, 0
    %p185 = por %p183, %p184
    %p186 = scmp.ne.s32.totalorder %s178, %s180
    %p187 = scmp.eq.s32.totalorder %s23, 1
    %p188 = por %p186, %p187
    %p189 = scmp.ne.s32.totalorder %s180, %s181
    %p190 = scmp.eq.s32.totalorder %s23, 0
    %p191 = por %p189, %p190
    %p192 = scmp.ne.s32.totalorder %s180, %s181
    %p193 = scmp.eq.s32.totalorder %s24, 1
    %p194 = por %p192, %p193
    %p196 = scmp.ne.s32.totalorder %s181, %s195
    %p197 = scmp.eq.s32.totalorder %s24, 0
    %p198 = por %p196, %p197
    %s200 = sadd.s32 %s199, 1
    %p203 = scmp.eq.s32.totalorder %s18, 1
    %p204 = scmp.ne.s32.totalorder %s199, %s201
    %p205 = scmp.eq.s32.totalorder %s18, 0
    %p206 = por %p204, %p205
    %p207 = scmp.ne.s32.totalorder %s199, %s201
    %p208 = scmp.eq.s32.totalorder %s23, 1
    %p209 = por %p207, %p208
    %p210 = scmp.ne.s32.totalorder %s201, %s202
    %p211 = scmp.eq.s32.totalorder %s23, 0
    %p212 = por %p210, %p211
    %p213 = scmp.ne.s32.totalorder %s201, %s202
    %p214 = scmp.eq.s32.totalorder %s24, 1
    %p215 = por %p213, %p214
    %p217 = scmp.ne.s32.totalorder %s202, %s216
    %p218 = scmp.eq.s32.totalorder %s24, 0
    %p219 = por %p217, %p218
    %s221 = sadd.s32 %s220, 1
    %p224 = scmp.eq.s32.totalorder %s18, 1
    %p225 = scmp.ne.s32.totalorder %s220, %s222
    %p226 = scmp.eq.s32.totalorder %s18, 0
    %p227 = por %p225, %p226
    %p228 = scmp.ne.s32.totalorder %s220, %s222
    %p229 = scmp.eq.s32.totalorder %s23, 1
    %p230 = por %p228, %p229
    %p231 = scmp.ne.s32.totalorder %s222, %s223
    %p232 = scmp.eq.s32.totalorder %s23, 0
    %p233 = por %p231, %p232
    %p234 = scmp.ne.s32.totalorder %s222, %s223
    %p235 = scmp.eq.s32.totalorder %s24, 1
    %p236 = por %p234, %p235
    %p238 = scmp.ne.s32.totalorder %s223, %s237
    %p239 = scmp.eq.s32.totalorder %s24, 0
    %p240 = por %p238, %p239
    %s242 = sadd.s32 %s241, 1
    %p245 = scmp.eq.s32.totalorder %s18, 1
    %p246 = scmp.ne.s32.totalorder %s241, %s243
    %p247 = scmp.eq.s32.totalorder %s18, 0
    %p248 = por %p246, %p247
    %p249 = scmp.ne.s32.totalorder %s241, %s243
    %p250 = scmp.eq.s32.totalorder %s23, 1
    %p251 = por %p249, %p250
    %p252 = scmp.ne.s32.totalorder %s243, %s244
    %p253 = scmp.eq.s32.totalorder %s23, 0
    %p254 = por %p252, %p253
    %p255 = scmp.ne.s32.totalorder %s243, %s244
    %p256 = scmp.eq.s32.totalorder %s24, 1
    %p257 = por %p255, %p256
    %p259 = scmp.ne.s32.totalorder %s244, %s258
    %p260 = scmp.eq.s32.totalorder %s24, 0
    %p261 = por %p259, %p260
    %s263 = sadd.s32 %s262, 1
    %p266 = scmp.eq.s32.totalorder %s18, 1
    %p267 = scmp.ne.s32.totalorder %s262, %s264
    %p268 = scmp.eq.s32.totalorder %s18, 0
    %p269 = por %p267, %p268
    %p270 = scmp.ne.s32.totalorder %s262, %s264
    %p271 = scmp.eq.s32.totalorder %s23, 1
    %p272 = por %p270, %p271
    %p273 = scmp.ne.s32.totalorder %s264, %s265
    %p274 = scmp.eq.s32.totalorder %s23, 0
    %p275 = por %p273, %p274
    %p276 = scmp.ne.s32.totalorder %s264, %s265
    %p277 = scmp.eq.s32.totalorder %s24, 1
    %p278 = por %p276, %p277
    %p280 = scmp.ne.s32.totalorder %s265, %s279
    %p281 = scmp.eq.s32.totalorder %s24, 0
    %p282 = por %p280, %p281
    %s283 = ssub.s32 %s18, %s25
    %p284 = scmp.eq.s32.totalorder %s283, 0
    %s286 = sadd.s32 %s285, 1
    %s287 = scalar_select %p284, %s285, %s286
    %p290 = pneg %p284
    %p291 = scmp.eq.s32.totalorder %s18, 1
    %p292 = por %p290, %p291
    %p293 = scmp.ne.s32.totalorder %s285, %s288
    %p294 = scmp.eq.s32.totalorder %s18, 0
    %p295 = por %p293, %p294
    %p296 = scmp.ne.s32.totalorder %s285, %s288
    %p297 = scmp.eq.s32.totalorder %s23, 1
    %p298 = por %p296, %p297
    %p299 = scmp.ne.s32.totalorder %s288, %s289
    %p300 = scmp.eq.s32.totalorder %s23, 0
    %p301 = por %p299, %p300
    %p302 = scmp.ne.s32.totalorder %s288, %s289
    %p303 = scmp.eq.s32.totalorder %s24, 1
    %p304 = por %p302, %p303
    %p306 = scmp.ne.s32.totalorder %s289, %s305
    %p307 = scmp.eq.s32.totalorder %s24, 0
    %p308 = por %p306, %p307
    %p309 = scmp.le.s32.totalorder 1, %s18
    %p310 = scmp.lt.s32.totalorder %s18, 3
    %p311 = pnand %p309, %p310
    %p312 = pneg %p311
    // Predicated region
    $region9: #{impala_cnn_forward.5} parent=5 // pred_check
      _
    $region10: #{impala_cnn_forward.5} parent=5 // pred_check_branch
      %314 = sbr.rel (%p311) target = $region12
    $region11: #{impala_cnn_forward.5} parent=5 // pred_region
      %s315 = ssub.s32 %s18, 1
      // Predicated region
      $region13: #{impala_cnn_forward.5} parent=11 // pred_check
        %p316 = pneg %p65
      $region14: #{impala_cnn_forward.5} parent=11 // pred_check_branch
        %318 = sbr.rel (%p316) target = $region16
      $region15: #{impala_cnn_forward.5} parent=11 // pred_region
        _
      $region16: #{impala_cnn_forward.5} parent=11 // pred_fallthru
        _
      // Predicated region
      $region17: #{impala_cnn_forward.5} parent=11 // pred_check
        %p319 = pneg %p86
      $region18: #{impala_cnn_forward.5} parent=11 // pred_check_branch
        %321 = sbr.rel (%p319) target = $region20
      $region19: #{impala_cnn_forward.5} parent=11 // pred_region
        _
      $region20: #{impala_cnn_forward.5} parent=11 // pred_fallthru
        _
      // Predicated region
      $region21: #{impala_cnn_forward.5} parent=11 // pred_check
        %p322 = pneg %p107
      $region22: #{impala_cnn_forward.5} parent=11 // pred_check_branch
        %324 = sbr.rel (%p322) target = $region24
      $region23: #{impala_cnn_forward.5} parent=11 // pred_region
        _
      $region24: #{impala_cnn_forward.5} parent=11 // pred_fallthru
        _
      // Predicated region
      $region25: #{impala_cnn_forward.5} parent=11 // pred_check
        %p325 = pneg %p128
      $region26: #{impala_cnn_forward.5} parent=11 // pred_check_branch
        %327 = sbr.rel (%p325) target = $region28
      $region27: #{impala_cnn_forward.5} parent=11 // pred_region
        _
      $region28: #{impala_cnn_forward.5} parent=11 // pred_fallthru
        _
      // Predicated region
      $region29: #{impala_cnn_forward.5} parent=11 // pred_check
        %p328 = pneg %p149
      $region30: #{impala_cnn_forward.5} parent=11 // pred_check_branch
        %330 = sbr.rel (%p328) target = $region32
      $region31: #{impala_cnn_forward.5} parent=11 // pred_region
        _
      $region32: #{impala_cnn_forward.5} parent=11 // pred_fallthru
        _
      // Predicated region
      $region33: #{impala_cnn_forward.5} parent=11 // pred_check
        %p331 = pneg %p170
      $region34: #{impala_cnn_forward.5} parent=11 // pred_check_branch
        %333 = sbr.rel (%p331) target = $region36
      $region35: #{impala_cnn_forward.5} parent=11 // pred_region
        _
      $region36: #{impala_cnn_forward.5} parent=11 // pred_fallthru
        _
      // Predicated region
      $region37: #{impala_cnn_forward.5} parent=11 // pred_check
        %p334 = pneg %p191
      $region38: #{impala_cnn_forward.5} parent=11 // pred_check_branch
        %336 = sbr.rel (%p334) target = $region40
      $region39: #{impala_cnn_forward.5} parent=11 // pred_region
        _
      $region40: #{impala_cnn_forward.5} parent=11 // pred_fallthru
        _
      // Predicated region
      $region41: #{impala_cnn_forward.5} parent=11 // pred_check
        %p337 = pneg %p212
      $region42: #{impala_cnn_forward.5} parent=11 // pred_check_branch
        %339 = sbr.rel (%p337) target = $region44
      $region43: #{impala_cnn_forward.5} parent=11 // pred_region
        _
      $region44: #{impala_cnn_forward.5} parent=11 // pred_fallthru
        _
      // Predicated region
      $region45: #{impala_cnn_forward.5} parent=11 // pred_check
        %p340 = pneg %p233
      $region46: #{impala_cnn_forward.5} parent=11 // pred_check_branch
        %342 = sbr.rel (%p340) target = $region48
      $region47: #{impala_cnn_forward.5} parent=11 // pred_region
        _
      $region48: #{impala_cnn_forward.5} parent=11 // pred_fallthru
        _
      // Predicated region
      $region49: #{impala_cnn_forward.5} parent=11 // pred_check
        %p343 = pneg %p254
      $region50: #{impala_cnn_forward.5} parent=11 // pred_check_branch
        %345 = sbr.rel (%p343) target = $region52
      $region51: #{impala_cnn_forward.5} parent=11 // pred_region
        _
      $region52: #{impala_cnn_forward.5} parent=11 // pred_fallthru
        _
      // Predicated region
      $region53: #{impala_cnn_forward.5} parent=11 // pred_check
        %p346 = pneg %p275
      $region54: #{impala_cnn_forward.5} parent=11 // pred_check_branch
        %348 = sbr.rel (%p346) target = $region56
      $region55: #{impala_cnn_forward.5} parent=11 // pred_region
        _
      $region56: #{impala_cnn_forward.5} parent=11 // pred_fallthru
        _
    $region12: #{impala_cnn_forward.5} parent=5 // pred_fallthru
      _
    %p349 = scmp.lt.s32.totalorder %s18, 2
    // Predicated region
    $region57: #{impala_cnn_forward.5} parent=5 // pred_check
      %p350 = pneg %p349
    $region58: #{impala_cnn_forward.5} parent=5 // pred_check_branch
      %352 = sbr.rel (%p350) target = $region60
    $region59: #{impala_cnn_forward.5} parent=5 // pred_region
      // Predicated region
      $region61: #{impala_cnn_forward.5} parent=59 // pred_check
        %p353 = pneg %p38
      $region62: #{impala_cnn_forward.5} parent=59 // pred_check_branch
        %355 = sbr.rel (%p353) target = $region64
      $region63: #{impala_cnn_forward.5} parent=59 // pred_region
        %p356 = scmp.lt.s32.totalorder %s18, 1
        %s357 = scalar_select %p356, %s18, 1
        %s358 = smul.addr %s357, 2
        %s359 = smul.addr %s358, 8
        %s360 = scalar_lea.vmem %s0, %s359
      $region64: #{impala_cnn_forward.5} parent=59 // pred_fallthru
        _
    $region60: #{impala_cnn_forward.5} parent=5 // pred_fallthru
      _
    %p361 = scmp.le.s32.totalorder 1, %s18
    %p362 = scmp.lt.s32.totalorder %s18, 3
    %p363 = pnand %p361, %p362
    %p364 = pneg %p363
    // Predicated region
    $region65: #{impala_cnn_forward.5} parent=5 // pred_check
      _
    $region66: #{impala_cnn_forward.5} parent=5 // pred_check_branch
      %366 = sbr.rel (%p363) target = $region68
    $region67: #{impala_cnn_forward.5} parent=5 // pred_region
      %s367 = ssub.s32 %s18, 1
      %p368 = scmp.lt.s32.totalorder %s23, 1
      %s369 = scalar_select %p368, %s23, 1
      %s370 = smul.addr %s369, 2
      %s371 = smul.addr %s370, 8
      %s372 = scalar_lea.vmem %s0, %s371
      %p373 = pneg %p44
      %p374 = pneg %p41
      %p375 = pneg %p65
      %p376 = pneg %p62
      %p377 = pneg %p86
      %p378 = pneg %p83
      %p379 = pneg %p107
      %p380 = pneg %p104
      %p381 = pneg %p128
      %p382 = pneg %p125
      %p383 = pneg %p149
      %p384 = pneg %p146
      %p385 = pneg %p170
      %p386 = pneg %p167
      %p387 = pneg %p191
      %p388 = pneg %p188
      %p389 = pneg %p212
      %p390 = pneg %p209
      %p391 = pneg %p233
      %p392 = pneg %p230
      %p393 = pneg %p254
      %p394 = pneg %p251
      %p395 = pneg %p275
      %p396 = pneg %p272
      %p397 = pneg %p301
      %p398 = pneg %p298
      %p399 = scmp.lt.s32.totalorder %s23, 1
      %s400 = scalar_select %p399, %s23, 1
      %s401 = smul.addr %s400, 8
      %s402 = scalar_lea.vmem %s12, %s401
      %p403 = scmp.lt.s32.totalorder %s23, 1
      %s404 = scalar_select %p403, %s23, 1
      %s405 = smul.addr %s404, 2
      %s406 = smul.addr %s405, 8
      %s407 = scalar_lea.vmem %s0, %s406
      %p408 = scmp.lt.s32.totalorder %s23, 1
      %s409 = scalar_select %p408, %s23, 1
      %s410 = smul.addr %s409, 8
      %s411 = scalar_lea.vmem %s12, %s410
      %v413 = vld [vmem:[%s407] sm:$0xff]
      %v414 = vpack.c.bf16 %v413, %v413
      %v415 = vld [vmem:[%s1] sm:$0xf]
      %v416 = vld [vmem:[%s1 + $0x4] sm:$0xf]
      %v417 = vld [vmem:[%s1 + $0x8] sm:$0xf]
      %v418 = vld [vmem:[%s1 + $0xc] sm:$0xf]
      %v419 = vld [vmem:[%s1 + $0x10] sm:$0xf]
      %v420 = vld [vmem:[%s1 + $0x14] sm:$0xf]
      %v421 = vld [vmem:[%s1 + $0x18] sm:$0xf]
      %v422 = vld [vmem:[%s1 + $0x1c] sm:$0xf]
      %v423 = vld [vmem:[%s1 + $0x20] sm:$0xf]
      %v424 = vld [vmem:[%s1 + $0x24] sm:$0xf]
      %v425 = vld [vmem:[%s1 + $0x28] sm:$0xf]
      %v426 = vld [vmem:[%s1 + $0x2c] sm:$0xf]
      %v427 = vld [vmem:[%s1 + $0x30] sm:$0xf]
      %v428 = vld [vmem:[%s1 + $0x34] sm:$0xf]
      %v429 = vld [vmem:[%s1 + $0x38] sm:$0xf]
      %v430 = vld [vmem:[%s1 + $0x3c] sm:$0xf]
      %v431 = vld [vmem:[%s407 + $0x1] sm:$0xff]
      %v432 = vpack.c.bf16 %v431, %v431
      %s433 = scalar_lea.vmem %s1, 64
      %v434 = vld [vmem:[%s433] sm:$0xf]
      %v435 = vld [vmem:[%s433 + $0x4] sm:$0xf]
      %v436 = vld [vmem:[%s433 + $0x8] sm:$0xf]
      %v437 = vld [vmem:[%s433 + $0xc] sm:$0xf]
      %v438 = vld [vmem:[%s433 + $0x10] sm:$0xf]
      %v439 = vld [vmem:[%s433 + $0x14] sm:$0xf]
      %v440 = vld [vmem:[%s433 + $0x18] sm:$0xf]
      %v441 = vld [vmem:[%s433 + $0x1c] sm:$0xf]
      %v442 = vld [vmem:[%s433 + $0x20] sm:$0xf]
      %v443 = vld [vmem:[%s433 + $0x24] sm:$0xf]
      %v444 = vld [vmem:[%s433 + $0x28] sm:$0xf]
      %v445 = vld [vmem:[%s433 + $0x2c] sm:$0xf]
      %v446 = vld [vmem:[%s433 + $0x30] sm:$0xf]
      %v447 = vld [vmem:[%s433 + $0x34] sm:$0xf]
      %v448 = vld [vmem:[%s433 + $0x38] sm:$0xf]
      %v449 = vld [vmem:[%s433 + $0x3c] sm:$0xf]
      %v466 = vunpack.c.l.b16 %v434
      %v467 = vunpack.c.l.b16 %v435
      %v468 = vunpack.c.l.b16 %v436
      %v469 = vunpack.c.l.b16 %v437
      %v470 = vunpack.c.l.b16 %v438
      %v471 = vunpack.c.l.b16 %v439
      %v472 = vunpack.c.l.b16 %v440
      %v473 = vunpack.c.l.b16 %v441
      %v474 = vunpack.c.l.b16 %v442
      %v475 = vunpack.c.l.b16 %v443
      %v476 = vunpack.c.l.b16 %v444
      %v477 = vunpack.c.l.b16 %v445
      %v478 = vunpack.c.l.b16 %v446
      %v479 = vunpack.c.l.b16 %v447
      %v480 = vunpack.c.l.b16 %v448
      %v481 = vunpack.c.l.b16 %v449
      %v482 = vpack.c.b16 %v467, %v466
      %v483 = vpack.c.b16 %v469, %v468
      %v484 = vpack.c.b16 %v471, %v470
      %v485 = vpack.c.b16 %v473, %v472
      %v486 = vpack.c.b16 %v475, %v474
      %v487 = vpack.c.b16 %v477, %v476
      %v488 = vpack.c.b16 %v479, %v478
      %v489 = vpack.c.b16 %v481, %v480
      %498 = vmatprep.subr.bf16.mxu0 0
      %499 = vmatpush1.bf16.msra.mxu0 %v482
      %500 = vmatprep.subr.bf16.mxu0 0
      %501 = vmatpush1.bf16.msra.mxu0 %v483
      %502 = vmatprep.subr.bf16.mxu0 0
      %503 = vmatpush1.bf16.msra.mxu0 %v484
      %504 = vmatprep.subr.bf16.mxu0 0
      %505 = vmatpush1.bf16.msra.mxu0 %v485
      %506 = vmatprep.subr.bf16.mxu0 0
      %507 = vmatpush1.bf16.msra.mxu0 %v486
      %508 = vmatprep.subr.bf16.mxu0 0
      %509 = vmatpush1.bf16.msra.mxu0 %v487
      %510 = vmatprep.subr.bf16.mxu0 0
      %511 = vmatpush1.bf16.msra.mxu0 %v488
      %512 = vmatprep.subr.bf16.mxu0 0
      %513 = vmatpush1.bf16.msra.mxu0 %v489
      %514 = vmatprep.subr.bf16.mxu0 0
      %515 = vmatpush1.bf16.msra.mxu0 0
      %516 = vmatprep.subr.bf16.mxu0 0
      %517 = vmatpush1.bf16.msra.mxu0 0
      %518 = vmatprep.subr.bf16.mxu0 0
      %519 = vmatpush1.bf16.msra.mxu0 0
      %520 = vmatprep.subr.bf16.mxu0 0
      %521 = vmatpush1.bf16.msra.mxu0 0
      %522 = vmatprep.subr.bf16.mxu0 0
      %523 = vmatpush1.bf16.msra.mxu0 0
      %524 = vmatprep.subr.bf16.mxu0 0
      %525 = vmatpush1.bf16.msra.mxu0 0
      %526 = vmatprep.subr.bf16.mxu0 0
      %527 = vmatpush1.bf16.msra.mxu0 0
      %528 = vmatprep.subr.bf16.mxu0 0
      %529 = vmatpush1.bf16.msra.mxu0 0
      %530 = vmatprep.mubr.bf16.mxu0 0
      %531 = vmatmul.mubr.bf16.gmra.mrb[0].mxu0 %v432
      %v532 = vpop.f32.mrb[0].mxu0
      %v533 = vadd.f32 0.0, %v532
      %v534 = vpop.f32.mrb[0].mxu0
      %v535 = vpop.f32.mrb[0].mxu0
      %v536 = vpop.f32.mrb[0].mxu0
      %537 = vdwg.mxu0
      %v554 = vunpack.c.l.b16 %v415
      %v555 = vunpack.c.l.b16 %v416
      %v556 = vunpack.c.l.b16 %v417
      %v557 = vunpack.c.l.b16 %v418
      %v558 = vunpack.c.l.b16 %v419
      %v559 = vunpack.c.l.b16 %v420
      %v560 = vunpack.c.l.b16 %v421
      %v561 = vunpack.c.l.b16 %v422
      %v562 = vunpack.c.l.b16 %v423
      %v563 = vunpack.c.l.b16 %v424
      %v564 = vunpack.c.l.b16 %v425
      %v565 = vunpack.c.l.b16 %v426
      %v566 = vunpack.c.l.b16 %v427
      %v567 = vunpack.c.l.b16 %v428
      %v568 = vunpack.c.l.b16 %v429
      %v569 = vunpack.c.l.b16 %v430
      %v570 = vpack.c.b16 %v555, %v554
      %v571 = vpack.c.b16 %v557, %v556
      %v572 = vpack.c.b16 %v559, %v558
      %v573 = vpack.c.b16 %v561, %v560
      %v574 = vpack.c.b16 %v563, %v562
      %v575 = vpack.c.b16 %v565, %v564
      %v576 = vpack.c.b16 %v567, %v566
      %v577 = vpack.c.b16 %v569, %v568
      %586 = vmatprep.subr.bf16.mxu0 0
      %587 = vmatpush1.bf16.msra.mxu0 %v570
      %588 = vmatprep.subr.bf16.mxu0 0
      %589 = vmatpush1.bf16.msra.mxu0 %v571
      %590 = vmatprep.subr.bf16.mxu0 0
      %591 = vmatpush1.bf16.msra.mxu0 %v572
      %592 = vmatprep.subr.bf16.mxu0 0
      %593 = vmatpush1.bf16.msra.mxu0 %v573
      %594 = vmatprep.subr.bf16.mxu0 0
      %595 = vmatpush1.bf16.msra.mxu0 %v574
      %596 = vmatprep.subr.bf16.mxu0 0
      %597 = vmatpush1.bf16.msra.mxu0 %v575
      %598 = vmatprep.subr.bf16.mxu0 0
      %599 = vmatpush1.bf16.msra.mxu0 %v576
      %600 = vmatprep.subr.bf16.mxu0 0
      %601 = vmatpush1.bf16.msra.mxu0 %v577
      %602 = vmatprep.subr.bf16.mxu0 0
      %603 = vmatpush1.bf16.msra.mxu0 0
      %604 = vmatprep.subr.bf16.mxu0 0
      %605 = vmatpush1.bf16.msra.mxu0 0
      %606 = vmatprep.subr.bf16.mxu0 0
      %607 = vmatpush1.bf16.msra.mxu0 0
      %608 = vmatprep.subr.bf16.mxu0 0
      %609 = vmatpush1.bf16.msra.mxu0 0
      %610 = vmatprep.subr.bf16.mxu0 0
      %611 = vmatpush1.bf16.msra.mxu0 0
      %612 = vmatprep.subr.bf16.mxu0 0
      %613 = vmatpush1.bf16.msra.mxu0 0
      %614 = vmatprep.subr.bf16.mxu0 0
      %615 = vmatpush1.bf16.msra.mxu0 0
      %616 = vmatprep.subr.bf16.mxu0 0
      %617 = vmatpush1.bf16.msra.mxu0 0
      %618 = vmatprep.mubr.bf16.mxu0 0
      %619 = vmatmul.mubr.bf16.gmra.mrb[0].mxu0 %v414
      %v620 = vpop.f32.mrb[0].mxu0
      %v621 = vadd.f32 %v533, %v620
      %v622 = vpop.f32.mrb[0].mxu0
      %v623 = vpop.f32.mrb[0].mxu0
      %v624 = vpop.f32.mrb[0].mxu0
      %625 = vdwg.mxu0
      %v626 = vld [vmem:[%s407 + $0x2] sm:$0xff]
      %v627 = vpack.c.bf16 %v626, %v626
      %s628 = scalar_lea.vmem %s1, 128
      %v629 = vld [vmem:[%s628] sm:$0xf]
      %v630 = vld [vmem:[%s628 + $0x4] sm:$0xf]
      %v631 = vld [vmem:[%s628 + $0x8] sm:$0xf]
      %v632 = vld [vmem:[%s628 + $0xc] sm:$0xf]
      %v633 = vld [vmem:[%s628 + $0x10] sm:$0xf]
      %v634 = vld [vmem:[%s628 + $0x14] sm:$0xf]
      %v635 = vld [vmem:[%s628 + $0x18] sm:$0xf]
      %v636 = vld [vmem:[%s628 + $0x1c] sm:$0xf]
      %v637 = vld [vmem:[%s628 + $0x20] sm:$0xf]
      %v638 = vld [vmem:[%s628 + $0x24] sm:$0xf]
      %v639 = vld [vmem:[%s628 + $0x28] sm:$0xf]
      %v640 = vld [vmem:[%s628 + $0x2c] sm:$0xf]
      %v641 = vld [vmem:[%s628 + $0x30] sm:$0xf]
      %v642 = vld [vmem:[%s628 + $0x34] sm:$0xf]
      %v643 = vld [vmem:[%s628 + $0x38] sm:$0xf]
      %v644 = vld [vmem:[%s628 + $0x3c] sm:$0xf]
      %v661 = vunpack.c.l.b16 %v629
      %v662 = vunpack.c.l.b16 %v630
      %v663 = vunpack.c.l.b16 %v631
      %v664 = vunpack.c.l.b16 %v632
      %v665 = vunpack.c.l.b16 %v633
      %v666 = vunpack.c.l.b16 %v634
      %v667 = vunpack.c.l.b16 %v635
      %v668 = vunpack.c.l.b16 %v636
      %v669 = vunpack.c.l.b16 %v637
      %v670 = vunpack.c.l.b16 %v638
      %v671 = vunpack.c.l.b16 %v639
      %v672 = vunpack.c.l.b16 %v640
      %v673 = vunpack.c.l.b16 %v641
      %v674 = vunpack.c.l.b16 %v642
      %v675 = vunpack.c.l.b16 %v643
      %v676 = vunpack.c.l.b16 %v644
      %v677 = vpack.c.b16 %v662, %v661
      %v678 = vpack.c.b16 %v664, %v663
      %v679 = vpack.c.b16 %v666, %v665
      %v680 = vpack.c.b16 %v668, %v667
      %v681 = vpack.c.b16 %v670, %v669
      %v682 = vpack.c.b16 %v672, %v671
      %v683 = vpack.c.b16 %v674, %v673
      %v684 = vpack.c.b16 %v676, %v675
      %693 = vmatprep.subr.bf16.mxu0 0
      %694 = vmatpush1.bf16.msra.mxu0 %v677
      %695 = vmatprep.subr.bf16.mxu0 0
      %696 = vmatpush1.bf16.msra.mxu0 %v678
      %697 = vmatprep.subr.bf16.mxu0 0
      %698 = vmatpush1.bf16.msra.mxu0 %v679
      %699 = vmatprep.subr.bf16.mxu0 0
      %700 = vmatpush1.bf16.msra.mxu0 %v680
      %701 = vmatprep.subr.bf16.mxu0 0
      %702 = vmatpush1.bf16.msra.mxu0 %v681
      %703 = vmatprep.subr.bf16.mxu0 0
      %704 = vmatpush1.bf16.msra.mxu0 %v682
      %705 = vmatprep.subr.bf16.mxu0 0
      %706 = vmatpush1.bf16.msra.mxu0 %v683
      %707 = vmatprep.subr.bf16.mxu0 0
      %708 = vmatpush1.bf16.msra.mxu0 %v684
      %709 = vmatprep.subr.bf16.mxu0 0
      %710 = vmatpush1.bf16.msra.mxu0 0
      %711 = vmatprep.subr.bf16.mxu0 0
      %712 = vmatpush1.bf16.msra.mxu0 0
      %713 = vmatprep.subr.bf16.mxu0 0
      %714 = vmatpush1.bf16.msra.mxu0 0
      %715 = vmatprep.subr.bf16.mxu0 0
      %716 = vmatpush1.bf16.msra.mxu0 0
      %717 = vmatprep.subr.bf16.mxu0 0
      %718 = vmatpush1.bf16.msra.mxu0 0
      %719 = vmatprep.subr.bf16.mxu0 0
      %720 = vmatpush1.bf16.msra.mxu0 0
      %721 = vmatprep.subr.bf16.mxu0 0
      %722 = vmatpush1.bf16.msra.mxu0 0
      %723 = vmatprep.subr.bf16.mxu0 0
      %724 = vmatpush1.bf16.msra.mxu0 0
      %725 = vmatprep.mubr.bf16.mxu0 0
      %726 = vmatmul.mubr.bf16.gmra.mrb[0].mxu0 %v627
      %v727 = vpop.f32.mrb[0].mxu0
      %v728 = vadd.f32 0.0, %v727
      %v729 = vpop.f32.mrb[0].mxu0
      %v730 = vpop.f32.mrb[0].mxu0
      %v731 = vpop.f32.mrb[0].mxu0
      %732 = vdwg.mxu0
      %v733 = vadd.f32 %v621, %v728
      %s734 = scalar_lea.vmem %s1, 192
      %v735 = vld [vmem:[%s734] sm:$0xf]
      %v736 = vld [vmem:[%s734 + $0x4] sm:$0xf]
      %v737 = vld [vmem:[%s734 + $0x8] sm:$0xf]
      %v738 = vld [vmem:[%s734 + $0xc] sm:$0xf]
      %v739 = vld [vmem:[%s734 + $0x10] sm:$0xf]
      %v740 = vld [vmem:[%s734 + $0x14] sm:$0xf]
      %v741 = vld [vmem:[%s734 + $0x18] sm:$0xf]
      %v742 = vld [vmem:[%s734 + $0x1c] sm:$0xf]
      %v743 = vld [vmem:[%s734 + $0x20] sm:$0xf]
      %v744 = vld [vmem:[%s734 + $0x24] sm:$0xf]
      %v745 = vld [vmem:[%s734 + $0x28] sm:$0xf]
      %v746 = vld [vmem:[%s734 + $0x2c] sm:$0xf]
      %v747 = vld [vmem:[%s734 + $0x30] sm:$0xf]
      %v748 = vld [vmem:[%s734 + $0x34] sm:$0xf]
      %v749 = vld [vmem:[%s734 + $0x38] sm:$0xf]
      %v750 = vld [vmem:[%s734 + $0x3c] sm:$0xf]
      %s751 = scalar_lea.vmem %s1, 256
      %v752 = vld [vmem:[%s751] sm:$0xf]
      %v753 = vld [vmem:[%s751 + $0x4] sm:$0xf]
      %v754 = vld [vmem:[%s751 + $0x8] sm:$0xf]
      %v755 = vld [vmem:[%s751 + $0xc] sm:$0xf]
      %v756 = vld [vmem:[%s751 + $0x10] sm:$0xf]
      %v757 = vld [vmem:[%s751 + $0x14] sm:$0xf]
      %v758 = vld [vmem:[%s751 + $0x18] sm:$0xf]
      %v759 = vld [vmem:[%s751 + $0x1c] sm:$0xf]
      %v760 = vld [vmem:[%s751 + $0x20] sm:$0xf]
      %v761 = vld [vmem:[%s751 + $0x24] sm:$0xf]
      %v762 = vld [vmem:[%s751 + $0x28] sm:$0xf]
      %v763 = vld [vmem:[%s751 + $0x2c] sm:$0xf]
      %v764 = vld [vmem:[%s751 + $0x30] sm:$0xf]
      %v765 = vld [vmem:[%s751 + $0x34] sm:$0xf]
      %v766 = vld [vmem:[%s751 + $0x38] sm:$0xf]
      %v767 = vld [vmem:[%s751 + $0x3c] sm:$0xf]
      %v784 = vunpack.c.l.b16 %v752
      %v785 = vunpack.c.l.b16 %v753
      %v786 = vunpack.c.l.b16 %v754
      %v787 = vunpack.c.l.b16 %v755
      %v788 = vunpack.c.l.b16 %v756
      %v789 = vunpack.c.l.b16 %v757
      %v790 = vunpack.c.l.b16 %v758
      %v791 = vunpack.c.l.b16 %v759
      %v792 = vunpack.c.l.b16 %v760
      %v793 = vunpack.c.l.b16 %v761
      %v794 = vunpack.c.l.b16 %v762
      %v795 = vunpack.c.l.b16 %v763
      %v796 = vunpack.c.l.b16 %v764
      %v797 = vunpack.c.l.b16 %v765
      %v798 = vunpack.c.l.b16 %v766
      %v799 = vunpack.c.l.b16 %v767
      %v800 = vpack.c.b16 %v785, %v784
      %v801 = vpack.c.b16 %v787, %v786
      %v802 = vpack.c.b16 %v789, %v788
      %v803 = vpack.c.b16 %v791, %v790
      %v804 = vpack.c.b16 %v793, %v792
      %v805 = vpack.c.b16 %v795, %v794
      %v806 = vpack.c.b16 %v797, %v796
      %v807 = vpack.c.b16 %v799, %v798
      %816 = vmatprep.subr.bf16.mxu0 0
      %817 = vmatpush1.bf16.msra.mxu0 %v800
      %818 = vmatprep.subr.bf16.mxu0 0
      %819 = vmatpush1.bf16.msra.mxu0 %v801
      %820 = vmatprep.subr.bf16.mxu0 0
      %821 = vmatpush1.bf16.msra.mxu0 %v802
      %822 = vmatprep.subr.bf16.mxu0 0
      %823 = vmatpush1.bf16.msra.mxu0 %v803
      %824 = vmatprep.subr.bf16.mxu0 0
      %825 = vmatpush1.bf16.msra.mxu0 %v804
      %826 = vmatprep.subr.bf16.mxu0 0
      %827 = vmatpush1.bf16.msra.mxu0 %v805
      %828 = vmatprep.subr.bf16.mxu0 0
      %829 = vmatpush1.bf16.msra.mxu0 %v806
      %830 = vmatprep.subr.bf16.mxu0 0
      %831 = vmatpush1.bf16.msra.mxu0 %v807
      %832 = vmatprep.subr.bf16.mxu0 0
      %833 = vmatpush1.bf16.msra.mxu0 0
      %834 = vmatprep.subr.bf16.mxu0 0
      %835 = vmatpush1.bf16.msra.mxu0 0
      %836 = vmatprep.subr.bf16.mxu0 0
      %837 = vmatpush1.bf16.msra.mxu0 0
      %838 = vmatprep.subr.bf16.mxu0 0
      %839 = vmatpush1.bf16.msra.mxu0 0
      %840 = vmatprep.subr.bf16.mxu0 0
      %841 = vmatpush1.bf16.msra.mxu0 0
      %842 = vmatprep.subr.bf16.mxu0 0
      %843 = vmatpush1.bf16.msra.mxu0 0
      %844 = vmatprep.subr.bf16.mxu0 0
      %845 = vmatpush1.bf16.msra.mxu0 0
      %846 = vmatprep.subr.bf16.mxu0 0
      %847 = vmatpush1.bf16.msra.mxu0 0
      %848 = vmatprep.mubr.bf16.mxu0 0
      %849 = vmatmul.mubr.bf16.gmra.mrb[0].mxu0 %v432
      %v850 = vpop.f32.mrb[0].mxu0
      %v851 = vadd.f32 0.0, %v850
      %v852 = vpop.f32.mrb[0].mxu0
      %v853 = vpop.f32.mrb[0].mxu0
      %v854 = vpop.f32.mrb[0].mxu0
      %855 = vdwg.mxu0
      %v872 = vunpack.c.l.b16 %v735
      %v873 = vunpack.c.l.b16 %v736
      %v874 = vunpack.c.l.b16 %v737
      %v875 = vunpack.c.l.b16 %v738
      %v876 = vunpack.c.l.b16 %v739
      %v877 = vunpack.c.l.b16 %v740
      %v878 = vunpack.c.l.b16 %v741
      %v879 = vunpack.c.l.b16 %v742
      %v880 = vunpack.c.l.b16 %v743
      %v881 = vunpack.c.l.b16 %v744
      %v882 = vunpack.c.l.b16 %v745
      %v883 = vunpack.c.l.b16 %v746
      %v884 = vunpack.c.l.b16 %v747
      %v885 = vunpack.c.l.b16 %v748
      %v886 = vunpack.c.l.b16 %v749
      %v887 = vunpack.c.l.b16 %v750
      %v888 = vpack.c.b16 %v873, %v872
      %v889 = vpack.c.b16 %v875, %v874
      %v890 = vpack.c.b16 %v877, %v876
      %v891 = vpack.c.b16 %v879, %v878
      %v892 = vpack.c.b16 %v881, %v880
      %v893 = vpack.c.b16 %v883, %v882
      %v894 = vpack.c.b16 %v885, %v884
      %v895 = vpack.c.b16 %v887, %v886
      %904 = vmatprep.subr.bf16.mxu0 0
      %905 = vmatpush1.bf16.msra.mxu0 %v888
      %906 = vmatprep.subr.bf16.mxu0 0
      %907 = vmatpush1.bf16.msra.mxu0 %v889
      %908 = vmatprep.subr.bf16.mxu0 0
      %909 = vmatpush1.bf16.msra.mxu0 %v890
      %910 = vmatprep.subr.bf16.mxu0 0
      %911 = vmatpush1.bf16.msra.mxu0 %v891
      %912 = vmatprep.subr.bf16.mxu0 0
      %913 = vmatpush1.bf16.msra.mxu0 %v892
      %914 = vmatprep.subr.bf16.mxu0 0
      %915 = vmatpush1.bf16.msra.mxu0 %v893
      %916 = vmatprep.subr.bf16.mxu0 0
      %917 = vmatpush1.bf16.msra.mxu0 %v894
      %918 = vmatprep.subr.bf16.mxu0 0
      %919 = vmatpush1.bf16.msra.mxu0 %v895
      %920 = vmatprep.subr.bf16.mxu0 0
      %921 = vmatpush1.bf16.msra.mxu0 0
      %922 = vmatprep.subr.bf16.mxu0 0
      %923 = vmatpush1.bf16.msra.mxu0 0
      %924 = vmatprep.subr.bf16.mxu0 0
      %925 = vmatpush1.bf16.msra.mxu0 0
      %926 = vmatprep.subr.bf16.mxu0 0
      %927 = vmatpush1.bf16.msra.mxu0 0
      %928 = vmatprep.subr.bf16.mxu0 0
      %929 = vmatpush1.bf16.msra.mxu0 0
      %930 = vmatprep.subr.bf16.mxu0 0
      %931 = vmatpush1.bf16.msra.mxu0 0
      %932 = vmatprep.subr.bf16.mxu0 0
      %933 = vmatpush1.bf16.msra.mxu0 0
      %934 = vmatprep.subr.bf16.mxu0 0
      %935 = vmatpush1.bf16.msra.mxu0 0
      %936 = vmatprep.mubr.bf16.mxu0 0
      %937 = vmatmul.mubr.bf16.gmra.mrb[0].mxu0 %v414
      %v938 = vpop.f32.mrb[0].mxu0
      %v939 = vadd.f32 %v851, %v938
      %v940 = vpop.f32.mrb[0].mxu0
      %v941 = vpop.f32.mrb[0].mxu0
      %v942 = vpop.f32.mrb[0].mxu0
      %943 = vdwg.mxu0
      %s944 = scalar_lea.vmem %s1, 320
      %v945 = vld [vmem:[%s944] sm:$0xf]
      %v946 = vld [vmem:[%s944 + $0x4] sm:$0xf]
      %v947 = vld [vmem:[%s944 + $0x8] sm:$0xf]
      %v948 = vld [vmem:[%s944 + $0xc] sm:$0xf]
      %v949 = vld [vmem:[%s944 + $0x10] sm:$0xf]
      %v950 = vld [vmem:[%s944 + $0x14] sm:$0xf]
      %v951 = vld [vmem:[%s944 + $0x18] sm:$0xf]
      %v952 = vld [vmem:[%s944 + $0x1c] sm:$0xf]
      %v953 = vld [vmem:[%s944 + $0x20] sm:$0xf]
      %v954 = vld [vmem:[%s944 + $0x24] sm:$0xf]
      %v955 = vld [vmem:[%s944 + $0x28] sm:$0xf]
      %v956 = vld [vmem:[%s944 + $0x2c] sm:$0xf]
      %v957 = vld [vmem:[%s944 + $0x30] sm:$0xf]
      %v958 = vld [vmem:[%s944 + $0x34] sm:$0xf]
      %v959 = vld [vmem:[%s944 + $0x38] sm:$0xf]
      %v960 = vld [vmem:[%s944 + $0x3c] sm:$0xf]
      %v977 = vunpack.c.l.b16 %v945
      %v978 = vunpack.c.l.b16 %v946
      %v979 = vunpack.c.l.b16 %v947
      %v980 = vunpack.c.l.b16 %v948
      %v981 = vunpack.c.l.b16 %v949
      %v982 = vunpack.c.l.b16 %v950
      %v983 = vunpack.c.l.b16 %v951
      %v984 = vunpack.c.l.b16 %v952
      %v985 = vunpack.c.l.b16 %v953
      %v986 = vunpack.c.l.b16 %v954
      %v987 = vunpack.c.l.b16 %v955
      %v988 = vunpack.c.l.b16 %v956
      %v989 = vunpack.c.l.b16 %v957
      %v990 = vunpack.c.l.b16 %v958
      %v991 = vunpack.c.l.b16 %v959
      %v992 = vunpack.c.l.b16 %v960
      %v993 = vpack.c.b16 %v978, %v977
      %v994 = vpack.c.b16 %v980, %v979
      %v995 = vpack.c.b16 %v982, %v981
      %v996 = vpack.c.b16 %v984, %v983
      %v997 = vpack.c.b16 %v986, %v985
      %v998 = vpack.c.b16 %v988, %v987
      %v999 = vpack.c.b16 %v990, %v989
      %v1000 = vpack.c.b16 %v992, %v991
      %1009 = vmatprep.subr.bf16.mxu0 0
      %1010 = vmatpush1.bf16.msra.mxu0 %v993
      %1011 = vmatprep.subr.bf16.mxu0 0
      %1012 = vmatpush1.bf16.msra.mxu0 %v994
      %1013 = vmatprep.subr.bf16.mxu0 0
      %1014 = vmatpush1.bf16.msra.mxu0 %v995
      %1015 = vmatprep.subr.bf16.mxu0 0
      %1016 = vmatpush1.bf16.msra.mxu0 %v996
      %1017 = vmatprep.subr.bf16.mxu0 0
      %1018 = vmatpush1.bf16.msra.mxu0 %v997
      %1019 = vmatprep.subr.bf16.mxu0 0
      %1020 = vmatpush1.bf16.msra.mxu0 %v998
      %1021 = vmatprep.subr.bf16.mxu0 0
      %1022 = vmatpush1.bf16.msra.mxu0 %v999
      %1023 = vmatprep.subr.bf16.mxu0 0
      %1024 = vmatpush1.bf16.msra.mxu0 %v1000
      %1025 = vmatprep.subr.bf16.mxu0 0
      %1026 = vmatpush1.bf16.msra.mxu0 0
      %1027 = vmatprep.subr.bf16.mxu0 0
      %1028 = vmatpush1.bf16.msra.mxu0 0
      %1029 = vmatprep.subr.bf16.mxu0 0
      %1030 = vmatpush1.bf16.msra.mxu0 0
      %1031 = vmatprep.subr.bf16.mxu0 0
      %1032 = vmatpush1.bf16.msra.mxu0 0
      %1033 = vmatprep.subr.bf16.mxu0 0
      %1034 = vmatpush1.bf16.msra.mxu0 0
      %1035 = vmatprep.subr.bf16.mxu0 0
      %1036 = vmatpush1.bf16.msra.mxu0 0
      %1037 = vmatprep.subr.bf16.mxu0 0
      %1038 = vmatpush1.bf16.msra.mxu0 0
      %1039 = vmatprep.subr.bf16.mxu0 0
      %1040 = vmatpush1.bf16.msra.mxu0 0
      %1041 = vmatprep.mubr.bf16.mxu0 0
      %1042 = vmatmul.mubr.bf16.gmra.mrb[0].mxu0 %v627
      %v1043 = vpop.f32.mrb[0].mxu0
      %v1044 = vadd.f32 0.0, %v1043
      %v1045 = vpop.f32.mrb[0].mxu0
      %v1046 = vpop.f32.mrb[0].mxu0
      %v1047 = vpop.f32.mrb[0].mxu0
      %1048 = vdwg.mxu0
      %v1049 = vadd.f32 %v939, %v1044
      %s1050 = scalar_lea.vmem %s1, 384
      %v1051 = vld [vmem:[%s1050] sm:$0xf]
      %v1052 = vld [vmem:[%s1050 + $0x4] sm:$0xf]
      %v1053 = vld [vmem:[%s1050 + $0x8] sm:$0xf]
      %v1054 = vld [vmem:[%s1050 + $0xc] sm:$0xf]
      %v1055 = vld [vmem:[%s1050 + $0x10] sm:$0xf]
      %v1056 = vld [vmem:[%s1050 + $0x14] sm:$0xf]
      %v1057 = vld [vmem:[%s1050 + $0x18] sm:$0xf]
      %v1058 = vld [vmem:[%s1050 + $0x1c] sm:$0xf]
      %v1059 = vld [vmem:[%s1050 + $0x20] sm:$0xf]
      %v1060 = vld [vmem:[%s1050 + $0x24] sm:$0xf]
      %v1061 = vld [vmem:[%s1050 + $0x28] sm:$0xf]
      %v1062 = vld [vmem:[%s1050 + $0x2c] sm:$0xf]
      %v1063 = vld [vmem:[%s1050 + $0x30] sm:$0xf]
      %v1064 = vld [vmem:[%s1050 + $0x34] sm:$0xf]
      %v1065 = vld [vmem:[%s1050 + $0x38] sm:$0xf]
      %v1066 = vld [vmem:[%s1050 + $0x3c] sm:$0xf]
      %s1067 = scalar_lea.vmem %s1, 448
      %v1068 = vld [vmem:[%s1067] sm:$0xf]
      %v1069 = vld [vmem:[%s1067 + $0x4] sm:$0xf]
      %v1070 = vld [vmem:[%s1067 + $0x8] sm:$0xf]
      %v1071 = vld [vmem:[%s1067 + $0xc] sm:$0xf]
      %v1072 = vld [vmem:[%s1067 + $0x10] sm:$0xf]
      %v1073 = vld [vmem:[%s1067 + $0x14] sm:$0xf]
      %v1074 = vld [vmem:[%s1067 + $0x18] sm:$0xf]
      %v1075 = vld [vmem:[%s1067 + $0x1c] sm:$0xf]
      %v1076 = vld [vmem:[%s1067 + $0x20] sm:$0xf]
      %v1077 = vld [vmem:[%s1067 + $0x24] sm:$0xf]
      %v1078 = vld [vmem:[%s1067 + $0x28] sm:$0xf]
      %v1079 = vld [vmem:[%s1067 + $0x2c] sm:$0xf]
      %v1080 = vld [vmem:[%s1067 + $0x30] sm:$0xf]
      %v1081 = vld [vmem:[%s1067 + $0x34] sm:$0xf]
      %v1082 = vld [vmem:[%s1067 + $0x38] sm:$0xf]
      %v1083 = vld [vmem:[%s1067 + $0x3c] sm:$0xf]
      %v1100 = vunpack.c.l.b16 %v1068
      %v1101 = vunpack.c.l.b16 %v1069
      %v1102 = vunpack.c.l.b16 %v1070
      %v1103 = vunpack.c.l.b16 %v1071
      %v1104 = vunpack.c.l.b16 %v1072
      %v1105 = vunpack.c.l.b16 %v1073
      %v1106 = vunpack.c.l.b16 %v1074
      %v1107 = vunpack.c.l.b16 %v1075
      %v1108 = vunpack.c.l.b16 %v1076
      %v1109 = vunpack.c.l.b16 %v1077
      %v1110 = vunpack.c.l.b16 %v1078
      %v1111 = vunpack.c.l.b16 %v1079
      %v1112 = vunpack.c.l.b16 %v1080
      %v1113 = vunpack.c.l.b16 %v1081
      %v1114 = vunpack.c.l.b16 %v1082
      %v1115 = vunpack.c.l.b16 %v1083
      %v1116 = vpack.c.b16 %v1101, %v1100
      %v1117 = vpack.c.b16 %v1103, %v1102
      %v1118 = vpack.c.b16 %v1105, %v1104
      %v1119 = vpack.c.b16 %v1107, %v1106
      %v1120 = vpack.c.b16 %v1109, %v1108
      %v1121 = vpack.c.b16 %v1111, %v1110
      %v1122 = vpack.c.b16 %v1113, %v1112
      %v1123 = vpack.c.b16 %v1115, %v1114
      %1132 = vmatprep.subr.bf16.mxu0 0
      %1133 = vmatpush1.bf16.msra.mxu0 %v1116
      %1134 = vmatprep.subr.bf16.mxu0 0
      %1135 = vmatpush1.bf16.msra.mxu0 %v1117
      %1136 = vmatprep.subr.bf16.mxu0 0
      %1137 = vmatpush1.bf16.msra.mxu0 %v1118
      %1138 = vmatprep.subr.bf16.mxu0 0
      %1139 = vmatpush1.bf16.msra.mxu0 %v1119
      %1140 = vmatprep.subr.bf16.mxu0 0
      %1141 = vmatpush1.bf16.msra.mxu0 %v1120
      %1142 = vmatprep.subr.bf16.mxu0 0
      %1143 = vmatpush1.bf16.msra.mxu0 %v1121
      %1144 = vmatprep.subr.bf16.mxu0 0
      %1145 = vmatpush1.bf16.msra.mxu0 %v1122
      %1146 = vmatprep.subr.bf16.mxu0 0
      %1147 = vmatpush1.bf16.msra.mxu0 %v1123
      %1148 = vmatprep.subr.bf16.mxu0 0
      %1149 = vmatpush1.bf16.msra.mxu0 0
      %1150 = vmatprep.subr.bf16.mxu0 0
      %1151 = vmatpush1.bf16.msra.mxu0 0
      %1152 = vmatprep.subr.bf16.mxu0 0
      %1153 = vmatpush1.bf16.msra.mxu0 0
      %1154 = vmatprep.subr.bf16.mxu0 0
      %1155 = vmatpush1.bf16.msra.mxu0 0
      %1156 = vmatprep.subr.bf16.mxu0 0
      %1157 = vmatpush1.bf16.msra.mxu0 0
      %1158 = vmatprep.subr.bf16.mxu0 0
      %1159 = vmatpush1.bf16.msra.mxu0 0
      %1160 = vmatprep.subr.bf16.mxu0 0
      %1161 = vmatpush1.bf16.msra.mxu0 0
      %1162 = vmatprep.subr.bf16.mxu0 0
      %1163 = vmatpush1.bf16.msra.mxu0 0
      %1164 = vmatprep.mubr.bf16.mxu0 0
      %1165 = vmatmul.mubr.bf16.gmra.mrb[0].mxu0 %v432
      %v1166 = vpop.f32.mrb[0].mxu0
      %v1167 = vadd.f32 0.0, %v1166
      %v1168 = vpop.f32.mrb[0].mxu0
      %v1169 = vpop.f32.mrb[0].mxu0
      %v1170 = vpop.f32.mrb[0].mxu0
      %1171 = vdwg.mxu0
      %v1188 = vunpack.c.l.b16 %v1051
      %v1189 = vunpack.c.l.b16 %v1052
      %v1190 = vunpack.c.l.b16 %v1053
      %v1191 = vunpack.c.l.b16 %v1054
      %v1192 = vunpack.c.l.b16 %v1055
      %v1193 = vunpack.c.l.b16 %v1056
      %v1194 = vunpack.c.l.b16 %v1057
      %v1195 = vunpack.c.l.b16 %v1058
      %v1196 = vunpack.c.l.b16 %v1059
      %v1197 = vunpack.c.l.b16 %v1060
      %v1198 = vunpack.c.l.b16 %v1061
      %v1199 = vunpack.c.l.b16 %v1062
      %v1200 = vunpack.c.l.b16 %v1063
      %v1201 = vunpack.c.l.b16 %v1064
      %v1202 = vunpack.c.l.b16 %v1065
      %v1203 = vunpack.c.l.b16 %v1066
      %v1204 = vpack.c.b16 %v1189, %v1188
      %v1205 = vpack.c.b16 %v1191, %v1190
      %v1206 = vpack.c.b16 %v1193, %v1192
      %v1207 = vpack.c.b16 %v1195, %v1194
      %v1208 = vpack.c.b16 %v1197, %v1196
      %v1209 = vpack.c.b16 %v1199, %v1198
      %v1210 = vpack.c.b16 %v1201, %v1200
      %v1211 = vpack.c.b16 %v1203, %v1202
      %1220 = vmatprep.subr.bf16.mxu0 0
      %1221 = vmatpush1.bf16.msra.mxu0 %v1204
      %1222 = vmatprep.subr.bf16.mxu0 0
      %1223 = vmatpush1.bf16.msra.mxu0 %v1205
      %1224 = vmatprep.subr.bf16.mxu0 0
      %1225 = vmatpush1.bf16.msra.mxu0 %v1206
      %1226 = vmatprep.subr.bf16.mxu0 0
      %1227 = vmatpush1.bf16.msra.mxu0 %v1207
      %1228 = vmatprep.subr.bf16.mxu0 0
      %1229 = vmatpush1.bf16.msra.mxu0 %v1208
      %1230 = vmatprep.subr.bf16.mxu0 0
      %1231 = vmatpush1.bf16.msra.mxu0 %v1209
      %1232 = vmatprep.subr.bf16.mxu0 0
      %1233 = vmatpush1.bf16.msra.mxu0 %v1210
      %1234 = vmatprep.subr.bf16.mxu0 0
      %1235 = vmatpush1.bf16.msra.mxu0 %v1211
      %1236 = vmatprep.subr.bf16.mxu0 0
      %1237 = vmatpush1.bf16.msra.mxu0 0
      %1238 = vmatprep.subr.bf16.mxu0 0
      %1239 = vmatpush1.bf16.msra.mxu0 0
      %1240 = vmatprep.subr.bf16.mxu0 0
      %1241 = vmatpush1.bf16.msra.mxu0 0
      %1242 = vmatprep.subr.bf16.mxu0 0
      %1243 = vmatpush1.bf16.msra.mxu0 0
      %1244 = vmatprep.subr.bf16.mxu0 0
      %1245 = vmatpush1.bf16.msra.mxu0 0
      %1246 = vmatprep.subr.bf16.mxu0 0
      %1247 = vmatpush1.bf16.msra.mxu0 0
      %1248 = vmatprep.subr.bf16.mxu0 0
      %1249 = vmatpush1.bf16.msra.mxu0 0
      %1250 = vmatprep.subr.bf16.mxu0 0
      %1251 = vmatpush1.bf16.msra.mxu0 0
      %1252 = vmatprep.mubr.bf16.mxu0 0
      %1253 = vmatmul.mubr.bf16.gmra.mrb[0].mxu0 %v414
      %v1254 = vpop.f32.mrb[0].mxu0
      %v1255 = vadd.f32 %v1167, %v1254
      %v1256 = vpop.f32.mrb[0].mxu0
      %v1257 = vpop.f32.mrb[0].mxu0
      %v1258 = vpop.f32.mrb[0].mxu0
      %1259 = vdwg.mxu0
      %s1260 = scalar_lea.vmem %s1, 512
      %v1261 = vld [vmem:[%s1260] sm:$0xf]
      %v1262 = vld [vmem:[%s1260 + $0x4] sm:$0xf]
      %v1263 = vld [vmem:[%s1260 + $0x8] sm:$0xf]
      %v1264 = vld [vmem:[%s1260 + $0xc] sm:$0xf]
      %v1265 = vld [vmem:[%s1260 + $0x10] sm:$0xf]
      %v1266 = vld [vmem:[%s1260 + $0x14] sm:$0xf]
      %v1267 = vld [vmem:[%s1260 + $0x18] sm:$0xf]
      %v1268 = vld [vmem:[%s1260 + $0x1c] sm:$0xf]
      %v1269 = vld [vmem:[%s1260 + $0x20] sm:$0xf]
      %v1270 = vld [vmem:[%s1260 + $0x24] sm:$0xf]
      %v1271 = vld [vmem:[%s1260 + $0x28] sm:$0xf]
      %v1272 = vld [vmem:[%s1260 + $0x2c] sm:$0xf]
      %v1273 = vld [vmem:[%s1260 + $0x30] sm:$0xf]
      %v1274 = vld [vmem:[%s1260 + $0x34] sm:$0xf]
      %v1275 = vld [vmem:[%s1260 + $0x38] sm:$0xf]
      %v1276 = vld [vmem:[%s1260 + $0x3c] sm:$0xf]
      %v1293 = vunpack.c.l.b16 %v1261
      %v1294 = vunpack.c.l.b16 %v1262
      %v1295 = vunpack.c.l.b16 %v1263
      %v1296 = vunpack.c.l.b16 %v1264
      %v1297 = vunpack.c.l.b16 %v1265
      %v1298 = vunpack.c.l.b16 %v1266
      %v1299 = vunpack.c.l.b16 %v1267
      %v1300 = vunpack.c.l.b16 %v1268
      %v1301 = vunpack.c.l.b16 %v1269
      %v1302 = vunpack.c.l.b16 %v1270
      %v1303 = vunpack.c.l.b16 %v1271
      %v1304 = vunpack.c.l.b16 %v1272
      %v1305 = vunpack.c.l.b16 %v1273
      %v1306 = vunpack.c.l.b16 %v1274
      %v1307 = vunpack.c.l.b16 %v1275
      %v1308 = vunpack.c.l.b16 %v1276
      %v1309 = vpack.c.b16 %v1294, %v1293
      %v1310 = vpack.c.b16 %v1296, %v1295
      %v1311 = vpack.c.b16 %v1298, %v1297
      %v1312 = vpack.c.b16 %v1300, %v1299
      %v1313 = vpack.c.b16 %v1302, %v1301
      %v1314 = vpack.c.b16 %v1304, %v1303
      %v1315 = vpack.c.b16 %v1306, %v1305
      %v1316 = vpack.c.b16 %v1308, %v1307
      %1325 = vmatprep.subr.bf16.mxu0 0
      %1326 = vmatpush1.bf16.msra.mxu0 %v1309
      %1327 = vmatprep.subr.bf16.mxu0 0
      %1328 = vmatpush1.bf16.msra.mxu0 %v1310
      %1329 = vmatprep.subr.bf16.mxu0 0
      %1330 = vmatpush1.bf16.msra.mxu0 %v1311
      %1331 = vmatprep.subr.bf16.mxu0 0
      %1332 = vmatpush1.bf16.msra.mxu0 %v1312
      %1333 = vmatprep.subr.bf16.mxu0 0
      %1334 = vmatpush1.bf16.msra.mxu0 %v1313
      %1335 = vmatprep.subr.bf16.mxu0 0
      %1336 = vmatpush1.bf16.msra.mxu0 %v1314
      %1337 = vmatprep.subr.bf16.mxu0 0
      %1338 = vmatpush1.bf16.msra.mxu0 %v1315
      %1339 = vmatprep.subr.bf16.mxu0 0
      %1340 = vmatpush1.bf16.msra.mxu0 %v1316
      %1341 = vmatprep.subr.bf16.mxu0 0
      %1342 = vmatpush1.bf16.msra.mxu0 0
      %1343 = vmatprep.subr.bf16.mxu0 0
      %1344 = vmatpush1.bf16.msra.mxu0 0
      %1345 = vmatprep.subr.bf16.mxu0 0
      %1346 = vmatpush1.bf16.msra.mxu0 0
      %1347 = vmatprep.subr.bf16.mxu0 0
      %1348 = vmatpush1.bf16.msra.mxu0 0
      %1349 = vmatprep.subr.bf16.mxu0 0
      %1350 = vmatpush1.bf16.msra.mxu0 0
      %1351 = vmatprep.subr.bf16.mxu0 0
      %1352 = vmatpush1.bf16.msra.mxu0 0
      %1353 = vmatprep.subr.bf16.mxu0 0
      %1354 = vmatpush1.bf16.msra.mxu0 0
      %1355 = vmatprep.subr.bf16.mxu0 0
      %1356 = vmatpush1.bf16.msra.mxu0 0
      %1357 = vmatprep.mubr.bf16.mxu0 0
      %1358 = vmatmul.mubr.bf16.gmra.mrb[0].mxu0 %v627
      %v1359 = vpop.f32.mrb[0].mxu0
      %v1360 = vadd.f32 0.0, %v1359
      %v1361 = vpop.f32.mrb[0].mxu0
      %v1362 = vpop.f32.mrb[0].mxu0
      %v1363 = vpop.f32.mrb[0].mxu0
      %1364 = vdwg.mxu0
      %v1365 = vadd.f32 %v1255, %v1360
      %v1366 = vmax.f32 %v733, %v1049
      %v1367 = vmax.f32 %v1366, %v1365
      %v1368 = vld [vmem:[%s3] sm:$0xf]
      %vm1369 = vcmask 64512
      %v1371 = vsel %vm1369, %v1368, 0
      %1373 = vmatprep.subr.mxu0 0.0
      %1374 = vmatpush1.msra.mxu0 %v1367
      %1375 = vmatprep.subr.mxu0 0.0
      %1376 = vmatpush1.msra.mxu0 0.0
      %1377 = vmatprep.subr.mxu0 0.0
      %1378 = vmatpush1.msra.mxu0 0.0
      %1379 = vmatprep.subr.mxu0 0.0
      %1380 = vmatpush1.msra.mxu0 0.0
      %1381 = vmatprep.subr.mxu0 0.0
      %1382 = vmatpush1.msra.mxu0 0.0
      %1383 = vmatprep.subr.mxu0 0.0
      %1384 = vmatpush1.msra.mxu0 0.0
      %1385 = vmatprep.subr.mxu0 0.0
      %1386 = vmatpush1.msra.mxu0 0.0
      %1387 = vmatprep.subr.mxu0 0.0
      %1388 = vmatpush1.msra.mxu0 0.0
      %1389 = vmatprep.subr.mxu0 0.0
      %1390 = vmatpush1.msra.mxu0 0.0
      %1391 = vmatprep.subr.mxu0 0.0
      %1392 = vmatpush1.msra.mxu0 0.0
      %1393 = vmatprep.subr.mxu0 0.0
      %1394 = vmatpush1.msra.mxu0 0.0
      %1395 = vmatprep.subr.mxu0 0.0
      %1396 = vmatpush1.msra.mxu0 0.0
      %1397 = vmatprep.subr.mxu0 0.0
      %1398 = vmatpush1.msra.mxu0 0.0
      %1399 = vmatprep.subr.mxu0 0.0
      %1400 = vmatpush1.msra.mxu0 0.0
      %1401 = vmatprep.subr.mxu0 0.0
      %1402 = vmatpush1.msra.mxu0 0.0
      %1403 = vmatprep.subr.mxu0 0.0
      %1404 = vmatpush1.msra.mxu0 0.0
      %1405 = vmatprep.subr.mxu0 0.0
      %1406 = vmatpush1.msra.mxu0 0.0
      %1407 = vmatprep.subr.mxu0 0.0
      %1408 = vmatpush1.msra.mxu0 0.0
      %1409 = vmatprep.subr.mxu0 0.0
      %1410 = vmatpush1.msra.mxu0 0.0
      %1411 = vmatprep.subr.mxu0 0.0
      %1412 = vmatpush1.msra.mxu0 0.0
      %1413 = vmatprep.subr.mxu0 0.0
      %1414 = vmatpush1.msra.mxu0 0.0
      %1415 = vmatprep.subr.mxu0 0.0
      %1416 = vmatpush1.msra.mxu0 0.0
      %1417 = vmatprep.subr.mxu0 0.0
      %1418 = vmatpush1.msra.mxu0 0.0
      %1419 = vmatprep.subr.mxu0 0.0
      %1420 = vmatpush1.msra.mxu0 0.0
      %1421 = vmatprep.subr.mxu0 0.0
      %1422 = vmatpush1.msra.mxu0 0.0
      %1423 = vmatprep.subr.mxu0 0.0
      %1424 = vmatpush1.msra.mxu0 0.0
      %1425 = vmatprep.subr.mxu0 0.0
      %1426 = vmatpush1.msra.mxu0 0.0
      %1427 = vmatprep.subr.mxu0 0.0
      %1428 = vmatpush1.msra.mxu0 0.0
      %1429 = vmatprep.subr.mxu0 0.0
      %1430 = vmatpush1.msra.mxu0 0.0
      %1431 = vmatprep.subr.mxu0 0.0
      %1432 = vmatpush1.msra.mxu0 0.0
      %1433 = vmatprep.subr.mxu0 0.0
      %1434 = vmatpush1.msra.mxu0 0.0
      %1435 = vmatprep.subr.mxu0 0.0
      %1436 = vmatpush1.msra.mxu0 0.0
      %1437 = vmatprep.mubr.f32.mxu0 0.0
      %1438 = vmatmul.mubr.f32.gmra.mrb[0].mxu0 %v1371
      %v1439 = vpop.f32.mrb[0].mxu0
      %v1440 = vadd.f32 0.0, %v1439
      %v1441 = vpop.f32.mrb[0].mxu0
      %1442 = vdwg.mxu0
      %s1443 = scalar_lea.vmem %s3, 4
      %v1444 = vld [vmem:[%s1443] sm:$0xf]
      %v1446 = vsel %vm1369, %v1444, 0
      %1448 = vmatprep.subr.mxu0 0.0
      %1449 = vmatpush1.msra.mxu0 %v1367
      %1450 = vmatprep.subr.mxu0 0.0
      %1451 = vmatpush1.msra.mxu0 0.0
      %1452 = vmatprep.subr.mxu0 0.0
      %1453 = vmatpush1.msra.mxu0 0.0
      %1454 = vmatprep.subr.mxu0 0.0
      %1455 = vmatpush1.msra.mxu0 0.0
      %1456 = vmatprep.subr.mxu0 0.0
      %1457 = vmatpush1.msra.mxu0 0.0
      %1458 = vmatprep.subr.mxu0 0.0
      %1459 = vmatpush1.msra.mxu0 0.0
      %1460 = vmatprep.subr.mxu0 0.0
      %1461 = vmatpush1.msra.mxu0 0.0
      %1462 = vmatprep.subr.mxu0 0.0
      %1463 = vmatpush1.msra.mxu0 0.0
      %1464 = vmatprep.subr.mxu0 0.0
      %1465 = vmatpush1.msra.mxu0 0.0
      %1466 = vmatprep.subr.mxu0 0.0
      %1467 = vmatpush1.msra.mxu0 0.0
      %1468 = vmatprep.subr.mxu0 0.0
      %1469 = vmatpush1.msra.mxu0 0.0
      %1470 = vmatprep.subr.mxu0 0.0
      %1471 = vmatpush1.msra.mxu0 0.0
      %1472 = vmatprep.subr.mxu0 0.0
      %1473 = vmatpush1.msra.mxu0 0.0
      %1474 = vmatprep.subr.mxu0 0.0
      %1475 = vmatpush1.msra.mxu0 0.0
      %1476 = vmatprep.subr.mxu0 0.0
      %1477 = vmatpush1.msra.mxu0 0.0
      %1478 = vmatprep.subr.mxu0 0.0
      %1479 = vmatpush1.msra.mxu0 0.0
      %1480 = vmatprep.subr.mxu0 0.0
      %1481 = vmatpush1.msra.mxu0 0.0
      %1482 = vmatprep.subr.mxu0 0.0
      %1483 = vmatpush1.msra.mxu0 0.0
      %1484 = vmatprep.subr.mxu0 0.0
      %1485 = vmatpush1.msra.mxu0 0.0
      %1486 = vmatprep.subr.mxu0 0.0
      %1487 = vmatpush1.msra.mxu0 0.0
      %1488 = vmatprep.subr.mxu0 0.0
      %1489 = vmatpush1.msra.mxu0 0.0
      %1490 = vmatprep.subr.mxu0 0.0
      %1491 = vmatpush1.msra.mxu0 0.0
      %1492 = vmatprep.subr.mxu0 0.0
      %1493 = vmatpush1.msra.mxu0 0.0
      %1494 = vmatprep.subr.mxu0 0.0
      %1495 = vmatpush1.msra.mxu0 0.0
      %1496 = vmatprep.subr.mxu0 0.0
      %1497 = vmatpush1.msra.mxu0 0.0
      %1498 = vmatprep.subr.mxu0 0.0
      %1499 = vmatpush1.msra.mxu0 0.0
      %1500 = vmatprep.subr.mxu0 0.0
      %1501 = vmatpush1.msra.mxu0 0.0
      %1502 = vmatprep.subr.mxu0 0.0
      %1503 = vmatpush1.msra.mxu0 0.0
      %1504 = vmatprep.subr.mxu0 0.0
      %1505 = vmatpush1.msra.mxu0 0.0
      %1506 = vmatprep.subr.mxu0 0.0
      %1507 = vmatpush1.msra.mxu0 0.0
      %1508 = vmatprep.subr.mxu0 0.0
      %1509 = vmatpush1.msra.mxu0 0.0
      %1510 = vmatprep.subr.mxu0 0.0
      %1511 = vmatpush1.msra.mxu0 0.0
      %1512 = vmatprep.mubr.f32.mxu0 0.0
      %1513 = vmatmul.mubr.f32.gmra.mrb[0].mxu0 %v1446
      %v1514 = vpop.f32.mrb[0].mxu0
      %v1515 = vadd.f32 0.0, %v1514
      %v1516 = vpop.f32.mrb[0].mxu0
      %1517 = vdwg.mxu0
      %s1518 = scalar_lea.vmem %s3, 8
      %v1519 = vld [vmem:[%s1518] sm:$0xf]
      %v1521 = vsel %vm1369, %v1519, 0
      %1523 = vmatprep.subr.mxu0 0.0
      %1524 = vmatpush1.msra.mxu0 %v1367
      %1525 = vmatprep.subr.mxu0 0.0
      %1526 = vmatpush1.msra.mxu0 0.0
      %1527 = vmatprep.subr.mxu0 0.0
      %1528 = vmatpush1.msra.mxu0 0.0
      %1529 = vmatprep.subr.mxu0 0.0
      %1530 = vmatpush1.msra.mxu0 0.0
      %1531 = vmatprep.subr.mxu0 0.0
      %1532 = vmatpush1.msra.mxu0 0.0
      %1533 = vmatprep.subr.mxu0 0.0
      %1534 = vmatpush1.msra.mxu0 0.0
      %1535 = vmatprep.subr.mxu0 0.0
      %1536 = vmatpush1.msra.mxu0 0.0
      %1537 = vmatprep.subr.mxu0 0.0
      %1538 = vmatpush1.msra.mxu0 0.0
      %1539 = vmatprep.subr.mxu0 0.0
      %1540 = vmatpush1.msra.mxu0 0.0
      %1541 = vmatprep.subr.mxu0 0.0
      %1542 = vmatpush1.msra.mxu0 0.0
      %1543 = vmatprep.subr.mxu0 0.0
      %1544 = vmatpush1.msra.mxu0 0.0
      %1545 = vmatprep.subr.mxu0 0.0
      %1546 = vmatpush1.msra.mxu0 0.0
      %1547 = vmatprep.subr.mxu0 0.0
      %1548 = vmatpush1.msra.mxu0 0.0
      %1549 = vmatprep.subr.mxu0 0.0
      %1550 = vmatpush1.msra.mxu0 0.0
      %1551 = vmatprep.subr.mxu0 0.0
      %1552 = vmatpush1.msra.mxu0 0.0
      %1553 = vmatprep.subr.mxu0 0.0
      %1554 = vmatpush1.msra.mxu0 0.0
      %1555 = vmatprep.subr.mxu0 0.0
      %1556 = vmatpush1.msra.mxu0 0.0
      %1557 = vmatprep.subr.mxu0 0.0
      %1558 = vmatpush1.msra.mxu0 0.0
      %1559 = vmatprep.subr.mxu0 0.0
      %1560 = vmatpush1.msra.mxu0 0.0
      %1561 = vmatprep.subr.mxu0 0.0
      %1562 = vmatpush1.msra.mxu0 0.0
      %1563 = vmatprep.subr.mxu0 0.0
      %1564 = vmatpush1.msra.mxu0 0.0
      %1565 = vmatprep.subr.mxu0 0.0
      %1566 = vmatpush1.msra.mxu0 0.0
      %1567 = vmatprep.subr.mxu0 0.0
      %1568 = vmatpush1.msra.mxu0 0.0
      %1569 = vmatprep.subr.mxu0 0.0
      %1570 = vmatpush1.msra.mxu0 0.0
      %1571 = vmatprep.subr.mxu0 0.0
      %1572 = vmatpush1.msra.mxu0 0.0
      %1573 = vmatprep.subr.mxu0 0.0
      %1574 = vmatpush1.msra.mxu0 0.0
      %1575 = vmatprep.subr.mxu0 0.0
      %1576 = vmatpush1.msra.mxu0 0.0
      %1577 = vmatprep.subr.mxu0 0.0
      %1578 = vmatpush1.msra.mxu0 0.0
      %1579 = vmatprep.subr.mxu0 0.0
      %1580 = vmatpush1.msra.mxu0 0.0
      %1581 = vmatprep.subr.mxu0 0.0
      %1582 = vmatpush1.msra.mxu0 0.0
      %1583 = vmatprep.subr.mxu0 0.0
      %1584 = vmatpush1.msra.mxu0 0.0
      %1585 = vmatprep.subr.mxu0 0.0
      %1586 = vmatpush1.msra.mxu0 0.0
      %1587 = vmatprep.mubr.f32.mxu0 0.0
      %1588 = vmatmul.mubr.f32.gmra.mrb[0].mxu0 %v1521
      %v1589 = vpop.f32.mrb[0].mxu0
      %v1590 = vadd.f32 0.0, %v1589
      %v1591 = vpop.f32.mrb[0].mxu0
      %1592 = vdwg.mxu0
      %v1593 = vmax.f32 %v1440, %v1515
      %v1594 = vmax.f32 %v1593, %v1590
      %v1595 = vld [vmem:[%s2] sm:$0x1]
      %v1597 = vlaneseq
      %v1598 = vshrl.u32 %v1597, 7
      %v1599 = vsub.s32 0, %v1598
      %v1600 = vrot.slane %v1595, %v1599
      %v1602 = vadd.f32 %v1594, %v1600
      %1603 = vst [vmem:[#allocation2] sm:$0x1] 0.0
      %1604 = vst [vmem:[#allocation2 + $0x5] sm:$0x1] 0.0
      %1605 = vst [vmem:[#allocation2 + $0x1] sm:$0xf] %v1602
      %v1606 = vld [vmem:[#allocation2] sm:$0xf]
      %v1607 = vmax.f32 %v1606, 0.0
      %v1608 = vpack.c.bf16 %v1607, %v1607
      %v1609 = vld [vmem:[%s4] sm:$0xf]
      %v1610 = vld [vmem:[%s4 + $0x4] sm:$0xf]
      %v1611 = vld [vmem:[%s4 + $0x8] sm:$0xf]
      %v1612 = vld [vmem:[%s4 + $0xc] sm:$0xf]
      %v1613 = vld [vmem:[%s4 + $0x10] sm:$0xf]
      %v1614 = vld [vmem:[%s4 + $0x14] sm:$0xf]
      %v1615 = vld [vmem:[%s4 + $0x18] sm:$0xf]
      %v1616 = vld [vmem:[%s4 + $0x1c] sm:$0xf]
      %v1617 = vld [vmem:[%s4 + $0x20] sm:$0xf]
      %v1618 = vld [vmem:[%s4 + $0x24] sm:$0xf]
      %v1619 = vld [vmem:[%s4 + $0x28] sm:$0xf]
      %v1620 = vld [vmem:[%s4 + $0x2c] sm:$0xf]
      %v1621 = vld [vmem:[%s4 + $0x30] sm:$0xf]
      %v1622 = vld [vmem:[%s4 + $0x34] sm:$0xf]
      %v1623 = vld [vmem:[%s4 + $0x38] sm:$0xf]
      %v1624 = vld [vmem:[%s4 + $0x3c] sm:$0xf]
      %v1625 = vld [vmem:[#allocation2 + $0x1] sm:$0xf]
      %v1626 = vmax.f32 %v1625, 0.0
      %v1627 = vpack.c.bf16 %v1626, %v1626
      %s1628 = scalar_lea.vmem %s4, 64
      %v1629 = vld [vmem:[%s1628] sm:$0xf]
      %v1630 = vld [vmem:[%s1628 + $0x4] sm:$0xf]
      %v1631 = vld [vmem:[%s1628 + $0x8] sm:$0xf]
      %v1632 = vld [vmem:[%s1628 + $0xc] sm:$0xf]
      %v1633 = vld [vmem:[%s1628 + $0x10] sm:$0xf]
      %v1634 = vld [vmem:[%s1628 + $0x14] sm:$0xf]
      %v1635 = vld [vmem:[%s1628 + $0x18] sm:$0xf]
      %v1636 = vld [vmem:[%s1628 + $0x1c] sm:$0xf]
      %v1637 = vld [vmem:[%s1628 + $0x20] sm:$0xf]
      %v1638 = vld [vmem:[%s1628 + $0x24] sm:$0xf]
      %v1639 = vld [vmem:[%s1628 + $0x28] sm:$0xf]
      %v1640 = vld [vmem:[%s1628 + $0x2c] sm:$0xf]
      %v1641 = vld [vmem:[%s1628 + $0x30] sm:$0xf]
      %v1642 = vld [vmem:[%s1628 + $0x34] sm:$0xf]
      %v1643 = vld [vmem:[%s1628 + $0x38] sm:$0xf]
      %v1644 = vld [vmem:[%s1628 + $0x3c] sm:$0xf]
      %v1661 = vunpack.c.l.b16 %v1629
      %v1662 = vunpack.c.l.b16 %v1630
      %v1663 = vunpack.c.l.b16 %v1631
      %v1664 = vunpack.c.l.b16 %v1632
      %v1665 = vunpack.c.l.b16 %v1633
      %v1666 = vunpack.c.l.b16 %v1634
      %v1667 = vunpack.c.l.b16 %v1635
      %v1668 = vunpack.c.l.b16 %v1636
      %v1669 = vunpack.c.l.b16 %v1637
      %v1670 = vunpack.c.l.b16 %v1638
      %v1671 = vunpack.c.l.b16 %v1639
      %v1672 = vunpack.c.l.b16 %v1640
      %v1673 = vunpack.c.l.b16 %v1641
      %v1674 = vunpack.c.l.b16 %v1642
      %v1675 = vunpack.c.l.b16 %v1643
      %v1676 = vunpack.c.l.b16 %v1644
      %v1677 = vpack.c.b16 %v1662, %v1661
      %v1678 = vpack.c.b16 %v1664, %v1663
      %v1679 = vpack.c.b16 %v1666, %v1665
      %v1680 = vpack.c.b16 %v1668, %v1667
      %v1681 = vpack.c.b16 %v1670, %v1669
      %v1682 = vpack.c.b16 %v1672, %v1671
      %v1683 = vpack.c.b16 %v1674, %v1673
      %v1684 = vpack.c.b16 %v1676, %v1675
      %1693 = vmatprep.subr.bf16.mxu0 0
      %1694 = vmatpush1.bf16.msra.mxu0 %v1677
      %1695 = vmatprep.subr.bf16.mxu0 0
      %1696 = vmatpush1.bf16.msra.mxu0 %v1678
      %1697 = vmatprep.subr.bf16.mxu0 0
      %1698 = vmatpush1.bf16.msra.mxu0 %v1679
      %1699 = vmatprep.subr.bf16.mxu0 0
      %1700 = vmatpush1.bf16.msra.mxu0 %v1680
      %1701 = vmatprep.subr.bf16.mxu0 0
      %1702 = vmatpush1.bf16.msra.mxu0 %v1681
      %1703 = vmatprep.subr.bf16.mxu0 0
      %1704 = vmatpush1.bf16.msra.mxu0 %v1682
      %1705 = vmatprep.subr.bf16.mxu0 0
      %1706 = vmatpush1.bf16.msra.mxu0 %v1683
      %1707 = vmatprep.subr.bf16.mxu0 0
      %1708 = vmatpush1.bf16.msra.mxu0 %v1684
      %1709 = vmatprep.subr.bf16.mxu0 0
      %1710 = vmatpush1.bf16.msra.mxu0 0
      %1711 = vmatprep.subr.bf16.mxu0 0
      %1712 = vmatpush1.bf16.msra.mxu0 0
      %1713 = vmatprep.subr.bf16.mxu0 0
      %1714 = vmatpush1.bf16.msra.mxu0 0
      %1715 = vmatprep.subr.bf16.mxu0 0
      %1716 = vmatpush1.bf16.msra.mxu0 0
      %1717 = vmatprep.subr.bf16.mxu0 0
      %1718 = vmatpush1.bf16.msra.mxu0 0
      %1719 = vmatprep.subr.bf16.mxu0 0
      %1720 = vmatpush1.bf16.msra.mxu0 0
      %1721 = vmatprep.subr.bf16.mxu0 0
      %1722 = vmatpush1.bf16.msra.mxu0 0
      %1723 = vmatprep.subr.bf16.mxu0 0
      %1724 = vmatpush1.bf16.msra.mxu0 0
      %1725 = vmatprep.mubr.bf16.mxu0 0
      %1726 = vmatmul.mubr.bf16.gmra.mrb[0].mxu0 %v1627
      %v1727 = vpop.f32.mrb[0].mxu0
      %v1728 = vadd.f32 0.0, %v1727
      %v1729 = vpop.f32.mrb[0].mxu0
      %v1730 = vpop.f32.mrb[0].mxu0
      %v1731 = vpop.f32.mrb[0].mxu0
      %1732 = vdwg.mxu0
      %v1749 = vunpack.c.l.b16 %v1609
      %v1750 = vunpack.c.l.b16 %v1610
      %v1751 = vunpack.c.l.b16 %v1611
      %v1752 = vunpack.c.l.b16 %v1612
      %v1753 = vunpack.c.l.b16 %v1613
      %v1754 = vunpack.c.l.b16 %v1614
      %v1755 = vunpack.c.l.b16 %v1615
      %v1756 = vunpack.c.l.b16 %v1616
      %v1757 = vunpack.c.l.b16 %v1617
      %v1758 = vunpack.c.l.b16 %v1618
      %v1759 = vunpack.c.l.b16 %v1619
      %v1760 = vunpack.c.l.b16 %v1620
      %v1761 = vunpack.c.l.b16 %v1621
      %v1762 = vunpack.c.l.b16 %v1622
      %v1763 = vunpack.c.l.b16 %v1623
      %v1764 = vunpack.c.l.b16 %v1624
      %v1765 = vpack.c.b16 %v1750, %v1749
      %v1766 = vpack.c.b16 %v1752, %v1751
      %v1767 = vpack.c.b16 %v1754, %v1753
      %v1768 = vpack.c.b16 %v1756, %v1755
      %v1769 = vpack.c.b16 %v1758, %v1757
      %v1770 = vpack.c.b16 %v1760, %v1759
      %v1771 = vpack.c.b16 %v1762, %v1761
      %v1772 = vpack.c.b16 %v1764, %v1763
      %1781 = vmatprep.subr.bf16.mxu0 0
      %1782 = vmatpush1.bf16.msra.mxu0 %v1765
      %1783 = vmatprep.subr.bf16.mxu0 0
      %1784 = vmatpush1.bf16.msra.mxu0 %v1766
      %1785 = vmatprep.subr.bf16.mxu0 0
      %1786 = vmatpush1.bf16.msra.mxu0 %v1767
      %1787 = vmatprep.subr.bf16.mxu0 0
      %1788 = vmatpush1.bf16.msra.mxu0 %v1768
      %1789 = vmatprep.subr.bf16.mxu0 0
      %1790 = vmatpush1.bf16.msra.mxu0 %v1769
      %1791 = vmatprep.subr.bf16.mxu0 0
      %1792 = vmatpush1.bf16.msra.mxu0 %v1770
      %1793 = vmatprep.subr.bf16.mxu0 0
      %1794 = vmatpush1.bf16.msra.mxu0 %v1771
      %1795 = vmatprep.subr.bf16.mxu0 0
      %1796 = vmatpush1.bf16.msra.mxu0 %v1772
      %1797 = vmatprep.subr.bf16.mxu0 0
      %1798 = vmatpush1.bf16.msra.mxu0 0
      %1799 = vmatprep.subr.bf16.mxu0 0
      %1800 = vmatpush1.bf16.msra.mxu0 0
      %1801 = vmatprep.subr.bf16.mxu0 0
      %1802 = vmatpush1.bf16.msra.mxu0 0
      %1803 = vmatprep.subr.bf16.mxu0 0
      %1804 = vmatpush1.bf16.msra.mxu0 0
      %1805 = vmatprep.subr.bf16.mxu0 0
      %1806 = vmatpush1.bf16.msra.mxu0 0
      %1807 = vmatprep.subr.bf16.mxu0 0
      %1808 = vmatpush1.bf16.msra.mxu0 0
      %1809 = vmatprep.subr.bf16.mxu0 0
      %1810 = vmatpush1.bf16.msra.mxu0 0
      %1811 = vmatprep.subr.bf16.mxu0 0
      %1812 = vmatpush1.bf16.msra.mxu0 0
      %1813 = vmatprep.mubr.bf16.mxu0 0
      %1814 = vmatmul.mubr.bf16.gmra.mrb[0].mxu0 %v1608
      %v1815 = vpop.f32.mrb[0].mxu0
      %v1816 = vadd.f32 %v1728, %v1815
      %v1817 = vpop.f32.mrb[0].mxu0
      %v1818 = vpop.f32.mrb[0].mxu0
      %v1819 = vpop.f32.mrb[0].mxu0
      %1820 = vdwg.mxu0
      %v1821 = vld [vmem:[#allocation2 + $0x2] sm:$0xf]
      %v1822 = vmax.f32 %v1821, 0.0
      %v1823 = vpack.c.bf16 %v1822, %v1822
      %s1824 = scalar_lea.vmem %s4, 128
      %v1825 = vld [vmem:[%s1824] sm:$0xf]
      %v1826 = vld [vmem:[%s1824 + $0x4] sm:$0xf]
      %v1827 = vld [vmem:[%s1824 + $0x8] sm:$0xf]
      %v1828 = vld [vmem:[%s1824 + $0xc] sm:$0xf]
      %v1829 = vld [vmem:[%s1824 + $0x10] sm:$0xf]
      %v1830 = vld [vmem:[%s1824 + $0x14] sm:$0xf]
      %v1831 = vld [vmem:[%s1824 + $0x18] sm:$0xf]
      %v1832 = vld [vmem:[%s1824 + $0x1c] sm:$0xf]
      %v1833 = vld [vmem:[%s1824 + $0x20] sm:$0xf]
      %v1834 = vld [vmem:[%s1824 + $0x24] sm:$0xf]
      %v1835 = vld [vmem:[%s1824 + $0x28] sm:$0xf]
      %v1836 = vld [vmem:[%s1824 + $0x2c] sm:$0xf]
      %v1837 = vld [vmem:[%s1824 + $0x30] sm:$0xf]
      %v1838 = vld [vmem:[%s1824 + $0x34] sm:$0xf]
      %v1839 = vld [vmem:[%s1824 + $0x38] sm:$0xf]
      %v1840 = vld [vmem:[%s1824 + $0x3c] sm:$0xf]
      %v1857 = vunpack.c.l.b16 %v1825
      %v1858 = vunpack.c.l.b16 %v1826
      %v1859 = vunpack.c.l.b16 %v1827
      %v1860 = vunpack.c.l.b16 %v1828
      %v1861 = vunpack.c.l.b16 %v1829
      %v1862 = vunpack.c.l.b16 %v1830
      %v1863 = vunpack.c.l.b16 %v1831
      %v1864 = vunpack.c.l.b16 %v1832
      %v1865 = vunpack.c.l.b16 %v1833
      %v1866 = vunpack.c.l.b16 %v1834
      %v1867 = vunpack.c.l.b16 %v1835
      %v1868 = vunpack.c.l.b16 %v1836
      %v1869 = vunpack.c.l.b16 %v1837
      %v1870 = vunpack.c.l.b16 %v1838
      %v1871 = vunpack.c.l.b16 %v1839
      %v1872 = vunpack.c.l.b16 %v1840
      %v1873 = vpack.c.b16 %v1858, %v1857
      %v1874 = vpack.c.b16 %v1860, %v1859
      %v1875 = vpack.c.b16 %v1862, %v1861
      %v1876 = vpack.c.b16 %v1864, %v1863
      %v1877 = vpack.c.b16 %v1866, %v1865
      %v1878 = vpack.c.b16 %v1868, %v1867
      %v1879 = vpack.c.b16 %v1870, %v1869
      %v1880 = vpack.c.b16 %v1872, %v1871
      %1889 = vmatprep.subr.bf16.mxu0 0
      %1890 = vmatpush1.bf16.msra.mxu0 %v1873
      %1891 = vmatprep.subr.bf16.mxu0 0
      %1892 = vmatpush1.bf16.msra.mxu0 %v1874
      %1893 = vmatprep.subr.bf16.mxu0 0
      %1894 = vmatpush1.bf16.msra.mxu0 %v1875
      %1895 = vmatprep.subr.bf16.mxu0 0
      %1896 = vmatpush1.bf16.msra.mxu0 %v1876
      %1897 = vmatprep.subr.bf16.mxu0 0
      %1898 = vmatpush1.bf16.msra.mxu0 %v1877
      %1899 = vmatprep.subr.bf16.mxu0 0
      %1900 = vmatpush1.bf16.msra.mxu0 %v1878
      %1901 = vmatprep.subr.bf16.mxu0 0
      %1902 = vmatpush1.bf16.msra.mxu0 %v1879
      %1903 = vmatprep.subr.bf16.mxu0 0
      %1904 = vmatpush1.bf16.msra.mxu0 %v1880
      %1905 = vmatprep.subr.bf16.mxu0 0
      %1906 = vmatpush1.bf16.msra.mxu0 0
      %1907 = vmatprep.subr.bf16.mxu0 0
      %1908 = vmatpush1.bf16.msra.mxu0 0
      %1909 = vmatprep.subr.bf16.mxu0 0
      %1910 = vmatpush1.bf16.msra.mxu0 0
      %1911 = vmatprep.subr.bf16.mxu0 0
      %1912 = vmatpush1.bf16.msra.mxu0 0
      %1913 = vmatprep.subr.bf16.mxu0 0
      %1914 = vmatpush1.bf16.msra.mxu0 0
      %1915 = vmatprep.subr.bf16.mxu0 0
      %1916 = vmatpush1.bf16.msra.mxu0 0
      %1917 = vmatprep.subr.bf16.mxu0 0
      %1918 = vmatpush1.bf16.msra.mxu0 0
      %1919 = vmatprep.subr.bf16.mxu0 0
      %1920 = vmatpush1.bf16.msra.mxu0 0
      %1921 = vmatprep.mubr.bf16.mxu0 0
      %1922 = vmatmul.mubr.bf16.gmra.mrb[0].mxu0 %v1823
      %v1923 = vpop.f32.mrb[0].mxu0
      %v1924 = vadd.f32 0.0, %v1923
      %v1925 = vpop.f32.mrb[0].mxu0
      %v1926 = vpop.f32.mrb[0].mxu0
      %v1927 = vpop.f32.mrb[0].mxu0
      %1928 = vdwg.mxu0
      %v1929 = vadd.f32 %v1816, %v1924
      %v1930 = vld [vmem:[%s5] sm:$0x1]
      %v1932 = vlaneseq
      %v1933 = vshrl.u32 %v1932, 7
      %v1934 = vsub.s32 0, %v1933
      %v1935 = vrot.slane %v1930, %v1934
      %v1937 = vadd.f32 %v1929, %v1935
      %1938 = vst [vmem:[#allocation3] sm:$0x1] 0.0
      %1939 = vst [vmem:[#allocation3 + $0x5] sm:$0x1] 0.0
      %v1940 = vmax.f32 %v1937, 0.0
      %1941 = vst [vmem:[#allocation3 + $0x1] sm:$0xf] %v1940
      %v1942 = vld [vmem:[#allocation3] sm:$0xf]
      %v1943 = vpack.c.bf16 %v1942, %v1942
      %v1944 = vld [vmem:[%s6] sm:$0xf]
      %v1945 = vld [vmem:[%s6 + $0x4] sm:$0xf]
      %v1946 = vld [vmem:[%s6 + $0x8] sm:$0xf]
      %v1947 = vld [vmem:[%s6 + $0xc] sm:$0xf]
      %v1948 = vld [vmem:[%s6 + $0x10] sm:$0xf]
      %v1949 = vld [vmem:[%s6 + $0x14] sm:$0xf]
      %v1950 = vld [vmem:[%s6 + $0x18] sm:$0xf]
      %v1951 = vld [vmem:[%s6 + $0x1c] sm:$0xf]
      %v1952 = vld [vmem:[%s6 + $0x20] sm:$0xf]
      %v1953 = vld [vmem:[%s6 + $0x24] sm:$0xf]
      %v1954 = vld [vmem:[%s6 + $0x28] sm:$0xf]
      %v1955 = vld [vmem:[%s6 + $0x2c] sm:$0xf]
      %v1956 = vld [vmem:[%s6 + $0x30] sm:$0xf]
      %v1957 = vld [vmem:[%s6 + $0x34] sm:$0xf]
      %v1958 = vld [vmem:[%s6 + $0x38] sm:$0xf]
      %v1959 = vld [vmem:[%s6 + $0x3c] sm:$0xf]
      %v1960 = vld [vmem:[#allocation3 + $0x1] sm:$0xf]
      %v1961 = vpack.c.bf16 %v1960, %v1960
      %s1962 = scalar_lea.vmem %s6, 64
      %v1963 = vld [vmem:[%s1962] sm:$0xf]
      %v1964 = vld [vmem:[%s1962 + $0x4] sm:$0xf]
      %v1965 = vld [vmem:[%s1962 + $0x8] sm:$0xf]
      %v1966 = vld [vmem:[%s1962 + $0xc] sm:$0xf]
      %v1967 = vld [vmem:[%s1962 + $0x10] sm:$0xf]
      %v1968 = vld [vmem:[%s1962 + $0x14] sm:$0xf]
      %v1969 = vld [vmem:[%s1962 + $0x18] sm:$0xf]
      %v1970 = vld [vmem:[%s1962 + $0x1c] sm:$0xf]
      %v1971 = vld [vmem:[%s1962 + $0x20] sm:$0xf]
      %v1972 = vld [vmem:[%s1962 + $0x24] sm:$0xf]
      %v1973 = vld [vmem:[%s1962 + $0x28] sm:$0xf]
      %v1974 = vld [vmem:[%s1962 + $0x2c] sm:$0xf]
      %v1975 = vld [vmem:[%s1962 + $0x30] sm:$0xf]
      %v1976 = vld [vmem:[%s1962 + $0x34] sm:$0xf]
      %v1977 = vld [vmem:[%s1962 + $0x38] sm:$0xf]
      %v1978 = vld [vmem:[%s1962 + $0x3c] sm:$0xf]
      %v1995 = vunpack.c.l.b16 %v1963
      %v1996 = vunpack.c.l.b16 %v1964
      %v1997 = vunpack.c.l.b16 %v1965
      %v1998 = vunpack.c.l.b16 %v1966
      %v1999 = vunpack.c.l.b16 %v1967
      %v2000 = vunpack.c.l.b16 %v1968
      %v2001 = vunpack.c.l.b16 %v1969
      %v2002 = vunpack.c.l.b16 %v1970
      %v2003 = vunpack.c.l.b16 %v1971
      %v2004 = vunpack.c.l.b16 %v1972
      %v2005 = vunpack.c.l.b16 %v1973
      %v2006 = vunpack.c.l.b16 %v1974
      %v2007 = vunpack.c.l.b16 %v1975
      %v2008 = vunpack.c.l.b16 %v1976
      %v2009 = vunpack.c.l.b16 %v1977
      %v2010 = vunpack.c.l.b16 %v1978
      %v2011 = vpack.c.b16 %v1996, %v1995
      %v2012 = vpack.c.b16 %v1998, %v1997
      %v2013 = vpack.c.b16 %v2000, %v1999
      %v2014 = vpack.c.b16 %v2002, %v2001
      %v2015 = vpack.c.b16 %v2004, %v2003
      %v2016 = vpack.c.b16 %v2006, %v2005
      %v2017 = vpack.c.b16 %v2008, %v2007
      %v2018 = vpack.c.b16 %v2010, %v2009
      %2027 = vmatprep.subr.bf16.mxu0 0
      %2028 = vmatpush1.bf16.msra.mxu0 %v2011
      %2029 = vmatprep.subr.bf16.mxu0 0
      %2030 = vmatpush1.bf16.msra.mxu0 %v2012
      %2031 = vmatprep.subr.bf16.mxu0 0
      %2032 = vmatpush1.bf16.msra.mxu0 %v2013
      %2033 = vmatprep.subr.bf16.mxu0 0
      %2034 = vmatpush1.bf16.msra.mxu0 %v2014
      %2035 = vmatprep.subr.bf16.mxu0 0
      %2036 = vmatpush1.bf16.msra.mxu0 %v2015
      %2037 = vmatprep.subr.bf16.mxu0 0
      %2038 = vmatpush1.bf16.msra.mxu0 %v2016
      %2039 = vmatprep.subr.bf16.mxu0 0
      %2040 = vmatpush1.bf16.msra.mxu0 %v2017
      %2041 = vmatprep.subr.bf16.mxu0 0
      %2042 = vmatpush1.bf16.msra.mxu0 %v2018
      %2043 = vmatprep.subr.bf16.mxu0 0
      %2044 = vmatpush1.bf16.msra.mxu0 0
      %2045 = vmatprep.subr.bf16.mxu0 0
      %2046 = vmatpush1.bf16.msra.mxu0 0
      %2047 = vmatprep.subr.bf16.mxu0 0
      %2048 = vmatpush1.bf16.msra.mxu0 0
      %2049 = vmatprep.subr.bf16.mxu0 0
      %2050 = vmatpush1.bf16.msra.mxu0 0
      %2051 = vmatprep.subr.bf16.mxu0 0
      %2052 = vmatpush1.bf16.msra.mxu0 0
      %2053 = vmatprep.subr.bf16.mxu0 0
      %2054 = vmatpush1.bf16.msra.mxu0 0
      %2055 = vmatprep.subr.bf16.mxu0 0
      %2056 = vmatpush1.bf16.msra.mxu0 0
      %2057 = vmatprep.subr.bf16.mxu0 0
      %2058 = vmatpush1.bf16.msra.mxu0 0
      %2059 = vmatprep.mubr.bf16.mxu0 0
      %2060 = vmatmul.mubr.bf16.gmra.mrb[0].mxu0 %v1961
      %v2061 = vpop.f32.mrb[0].mxu0
      %v2062 = vadd.f32 0.0, %v2061
      %v2063 = vpop.f32.mrb[0].mxu0
      %v2064 = vpop.f32.mrb[0].mxu0
      %v2065 = vpop.f32.mrb[0].mxu0
      %2066 = vdwg.mxu0
      %v2083 = vunpack.c.l.b16 %v1944
      %v2084 = vunpack.c.l.b16 %v1945
      %v2085 = vunpack.c.l.b16 %v1946
      %v2086 = vunpack.c.l.b16 %v1947
      %v2087 = vunpack.c.l.b16 %v1948
      %v2088 = vunpack.c.l.b16 %v1949
      %v2089 = vunpack.c.l.b16 %v1950
      %v2090 = vunpack.c.l.b16 %v1951
      %v2091 = vunpack.c.l.b16 %v1952
      %v2092 = vunpack.c.l.b16 %v1953
      %v2093 = vunpack.c.l.b16 %v1954
      %v2094 = vunpack.c.l.b16 %v1955
      %v2095 = vunpack.c.l.b16 %v1956
      %v2096 = vunpack.c.l.b16 %v1957
      %v2097 = vunpack.c.l.b16 %v1958
      %v2098 = vunpack.c.l.b16 %v1959
      %v2099 = vpack.c.b16 %v2084, %v2083
      %v2100 = vpack.c.b16 %v2086, %v2085
      %v2101 = vpack.c.b16 %v2088, %v2087
      %v2102 = vpack.c.b16 %v2090, %v2089
      %v2103 = vpack.c.b16 %v2092, %v2091
      %v2104 = vpack.c.b16 %v2094, %v2093
      %v2105 = vpack.c.b16 %v2096, %v2095
      %v2106 = vpack.c.b16 %v2098, %v2097
      %2115 = vmatprep.subr.bf16.mxu0 0
      %2116 = vmatpush1.bf16.msra.mxu0 %v2099
      %2117 = vmatprep.subr.bf16.mxu0 0
      %2118 = vmatpush1.bf16.msra.mxu0 %v2100
      %2119 = vmatprep.subr.bf16.mxu0 0
      %2120 = vmatpush1.bf16.msra.mxu0 %v2101
      %2121 = vmatprep.subr.bf16.mxu0 0
      %2122 = vmatpush1.bf16.msra.mxu0 %v2102
      %2123 = vmatprep.subr.bf16.mxu0 0
      %2124 = vmatpush1.bf16.msra.mxu0 %v2103
      %2125 = vmatprep.subr.bf16.mxu0 0
      %2126 = vmatpush1.bf16.msra.mxu0 %v2104
      %2127 = vmatprep.subr.bf16.mxu0 0
      %2128 = vmatpush1.bf16.msra.mxu0 %v2105
      %2129 = vmatprep.subr.bf16.mxu0 0
      %2130 = vmatpush1.bf16.msra.mxu0 %v2106
      %2131 = vmatprep.subr.bf16.mxu0 0
      %2132 = vmatpush1.bf16.msra.mxu0 0
      %2133 = vmatprep.subr.bf16.mxu0 0
      %2134 = vmatpush1.bf16.msra.mxu0 0
      %2135 = vmatprep.subr.bf16.mxu0 0
      %2136 = vmatpush1.bf16.msra.mxu0 0
      %2137 = vmatprep.subr.bf16.mxu0 0
      %2138 = vmatpush1.bf16.msra.mxu0 0
      %2139 = vmatprep.subr.bf16.mxu0 0
      %2140 = vmatpush1.bf16.msra.mxu0 0
      %2141 = vmatprep.subr.bf16.mxu0 0
      %2142 = vmatpush1.bf16.msra.mxu0 0
      %2143 = vmatprep.subr.bf16.mxu0 0
      %2144 = vmatpush1.bf16.msra.mxu0 0
      %2145 = vmatprep.subr.bf16.mxu0 0
      %2146 = vmatpush1.bf16.msra.mxu0 0
      %2147 = vmatprep.mubr.bf16.mxu0 0
      %2148 = vmatmul.mubr.bf16.gmra.mrb[0].mxu0 %v1943
      %v2149 = vpop.f32.mrb[0].mxu0
      %v2150 = vadd.f32 %v2062, %v2149
      %v2151 = vpop.f32.mrb[0].mxu0
      %v2152 = vpop.f32.mrb[0].mxu0
      %v2153 = vpop.f32.mrb[0].mxu0
      %2154 = vdwg.mxu0
      %v2155 = vld [vmem:[#allocation3 + $0x2] sm:$0xf]
      %v2156 = vpack.c.bf16 %v2155, %v2155
      %s2157 = scalar_lea.vmem %s6, 128
      %v2158 = vld [vmem:[%s2157] sm:$0xf]
      %v2159 = vld [vmem:[%s2157 + $0x4] sm:$0xf]
      %v2160 = vld [vmem:[%s2157 + $0x8] sm:$0xf]
      %v2161 = vld [vmem:[%s2157 + $0xc] sm:$0xf]
      %v2162 = vld [vmem:[%s2157 + $0x10] sm:$0xf]
      %v2163 = vld [vmem:[%s2157 + $0x14] sm:$0xf]
      %v2164 = vld [vmem:[%s2157 + $0x18] sm:$0xf]
      %v2165 = vld [vmem:[%s2157 + $0x1c] sm:$0xf]
      %v2166 = vld [vmem:[%s2157 + $0x20] sm:$0xf]
      %v2167 = vld [vmem:[%s2157 + $0x24] sm:$0xf]
      %v2168 = vld [vmem:[%s2157 + $0x28] sm:$0xf]
      %v2169 = vld [vmem:[%s2157 + $0x2c] sm:$0xf]
      %v2170 = vld [vmem:[%s2157 + $0x30] sm:$0xf]
      %v2171 = vld [vmem:[%s2157 + $0x34] sm:$0xf]
      %v2172 = vld [vmem:[%s2157 + $0x38] sm:$0xf]
      %v2173 = vld [vmem:[%s2157 + $0x3c] sm:$0xf]
      %v2190 = vunpack.c.l.b16 %v2158
      %v2191 = vunpack.c.l.b16 %v2159
      %v2192 = vunpack.c.l.b16 %v2160
      %v2193 = vunpack.c.l.b16 %v2161
      %v2194 = vunpack.c.l.b16 %v2162
      %v2195 = vunpack.c.l.b16 %v2163
      %v2196 = vunpack.c.l.b16 %v2164
      %v2197 = vunpack.c.l.b16 %v2165
      %v2198 = vunpack.c.l.b16 %v2166
      %v2199 = vunpack.c.l.b16 %v2167
      %v2200 = vunpack.c.l.b16 %v2168
      %v2201 = vunpack.c.l.b16 %v2169
      %v2202 = vunpack.c.l.b16 %v2170
      %v2203 = vunpack.c.l.b16 %v2171
      %v2204 = vunpack.c.l.b16 %v2172
      %v2205 = vunpack.c.l.b16 %v2173
      %v2206 = vpack.c.b16 %v2191, %v2190
      %v2207 = vpack.c.b16 %v2193, %v2192
      %v2208 = vpack.c.b16 %v2195, %v2194
      %v2209 = vpack.c.b16 %v2197, %v2196
      %v2210 = vpack.c.b16 %v2199, %v2198
      %v2211 = vpack.c.b16 %v2201, %v2200
      %v2212 = vpack.c.b16 %v2203, %v2202
      %v2213 = vpack.c.b16 %v2205, %v2204
      %2222 = vmatprep.subr.bf16.mxu0 0
      %2223 = vmatpush1.bf16.msra.mxu0 %v2206
      %2224 = vmatprep.subr.bf16.mxu0 0
      %2225 = vmatpush1.bf16.msra.mxu0 %v2207
      %2226 = vmatprep.subr.bf16.mxu0 0
      %2227 = vmatpush1.bf16.msra.mxu0 %v2208
      %2228 = vmatprep.subr.bf16.mxu0 0
      %2229 = vmatpush1.bf16.msra.mxu0 %v2209
      %2230 = vmatprep.subr.bf16.mxu0 0
      %2231 = vmatpush1.bf16.msra.mxu0 %v2210
      %2232 = vmatprep.subr.bf16.mxu0 0
      %2233 = vmatpush1.bf16.msra.mxu0 %v2211
      %2234 = vmatprep.subr.bf16.mxu0 0
      %2235 = vmatpush1.bf16.msra.mxu0 %v2212
      %2236 = vmatprep.subr.bf16.mxu0 0
      %2237 = vmatpush1.bf16.msra.mxu0 %v2213
      %2238 = vmatprep.subr.bf16.mxu0 0
      %2239 = vmatpush1.bf16.msra.mxu0 0
      %2240 = vmatprep.subr.bf16.mxu0 0
      %2241 = vmatpush1.bf16.msra.mxu0 0
      %2242 = vmatprep.subr.bf16.mxu0 0
      %2243 = vmatpush1.bf16.msra.mxu0 0
      %2244 = vmatprep.subr.bf16.mxu0 0
      %2245 = vmatpush1.bf16.msra.mxu0 0
      %2246 = vmatprep.subr.bf16.mxu0 0
      %2247 = vmatpush1.bf16.msra.mxu0 0
      %2248 = vmatprep.subr.bf16.mxu0 0
      %2249 = vmatpush1.bf16.msra.mxu0 0
      %2250 = vmatprep.subr.bf16.mxu0 0
      %2251 = vmatpush1.bf16.msra.mxu0 0
      %2252 = vmatprep.subr.bf16.mxu0 0
      %2253 = vmatpush1.bf16.msra.mxu0 0
      %2254 = vmatprep.mubr.bf16.mxu0 0
      %2255 = vmatmul.mubr.bf16.gmra.mrb[0].mxu0 %v2156
      %v2256 = vpop.f32.mrb[0].mxu0
      %v2257 = vadd.f32 0.0, %v2256
      %v2258 = vpop.f32.mrb[0].mxu0
      %v2259 = vpop.f32.mrb[0].mxu0
      %v2260 = vpop.f32.mrb[0].mxu0
      %2261 = vdwg.mxu0
      %v2262 = vadd.f32 %v2150, %v2257
      %v2263 = vld [vmem:[%s7] sm:$0x1]
      %v2265 = vlaneseq
      %v2266 = vshrl.u32 %v2265, 7
      %v2267 = vsub.s32 0, %v2266
      %v2268 = vrot.slane %v2263, %v2267
      %v2270 = vadd.f32 %v2262, %v2268
      %v2271 = vld [vmem:[#allocation2 + $0x1] sm:$0xf]
      %v2272 = vadd.f32 %v2270, %v2271
      %2273 = vst [vmem:[#allocation2 + $0x1] sm:$0xf] %v2272
      %v2274 = vld [vmem:[#allocation2] sm:$0xf]
      %v2275 = vmax.f32 %v2274, 0.0
      %v2276 = vpack.c.bf16 %v2275, %v2275
      %v2277 = vld [vmem:[%s8] sm:$0xf]
      %v2278 = vld [vmem:[%s8 + $0x4] sm:$0xf]
      %v2279 = vld [vmem:[%s8 + $0x8] sm:$0xf]
      %v2280 = vld [vmem:[%s8 + $0xc] sm:$0xf]
      %v2281 = vld [vmem:[%s8 + $0x10] sm:$0xf]
      %v2282 = vld [vmem:[%s8 + $0x14] sm:$0xf]
      %v2283 = vld [vmem:[%s8 + $0x18] sm:$0xf]
      %v2284 = vld [vmem:[%s8 + $0x1c] sm:$0xf]
      %v2285 = vld [vmem:[%s8 + $0x20] sm:$0xf]
      %v2286 = vld [vmem:[%s8 + $0x24] sm:$0xf]
      %v2287 = vld [vmem:[%s8 + $0x28] sm:$0xf]
      %v2288 = vld [vmem:[%s8 + $0x2c] sm:$0xf]
      %v2289 = vld [vmem:[%s8 + $0x30] sm:$0xf]
      %v2290 = vld [vmem:[%s8 + $0x34] sm:$0xf]
      %v2291 = vld [vmem:[%s8 + $0x38] sm:$0xf]
      %v2292 = vld [vmem:[%s8 + $0x3c] sm:$0xf]
      %v2293 = vld [vmem:[#allocation2 + $0x1] sm:$0xf]
      %v2294 = vmax.f32 %v2293, 0.0
      %v2295 = vpack.c.bf16 %v2294, %v2294
      %s2296 = scalar_lea.vmem %s8, 64
      %v2297 = vld [vmem:[%s2296] sm:$0xf]
      %v2298 = vld [vmem:[%s2296 + $0x4] sm:$0xf]
      %v2299 = vld [vmem:[%s2296 + $0x8] sm:$0xf]
      %v2300 = vld [vmem:[%s2296 + $0xc] sm:$0xf]
      %v2301 = vld [vmem:[%s2296 + $0x10] sm:$0xf]
      %v2302 = vld [vmem:[%s2296 + $0x14] sm:$0xf]
      %v2303 = vld [vmem:[%s2296 + $0x18] sm:$0xf]
      %v2304 = vld [vmem:[%s2296 + $0x1c] sm:$0xf]
      %v2305 = vld [vmem:[%s2296 + $0x20] sm:$0xf]
      %v2306 = vld [vmem:[%s2296 + $0x24] sm:$0xf]
      %v2307 = vld [vmem:[%s2296 + $0x28] sm:$0xf]
      %v2308 = vld [vmem:[%s2296 + $0x2c] sm:$0xf]
      %v2309 = vld [vmem:[%s2296 + $0x30] sm:$0xf]
      %v2310 = vld [vmem:[%s2296 + $0x34] sm:$0xf]
      %v2311 = vld [vmem:[%s2296 + $0x38] sm:$0xf]
      %v2312 = vld [vmem:[%s2296 + $0x3c] sm:$0xf]
      %v2329 = vunpack.c.l.b16 %v2297
      %v2330 = vunpack.c.l.b16 %v2298
      %v2331 = vunpack.c.l.b16 %v2299
      %v2332 = vunpack.c.l.b16 %v2300
      %v2333 = vunpack.c.l.b16 %v2301
      %v2334 = vunpack.c.l.b16 %v2302
      %v2335 = vunpack.c.l.b16 %v2303
      %v2336 = vunpack.c.l.b16 %v2304
      %v2337 = vunpack.c.l.b16 %v2305
      %v2338 = vunpack.c.l.b16 %v2306
      %v2339 = vunpack.c.l.b16 %v2307
      %v2340 = vunpack.c.l.b16 %v2308
      %v2341 = vunpack.c.l.b16 %v2309
      %v2342 = vunpack.c.l.b16 %v2310
      %v2343 = vunpack.c.l.b16 %v2311
      %v2344 = vunpack.c.l.b16 %v2312
      %v2345 = vpack.c.b16 %v2330, %v2329
      %v2346 = vpack.c.b16 %v2332, %v2331
      %v2347 = vpack.c.b16 %v2334, %v2333
      %v2348 = vpack.c.b16 %v2336, %v2335
      %v2349 = vpack.c.b16 %v2338, %v2337
      %v2350 = vpack.c.b16 %v2340, %v2339
      %v2351 = vpack.c.b16 %v2342, %v2341
      %v2352 = vpack.c.b16 %v2344, %v2343
      %2361 = vmatprep.subr.bf16.mxu0 0
      %2362 = vmatpush1.bf16.msra.mxu0 %v2345
      %2363 = vmatprep.subr.bf16.mxu0 0
      %2364 = vmatpush1.bf16.msra.mxu0 %v2346
      %2365 = vmatprep.subr.bf16.mxu0 0
      %2366 = vmatpush1.bf16.msra.mxu0 %v2347
      %2367 = vmatprep.subr.bf16.mxu0 0
      %2368 = vmatpush1.bf16.msra.mxu0 %v2348
      %2369 = vmatprep.subr.bf16.mxu0 0
      %2370 = vmatpush1.bf16.msra.mxu0 %v2349
      %2371 = vmatprep.subr.bf16.mxu0 0
      %2372 = vmatpush1.bf16.msra.mxu0 %v2350
      %2373 = vmatprep.subr.bf16.mxu0 0
      %2374 = vmatpush1.bf16.msra.mxu0 %v2351
      %2375 = vmatprep.subr.bf16.mxu0 0
      %2376 = vmatpush1.bf16.msra.mxu0 %v2352
      %2377 = vmatprep.subr.bf16.mxu0 0
      %2378 = vmatpush1.bf16.msra.mxu0 0
      %2379 = vmatprep.subr.bf16.mxu0 0
      %2380 = vmatpush1.bf16.msra.mxu0 0
      %2381 = vmatprep.subr.bf16.mxu0 0
      %2382 = vmatpush1.bf16.msra.mxu0 0
      %2383 = vmatprep.subr.bf16.mxu0 0
      %2384 = vmatpush1.bf16.msra.mxu0 0
      %2385 = vmatprep.subr.bf16.mxu0 0
      %2386 = vmatpush1.bf16.msra.mxu0 0
      %2387 = vmatprep.subr.bf16.mxu0 0
      %2388 = vmatpush1.bf16.msra.mxu0 0
      %2389 = vmatprep.subr.bf16.mxu0 0
      %2390 = vmatpush1.bf16.msra.mxu0 0
      %2391 = vmatprep.subr.bf16.mxu0 0
      %2392 = vmatpush1.bf16.msra.mxu0 0
      %2393 = vmatprep.mubr.bf16.mxu0 0
      %2394 = vmatmul.mubr.bf16.gmra.mrb[0].mxu0 %v2295
      %v2395 = vpop.f32.mrb[0].mxu0
      %v2396 = vadd.f32 0.0, %v2395
      %v2397 = vpop.f32.mrb[0].mxu0
      %v2398 = vpop.f32.mrb[0].mxu0
      %v2399 = vpop.f32.mrb[0].mxu0
      %2400 = vdwg.mxu0
      %v2417 = vunpack.c.l.b16 %v2277
      %v2418 = vunpack.c.l.b16 %v2278
      %v2419 = vunpack.c.l.b16 %v2279
      %v2420 = vunpack.c.l.b16 %v2280
      %v2421 = vunpack.c.l.b16 %v2281
      %v2422 = vunpack.c.l.b16 %v2282
      %v2423 = vunpack.c.l.b16 %v2283
      %v2424 = vunpack.c.l.b16 %v2284
      %v2425 = vunpack.c.l.b16 %v2285
      %v2426 = vunpack.c.l.b16 %v2286
      %v2427 = vunpack.c.l.b16 %v2287
      %v2428 = vunpack.c.l.b16 %v2288
      %v2429 = vunpack.c.l.b16 %v2289
      %v2430 = vunpack.c.l.b16 %v2290
      %v2431 = vunpack.c.l.b16 %v2291
      %v2432 = vunpack.c.l.b16 %v2292
      %v2433 = vpack.c.b16 %v2418, %v2417
      %v2434 = vpack.c.b16 %v2420, %v2419
      %v2435 = vpack.c.b16 %v2422, %v2421
      %v2436 = vpack.c.b16 %v2424, %v2423
      %v2437 = vpack.c.b16 %v2426, %v2425
      %v2438 = vpack.c.b16 %v2428, %v2427
      %v2439 = vpack.c.b16 %v2430, %v2429
      %v2440 = vpack.c.b16 %v2432, %v2431
      %2449 = vmatprep.subr.bf16.mxu0 0
      %2450 = vmatpush1.bf16.msra.mxu0 %v2433
      %2451 = vmatprep.subr.bf16.mxu0 0
      %2452 = vmatpush1.bf16.msra.mxu0 %v2434
      %2453 = vmatprep.subr.bf16.mxu0 0
      %2454 = vmatpush1.bf16.msra.mxu0 %v2435
      %2455 = vmatprep.subr.bf16.mxu0 0
      %2456 = vmatpush1.bf16.msra.mxu0 %v2436
      %2457 = vmatprep.subr.bf16.mxu0 0
      %2458 = vmatpush1.bf16.msra.mxu0 %v2437
      %2459 = vmatprep.subr.bf16.mxu0 0
      %2460 = vmatpush1.bf16.msra.mxu0 %v2438
      %2461 = vmatprep.subr.bf16.mxu0 0
      %2462 = vmatpush1.bf16.msra.mxu0 %v2439
      %2463 = vmatprep.subr.bf16.mxu0 0
      %2464 = vmatpush1.bf16.msra.mxu0 %v2440
      %2465 = vmatprep.subr.bf16.mxu0 0
      %2466 = vmatpush1.bf16.msra.mxu0 0
      %2467 = vmatprep.subr.bf16.mxu0 0
      %2468 = vmatpush1.bf16.msra.mxu0 0
      %2469 = vmatprep.subr.bf16.mxu0 0
      %2470 = vmatpush1.bf16.msra.mxu0 0
      %2471 = vmatprep.subr.bf16.mxu0 0
      %2472 = vmatpush1.bf16.msra.mxu0 0
      %2473 = vmatprep.subr.bf16.mxu0 0
      %2474 = vmatpush1.bf16.msra.mxu0 0
      %2475 = vmatprep.subr.bf16.mxu0 0
      %2476 = vmatpush1.bf16.msra.mxu0 0
      %2477 = vmatprep.subr.bf16.mxu0 0
      %2478 = vmatpush1.bf16.msra.mxu0 0
      %2479 = vmatprep.subr.bf16.mxu0 0
      %2480 = vmatpush1.bf16.msra.mxu0 0
      %2481 = vmatprep.mubr.bf16.mxu0 0
      %2482 = vmatmul.mubr.bf16.gmra.mrb[0].mxu0 %v2276
      %v2483 = vpop.f32.mrb[0].mxu0
      %v2484 = vadd.f32 %v2396, %v2483
      %v2485 = vpop.f32.mrb[0].mxu0
      %v2486 = vpop.f32.mrb[0].mxu0
      %v2487 = vpop.f32.mrb[0].mxu0
      %2488 = vdwg.mxu0
      %v2489 = vld [vmem:[#allocation2 + $0x2] sm:$0xf]
      %v2490 = vmax.f32 %v2489, 0.0
      %v2491 = vpack.c.bf16 %v2490, %v2490
      %s2492 = scalar_lea.vmem %s8, 128
      %v2493 = vld [vmem:[%s2492] sm:$0xf]
      %v2494 = vld [vmem:[%s2492 + $0x4] sm:$0xf]
      %v2495 = vld [vmem:[%s2492 + $0x8] sm:$0xf]
      %v2496 = vld [vmem:[%s2492 + $0xc] sm:$0xf]
      %v2497 = vld [vmem:[%s2492 + $0x10] sm:$0xf]
      %v2498 = vld [vmem:[%s2492 + $0x14] sm:$0xf]
      %v2499 = vld [vmem:[%s2492 + $0x18] sm:$0xf]
      %v2500 = vld [vmem:[%s2492 + $0x1c] sm:$0xf]
      %v2501 = vld [vmem:[%s2492 + $0x20] sm:$0xf]
      %v2502 = vld [vmem:[%s2492 + $0x24] sm:$0xf]
      %v2503 = vld [vmem:[%s2492 + $0x28] sm:$0xf]
      %v2504 = vld [vmem:[%s2492 + $0x2c] sm:$0xf]
      %v2505 = vld [vmem:[%s2492 + $0x30] sm:$0xf]
      %v2506 = vld [vmem:[%s2492 + $0x34] sm:$0xf]
      %v2507 = vld [vmem:[%s2492 + $0x38] sm:$0xf]
      %v2508 = vld [vmem:[%s2492 + $0x3c] sm:$0xf]
      %v2525 = vunpack.c.l.b16 %v2493
      %v2526 = vunpack.c.l.b16 %v2494
      %v2527 = vunpack.c.l.b16 %v2495
      %v2528 = vunpack.c.l.b16 %v2496
      %v2529 = vunpack.c.l.b16 %v2497
      %v2530 = vunpack.c.l.b16 %v2498
      %v2531 = vunpack.c.l.b16 %v2499
      %v2532 = vunpack.c.l.b16 %v2500
      %v2533 = vunpack.c.l.b16 %v2501
      %v2534 = vunpack.c.l.b16 %v2502
      %v2535 = vunpack.c.l.b16 %v2503
      %v2536 = vunpack.c.l.b16 %v2504
      %v2537 = vunpack.c.l.b16 %v2505
      %v2538 = vunpack.c.l.b16 %v2506
      %v2539 = vunpack.c.l.b16 %v2507
      %v2540 = vunpack.c.l.b16 %v2508
      %v2541 = vpack.c.b16 %v2526, %v2525
      %v2542 = vpack.c.b16 %v2528, %v2527
      %v2543 = vpack.c.b16 %v2530, %v2529
      %v2544 = vpack.c.b16 %v2532, %v2531
      %v2545 = vpack.c.b16 %v2534, %v2533
      %v2546 = vpack.c.b16 %v2536, %v2535
      %v2547 = vpack.c.b16 %v2538, %v2537
      %v2548 = vpack.c.b16 %v2540, %v2539
      %2557 = vmatprep.subr.bf16.mxu0 0
      %2558 = vmatpush1.bf16.msra.mxu0 %v2541
      %2559 = vmatprep.subr.bf16.mxu0 0
      %2560 = vmatpush1.bf16.msra.mxu0 %v2542
      %2561 = vmatprep.subr.bf16.mxu0 0
      %2562 = vmatpush1.bf16.msra.mxu0 %v2543
      %2563 = vmatprep.subr.bf16.mxu0 0
      %2564 = vmatpush1.bf16.msra.mxu0 %v2544
      %2565 = vmatprep.subr.bf16.mxu0 0
      %2566 = vmatpush1.bf16.msra.mxu0 %v2545
      %2567 = vmatprep.subr.bf16.mxu0 0
      %2568 = vmatpush1.bf16.msra.mxu0 %v2546
      %2569 = vmatprep.subr.bf16.mxu0 0
      %2570 = vmatpush1.bf16.msra.mxu0 %v2547
      %2571 = vmatprep.subr.bf16.mxu0 0
      %2572 = vmatpush1.bf16.msra.mxu0 %v2548
      %2573 = vmatprep.subr.bf16.mxu0 0
      %2574 = vmatpush1.bf16.msra.mxu0 0
      %2575 = vmatprep.subr.bf16.mxu0 0
      %2576 = vmatpush1.bf16.msra.mxu0 0
      %2577 = vmatprep.subr.bf16.mxu0 0
      %2578 = vmatpush1.bf16.msra.mxu0 0
      %2579 = vmatprep.subr.bf16.mxu0 0
      %2580 = vmatpush1.bf16.msra.mxu0 0
      %2581 = vmatprep.subr.bf16.mxu0 0
      %2582 = vmatpush1.bf16.msra.mxu0 0
      %2583 = vmatprep.subr.bf16.mxu0 0
      %2584 = vmatpush1.bf16.msra.mxu0 0
      %2585 = vmatprep.subr.bf16.mxu0 0
      %2586 = vmatpush1.bf16.msra.mxu0 0
      %2587 = vmatprep.subr.bf16.mxu0 0
      %2588 = vmatpush1.bf16.msra.mxu0 0
      %2589 = vmatprep.mubr.bf16.mxu0 0
      %2590 = vmatmul.mubr.bf16.gmra.mrb[0].mxu0 %v2491
      %v2591 = vpop.f32.mrb[0].mxu0
      %v2592 = vadd.f32 0.0, %v2591
      %v2593 = vpop.f32.mrb[0].mxu0
      %v2594 = vpop.f32.mrb[0].mxu0
      %v2595 = vpop.f32.mrb[0].mxu0
      %2596 = vdwg.mxu0
      %v2597 = vadd.f32 %v2484, %v2592
      %v2598 = vld [vmem:[%s9] sm:$0x1]
      %v2600 = vlaneseq
      %v2601 = vshrl.u32 %v2600, 7
      %v2602 = vsub.s32 0, %v2601
      %v2603 = vrot.slane %v2598, %v2602
      %v2605 = vadd.f32 %v2597, %v2603
      %2606 = vst [vmem:[#allocation3] sm:$0x1] 0.0
      %2607 = vst [vmem:[#allocation3 + $0x5] sm:$0x1] 0.0
      %v2608 = vmax.f32 %v2605, 0.0
      %2609 = vst [vmem:[#allocation3 + $0x1] sm:$0xf] %v2608
      %v2610 = vld [vmem:[#allocation3] sm:$0xf]
      %v2611 = vpack.c.bf16 %v2610, %v2610
      %v2612 = vld [vmem:[%s10] sm:$0xf]
      %v2613 = vld [vmem:[%s10 + $0x4] sm:$0xf]
      %v2614 = vld [vmem:[%s10 + $0x8] sm:$0xf]
      %v2615 = vld [vmem:[%s10 + $0xc] sm:$0xf]
      %v2616 = vld [vmem:[%s10 + $0x10] sm:$0xf]
      %v2617 = vld [vmem:[%s10 + $0x14] sm:$0xf]
      %v2618 = vld [vmem:[%s10 + $0x18] sm:$0xf]
      %v2619 = vld [vmem:[%s10 + $0x1c] sm:$0xf]
      %v2620 = vld [vmem:[%s10 + $0x20] sm:$0xf]
      %v2621 = vld [vmem:[%s10 + $0x24] sm:$0xf]
      %v2622 = vld [vmem:[%s10 + $0x28] sm:$0xf]
      %v2623 = vld [vmem:[%s10 + $0x2c] sm:$0xf]
      %v2624 = vld [vmem:[%s10 + $0x30] sm:$0xf]
      %v2625 = vld [vmem:[%s10 + $0x34] sm:$0xf]
      %v2626 = vld [vmem:[%s10 + $0x38] sm:$0xf]
      %v2627 = vld [vmem:[%s10 + $0x3c] sm:$0xf]
      %v2628 = vld [vmem:[#allocation3 + $0x1] sm:$0xf]
      %v2629 = vpack.c.bf16 %v2628, %v2628
      %s2630 = scalar_lea.vmem %s10, 64
      %v2631 = vld [vmem:[%s2630] sm:$0xf]
      %v2632 = vld [vmem:[%s2630 + $0x4] sm:$0xf]
      %v2633 = vld [vmem:[%s2630 + $0x8] sm:$0xf]
      %v2634 = vld [vmem:[%s2630 + $0xc] sm:$0xf]
      %v2635 = vld [vmem:[%s2630 + $0x10] sm:$0xf]
      %v2636 = vld [vmem:[%s2630 + $0x14] sm:$0xf]
      %v2637 = vld [vmem:[%s2630 + $0x18] sm:$0xf]
      %v2638 = vld [vmem:[%s2630 + $0x1c] sm:$0xf]
      %v2639 = vld [vmem:[%s2630 + $0x20] sm:$0xf]
      %v2640 = vld [vmem:[%s2630 + $0x24] sm:$0xf]
      %v2641 = vld [vmem:[%s2630 + $0x28] sm:$0xf]
      %v2642 = vld [vmem:[%s2630 + $0x2c] sm:$0xf]
      %v2643 = vld [vmem:[%s2630 + $0x30] sm:$0xf]
      %v2644 = vld [vmem:[%s2630 + $0x34] sm:$0xf]
      %v2645 = vld [vmem:[%s2630 + $0x38] sm:$0xf]
      %v2646 = vld [vmem:[%s2630 + $0x3c] sm:$0xf]
      %v2663 = vunpack.c.l.b16 %v2631
      %v2664 = vunpack.c.l.b16 %v2632
      %v2665 = vunpack.c.l.b16 %v2633
      %v2666 = vunpack.c.l.b16 %v2634
      %v2667 = vunpack.c.l.b16 %v2635
      %v2668 = vunpack.c.l.b16 %v2636
      %v2669 = vunpack.c.l.b16 %v2637
      %v2670 = vunpack.c.l.b16 %v2638
      %v2671 = vunpack.c.l.b16 %v2639
      %v2672 = vunpack.c.l.b16 %v2640
      %v2673 = vunpack.c.l.b16 %v2641
      %v2674 = vunpack.c.l.b16 %v2642
      %v2675 = vunpack.c.l.b16 %v2643
      %v2676 = vunpack.c.l.b16 %v2644
      %v2677 = vunpack.c.l.b16 %v2645
      %v2678 = vunpack.c.l.b16 %v2646
      %v2679 = vpack.c.b16 %v2664, %v2663
      %v2680 = vpack.c.b16 %v2666, %v2665
      %v2681 = vpack.c.b16 %v2668, %v2667
      %v2682 = vpack.c.b16 %v2670, %v2669
      %v2683 = vpack.c.b16 %v2672, %v2671
      %v2684 = vpack.c.b16 %v2674, %v2673
      %v2685 = vpack.c.b16 %v2676, %v2675
      %v2686 = vpack.c.b16 %v2678, %v2677
      %2695 = vmatprep.subr.bf16.mxu0 0
      %2696 = vmatpush1.bf16.msra.mxu0 %v2679
      %2697 = vmatprep.subr.bf16.mxu0 0
      %2698 = vmatpush1.bf16.msra.mxu0 %v2680
      %2699 = vmatprep.subr.bf16.mxu0 0
      %2700 = vmatpush1.bf16.msra.mxu0 %v2681
      %2701 = vmatprep.subr.bf16.mxu0 0
      %2702 = vmatpush1.bf16.msra.mxu0 %v2682
      %2703 = vmatprep.subr.bf16.mxu0 0
      %2704 = vmatpush1.bf16.msra.mxu0 %v2683
      %2705 = vmatprep.subr.bf16.mxu0 0
      %2706 = vmatpush1.bf16.msra.mxu0 %v2684
      %2707 = vmatprep.subr.bf16.mxu0 0
      %2708 = vmatpush1.bf16.msra.mxu0 %v2685
      %2709 = vmatprep.subr.bf16.mxu0 0
      %2710 = vmatpush1.bf16.msra.mxu0 %v2686
      %2711 = vmatprep.subr.bf16.mxu0 0
      %2712 = vmatpush1.bf16.msra.mxu0 0
      %2713 = vmatprep.subr.bf16.mxu0 0
      %2714 = vmatpush1.bf16.msra.mxu0 0
      %2715 = vmatprep.subr.bf16.mxu0 0
      %2716 = vmatpush1.bf16.msra.mxu0 0
      %2717 = vmatprep.subr.bf16.mxu0 0
      %2718 = vmatpush1.bf16.msra.mxu0 0
      %2719 = vmatprep.subr.bf16.mxu0 0
      %2720 = vmatpush1.bf16.msra.mxu0 0
      %2721 = vmatprep.subr.bf16.mxu0 0
      %2722 = vmatpush1.bf16.msra.mxu0 0
      %2723 = vmatprep.subr.bf16.mxu0 0
      %2724 = vmatpush1.bf16.msra.mxu0 0
      %2725 = vmatprep.subr.bf16.mxu0 0
      %2726 = vmatpush1.bf16.msra.mxu0 0
      %2727 = vmatprep.mubr.bf16.mxu0 0
      %2728 = vmatmul.mubr.bf16.gmra.mrb[0].mxu0 %v2629
      %v2729 = vpop.f32.mrb[0].mxu0
      %v2730 = vadd.f32 0.0, %v2729
      %v2731 = vpop.f32.mrb[0].mxu0
      %v2732 = vpop.f32.mrb[0].mxu0
      %v2733 = vpop.f32.mrb[0].mxu0
      %2734 = vdwg.mxu0
      %v2751 = vunpack.c.l.b16 %v2612
      %v2752 = vunpack.c.l.b16 %v2613
      %v2753 = vunpack.c.l.b16 %v2614
      %v2754 = vunpack.c.l.b16 %v2615
      %v2755 = vunpack.c.l.b16 %v2616
      %v2756 = vunpack.c.l.b16 %v2617
      %v2757 = vunpack.c.l.b16 %v2618
      %v2758 = vunpack.c.l.b16 %v2619
      %v2759 = vunpack.c.l.b16 %v2620
      %v2760 = vunpack.c.l.b16 %v2621
      %v2761 = vunpack.c.l.b16 %v2622
      %v2762 = vunpack.c.l.b16 %v2623
      %v2763 = vunpack.c.l.b16 %v2624
      %v2764 = vunpack.c.l.b16 %v2625
      %v2765 = vunpack.c.l.b16 %v2626
      %v2766 = vunpack.c.l.b16 %v2627
      %v2767 = vpack.c.b16 %v2752, %v2751
      %v2768 = vpack.c.b16 %v2754, %v2753
      %v2769 = vpack.c.b16 %v2756, %v2755
      %v2770 = vpack.c.b16 %v2758, %v2757
      %v2771 = vpack.c.b16 %v2760, %v2759
      %v2772 = vpack.c.b16 %v2762, %v2761
      %v2773 = vpack.c.b16 %v2764, %v2763
      %v2774 = vpack.c.b16 %v2766, %v2765
      %2783 = vmatprep.subr.bf16.mxu0 0
      %2784 = vmatpush1.bf16.msra.mxu0 %v2767
      %2785 = vmatprep.subr.bf16.mxu0 0
      %2786 = vmatpush1.bf16.msra.mxu0 %v2768
      %2787 = vmatprep.subr.bf16.mxu0 0
      %2788 = vmatpush1.bf16.msra.mxu0 %v2769
      %2789 = vmatprep.subr.bf16.mxu0 0
      %2790 = vmatpush1.bf16.msra.mxu0 %v2770
      %2791 = vmatprep.subr.bf16.mxu0 0
      %2792 = vmatpush1.bf16.msra.mxu0 %v2771
      %2793 = vmatprep.subr.bf16.mxu0 0
      %2794 = vmatpush1.bf16.msra.mxu0 %v2772
      %2795 = vmatprep.subr.bf16.mxu0 0
      %2796 = vmatpush1.bf16.msra.mxu0 %v2773
      %2797 = vmatprep.subr.bf16.mxu0 0
      %2798 = vmatpush1.bf16.msra.mxu0 %v2774
      %2799 = vmatprep.subr.bf16.mxu0 0
      %2800 = vmatpush1.bf16.msra.mxu0 0
      %2801 = vmatprep.subr.bf16.mxu0 0
      %2802 = vmatpush1.bf16.msra.mxu0 0
      %2803 = vmatprep.subr.bf16.mxu0 0
      %2804 = vmatpush1.bf16.msra.mxu0 0
      %2805 = vmatprep.subr.bf16.mxu0 0
      %2806 = vmatpush1.bf16.msra.mxu0 0
      %2807 = vmatprep.subr.bf16.mxu0 0
      %2808 = vmatpush1.bf16.msra.mxu0 0
      %2809 = vmatprep.subr.bf16.mxu0 0
      %2810 = vmatpush1.bf16.msra.mxu0 0
      %2811 = vmatprep.subr.bf16.mxu0 0
      %2812 = vmatpush1.bf16.msra.mxu0 0
      %2813 = vmatprep.subr.bf16.mxu0 0
      %2814 = vmatpush1.bf16.msra.mxu0 0
      %2815 = vmatprep.mubr.bf16.mxu0 0
      %2816 = vmatmul.mubr.bf16.gmra.mrb[0].mxu0 %v2611
      %v2817 = vpop.f32.mrb[0].mxu0
      %v2818 = vadd.f32 %v2730, %v2817
      %v2819 = vpop.f32.mrb[0].mxu0
      %v2820 = vpop.f32.mrb[0].mxu0
      %v2821 = vpop.f32.mrb[0].mxu0
      %2822 = vdwg.mxu0
      %v2823 = vld [vmem:[#allocation3 + $0x2] sm:$0xf]
      %v2824 = vpack.c.bf16 %v2823, %v2823
      %s2825 = scalar_lea.vmem %s10, 128
      %v2826 = vld [vmem:[%s2825] sm:$0xf]
      %v2827 = vld [vmem:[%s2825 + $0x4] sm:$0xf]
      %v2828 = vld [vmem:[%s2825 + $0x8] sm:$0xf]
      %v2829 = vld [vmem:[%s2825 + $0xc] sm:$0xf]
      %v2830 = vld [vmem:[%s2825 + $0x10] sm:$0xf]
      %v2831 = vld [vmem:[%s2825 + $0x14] sm:$0xf]
      %v2832 = vld [vmem:[%s2825 + $0x18] sm:$0xf]
      %v2833 = vld [vmem:[%s2825 + $0x1c] sm:$0xf]
      %v2834 = vld [vmem:[%s2825 + $0x20] sm:$0xf]
      %v2835 = vld [vmem:[%s2825 + $0x24] sm:$0xf]
      %v2836 = vld [vmem:[%s2825 + $0x28] sm:$0xf]
      %v2837 = vld [vmem:[%s2825 + $0x2c] sm:$0xf]
      %v2838 = vld [vmem:[%s2825 + $0x30] sm:$0xf]
      %v2839 = vld [vmem:[%s2825 + $0x34] sm:$0xf]
      %v2840 = vld [vmem:[%s2825 + $0x38] sm:$0xf]
      %v2841 = vld [vmem:[%s2825 + $0x3c] sm:$0xf]
      %v2858 = vunpack.c.l.b16 %v2826
      %v2859 = vunpack.c.l.b16 %v2827
      %v2860 = vunpack.c.l.b16 %v2828
      %v2861 = vunpack.c.l.b16 %v2829
      %v2862 = vunpack.c.l.b16 %v2830
      %v2863 = vunpack.c.l.b16 %v2831
      %v2864 = vunpack.c.l.b16 %v2832
      %v2865 = vunpack.c.l.b16 %v2833
      %v2866 = vunpack.c.l.b16 %v2834
      %v2867 = vunpack.c.l.b16 %v2835
      %v2868 = vunpack.c.l.b16 %v2836
      %v2869 = vunpack.c.l.b16 %v2837
      %v2870 = vunpack.c.l.b16 %v2838
      %v2871 = vunpack.c.l.b16 %v2839
      %v2872 = vunpack.c.l.b16 %v2840
      %v2873 = vunpack.c.l.b16 %v2841
      %v2874 = vpack.c.b16 %v2859, %v2858
      %v2875 = vpack.c.b16 %v2861, %v2860
      %v2876 = vpack.c.b16 %v2863, %v2862
      %v2877 = vpack.c.b16 %v2865, %v2864
      %v2878 = vpack.c.b16 %v2867, %v2866
      %v2879 = vpack.c.b16 %v2869, %v2868
      %v2880 = vpack.c.b16 %v2871, %v2870
      %v2881 = vpack.c.b16 %v2873, %v2872
      %2890 = vmatprep.subr.bf16.mxu0 0
      %2891 = vmatpush1.bf16.msra.mxu0 %v2874
      %2892 = vmatprep.subr.bf16.mxu0 0
      %2893 = vmatpush1.bf16.msra.mxu0 %v2875
      %2894 = vmatprep.subr.bf16.mxu0 0
      %2895 = vmatpush1.bf16.msra.mxu0 %v2876
      %2896 = vmatprep.subr.bf16.mxu0 0
      %2897 = vmatpush1.bf16.msra.mxu0 %v2877
      %2898 = vmatprep.subr.bf16.mxu0 0
      %2899 = vmatpush1.bf16.msra.mxu0 %v2878
      %2900 = vmatprep.subr.bf16.mxu0 0
      %2901 = vmatpush1.bf16.msra.mxu0 %v2879
      %2902 = vmatprep.subr.bf16.mxu0 0
      %2903 = vmatpush1.bf16.msra.mxu0 %v2880
      %2904 = vmatprep.subr.bf16.mxu0 0
      %2905 = vmatpush1.bf16.msra.mxu0 %v2881
      %2906 = vmatprep.subr.bf16.mxu0 0
      %2907 = vmatpush1.bf16.msra.mxu0 0
      %2908 = vmatprep.subr.bf16.mxu0 0
      %2909 = vmatpush1.bf16.msra.mxu0 0
      %2910 = vmatprep.subr.bf16.mxu0 0
      %2911 = vmatpush1.bf16.msra.mxu0 0
      %2912 = vmatprep.subr.bf16.mxu0 0
      %2913 = vmatpush1.bf16.msra.mxu0 0
      %2914 = vmatprep.subr.bf16.mxu0 0
      %2915 = vmatpush1.bf16.msra.mxu0 0
      %2916 = vmatprep.subr.bf16.mxu0 0
      %2917 = vmatpush1.bf16.msra.mxu0 0
      %2918 = vmatprep.subr.bf16.mxu0 0
      %2919 = vmatpush1.bf16.msra.mxu0 0
      %2920 = vmatprep.subr.bf16.mxu0 0
      %2921 = vmatpush1.bf16.msra.mxu0 0
      %2922 = vmatprep.mubr.bf16.mxu0 0
      %2923 = vmatmul.mubr.bf16.gmra.mrb[0].mxu0 %v2824
      %v2924 = vpop.f32.mrb[0].mxu0
      %v2925 = vadd.f32 0.0, %v2924
      %v2926 = vpop.f32.mrb[0].mxu0
      %v2927 = vpop.f32.mrb[0].mxu0
      %v2928 = vpop.f32.mrb[0].mxu0
      %2929 = vdwg.mxu0
      %v2930 = vadd.f32 %v2818, %v2925
      %v2931 = vld [vmem:[%s11] sm:$0x1]
      %v2933 = vlaneseq
      %v2934 = vshrl.u32 %v2933, 7
      %v2935 = vsub.s32 0, %v2934
      %v2936 = vrot.slane %v2931, %v2935
      %v2938 = vadd.f32 %v2930, %v2936
      %v2939 = vld [vmem:[#allocation2 + $0x1] sm:$0xf]
      %v2940 = vadd.f32 %v2938, %v2939
      %2941 = vst [vmem:[%s411] sm:$0x1] 0.0
      %2942 = vst [vmem:[%s411 + $0x5] sm:$0x1] 0.0
      %2943 = vst [vmem:[%s411 + $0x1] sm:$0xf] %v2940
      %p2944 = scmp.lt.s32.totalorder %s23, 1
      %s2945 = scalar_select %p2944, %s23, 1
      %s2946 = smul.addr %s2945, 8
      %s2947 = scalar_lea.vmem %s12, %s2946
      // Predicated region
      $region69: #{impala_cnn_forward.5} parent=67 // pred_check
        %p2948 = pneg %p298
      $region70: #{impala_cnn_forward.5} parent=67 // pred_check_branch
        %2950 = sbr.rel (%p2948) target = $region72
      $region71: #{impala_cnn_forward.5} parent=67 // pred_region
        _
      $region72: #{impala_cnn_forward.5} parent=67 // pred_fallthru
        _
    $region68: #{impala_cnn_forward.5} parent=5 // pred_fallthru
      _
    %p2951 = scmp.le.s32.totalorder 2, %s18
    // Predicated region
    $region73: #{impala_cnn_forward.5} parent=5 // pred_check
      %p2952 = pneg %p2951
    $region74: #{impala_cnn_forward.5} parent=5 // pred_check_branch
      %2954 = sbr.rel (%p2952) target = $region76
    $region75: #{impala_cnn_forward.5} parent=5 // pred_region
      %s2955 = ssub.s32 %s18, 2
      // Predicated region
      $region77: #{impala_cnn_forward.5} parent=75 // pred_check
        %p2956 = pneg %p304
      $region78: #{impala_cnn_forward.5} parent=75 // pred_check_branch
        %2958 = sbr.rel (%p2956) target = $region80
      $region79: #{impala_cnn_forward.5} parent=75 // pred_region
        %p2959 = scmp.lt.s32.totalorder %s24, 1
        %s2960 = scalar_select %p2959, %s24, 1
        %s2961 = smul.addr %s2960, 8
        %s2962 = scalar_lea.vmem %s12, %s2961
      $region80: #{impala_cnn_forward.5} parent=75 // pred_fallthru
        _
    $region76: #{impala_cnn_forward.5} parent=5 // pred_fallthru
      _
  $region6: #{impala_cnn_forward.5} parent=0 // loop_footer
    %s22 = sadd.s32 1, %s18
  $region7: #{impala_cnn_forward.5} parent=0 // loop_footer_branch
    %17 = sbr.rel target = $region3
  $region8: #{impala_cnn_forward.5} parent=0 // loop_exit
    _

</llo_original>
